<compile_context>
chip_gen: v7x
topology: tpu7x:2x2x1
jax: 0.10.0
libtpu: 0.0.40
codegen_flags: <defaults>
</compile_context>

<pallas_src>
import jax
import jax.numpy as jnp
from jax import lax
from jax.experimental import pallas as pl
from jax.experimental.pallas import tpu as pltpu

_PAD_W = 32                 # padded row length (28 + 2*2) = row stride in flat layout
_FLAT = _PAD_W * _PAD_W     # 1024 values per padded image
_POOL_LEN = 925             # pooled flat positions live in [0, 128*6 + 4*6] = [0, 792] < 925
_TAIL = 256                 # zero tail so all 25 tap slices (offsets <= 132) are full length


def _make_kernel(tb):
    s = tb * _FLAT
    tap_offsets = [_PAD_W * ki + kj for ki in range(5) for kj in range(5)]

    def kernel(xf_ref, wct_ref, bc_ref, wfc_ref, bfc_ref, out_ref, p_ref, h3_ref):
        # xf_ref:  (1, 1, s+_TAIL)  flattened padded images of this block
        # wct_ref: (16, 25)         conv weights [c, ki*5+kj]
        # bc_ref:  (16, 1)          conv bias
        # wfc_ref: (16, 26, 925)    fc weights, zero-embedded, lane-dense (pooled pos last)
        # bfc_ref: (1, 26)          fc bias
        # out_ref: (TB, 26)         logits for this block
        # p_ref:   (25, s) VMEM     im2col patch matrix scratch
        # h3_ref:  (16, TB, 1024)   per-image conv output scratch
        xf = xf_ref[0]                                        # (1, s + _TAIL)

        # ---- in-kernel im2col: p[k, n*1024 + 32*y + x] = xpad[n, y+ki, x+kj] ----
        for k, d in enumerate(tap_offsets):
            p_ref[k:k + 1, :] = xf[:, d:d + s]

        # ---- conv1: one (16,25)@(25,TB*1024) matmul + bias + ReLU ----
        h = jnp.dot(wct_ref[...], p_ref[...],
                    preferred_element_type=jnp.float32)       # (16, s)
        h = jnp.maximum(h + bc_ref[...], 0.0)

        # ---- split images: aligned lane slices (1024 = 8 lane tiles per image) ----
        for n in range(tb):
            h3_ref[:, n, :] = h[:, n * _FLAT:(n + 1) * _FLAT]
        h3 = h3_ref[...]                                      # (16, TB, 1024)

        # ---- MaxPool2d(4): shifted lane slices, row stride 32 ----
        r = h3[:, :, 0:1021]
        for dx in (1, 2, 3):
            r = jnp.maximum(r, h3[:, :, dx:dx + 1021])        # max over x-offsets
        bm = r[:, :, 0:_POOL_LEN]
        for dy in (1, 2, 3):
            bm = jnp.maximum(bm, r[:, :, _PAD_W * dy:_PAD_W * dy + _POOL_LEN])
        # bm[c, n, 128*oy + 4*ox] is the 4x4 window max at (oy, ox); other lane
        # positions hold junk that is zero-masked by wfc below.

        # ---- fc1: one batched matmul (batch = channel), contract pooled axis ----
        part = lax.dot_general(bm, wfc_ref[...],
                               dimension_numbers=(((2,), (2,)), ((0,), (0,))),
                               preferred_element_type=jnp.float32)   # (16, TB, 26)
        out_ref[...] = jnp.sum(part, axis=0) + bfc_ref[...]

    return kernel


def emnist_cnn2_prepare(w_conv, b_conv, w_fc, b_fc):
    """One-time parameter prep (hoist out of the per-call path).
       PyTorch layouts: w_conv (16,1,5,5), b_conv (16,), w_fc (26,784), b_fc (26,)."""
    wct = w_conv.reshape(16, 25).astype(jnp.float32)                 # (16, 25)
    bc = b_conv.reshape(16, 1).astype(jnp.float32)                   # (16, 1)
    bfc = b_fc.reshape(1, 26).astype(jnp.float32)                    # (1, 26)
    # Zero-embed fc weights at pooled flat positions 128*oy + 4*ox, lane-dense:
    # contraction (pooled flat) axis last -> (16, 26, 925) instead of (16, 925, 26).
    oy, ox = jnp.meshgrid(jnp.arange(7), jnp.arange(7), indexing="ij")
    r_idx = (4 * _PAD_W * oy + 4 * ox).reshape(-1)                   # (49,)
    wfc3 = jnp.transpose(w_fc.reshape(26, 16, 49).astype(jnp.float32),
                         (1, 0, 2))                                  # (16, 26, 49)
    wbig = jnp.zeros((16, 26, _POOL_LEN), jnp.float32).at[:, :, r_idx].set(wfc3)
    return wct, bc, wbig, bfc


def emnist_cnn2_forward(x, params, block=32):
    """x: (N, 1, 28, 28) f32 NCHW; params from emnist_cnn2_prepare."""
    wct, bc, wbig, bfc = params
    n = x.shape[0]
    tb = block if n >= block else n
    nblk = -(-n // tb)
    n_pad = nblk * tb
    s = tb * _FLAT

    # Cheap host glue: zero-pad to 32x32, flatten each block of TB images into one
    # lane-dense row, append a small zero tail so all 25 tap slices are full length.
    xpad = jnp.pad(x[:, 0].astype(jnp.float32),
                   ((0, n_pad - n), (2, 2), (2, 2)))                 # (n_pad, 32, 32)
    xflat = xpad.reshape(nblk, 1, s)
    xflat = jnp.pad(xflat, ((0, 0), (0, 0), (0, _TAIL)))             # (nblk, 1, s+_TAIL)

    out = pl.pallas_call(
        _make_kernel(tb),
        out_shape=jax.ShapeDtypeStruct((n_pad, 26), jnp.float32),
        grid_spec=pltpu.PrefetchScalarGridSpec(
            num_scalar_prefetch=0,
            grid=(nblk,),
            in_specs=[
                pl.BlockSpec((1, 1, s + _TAIL), lambda i: (i, 0, 0)),
                pl.BlockSpec((16, 25), lambda i: (0, 0)),
                pl.BlockSpec((16, 1), lambda i: (0, 0)),
                pl.BlockSpec((16, 26, _POOL_LEN), lambda i: (0, 0, 0)),
                pl.BlockSpec((1, 26), lambda i: (0, 0)),
            ],
            out_specs=pl.BlockSpec((tb, 26), lambda i: (i, 0)),
            scratch_shapes=[
                pltpu.VMEM((25, s), jnp.float32),
                pltpu.VMEM((16, tb, _FLAT), jnp.float32),
            ],
        ),
        compiler_params=pltpu.CompilerParams(
            dimension_semantics=("parallel",)),
    )(xflat, wct, bc, wbig, bfc)
    return out[:n]


def reference_forward(x, w_conv, b_conv, w_fc, b_fc):
    """Pure-JAX replica of the PyTorch forward (NCHW)."""
    y = lax.conv_general_dilated(
        x, w_conv, window_strides=(1, 1), padding=((2, 2), (2, 2)),
        dimension_numbers=("NCHW", "OIHW", "NCHW"))
    y = y + b_conv.reshape(1, 16, 1, 1)
    y = jnp.maximum(y, 0.0)
    y = lax.reduce_window(y, -jnp.inf, lax.max,
                          window_dimensions=(1, 1, 4, 4),
                          window_strides=(1, 1, 4, 4), padding="VALID")
    y = y.reshape(x.shape[0], -1)                                    # c*49 + oy*7 + ox order
    return y @ w_fc.T + b_fc


if __name__ == "__main__":
    key = jax.random.PRNGKey(0)
    kx, kw1, kb1, kw2, kb2 = jax.random.split(key, 5)

    # Small, module-consistent shapes: batch=2, EMNIST-style 1x28x28 images.
    x = jax.random.normal(kx, (2, 1, 28, 28), jnp.float32)

    cb = 1.0 / (1 * 5 * 5) ** 0.5
    w_conv = jax.random.uniform(kw1, (16, 1, 5, 5), jnp.float32, -cb, cb)
    b_conv = jax.random.uniform(kb1, (16,), jnp.float32, -cb, cb)
    fb = 1.0 / (16 * 7 * 7) ** 0.5
    w_fc = jax.random.uniform(kw2, (26, 16 * 7 * 7), jnp.float32, -fb, fb)
    b_fc = jax.random.uniform(kb2, (26,), jnp.float32, -fb, fb)

    params = emnist_cnn2_prepare(w_conv, b_conv, w_fc, b_fc)
    out = emnist_cnn2_forward(x, params)
    out = jax.block_until_ready(out)

    ref = reference_forward(x, w_conv, b_conv, w_fc, b_fc)
    assert out.shape == (2, 26), out.shape
    if not jnp.allclose(out, ref, atol=2e-2, rtol=2e-2):
        raise AssertionError(
            f"mismatch vs reference, max abs err = {jnp.max(jnp.abs(out - ref))}")

    print("KERNEL_OK")
</pallas_src>

<mosaic_0001>
module attributes {stable_mosaic.version = 11 : i64} {
  func.func @kernel(%arg0: i32, %arg1: memref<1x1x2304xf32, #tpu.memory_space<vmem>>, %arg2: memref<16x25xf32, #tpu.memory_space<vmem>>, %arg3: memref<16x1xf32, #tpu.memory_space<vmem>>, %arg4: memref<16x26x925xf32, #tpu.memory_space<vmem>>, %arg5: memref<1x26xf32, #tpu.memory_space<vmem>>, %arg6: memref<2x26xf32, #tpu.memory_space<vmem>>, %arg7: memref<25x2048xf32, #tpu.memory_space<vmem>>, %arg8: memref<16x2x1024xf32, #tpu.memory_space<vmem>>) attributes {dimension_semantics = [#tpu.dimension_semantics<parallel>], iteration_bounds = array<i64: 1>, scalar_prefetch = 0 : i64, scratch_operands = 2 : i64, tpu.core_type = #tpu.core_type<tc>, window_params = [{transform_indices = @transform_0, window_bounds = array<i64: 1, 1, 2304>}, {pipeline_mode = #tpu.pipeline_mode<synchronous>, transform_indices = @transform_1, window_bounds = array<i64: 16, 25>}, {pipeline_mode = #tpu.pipeline_mode<synchronous>, transform_indices = @transform_2, window_bounds = array<i64: 16, 1>}, {pipeline_mode = #tpu.pipeline_mode<synchronous>, transform_indices = @transform_3, window_bounds = array<i64: 16, 26, 925>}, {pipeline_mode = #tpu.pipeline_mode<synchronous>, transform_indices = @transform_4, window_bounds = array<i64: 1, 26>}, {transform_indices = @transform_5, window_bounds = array<i64: 2, 26>}]} {
    %c0 = arith.constant 0 : index
    %c0_0 = arith.constant 0 : index
    %c0_1 = arith.constant 0 : index
    %0 = vector.load %arg1[%c0, %c0_0, %c0_1] : memref<1x1x2304xf32, #tpu.memory_space<vmem>>, vector<1x1x2304xf32>
    %1 = vector.shape_cast %0 : vector<1x1x2304xf32> to vector<1x2304xf32>
    %2 = vector.extract_strided_slice %1 {offsets = [0, 0], sizes = [1, 2048], strides = [1, 1]} : vector<1x2304xf32> to vector<1x2048xf32>
    %c0_2 = arith.constant 0 : index
    %c0_3 = arith.constant 0 : index
    %3 = vector.load %arg7[%c0_2, %c0_3] : memref<25x2048xf32, #tpu.memory_space<vmem>>, vector<1x2048xf32>
    tpu.vector_store %arg7[%c0_2, %c0_3], %2 {strides = array<i32>} : memref<25x2048xf32, #tpu.memory_space<vmem>>, vector<1x2048xf32>,
    %4 = vector.extract_strided_slice %1 {offsets = [0, 1], sizes = [1, 2048], strides = [1, 1]} : vector<1x2304xf32> to vector<1x2048xf32>
    %c1 = arith.constant 1 : index
    %c0_4 = arith.constant 0 : index
    %5 = vector.load %arg7[%c1, %c0_4] : memref<25x2048xf32, #tpu.memory_space<vmem>>, vector<1x2048xf32>
    tpu.vector_store %arg7[%c1, %c0_4], %4 {strides = array<i32>} : memref<25x2048xf32, #tpu.memory_space<vmem>>, vector<1x2048xf32>,
    %6 = vector.extract_strided_slice %1 {offsets = [0, 2], sizes = [1, 2048], strides = [1, 1]} : vector<1x2304xf32> to vector<1x2048xf32>
    %c2 = arith.constant 2 : index
    %c0_5 = arith.constant 0 : index
    %7 = vector.load %arg7[%c2, %c0_5] : memref<25x2048xf32, #tpu.memory_space<vmem>>, vector<1x2048xf32>
    tpu.vector_store %arg7[%c2, %c0_5], %6 {strides = array<i32>} : memref<25x2048xf32, #tpu.memory_space<vmem>>, vector<1x2048xf32>,
    %8 = vector.extract_strided_slice %1 {offsets = [0, 3], sizes = [1, 2048], strides = [1, 1]} : vector<1x2304xf32> to vector<1x2048xf32>
    %c3 = arith.constant 3 : index
    %c0_6 = arith.constant 0 : index
    %9 = vector.load %arg7[%c3, %c0_6] : memref<25x2048xf32, #tpu.memory_space<vmem>>, vector<1x2048xf32>
    tpu.vector_store %arg7[%c3, %c0_6], %8 {strides = array<i32>} : memref<25x2048xf32, #tpu.memory_space<vmem>>, vector<1x2048xf32>,
    %10 = vector.extract_strided_slice %1 {offsets = [0, 4], sizes = [1, 2048], strides = [1, 1]} : vector<1x2304xf32> to vector<1x2048xf32>
    %c4 = arith.constant 4 : index
    %c0_7 = arith.constant 0 : index
    %11 = vector.load %arg7[%c4, %c0_7] : memref<25x2048xf32, #tpu.memory_space<vmem>>, vector<1x2048xf32>
    tpu.vector_store %arg7[%c4, %c0_7], %10 {strides = array<i32>} : memref<25x2048xf32, #tpu.memory_space<vmem>>, vector<1x2048xf32>,
    %12 = vector.extract_strided_slice %1 {offsets = [0, 32], sizes = [1, 2048], strides = [1, 1]} : vector<1x2304xf32> to vector<1x2048xf32>
    %c5 = arith.constant 5 : index
    %c0_8 = arith.constant 0 : index
    %13 = vector.load %arg7[%c5, %c0_8] : memref<25x2048xf32, #tpu.memory_space<vmem>>, vector<1x2048xf32>
    tpu.vector_store %arg7[%c5, %c0_8], %12 {strides = array<i32>} : memref<25x2048xf32, #tpu.memory_space<vmem>>, vector<1x2048xf32>,
    %14 = vector.extract_strided_slice %1 {offsets = [0, 33], sizes = [1, 2048], strides = [1, 1]} : vector<1x2304xf32> to vector<1x2048xf32>
    %c6 = arith.constant 6 : index
    %c0_9 = arith.constant 0 : index
    %15 = vector.load %arg7[%c6, %c0_9] : memref<25x2048xf32, #tpu.memory_space<vmem>>, vector<1x2048xf32>
    tpu.vector_store %arg7[%c6, %c0_9], %14 {strides = array<i32>} : memref<25x2048xf32, #tpu.memory_space<vmem>>, vector<1x2048xf32>,
    %16 = vector.extract_strided_slice %1 {offsets = [0, 34], sizes = [1, 2048], strides = [1, 1]} : vector<1x2304xf32> to vector<1x2048xf32>
    %c7 = arith.constant 7 : index
    %c0_10 = arith.constant 0 : index
    %17 = vector.load %arg7[%c7, %c0_10] : memref<25x2048xf32, #tpu.memory_space<vmem>>, vector<1x2048xf32>
    tpu.vector_store %arg7[%c7, %c0_10], %16 {strides = array<i32>} : memref<25x2048xf32, #tpu.memory_space<vmem>>, vector<1x2048xf32>,
    %18 = vector.extract_strided_slice %1 {offsets = [0, 35], sizes = [1, 2048], strides = [1, 1]} : vector<1x2304xf32> to vector<1x2048xf32>
    %c8 = arith.constant 8 : index
    %c0_11 = arith.constant 0 : index
    %19 = vector.load %arg7[%c8, %c0_11] : memref<25x2048xf32, #tpu.memory_space<vmem>>, vector<1x2048xf32>
    tpu.vector_store %arg7[%c8, %c0_11], %18 {strides = array<i32>} : memref<25x2048xf32, #tpu.memory_space<vmem>>, vector<1x2048xf32>,
    %20 = vector.extract_strided_slice %1 {offsets = [0, 36], sizes = [1, 2048], strides = [1, 1]} : vector<1x2304xf32> to vector<1x2048xf32>
    %c9 = arith.constant 9 : index
    %c0_12 = arith.constant 0 : index
    %21 = vector.load %arg7[%c9, %c0_12] : memref<25x2048xf32, #tpu.memory_space<vmem>>, vector<1x2048xf32>
    tpu.vector_store %arg7[%c9, %c0_12], %20 {strides = array<i32>} : memref<25x2048xf32, #tpu.memory_space<vmem>>, vector<1x2048xf32>,
    %22 = vector.extract_strided_slice %1 {offsets = [0, 64], sizes = [1, 2048], strides = [1, 1]} : vector<1x2304xf32> to vector<1x2048xf32>
    %c10 = arith.constant 10 : index
    %c0_13 = arith.constant 0 : index
    %23 = vector.load %arg7[%c10, %c0_13] : memref<25x2048xf32, #tpu.memory_space<vmem>>, vector<1x2048xf32>
    tpu.vector_store %arg7[%c10, %c0_13], %22 {strides = array<i32>} : memref<25x2048xf32, #tpu.memory_space<vmem>>, vector<1x2048xf32>,
    %24 = vector.extract_strided_slice %1 {offsets = [0, 65], sizes = [1, 2048], strides = [1, 1]} : vector<1x2304xf32> to vector<1x2048xf32>
    %c11 = arith.constant 11 : index
    %c0_14 = arith.constant 0 : index
    %25 = vector.load %arg7[%c11, %c0_14] : memref<25x2048xf32, #tpu.memory_space<vmem>>, vector<1x2048xf32>
    tpu.vector_store %arg7[%c11, %c0_14], %24 {strides = array<i32>} : memref<25x2048xf32, #tpu.memory_space<vmem>>, vector<1x2048xf32>,
    %26 = vector.extract_strided_slice %1 {offsets = [0, 66], sizes = [1, 2048], strides = [1, 1]} : vector<1x2304xf32> to vector<1x2048xf32>
    %c12 = arith.constant 12 : index
    %c0_15 = arith.constant 0 : index
    %27 = vector.load %arg7[%c12, %c0_15] : memref<25x2048xf32, #tpu.memory_space<vmem>>, vector<1x2048xf32>
    tpu.vector_store %arg7[%c12, %c0_15], %26 {strides = array<i32>} : memref<25x2048xf32, #tpu.memory_space<vmem>>, vector<1x2048xf32>,
    %28 = vector.extract_strided_slice %1 {offsets = [0, 67], sizes = [1, 2048], strides = [1, 1]} : vector<1x2304xf32> to vector<1x2048xf32>
    %c13 = arith.constant 13 : index
    %c0_16 = arith.constant 0 : index
    %29 = vector.load %arg7[%c13, %c0_16] : memref<25x2048xf32, #tpu.memory_space<vmem>>, vector<1x2048xf32>
    tpu.vector_store %arg7[%c13, %c0_16], %28 {strides = array<i32>} : memref<25x2048xf32, #tpu.memory_space<vmem>>, vector<1x2048xf32>,
    %30 = vector.extract_strided_slice %1 {offsets = [0, 68], sizes = [1, 2048], strides = [1, 1]} : vector<1x2304xf32> to vector<1x2048xf32>
    %c14 = arith.constant 14 : index
    %c0_17 = arith.constant 0 : index
    %31 = vector.load %arg7[%c14, %c0_17] : memref<25x2048xf32, #tpu.memory_space<vmem>>, vector<1x2048xf32>
    tpu.vector_store %arg7[%c14, %c0_17], %30 {strides = array<i32>} : memref<25x2048xf32, #tpu.memory_space<vmem>>, vector<1x2048xf32>,
    %32 = vector.extract_strided_slice %1 {offsets = [0, 96], sizes = [1, 2048], strides = [1, 1]} : vector<1x2304xf32> to vector<1x2048xf32>
    %c15 = arith.constant 15 : index
    %c0_18 = arith.constant 0 : index
    %33 = vector.load %arg7[%c15, %c0_18] : memref<25x2048xf32, #tpu.memory_space<vmem>>, vector<1x2048xf32>
    tpu.vector_store %arg7[%c15, %c0_18], %32 {strides = array<i32>} : memref<25x2048xf32, #tpu.memory_space<vmem>>, vector<1x2048xf32>,
    %34 = vector.extract_strided_slice %1 {offsets = [0, 97], sizes = [1, 2048], strides = [1, 1]} : vector<1x2304xf32> to vector<1x2048xf32>
    %c16 = arith.constant 16 : index
    %c0_19 = arith.constant 0 : index
    %35 = vector.load %arg7[%c16, %c0_19] : memref<25x2048xf32, #tpu.memory_space<vmem>>, vector<1x2048xf32>
    tpu.vector_store %arg7[%c16, %c0_19], %34 {strides = array<i32>} : memref<25x2048xf32, #tpu.memory_space<vmem>>, vector<1x2048xf32>,
    %36 = vector.extract_strided_slice %1 {offsets = [0, 98], sizes = [1, 2048], strides = [1, 1]} : vector<1x2304xf32> to vector<1x2048xf32>
    %c17 = arith.constant 17 : index
    %c0_20 = arith.constant 0 : index
    %37 = vector.load %arg7[%c17, %c0_20] : memref<25x2048xf32, #tpu.memory_space<vmem>>, vector<1x2048xf32>
    tpu.vector_store %arg7[%c17, %c0_20], %36 {strides = array<i32>} : memref<25x2048xf32, #tpu.memory_space<vmem>>, vector<1x2048xf32>,
    %38 = vector.extract_strided_slice %1 {offsets = [0, 99], sizes = [1, 2048], strides = [1, 1]} : vector<1x2304xf32> to vector<1x2048xf32>
    %c18 = arith.constant 18 : index
    %c0_21 = arith.constant 0 : index
    %39 = vector.load %arg7[%c18, %c0_21] : memref<25x2048xf32, #tpu.memory_space<vmem>>, vector<1x2048xf32>
    tpu.vector_store %arg7[%c18, %c0_21], %38 {strides = array<i32>} : memref<25x2048xf32, #tpu.memory_space<vmem>>, vector<1x2048xf32>,
    %40 = vector.extract_strided_slice %1 {offsets = [0, 100], sizes = [1, 2048], strides = [1, 1]} : vector<1x2304xf32> to vector<1x2048xf32>
    %c19 = arith.constant 19 : index
    %c0_22 = arith.constant 0 : index
    %41 = vector.load %arg7[%c19, %c0_22] : memref<25x2048xf32, #tpu.memory_space<vmem>>, vector<1x2048xf32>
    tpu.vector_store %arg7[%c19, %c0_22], %40 {strides = array<i32>} : memref<25x2048xf32, #tpu.memory_space<vmem>>, vector<1x2048xf32>,
    %42 = vector.extract_strided_slice %1 {offsets = [0, 128], sizes = [1, 2048], strides = [1, 1]} : vector<1x2304xf32> to vector<1x2048xf32>
    %c20 = arith.constant 20 : index
    %c0_23 = arith.constant 0 : index
    %43 = vector.load %arg7[%c20, %c0_23] : memref<25x2048xf32, #tpu.memory_space<vmem>>, vector<1x2048xf32>
    tpu.vector_store %arg7[%c20, %c0_23], %42 {strides = array<i32>} : memref<25x2048xf32, #tpu.memory_space<vmem>>, vector<1x2048xf32>,
    %44 = vector.extract_strided_slice %1 {offsets = [0, 129], sizes = [1, 2048], strides = [1, 1]} : vector<1x2304xf32> to vector<1x2048xf32>
    %c21 = arith.constant 21 : index
    %c0_24 = arith.constant 0 : index
    %45 = vector.load %arg7[%c21, %c0_24] : memref<25x2048xf32, #tpu.memory_space<vmem>>, vector<1x2048xf32>
    tpu.vector_store %arg7[%c21, %c0_24], %44 {strides = array<i32>} : memref<25x2048xf32, #tpu.memory_space<vmem>>, vector<1x2048xf32>,
    %46 = vector.extract_strided_slice %1 {offsets = [0, 130], sizes = [1, 2048], strides = [1, 1]} : vector<1x2304xf32> to vector<1x2048xf32>
    %c22 = arith.constant 22 : index
    %c0_25 = arith.constant 0 : index
    %47 = vector.load %arg7[%c22, %c0_25] : memref<25x2048xf32, #tpu.memory_space<vmem>>, vector<1x2048xf32>
    tpu.vector_store %arg7[%c22, %c0_25], %46 {strides = array<i32>} : memref<25x2048xf32, #tpu.memory_space<vmem>>, vector<1x2048xf32>,
    %48 = vector.extract_strided_slice %1 {offsets = [0, 131], sizes = [1, 2048], strides = [1, 1]} : vector<1x2304xf32> to vector<1x2048xf32>
    %c23 = arith.constant 23 : index
    %c0_26 = arith.constant 0 : index
    %49 = vector.load %arg7[%c23, %c0_26] : memref<25x2048xf32, #tpu.memory_space<vmem>>, vector<1x2048xf32>
    tpu.vector_store %arg7[%c23, %c0_26], %48 {strides = array<i32>} : memref<25x2048xf32, #tpu.memory_space<vmem>>, vector<1x2048xf32>,
    %50 = vector.extract_strided_slice %1 {offsets = [0, 132], sizes = [1, 2048], strides = [1, 1]} : vector<1x2304xf32> to vector<1x2048xf32>
    %c24 = arith.constant 24 : index
    %c0_27 = arith.constant 0 : index
    %51 = vector.load %arg7[%c24, %c0_27] : memref<25x2048xf32, #tpu.memory_space<vmem>>, vector<1x2048xf32>
    tpu.vector_store %arg7[%c24, %c0_27], %50 {strides = array<i32>} : memref<25x2048xf32, #tpu.memory_space<vmem>>, vector<1x2048xf32>,
    %c0_28 = arith.constant 0 : index
    %c0_29 = arith.constant 0 : index
    %52 = vector.load %arg2[%c0_28, %c0_29] : memref<16x25xf32, #tpu.memory_space<vmem>>, vector<16x25xf32>
    %c0_30 = arith.constant 0 : index
    %c0_31 = arith.constant 0 : index
    %53 = vector.load %arg7[%c0_30, %c0_31] : memref<25x2048xf32, #tpu.memory_space<vmem>>, vector<25x2048xf32>
    %cst = arith.constant dense<0.000000e+00> : vector<16x2048xf32>
    %54 = tpu.matmul %52, %53, %cst {dimension_numbers = #tpu.dot_dimension_numbers<[1], [0], [0], [1], [0, 0, 1, 1], [], []>} : vector<16x25xf32>, vector<25x2048xf32>, vector<16x2048xf32> -> vector<16x2048xf32>
    %c0_32 = arith.constant 0 : index
    %c0_33 = arith.constant 0 : index
    %55 = vector.load %arg3[%c0_32, %c0_33] : memref<16x1xf32, #tpu.memory_space<vmem>>, vector<16x1xf32>
    %56 = vector.broadcast %55 : vector<16x1xf32> to vector<16x2048xf32>
    %57 = arith.addf %54, %56 : vector<16x2048xf32>
    %cst_34 = arith.constant 0.000000e+00 : f32
    %58 = vector.broadcast %cst_34 : f32 to vector<16x2048xf32>
    %59 = arith.maximumf %57, %58 : vector<16x2048xf32>
    %60 = vector.extract_strided_slice %59 {offsets = [0, 0], sizes = [16, 1024], strides = [1, 1]} : vector<16x2048xf32> to vector<16x1024xf32>
    %c0_35 = arith.constant 0 : index
    %c0_36 = arith.constant 0 : index
    %c0_37 = arith.constant 0 : index
    %61 = vector.load %arg8[%c0_35, %c0_36, %c0_37] : memref<16x2x1024xf32, #tpu.memory_space<vmem>>, vector<16x1x1024xf32>
    %62 = vector.shape_cast %61 : vector<16x1x1024xf32> to vector<16x1024xf32>
    %63 = vector.shape_cast %60 : vector<16x1024xf32> to vector<16x1x1024xf32>
    tpu.vector_store %arg8[%c0_35, %c0_36, %c0_37], %63 {strides = array<i32>} : memref<16x2x1024xf32, #tpu.memory_space<vmem>>, vector<16x1x1024xf32>,
    %64 = vector.extract_strided_slice %59 {offsets = [0, 1024], sizes = [16, 1024], strides = [1, 1]} : vector<16x2048xf32> to vector<16x1024xf32>
    %c0_38 = arith.constant 0 : index
    %c1_39 = arith.constant 1 : index
    %c0_40 = arith.constant 0 : index
    %65 = vector.load %arg8[%c0_38, %c1_39, %c0_40] : memref<16x2x1024xf32, #tpu.memory_space<vmem>>, vector<16x1x1024xf32>
    %66 = vector.shape_cast %65 : vector<16x1x1024xf32> to vector<16x1024xf32>
    %67 = vector.shape_cast %64 : vector<16x1024xf32> to vector<16x1x1024xf32>
    tpu.vector_store %arg8[%c0_38, %c1_39, %c0_40], %67 {strides = array<i32>} : memref<16x2x1024xf32, #tpu.memory_space<vmem>>, vector<16x1x1024xf32>,
    %c0_41 = arith.constant 0 : index
    %c0_42 = arith.constant 0 : index
    %c0_43 = arith.constant 0 : index
    %68 = vector.load %arg8[%c0_41, %c0_42, %c0_43] : memref<16x2x1024xf32, #tpu.memory_space<vmem>>, vector<16x2x1024xf32>
    %69 = vector.extract_strided_slice %68 {offsets = [0, 0, 0], sizes = [16, 2, 1021], strides = [1, 1, 1]} : vector<16x2x1024xf32> to vector<16x2x1021xf32>
    %70 = vector.extract_strided_slice %68 {offsets = [0, 0, 1], sizes = [16, 2, 1021], strides = [1, 1, 1]} : vector<16x2x1024xf32> to vector<16x2x1021xf32>
    %71 = arith.maximumf %69, %70 : vector<16x2x1021xf32>
    %72 = vector.extract_strided_slice %68 {offsets = [0, 0, 2], sizes = [16, 2, 1021], strides = [1, 1, 1]} : vector<16x2x1024xf32> to vector<16x2x1021xf32>
    %73 = arith.maximumf %71, %72 : vector<16x2x1021xf32>
    %74 = vector.extract_strided_slice %68 {offsets = [0, 0, 3], sizes = [16, 2, 1021], strides = [1, 1, 1]} : vector<16x2x1024xf32> to vector<16x2x1021xf32>
    %75 = arith.maximumf %73, %74 : vector<16x2x1021xf32>
    %76 = vector.extract_strided_slice %75 {offsets = [0, 0, 0], sizes = [16, 2, 925], strides = [1, 1, 1]} : vector<16x2x1021xf32> to vector<16x2x925xf32>
    %77 = vector.extract_strided_slice %75 {offsets = [0, 0, 32], sizes = [16, 2, 925], strides = [1, 1, 1]} : vector<16x2x1021xf32> to vector<16x2x925xf32>
    %78 = arith.maximumf %76, %77 : vector<16x2x925xf32>
    %79 = vector.extract_strided_slice %75 {offsets = [0, 0, 64], sizes = [16, 2, 925], strides = [1, 1, 1]} : vector<16x2x1021xf32> to vector<16x2x925xf32>
    %80 = arith.maximumf %78, %79 : vector<16x2x925xf32>
    %81 = vector.extract_strided_slice %75 {offsets = [0, 0, 96], sizes = [16, 2, 925], strides = [1, 1, 1]} : vector<16x2x1021xf32> to vector<16x2x925xf32>
    %82 = arith.maximumf %80, %81 : vector<16x2x925xf32>
    %c0_44 = arith.constant 0 : index
    %c0_45 = arith.constant 0 : index
    %c0_46 = arith.constant 0 : index
    %83 = vector.load %arg4[%c0_44, %c0_45, %c0_46] : memref<16x26x925xf32, #tpu.memory_space<vmem>>, vector<16x26x925xf32>
    %cst_47 = arith.constant dense<0.000000e+00> : vector<16x2x26xf32>
    %84 = tpu.matmul %82, %83, %cst_47 {dimension_numbers = #tpu.dot_dimension_numbers<[2], [2], [1], [1], [0, 0, 0, 1, 1, 1], [0], [0]>} : vector<16x2x925xf32>, vector<16x26x925xf32>, vector<16x2x26xf32> -> vector<16x2x26xf32>
    %cst_48 = arith.constant dense<0.000000e+00> : vector<2x26xf32>
    %85 = vector.multi_reduction <add>, %84, %cst_48 [0] : vector<16x2x26xf32> to vector<2x26xf32>
    %c0_49 = arith.constant 0 : index
    %c0_50 = arith.constant 0 : index
    %86 = vector.load %arg5[%c0_49, %c0_50] : memref<1x26xf32, #tpu.memory_space<vmem>>, vector<1x26xf32>
    %87 = vector.broadcast %86 : vector<1x26xf32> to vector<2x26xf32>
    %88 = arith.addf %85, %87 : vector<2x26xf32>
    %c0_51 = arith.constant 0 : index
    %c0_52 = arith.constant 0 : index
    %89 = vector.load %arg6[%c0_51, %c0_52] : memref<2x26xf32, #tpu.memory_space<vmem>>, vector<2x26xf32>
    tpu.vector_store %arg6[%c0_51, %c0_52], %88 {strides = array<i32>} : memref<2x26xf32, #tpu.memory_space<vmem>>, vector<2x26xf32>,
    return
  }
  func.func @transform_0(%arg0: i32) -> (i32, i32, i32) {
    %c0_i32 = arith.constant 0 : i32
    %c0_i32_0 = arith.constant 0 : i32
    %c0_i32_1 = arith.constant 0 : i32
    return %arg0, %c0_i32, %c0_i32_0 : i32, i32, i32
  }
  func.func @transform_1(%arg0: i32) -> (i32, i32) {
    %c0_i32 = arith.constant 0 : i32
    %c0_i32_0 = arith.constant 0 : i32
    %c0_i32_1 = arith.constant 0 : i32
    return %c0_i32, %c0_i32_0 : i32, i32
  }
  func.func @transform_2(%arg0: i32) -> (i32, i32) {
    %c0_i32 = arith.constant 0 : i32
    %c0_i32_0 = arith.constant 0 : i32
    %c0_i32_1 = arith.constant 0 : i32
    return %c0_i32, %c0_i32_0 : i32, i32
  }
  func.func @transform_3(%arg0: i32) -> (i32, i32, i32) {
    %c0_i32 = arith.constant 0 : i32
    %c0_i32_0 = arith.constant 0 : i32
    %c0_i32_1 = arith.constant 0 : i32
    %c0_i32_2 = arith.constant 0 : i32
    return %c0_i32, %c0_i32_0, %c0_i32_1 : i32, i32, i32
  }
  func.func @transform_4(%arg0: i32) -> (i32, i32) {
    %c0_i32 = arith.constant 0 : i32
    %c0_i32_0 = arith.constant 0 : i32
    %c0_i32_1 = arith.constant 0 : i32
    return %c0_i32, %c0_i32_0 : i32, i32
  }
  func.func @transform_5(%arg0: i32) -> (i32, i32) {
    %c0_i32 = arith.constant 0 : i32
    %c0_i32_0 = arith.constant 0 : i32
    return %arg0, %c0_i32 : i32, i32
  }
}

</mosaic_0001>

<llo_original>
// kernel: tpu_custom_call.1
$region0: #{tpu_custom_call.1}
  #allocation0 [shape = 'u32[]', space=smem, size = 0x4, offset = 0x4, fixed_abs, tag = 'smem constant byte address 0x4 - core index']
  #allocation1 [shape = 'u32[144,128]{1,0:T(1,128)}', space=vmem, size = 0x12000, scoped, tag = 'internal scratch']
  #allocation2 [shape = 'f32[25,2048]{1,0:T(8,128)}', space=vmem, size = 0x40000, scoped, tag = 'scratch operand']
  #allocation3 [shape = 'f32[16,2,1024]{2,1,0:T(2,128)}', space=vmem, size = 0x20000, scoped, tag = 'scratch operand']
  %s0 = inlined_call_operand.vmem [shape: f32[1,1,2304], index: 0, kind: input, shape index: {}]
  %s1 = inlined_call_operand.vmem [shape: f32[16,25], index: 1, kind: input, shape index: {}]
  %s2 = inlined_call_operand.vmem [shape: f32[16,1], index: 2, kind: input, shape index: {}]
  %s3 = inlined_call_operand.vmem [shape: f32[16,26,925], index: 3, kind: input, shape index: {}]
  %s4 = inlined_call_operand.vmem [shape: f32[1,26], index: 4, kind: input, shape index: {}]
  %s5 = inlined_call_operand.hbm [shape: f32[2,26], index: 5, kind: output, shape index: {}]
  %s6 = sld [smem:[#allocation0]]
  $region30: #{tpu_custom_call.1} parent=0
    _
  %s8 = ssub.s32 1, %s6
  %s9 = scalar_select 0, %s8, %s6
  $region1: #{tpu_custom_call.1} parent=0
    #allocation4 [shape = 'u8[1024]{0}', space=vmem, size = 0x400, scoped, tag = 'output window, operand 0, single buffered']
    #allocation5 [shape = 's32[1]{0}', space=sflag, size = 0x4, scoped, tag = 'scoped memory for tpu_custom_call.1']
    %10 = vsyncpa [#allocation5], 0
    // Predicated region
    $region2: #{tpu_custom_call.1} parent=1 // pred_check
      _
    $region3: #{tpu_custom_call.1} parent=1 // pred_check_branch
      %12 = sbr.rel (0) target = $region5
    $region4: #{tpu_custom_call.1} parent=1 // pred_region
      _
    $region5: #{tpu_custom_call.1} parent=1 // pred_fallthru
      _
    // Predicated region
    $region6: #{tpu_custom_call.1} parent=1 // pred_check
      _
    $region7: #{tpu_custom_call.1} parent=1 // pred_check_branch
      %14 = sbr.rel (0) target = $region9
    $region8: #{tpu_custom_call.1} parent=1 // pred_region
      _
    $region9: #{tpu_custom_call.1} parent=1 // pred_fallthru
      _
    // Predicated region
    $region10: #{tpu_custom_call.1} parent=1 // pred_check
      _
    $region11: #{tpu_custom_call.1} parent=1 // pred_check_branch
      %16 = sbr.rel (0) target = $region13
    $region12: #{tpu_custom_call.1} parent=1 // pred_region
      _
    $region13: #{tpu_custom_call.1} parent=1 // pred_fallthru
      _
    // Predicated region
    $region14: #{tpu_custom_call.1} parent=1 // pred_check
      _
    $region15: #{tpu_custom_call.1} parent=1 // pred_check_branch
      %18 = sbr.rel (0) target = $region17
    $region16: #{tpu_custom_call.1} parent=1 // pred_region
      _
    $region17: #{tpu_custom_call.1} parent=1 // pred_fallthru
      _
    // Predicated region
    $region18: #{tpu_custom_call.1} parent=1 // pred_check
      _
    $region19: #{tpu_custom_call.1} parent=1 // pred_check_branch
      %20 = sbr.rel (0) target = $region21
    $region20: #{tpu_custom_call.1} parent=1 // pred_region
      _
    $region21: #{tpu_custom_call.1} parent=1 // pred_fallthru
      _
    %v21 = vld [vmem:[%s0] sm:$0xff]
    %v22 = vld [vmem:[%s0 + $0x8] sm:$0xff]
    %v23 = vld [vmem:[%s0 + $0x10] sm:$0x3]
    %24 = vst [vmem:[#allocation2] ss:$8 sm:$0xf] %v21
    %25 = vst [vmem:[#allocation2] ss:$8 sm:$0xf0] %v21
    %s26 = scalar_lea.vmem [#allocation2], 64
    %27 = vst [vmem:[%s26] ss:$8 sm:$0xf] %v22
    %28 = vst [vmem:[%s26] ss:$8 sm:$0xf0] %v22
    %32 = vrot.lane.b32.xlu0 %v21, 127
    %v33 = vpop.permute.xlu0 %32
    %34 = vrot.lane.b32.xlu0 %v22, 127
    %v35 = vpop.permute.xlu0 %34
    %36 = vrot.lane.b32.xlu0 %v23, 127
    %v37 = vpop.permute.xlu0 %36
    %v38 = vrot.slane %v33, 1
    %v39 = vrot.slane %v35, 1
    %v40 = vrot.slane %v37, 1
    %vm41 = vcmask 1046528
    %v42 = vsel %vm41, %v38, %v39
    %vm43 = vcmask 1039360
    %v44 = vsel %vm43, %v33, %v42
    %v45 = vsel %vm41, %v39, %v40
    %v46 = vsel %vm43, %v35, %v45
    %s49 = scalar_lea.vmem [#allocation2], 1
    %50 = vst [vmem:[%s49] ss:$8 sm:$0xf] %v44
    %51 = vst [vmem:[%s49] ss:$8 sm:$0xf0] %v44
    %s52 = scalar_lea.vmem [#allocation2], 65
    %53 = vst [vmem:[%s52] ss:$8 sm:$0xf] %v46
    %54 = vst [vmem:[%s52] ss:$8 sm:$0xf0] %v46
    %55 = vrot.lane.b32.xlu0 %v21, 126
    %v56 = vpop.permute.xlu0 %55
    %57 = vrot.lane.b32.xlu0 %v22, 126
    %v58 = vpop.permute.xlu0 %57
    %59 = vrot.lane.b32.xlu0 %v23, 126
    %v60 = vpop.permute.xlu0 %59
    %v61 = vrot.slane %v56, 1
    %v62 = vrot.slane %v58, 1
    %v63 = vrot.slane %v60, 1
    %v64 = vsel %vm41, %v61, %v62
    %vm65 = vcmask 1031168
    %v66 = vsel %vm65, %v56, %v64
    %v67 = vsel %vm41, %v62, %v63
    %v68 = vsel %vm65, %v58, %v67
    %s71 = scalar_lea.vmem [#allocation2], 2
    %72 = vst [vmem:[%s71] ss:$8 sm:$0xf] %v66
    %73 = vst [vmem:[%s71] ss:$8 sm:$0xf0] %v66
    %s74 = scalar_lea.vmem [#allocation2], 66
    %75 = vst [vmem:[%s74] ss:$8 sm:$0xf] %v68
    %76 = vst [vmem:[%s74] ss:$8 sm:$0xf0] %v68
    %77 = vrot.lane.b32.xlu0 %v21, 125
    %v78 = vpop.permute.xlu0 %77
    %79 = vrot.lane.b32.xlu0 %v22, 125
    %v80 = vpop.permute.xlu0 %79
    %81 = vrot.lane.b32.xlu0 %v23, 125
    %v82 = vpop.permute.xlu0 %81
    %v83 = vrot.slane %v78, 1
    %v84 = vrot.slane %v80, 1
    %v85 = vrot.slane %v82, 1
    %v86 = vsel %vm41, %v83, %v84
    %vm87 = vcmask 1022976
    %v88 = vsel %vm87, %v78, %v86
    %v89 = vsel %vm41, %v84, %v85
    %v90 = vsel %vm87, %v80, %v89
    %s93 = scalar_lea.vmem [#allocation2], 3
    %94 = vst [vmem:[%s93] ss:$8 sm:$0xf] %v88
    %95 = vst [vmem:[%s93] ss:$8 sm:$0xf0] %v88
    %s96 = scalar_lea.vmem [#allocation2], 67
    %97 = vst [vmem:[%s96] ss:$8 sm:$0xf] %v90
    %98 = vst [vmem:[%s96] ss:$8 sm:$0xf0] %v90
    %99 = vrot.lane.b32.xlu0 %v21, 124
    %v100 = vpop.permute.xlu0 %99
    %101 = vrot.lane.b32.xlu0 %v22, 124
    %v102 = vpop.permute.xlu0 %101
    %103 = vrot.lane.b32.xlu0 %v23, 124
    %v104 = vpop.permute.xlu0 %103
    %v105 = vrot.slane %v100, 1
    %v106 = vrot.slane %v102, 1
    %v107 = vrot.slane %v104, 1
    %v108 = vsel %vm41, %v105, %v106
    %vm109 = vcmask 1014784
    %v110 = vsel %vm109, %v100, %v108
    %v111 = vsel %vm41, %v106, %v107
    %v112 = vsel %vm109, %v102, %v111
    %s115 = scalar_lea.vmem [#allocation2], 4
    %116 = vst [vmem:[%s115] ss:$8 sm:$0xf] %v110
    %117 = vst [vmem:[%s115] ss:$8 sm:$0xf0] %v110
    %s118 = scalar_lea.vmem [#allocation2], 68
    %119 = vst [vmem:[%s118] ss:$8 sm:$0xf] %v112
    %120 = vst [vmem:[%s118] ss:$8 sm:$0xf0] %v112
    %121 = vrot.lane.b32.xlu0 %v21, 96
    %v122 = vpop.permute.xlu0 %121
    %123 = vrot.lane.b32.xlu0 %v22, 96
    %v124 = vpop.permute.xlu0 %123
    %125 = vrot.lane.b32.xlu0 %v23, 96
    %v126 = vpop.permute.xlu0 %125
    %v127 = vrot.slane %v122, 1
    %v128 = vrot.slane %v124, 1
    %v129 = vrot.slane %v126, 1
    %v130 = vsel %vm41, %v127, %v128
    %vm131 = vcmask 785408
    %v132 = vsel %vm131, %v122, %v130
    %v133 = vsel %vm41, %v128, %v129
    %v134 = vsel %vm131, %v124, %v133
    %s137 = scalar_lea.vmem [#allocation2], 5
    %138 = vst [vmem:[%s137] ss:$8 sm:$0xf] %v132
    %139 = vst [vmem:[%s137] ss:$8 sm:$0xf0] %v132
    %s140 = scalar_lea.vmem [#allocation2], 69
    %141 = vst [vmem:[%s140] ss:$8 sm:$0xf] %v134
    %142 = vst [vmem:[%s140] ss:$8 sm:$0xf0] %v134
    %143 = vrot.lane.b32.xlu0 %v21, 95
    %v144 = vpop.permute.xlu0 %143
    %145 = vrot.lane.b32.xlu0 %v22, 95
    %v146 = vpop.permute.xlu0 %145
    %147 = vrot.lane.b32.xlu0 %v23, 95
    %v148 = vpop.permute.xlu0 %147
    %v149 = vrot.slane %v144, 1
    %v150 = vrot.slane %v146, 1
    %v151 = vrot.slane %v148, 1
    %v152 = vsel %vm41, %v149, %v150
    %vm153 = vcmask 777216
    %v154 = vsel %vm153, %v144, %v152
    %v155 = vsel %vm41, %v150, %v151
    %v156 = vsel %vm153, %v146, %v155
    %s159 = scalar_lea.vmem [#allocation2], 6
    %160 = vst [vmem:[%s159] ss:$8 sm:$0xf] %v154
    %161 = vst [vmem:[%s159] ss:$8 sm:$0xf0] %v154
    %s162 = scalar_lea.vmem [#allocation2], 70
    %163 = vst [vmem:[%s162] ss:$8 sm:$0xf] %v156
    %164 = vst [vmem:[%s162] ss:$8 sm:$0xf0] %v156
    %165 = vrot.lane.b32.xlu0 %v21, 94
    %v166 = vpop.permute.xlu0 %165
    %167 = vrot.lane.b32.xlu0 %v22, 94
    %v168 = vpop.permute.xlu0 %167
    %169 = vrot.lane.b32.xlu0 %v23, 94
    %v170 = vpop.permute.xlu0 %169
    %v171 = vrot.slane %v166, 1
    %v172 = vrot.slane %v168, 1
    %v173 = vrot.slane %v170, 1
    %v174 = vsel %vm41, %v171, %v172
    %vm175 = vcmask 769024
    %v176 = vsel %vm175, %v166, %v174
    %v177 = vsel %vm41, %v172, %v173
    %v178 = vsel %vm175, %v168, %v177
    %s181 = scalar_lea.vmem [#allocation2], 7
    %182 = vst [vmem:[%s181] ss:$8 sm:$0xf] %v176
    %183 = vst [vmem:[%s181] ss:$8 sm:$0xf0] %v176
    %s184 = scalar_lea.vmem [#allocation2], 71
    %185 = vst [vmem:[%s184] ss:$8 sm:$0xf] %v178
    %186 = vst [vmem:[%s184] ss:$8 sm:$0xf0] %v178
    %187 = vrot.lane.b32.xlu0 %v21, 93
    %v188 = vpop.permute.xlu0 %187
    %189 = vrot.lane.b32.xlu0 %v22, 93
    %v190 = vpop.permute.xlu0 %189
    %191 = vrot.lane.b32.xlu0 %v23, 93
    %v192 = vpop.permute.xlu0 %191
    %v193 = vrot.slane %v188, 1
    %v194 = vrot.slane %v190, 1
    %v195 = vrot.slane %v192, 1
    %v196 = vsel %vm41, %v193, %v194
    %vm197 = vcmask 760832
    %v198 = vsel %vm197, %v188, %v196
    %v199 = vsel %vm41, %v194, %v195
    %v200 = vsel %vm197, %v190, %v199
    %s203 = scalar_lea.vmem [#allocation2], 128
    %204 = vst [vmem:[%s203] ss:$8 sm:$0xf] %v198
    %205 = vst [vmem:[%s203] ss:$8 sm:$0xf0] %v198
    %s206 = scalar_lea.vmem [#allocation2], 192
    %207 = vst [vmem:[%s206] ss:$8 sm:$0xf] %v200
    %208 = vst [vmem:[%s206] ss:$8 sm:$0xf0] %v200
    %209 = vrot.lane.b32.xlu0 %v21, 92
    %v210 = vpop.permute.xlu0 %209
    %211 = vrot.lane.b32.xlu0 %v22, 92
    %v212 = vpop.permute.xlu0 %211
    %213 = vrot.lane.b32.xlu0 %v23, 92
    %v214 = vpop.permute.xlu0 %213
    %v215 = vrot.slane %v210, 1
    %v216 = vrot.slane %v212, 1
    %v217 = vrot.slane %v214, 1
    %v218 = vsel %vm41, %v215, %v216
    %vm219 = vcmask 752640
    %v220 = vsel %vm219, %v210, %v218
    %v221 = vsel %vm41, %v216, %v217
    %v222 = vsel %vm219, %v212, %v221
    %s225 = scalar_lea.vmem [#allocation2], 129
    %226 = vst [vmem:[%s225] ss:$8 sm:$0xf] %v220
    %227 = vst [vmem:[%s225] ss:$8 sm:$0xf0] %v220
    %s228 = scalar_lea.vmem [#allocation2], 193
    %229 = vst [vmem:[%s228] ss:$8 sm:$0xf] %v222
    %230 = vst [vmem:[%s228] ss:$8 sm:$0xf0] %v222
    %231 = vrot.lane.b32.xlu0 %v21, 64
    %v232 = vpop.permute.xlu0 %231
    %233 = vrot.lane.b32.xlu0 %v22, 64
    %v234 = vpop.permute.xlu0 %233
    %235 = vrot.lane.b32.xlu0 %v23, 64
    %v236 = vpop.permute.xlu0 %235
    %v237 = vrot.slane %v232, 1
    %v238 = vrot.slane %v234, 1
    %v239 = vrot.slane %v236, 1
    %v240 = vsel %vm41, %v237, %v238
    %vm241 = vcmask 523264
    %v242 = vsel %vm241, %v232, %v240
    %v243 = vsel %vm41, %v238, %v239
    %v244 = vsel %vm241, %v234, %v243
    %s247 = scalar_lea.vmem [#allocation2], 130
    %248 = vst [vmem:[%s247] ss:$8 sm:$0xf] %v242
    %249 = vst [vmem:[%s247] ss:$8 sm:$0xf0] %v242
    %s250 = scalar_lea.vmem [#allocation2], 194
    %251 = vst [vmem:[%s250] ss:$8 sm:$0xf] %v244
    %252 = vst [vmem:[%s250] ss:$8 sm:$0xf0] %v244
    %253 = vrot.lane.b32.xlu0 %v21, 63
    %v254 = vpop.permute.xlu0 %253
    %255 = vrot.lane.b32.xlu0 %v22, 63
    %v256 = vpop.permute.xlu0 %255
    %257 = vrot.lane.b32.xlu0 %v23, 63
    %v258 = vpop.permute.xlu0 %257
    %v259 = vrot.slane %v254, 1
    %v260 = vrot.slane %v256, 1
    %v261 = vrot.slane %v258, 1
    %v262 = vsel %vm41, %v259, %v260
    %vm263 = vcmask 515072
    %v264 = vsel %vm263, %v254, %v262
    %v265 = vsel %vm41, %v260, %v261
    %v266 = vsel %vm263, %v256, %v265
    %s269 = scalar_lea.vmem [#allocation2], 131
    %270 = vst [vmem:[%s269] ss:$8 sm:$0xf] %v264
    %271 = vst [vmem:[%s269] ss:$8 sm:$0xf0] %v264
    %s272 = scalar_lea.vmem [#allocation2], 195
    %273 = vst [vmem:[%s272] ss:$8 sm:$0xf] %v266
    %274 = vst [vmem:[%s272] ss:$8 sm:$0xf0] %v266
    %275 = vrot.lane.b32.xlu0 %v21, 62
    %v276 = vpop.permute.xlu0 %275
    %277 = vrot.lane.b32.xlu0 %v22, 62
    %v278 = vpop.permute.xlu0 %277
    %279 = vrot.lane.b32.xlu0 %v23, 62
    %v280 = vpop.permute.xlu0 %279
    %v281 = vrot.slane %v276, 1
    %v282 = vrot.slane %v278, 1
    %v283 = vrot.slane %v280, 1
    %v284 = vsel %vm41, %v281, %v282
    %vm285 = vcmask 506880
    %v286 = vsel %vm285, %v276, %v284
    %v287 = vsel %vm41, %v282, %v283
    %v288 = vsel %vm285, %v278, %v287
    %s291 = scalar_lea.vmem [#allocation2], 132
    %292 = vst [vmem:[%s291] ss:$8 sm:$0xf] %v286
    %293 = vst [vmem:[%s291] ss:$8 sm:$0xf0] %v286
    %s294 = scalar_lea.vmem [#allocation2], 196
    %295 = vst [vmem:[%s294] ss:$8 sm:$0xf] %v288
    %296 = vst [vmem:[%s294] ss:$8 sm:$0xf0] %v288
    %297 = vrot.lane.b32.xlu0 %v21, 61
    %v298 = vpop.permute.xlu0 %297
    %299 = vrot.lane.b32.xlu0 %v22, 61
    %v300 = vpop.permute.xlu0 %299
    %301 = vrot.lane.b32.xlu0 %v23, 61
    %v302 = vpop.permute.xlu0 %301
    %v303 = vrot.slane %v298, 1
    %v304 = vrot.slane %v300, 1
    %v305 = vrot.slane %v302, 1
    %v306 = vsel %vm41, %v303, %v304
    %vm307 = vcmask 498688
    %v308 = vsel %vm307, %v298, %v306
    %v309 = vsel %vm41, %v304, %v305
    %v310 = vsel %vm307, %v300, %v309
    %s313 = scalar_lea.vmem [#allocation2], 133
    %314 = vst [vmem:[%s313] ss:$8 sm:$0xf] %v308
    %315 = vst [vmem:[%s313] ss:$8 sm:$0xf0] %v308
    %s316 = scalar_lea.vmem [#allocation2], 197
    %317 = vst [vmem:[%s316] ss:$8 sm:$0xf] %v310
    %318 = vst [vmem:[%s316] ss:$8 sm:$0xf0] %v310
    %319 = vrot.lane.b32.xlu0 %v21, 60
    %v320 = vpop.permute.xlu0 %319
    %321 = vrot.lane.b32.xlu0 %v22, 60
    %v322 = vpop.permute.xlu0 %321
    %323 = vrot.lane.b32.xlu0 %v23, 60
    %v324 = vpop.permute.xlu0 %323
    %v325 = vrot.slane %v320, 1
    %v326 = vrot.slane %v322, 1
    %v327 = vrot.slane %v324, 1
    %v328 = vsel %vm41, %v325, %v326
    %vm329 = vcmask 490496
    %v330 = vsel %vm329, %v320, %v328
    %v331 = vsel %vm41, %v326, %v327
    %v332 = vsel %vm329, %v322, %v331
    %s335 = scalar_lea.vmem [#allocation2], 134
    %336 = vst [vmem:[%s335] ss:$8 sm:$0xf] %v330
    %337 = vst [vmem:[%s335] ss:$8 sm:$0xf0] %v330
    %s338 = scalar_lea.vmem [#allocation2], 198
    %339 = vst [vmem:[%s338] ss:$8 sm:$0xf] %v332
    %340 = vst [vmem:[%s338] ss:$8 sm:$0xf0] %v332
    %341 = vrot.lane.b32.xlu0 %v21, 32
    %v342 = vpop.permute.xlu0 %341
    %343 = vrot.lane.b32.xlu0 %v22, 32
    %v344 = vpop.permute.xlu0 %343
    %345 = vrot.lane.b32.xlu0 %v23, 32
    %v346 = vpop.permute.xlu0 %345
    %v347 = vrot.slane %v342, 1
    %v348 = vrot.slane %v344, 1
    %v349 = vrot.slane %v346, 1
    %v350 = vsel %vm41, %v347, %v348
    %vm351 = vcmask 261120
    %v352 = vsel %vm351, %v342, %v350
    %v353 = vsel %vm41, %v348, %v349
    %v354 = vsel %vm351, %v344, %v353
    %s357 = scalar_lea.vmem [#allocation2], 135
    %358 = vst [vmem:[%s357] ss:$8 sm:$0xf] %v352
    %359 = vst [vmem:[%s357] ss:$8 sm:$0xf0] %v352
    %s360 = scalar_lea.vmem [#allocation2], 199
    %361 = vst [vmem:[%s360] ss:$8 sm:$0xf] %v354
    %362 = vst [vmem:[%s360] ss:$8 sm:$0xf0] %v354
    %363 = vrot.lane.b32.xlu0 %v21, 31
    %v364 = vpop.permute.xlu0 %363
    %365 = vrot.lane.b32.xlu0 %v22, 31
    %v366 = vpop.permute.xlu0 %365
    %367 = vrot.lane.b32.xlu0 %v23, 31
    %v368 = vpop.permute.xlu0 %367
    %v369 = vrot.slane %v364, 1
    %v370 = vrot.slane %v366, 1
    %v371 = vrot.slane %v368, 1
    %v372 = vsel %vm41, %v369, %v370
    %vm373 = vcmask 252928
    %v374 = vsel %vm373, %v364, %v372
    %v375 = vsel %vm41, %v370, %v371
    %v376 = vsel %vm373, %v366, %v375
    %s379 = scalar_lea.vmem [#allocation2], 256
    %380 = vst [vmem:[%s379] ss:$8 sm:$0xf] %v374
    %381 = vst [vmem:[%s379] ss:$8 sm:$0xf0] %v374
    %s382 = scalar_lea.vmem [#allocation2], 320
    %383 = vst [vmem:[%s382] ss:$8 sm:$0xf] %v376
    %384 = vst [vmem:[%s382] ss:$8 sm:$0xf0] %v376
    %385 = vrot.lane.b32.xlu0 %v21, 30
    %v386 = vpop.permute.xlu0 %385
    %387 = vrot.lane.b32.xlu0 %v22, 30
    %v388 = vpop.permute.xlu0 %387
    %389 = vrot.lane.b32.xlu0 %v23, 30
    %v390 = vpop.permute.xlu0 %389
    %v391 = vrot.slane %v386, 1
    %v392 = vrot.slane %v388, 1
    %v393 = vrot.slane %v390, 1
    %v394 = vsel %vm41, %v391, %v392
    %vm395 = vcmask 244736
    %v396 = vsel %vm395, %v386, %v394
    %v397 = vsel %vm41, %v392, %v393
    %v398 = vsel %vm395, %v388, %v397
    %s401 = scalar_lea.vmem [#allocation2], 257
    %402 = vst [vmem:[%s401] ss:$8 sm:$0xf] %v396
    %403 = vst [vmem:[%s401] ss:$8 sm:$0xf0] %v396
    %s404 = scalar_lea.vmem [#allocation2], 321
    %405 = vst [vmem:[%s404] ss:$8 sm:$0xf] %v398
    %406 = vst [vmem:[%s404] ss:$8 sm:$0xf0] %v398
    %407 = vrot.lane.b32.xlu0 %v21, 29
    %v408 = vpop.permute.xlu0 %407
    %409 = vrot.lane.b32.xlu0 %v22, 29
    %v410 = vpop.permute.xlu0 %409
    %411 = vrot.lane.b32.xlu0 %v23, 29
    %v412 = vpop.permute.xlu0 %411
    %v413 = vrot.slane %v408, 1
    %v414 = vrot.slane %v410, 1
    %v415 = vrot.slane %v412, 1
    %v416 = vsel %vm41, %v413, %v414
    %vm417 = vcmask 236544
    %v418 = vsel %vm417, %v408, %v416
    %v419 = vsel %vm41, %v414, %v415
    %v420 = vsel %vm417, %v410, %v419
    %s423 = scalar_lea.vmem [#allocation2], 258
    %424 = vst [vmem:[%s423] ss:$8 sm:$0xf] %v418
    %425 = vst [vmem:[%s423] ss:$8 sm:$0xf0] %v418
    %s426 = scalar_lea.vmem [#allocation2], 322
    %427 = vst [vmem:[%s426] ss:$8 sm:$0xf] %v420
    %428 = vst [vmem:[%s426] ss:$8 sm:$0xf0] %v420
    %429 = vrot.lane.b32.xlu0 %v21, 28
    %v430 = vpop.permute.xlu0 %429
    %431 = vrot.lane.b32.xlu0 %v22, 28
    %v432 = vpop.permute.xlu0 %431
    %433 = vrot.lane.b32.xlu0 %v23, 28
    %v434 = vpop.permute.xlu0 %433
    %v435 = vrot.slane %v430, 1
    %v436 = vrot.slane %v432, 1
    %v437 = vrot.slane %v434, 1
    %v438 = vsel %vm41, %v435, %v436
    %vm439 = vcmask 228352
    %v440 = vsel %vm439, %v430, %v438
    %v441 = vsel %vm41, %v436, %v437
    %v442 = vsel %vm439, %v432, %v441
    %s445 = scalar_lea.vmem [#allocation2], 259
    %446 = vst [vmem:[%s445] ss:$8 sm:$0xf] %v440
    %447 = vst [vmem:[%s445] ss:$8 sm:$0xf0] %v440
    %s448 = scalar_lea.vmem [#allocation2], 323
    %449 = vst [vmem:[%s448] ss:$8 sm:$0xf] %v442
    %450 = vst [vmem:[%s448] ss:$8 sm:$0xf0] %v442
    %v451 = vrot.slane %v21, 1
    %v452 = vrot.slane %v22, 1
    %v453 = vrot.slane %v23, 1
    %v454 = vsel %vm41, %v451, %v452
    %v455 = vsel %vm41, %v452, %v453
    %s458 = scalar_lea.vmem [#allocation2], 260
    %459 = vst [vmem:[%s458] ss:$8 sm:$0xf] %v454
    %460 = vst [vmem:[%s458] ss:$8 sm:$0xf0] %v454
    %s461 = scalar_lea.vmem [#allocation2], 324
    %462 = vst [vmem:[%s461] ss:$8 sm:$0xf] %v455
    %463 = vst [vmem:[%s461] ss:$8 sm:$0xf0] %v455
    %v464 = vrot.slane %v33, 2
    %v465 = vrot.slane %v35, 2
    %v466 = vrot.slane %v37, 2
    %vm467 = vcmask 1045504
    %v468 = vsel %vm467, %v464, %v465
    %v469 = vsel %vm43, %v42, %v468
    %v470 = vsel %vm467, %v465, %v466
    %v471 = vsel %vm43, %v45, %v470
    %s474 = scalar_lea.vmem [#allocation2], 261
    %475 = vst [vmem:[%s474] ss:$8 sm:$0xf] %v469
    %476 = vst [vmem:[%s474] ss:$8 sm:$0xf0] %v469
    %s477 = scalar_lea.vmem [#allocation2], 325
    %478 = vst [vmem:[%s477] ss:$8 sm:$0xf] %v471
    %479 = vst [vmem:[%s477] ss:$8 sm:$0xf0] %v471
    %v480 = vrot.slane %v56, 2
    %v481 = vrot.slane %v58, 2
    %v482 = vrot.slane %v60, 2
    %v483 = vsel %vm467, %v480, %v481
    %v484 = vsel %vm65, %v64, %v483
    %v485 = vsel %vm467, %v481, %v482
    %v486 = vsel %vm65, %v67, %v485
    %s489 = scalar_lea.vmem [#allocation2], 262
    %490 = vst [vmem:[%s489] ss:$8 sm:$0xf] %v484
    %491 = vst [vmem:[%s489] ss:$8 sm:$0xf0] %v484
    %s492 = scalar_lea.vmem [#allocation2], 326
    %493 = vst [vmem:[%s492] ss:$8 sm:$0xf] %v486
    %494 = vst [vmem:[%s492] ss:$8 sm:$0xf0] %v486
    %v495 = vrot.slane %v78, 2
    %v496 = vrot.slane %v80, 2
    %v497 = vrot.slane %v82, 2
    %v498 = vsel %vm467, %v495, %v496
    %v499 = vsel %vm87, %v86, %v498
    %v500 = vsel %vm467, %v496, %v497
    %v501 = vsel %vm87, %v89, %v500
    %s504 = scalar_lea.vmem [#allocation2], 263
    %505 = vst [vmem:[%s504] ss:$8 sm:$0xf] %v499
    %506 = vst [vmem:[%s504] ss:$8 sm:$0xf0] %v499
    %s507 = scalar_lea.vmem [#allocation2], 327
    %508 = vst [vmem:[%s507] ss:$8 sm:$0xf] %v501
    %509 = vst [vmem:[%s507] ss:$8 sm:$0xf0] %v501
    %v510 = vrot.slane %v100, 2
    %v511 = vrot.slane %v102, 2
    %v512 = vrot.slane %v104, 2
    %v513 = vsel %vm467, %v510, %v511
    %v514 = vsel %vm109, %v108, %v513
    %v515 = vsel %vm467, %v511, %v512
    %v516 = vsel %vm109, %v111, %v515
    %s519 = scalar_lea.vmem [#allocation2], 384
    %520 = vst [vmem:[%s519] ss:$8 sm:$0xf] %v514
    %521 = vst [vmem:[%s519] ss:$8 sm:$0xf0] %v514
    %s522 = scalar_lea.vmem [#allocation2], 448
    %523 = vst [vmem:[%s522] ss:$8 sm:$0xf] %v516
    %524 = vst [vmem:[%s522] ss:$8 sm:$0xf0] %v516
    %v525 = vld [vmem:[%s1] sm:$0xff]
    %v526 = vld [vmem:[%s1 + $0x8] sm:$0xff]
    %v527 = vld [vmem:[#allocation2] sm:$0xff]
    %v528 = vld [vmem:[#allocation2 + $0x8] sm:$0xff]
    %v529 = vld [vmem:[#allocation2 + $0x10] sm:$0xff]
    %v530 = vld [vmem:[#allocation2 + $0x18] sm:$0xff]
    %v531 = vld [vmem:[#allocation2 + $0x20] sm:$0xff]
    %v532 = vld [vmem:[#allocation2 + $0x28] sm:$0xff]
    %v533 = vld [vmem:[#allocation2 + $0x30] sm:$0xff]
    %v534 = vld [vmem:[#allocation2 + $0x38] sm:$0xff]
    %v535 = vld [vmem:[#allocation2 + $0x40] sm:$0xff]
    %v536 = vld [vmem:[#allocation2 + $0x48] sm:$0xff]
    %v537 = vld [vmem:[#allocation2 + $0x50] sm:$0xff]
    %v538 = vld [vmem:[#allocation2 + $0x58] sm:$0xff]
    %v539 = vld [vmem:[#allocation2 + $0x60] sm:$0xff]
    %v540 = vld [vmem:[#allocation2 + $0x68] sm:$0xff]
    %v541 = vld [vmem:[#allocation2 + $0x70] sm:$0xff]
    %v542 = vld [vmem:[#allocation2 + $0x78] sm:$0xff]
    %v543 = vld [vmem:[#allocation2 + $0x80] sm:$0xff]
    %v544 = vld [vmem:[#allocation2 + $0x88] sm:$0xff]
    %v545 = vld [vmem:[#allocation2 + $0x90] sm:$0xff]
    %v546 = vld [vmem:[#allocation2 + $0x98] sm:$0xff]
    %v547 = vld [vmem:[#allocation2 + $0xa0] sm:$0xff]
    %v548 = vld [vmem:[#allocation2 + $0xa8] sm:$0xff]
    %v549 = vld [vmem:[#allocation2 + $0xb0] sm:$0xff]
    %v550 = vld [vmem:[#allocation2 + $0xb8] sm:$0xff]
    %v551 = vld [vmem:[#allocation2 + $0xc0] sm:$0xff]
    %v552 = vld [vmem:[#allocation2 + $0xc8] sm:$0xff]
    %v553 = vld [vmem:[#allocation2 + $0xd0] sm:$0xff]
    %v554 = vld [vmem:[#allocation2 + $0xd8] sm:$0xff]
    %v555 = vld [vmem:[#allocation2 + $0xe0] sm:$0xff]
    %v556 = vld [vmem:[#allocation2 + $0xe8] sm:$0xff]
    %v557 = vld [vmem:[#allocation2 + $0xf0] sm:$0xff]
    %v558 = vld [vmem:[#allocation2 + $0xf8] sm:$0xff]
    %v559 = vld [vmem:[#allocation2 + $0x100] sm:$0xff]
    %v560 = vld [vmem:[#allocation2 + $0x108] sm:$0xff]
    %v561 = vld [vmem:[#allocation2 + $0x110] sm:$0xff]
    %v562 = vld [vmem:[#allocation2 + $0x118] sm:$0xff]
    %v563 = vld [vmem:[#allocation2 + $0x120] sm:$0xff]
    %v564 = vld [vmem:[#allocation2 + $0x128] sm:$0xff]
    %v565 = vld [vmem:[#allocation2 + $0x130] sm:$0xff]
    %v566 = vld [vmem:[#allocation2 + $0x138] sm:$0xff]
    %v567 = vld [vmem:[#allocation2 + $0x140] sm:$0xff]
    %v568 = vld [vmem:[#allocation2 + $0x148] sm:$0xff]
    %v569 = vld [vmem:[#allocation2 + $0x150] sm:$0xff]
    %v570 = vld [vmem:[#allocation2 + $0x158] sm:$0xff]
    %v571 = vld [vmem:[#allocation2 + $0x160] sm:$0xff]
    %v572 = vld [vmem:[#allocation2 + $0x168] sm:$0xff]
    %v573 = vld [vmem:[#allocation2 + $0x170] sm:$0xff]
    %v574 = vld [vmem:[#allocation2 + $0x178] sm:$0xff]
    %v575 = vld [vmem:[#allocation2 + $0x180] sm:$0x1]
    %v576 = vld [vmem:[#allocation2 + $0x188] sm:$0x1]
    %v577 = vld [vmem:[#allocation2 + $0x190] sm:$0x1]
    %v578 = vld [vmem:[#allocation2 + $0x198] sm:$0x1]
    %v579 = vld [vmem:[#allocation2 + $0x1a0] sm:$0x1]
    %v580 = vld [vmem:[#allocation2 + $0x1a8] sm:$0x1]
    %v581 = vld [vmem:[#allocation2 + $0x1b0] sm:$0x1]
    %v582 = vld [vmem:[#allocation2 + $0x1b8] sm:$0x1]
    %v583 = vld [vmem:[#allocation2 + $0x1c0] sm:$0x1]
    %v584 = vld [vmem:[#allocation2 + $0x1c8] sm:$0x1]
    %v585 = vld [vmem:[#allocation2 + $0x1d0] sm:$0x1]
    %v586 = vld [vmem:[#allocation2 + $0x1d8] sm:$0x1]
    %v587 = vld [vmem:[#allocation2 + $0x1e0] sm:$0x1]
    %v588 = vld [vmem:[#allocation2 + $0x1e8] sm:$0x1]
    %v589 = vld [vmem:[#allocation2 + $0x1f0] sm:$0x1]
    %v590 = vld [vmem:[#allocation2 + $0x1f8] sm:$0x1]
    %v591 = vld [vmem:[%s2] sm:$0xff]
    %v592 = vld [vmem:[%s2 + $0x8] sm:$0xff]
    %594 = vset.pattern.permute.xlu0 0
    %595 = vperm.xlu0 %594, %v591
    %v596 = vpop.permute.xlu0 %595
    %599 = vset.pattern.permute.xlu0 0
    %600 = vperm.xlu0 %599, %v592
    %v601 = vpop.permute.xlu0 %600
    %vm603 = vcmask 203776
    %v605 = vsel %vm603, %v525, 0
    %v608 = vsel %vm603, %v526, 0
    %vm610 = vcmask 1040384
    %v612 = vsel %vm610, %v575, 0
    %v615 = vsel %vm610, %v576, 0
    %v618 = vsel %vm610, %v577, 0
    %v621 = vsel %vm610, %v578, 0
    %v624 = vsel %vm610, %v579, 0
    %v627 = vsel %vm610, %v580, 0
    %v630 = vsel %vm610, %v581, 0
    %v633 = vsel %vm610, %v582, 0
    %v636 = vsel %vm610, %v583, 0
    %v639 = vsel %vm610, %v584, 0
    %v642 = vsel %vm610, %v585, 0
    %v645 = vsel %vm610, %v586, 0
    %v648 = vsel %vm610, %v587, 0
    %v651 = vsel %vm610, %v588, 0
    %v654 = vsel %vm610, %v589, 0
    %v657 = vsel %vm610, %v590, 0
    %659 = vmatprep.subr.mxu0 %v528
    %660 = vmatpush1.msra.mxu0 %v527
    %661 = vmatprep.subr.mxu0 %v544
    %662 = vmatpush1.msra.mxu0 %v543
    %663 = vmatprep.subr.mxu0 %v560
    %664 = vmatpush1.msra.mxu0 %v559
    %665 = vmatprep.subr.mxu0 %v615
    %666 = vmatpush1.msra.mxu0 %v612
    %667 = vmatprep.subr.mxu0 0.0
    %668 = vmatpush1.msra.mxu0 0.0
    %669 = vmatprep.subr.mxu0 0.0
    %670 = vmatpush1.msra.mxu0 0.0
    %671 = vmatprep.subr.mxu0 0.0
    %672 = vmatpush1.msra.mxu0 0.0
    %673 = vmatprep.subr.mxu0 0.0
    %674 = vmatpush1.msra.mxu0 0.0
    %675 = vmatprep.subr.mxu0 0.0
    %676 = vmatpush1.msra.mxu0 0.0
    %677 = vmatprep.subr.mxu0 0.0
    %678 = vmatpush1.msra.mxu0 0.0
    %679 = vmatprep.subr.mxu0 0.0
    %680 = vmatpush1.msra.mxu0 0.0
    %681 = vmatprep.subr.mxu0 0.0
    %682 = vmatpush1.msra.mxu0 0.0
    %683 = vmatprep.subr.mxu0 0.0
    %684 = vmatpush1.msra.mxu0 0.0
    %685 = vmatprep.subr.mxu0 0.0
    %686 = vmatpush1.msra.mxu0 0.0
    %687 = vmatprep.subr.mxu0 0.0
    %688 = vmatpush1.msra.mxu0 0.0
    %689 = vmatprep.subr.mxu0 0.0
    %690 = vmatpush1.msra.mxu0 0.0
    %691 = vmatprep.subr.mxu0 0.0
    %692 = vmatpush1.msra.mxu0 0.0
    %693 = vmatprep.subr.mxu0 0.0
    %694 = vmatpush1.msra.mxu0 0.0
    %695 = vmatprep.subr.mxu0 0.0
    %696 = vmatpush1.msra.mxu0 0.0
    %697 = vmatprep.subr.mxu0 0.0
    %698 = vmatpush1.msra.mxu0 0.0
    %699 = vmatprep.subr.mxu0 0.0
    %700 = vmatpush1.msra.mxu0 0.0
    %701 = vmatprep.subr.mxu0 0.0
    %702 = vmatpush1.msra.mxu0 0.0
    %703 = vmatprep.subr.mxu0 0.0
    %704 = vmatpush1.msra.mxu0 0.0
    %705 = vmatprep.subr.mxu0 0.0
    %706 = vmatpush1.msra.mxu0 0.0
    %707 = vmatprep.subr.mxu0 0.0
    %708 = vmatpush1.msra.mxu0 0.0
    %709 = vmatprep.subr.mxu0 0.0
    %710 = vmatpush1.msra.mxu0 0.0
    %711 = vmatprep.subr.mxu0 0.0
    %712 = vmatpush1.msra.mxu0 0.0
    %713 = vmatprep.subr.mxu0 0.0
    %714 = vmatpush1.msra.mxu0 0.0
    %715 = vmatprep.subr.mxu0 0.0
    %716 = vmatpush1.msra.mxu0 0.0
    %717 = vmatprep.subr.mxu0 0.0
    %718 = vmatpush1.msra.mxu0 0.0
    %719 = vmatprep.subr.mxu0 0.0
    %720 = vmatpush1.msra.mxu0 0.0
    %721 = vmatprep.subr.mxu0 0.0
    %722 = vmatpush1.msra.mxu0 0.0
    %723 = vmatprep.mubr.f32.mxu0 0.0
    %724 = vmatmul.mubr.f32.gmra.mrb[0].mxu0 %v605
    %v725 = vpop.f32.mrb[0].mxu0
    %v726 = vadd.f32 %v596, %v725
    %v727 = vpop.f32.mrb[0].mxu0
    %v728 = vadd.f32 %v596, %v727
    %729 = vmatprep.mubr.f32.mxu0 0.0
    %730 = vmatmul.mubr.f32.gmra.mrb[0].mxu0 %v608
    %v731 = vpop.f32.mrb[0].mxu0
    %v732 = vadd.f32 %v601, %v731
    %v733 = vpop.f32.mrb[0].mxu0
    %v734 = vadd.f32 %v601, %v733
    %735 = vdwg.mxu0
    %736 = vmatprep.subr.mxu0 %v530
    %737 = vmatpush1.msra.mxu0 %v529
    %738 = vmatprep.subr.mxu0 %v546
    %739 = vmatpush1.msra.mxu0 %v545
    %740 = vmatprep.subr.mxu0 %v562
    %741 = vmatpush1.msra.mxu0 %v561
    %742 = vmatprep.subr.mxu0 %v621
    %743 = vmatpush1.msra.mxu0 %v618
    %744 = vmatprep.subr.mxu0 0.0
    %745 = vmatpush1.msra.mxu0 0.0
    %746 = vmatprep.subr.mxu0 0.0
    %747 = vmatpush1.msra.mxu0 0.0
    %748 = vmatprep.subr.mxu0 0.0
    %749 = vmatpush1.msra.mxu0 0.0
    %750 = vmatprep.subr.mxu0 0.0
    %751 = vmatpush1.msra.mxu0 0.0
    %752 = vmatprep.subr.mxu0 0.0
    %753 = vmatpush1.msra.mxu0 0.0
    %754 = vmatprep.subr.mxu0 0.0
    %755 = vmatpush1.msra.mxu0 0.0
    %756 = vmatprep.subr.mxu0 0.0
    %757 = vmatpush1.msra.mxu0 0.0
    %758 = vmatprep.subr.mxu0 0.0
    %759 = vmatpush1.msra.mxu0 0.0
    %760 = vmatprep.subr.mxu0 0.0
    %761 = vmatpush1.msra.mxu0 0.0
    %762 = vmatprep.subr.mxu0 0.0
    %763 = vmatpush1.msra.mxu0 0.0
    %764 = vmatprep.subr.mxu0 0.0
    %765 = vmatpush1.msra.mxu0 0.0
    %766 = vmatprep.subr.mxu0 0.0
    %767 = vmatpush1.msra.mxu0 0.0
    %768 = vmatprep.subr.mxu0 0.0
    %769 = vmatpush1.msra.mxu0 0.0
    %770 = vmatprep.subr.mxu0 0.0
    %771 = vmatpush1.msra.mxu0 0.0
    %772 = vmatprep.subr.mxu0 0.0
    %773 = vmatpush1.msra.mxu0 0.0
    %774 = vmatprep.subr.mxu0 0.0
    %775 = vmatpush1.msra.mxu0 0.0
    %776 = vmatprep.subr.mxu0 0.0
    %777 = vmatpush1.msra.mxu0 0.0
    %778 = vmatprep.subr.mxu0 0.0
    %779 = vmatpush1.msra.mxu0 0.0
    %780 = vmatprep.subr.mxu0 0.0
    %781 = vmatpush1.msra.mxu0 0.0
    %782 = vmatprep.subr.mxu0 0.0
    %783 = vmatpush1.msra.mxu0 0.0
    %784 = vmatprep.subr.mxu0 0.0
    %785 = vmatpush1.msra.mxu0 0.0
    %786 = vmatprep.subr.mxu0 0.0
    %787 = vmatpush1.msra.mxu0 0.0
    %788 = vmatprep.subr.mxu0 0.0
    %789 = vmatpush1.msra.mxu0 0.0
    %790 = vmatprep.subr.mxu0 0.0
    %791 = vmatpush1.msra.mxu0 0.0
    %792 = vmatprep.subr.mxu0 0.0
    %793 = vmatpush1.msra.mxu0 0.0
    %794 = vmatprep.subr.mxu0 0.0
    %795 = vmatpush1.msra.mxu0 0.0
    %796 = vmatprep.subr.mxu0 0.0
    %797 = vmatpush1.msra.mxu0 0.0
    %798 = vmatprep.subr.mxu0 0.0
    %799 = vmatpush1.msra.mxu0 0.0
    %800 = vmatprep.mubr.f32.mxu0 0.0
    %801 = vmatmul.mubr.f32.gmra.mrb[0].mxu0 %v605
    %v802 = vpop.f32.mrb[0].mxu0
    %v803 = vadd.f32 %v596, %v802
    %v804 = vpop.f32.mrb[0].mxu0
    %v805 = vadd.f32 %v596, %v804
    %806 = vmatprep.mubr.f32.mxu0 0.0
    %807 = vmatmul.mubr.f32.gmra.mrb[0].mxu0 %v608
    %v808 = vpop.f32.mrb[0].mxu0
    %v809 = vadd.f32 %v601, %v808
    %v810 = vpop.f32.mrb[0].mxu0
    %v811 = vadd.f32 %v601, %v810
    %812 = vdwg.mxu0
    %813 = vmatprep.subr.mxu0 %v532
    %814 = vmatpush1.msra.mxu0 %v531
    %815 = vmatprep.subr.mxu0 %v548
    %816 = vmatpush1.msra.mxu0 %v547
    %817 = vmatprep.subr.mxu0 %v564
    %818 = vmatpush1.msra.mxu0 %v563
    %819 = vmatprep.subr.mxu0 %v627
    %820 = vmatpush1.msra.mxu0 %v624
    %821 = vmatprep.subr.mxu0 0.0
    %822 = vmatpush1.msra.mxu0 0.0
    %823 = vmatprep.subr.mxu0 0.0
    %824 = vmatpush1.msra.mxu0 0.0
    %825 = vmatprep.subr.mxu0 0.0
    %826 = vmatpush1.msra.mxu0 0.0
    %827 = vmatprep.subr.mxu0 0.0
    %828 = vmatpush1.msra.mxu0 0.0
    %829 = vmatprep.subr.mxu0 0.0
    %830 = vmatpush1.msra.mxu0 0.0
    %831 = vmatprep.subr.mxu0 0.0
    %832 = vmatpush1.msra.mxu0 0.0
    %833 = vmatprep.subr.mxu0 0.0
    %834 = vmatpush1.msra.mxu0 0.0
    %835 = vmatprep.subr.mxu0 0.0
    %836 = vmatpush1.msra.mxu0 0.0
    %837 = vmatprep.subr.mxu0 0.0
    %838 = vmatpush1.msra.mxu0 0.0
    %839 = vmatprep.subr.mxu0 0.0
    %840 = vmatpush1.msra.mxu0 0.0
    %841 = vmatprep.subr.mxu0 0.0
    %842 = vmatpush1.msra.mxu0 0.0
    %843 = vmatprep.subr.mxu0 0.0
    %844 = vmatpush1.msra.mxu0 0.0
    %845 = vmatprep.subr.mxu0 0.0
    %846 = vmatpush1.msra.mxu0 0.0
    %847 = vmatprep.subr.mxu0 0.0
    %848 = vmatpush1.msra.mxu0 0.0
    %849 = vmatprep.subr.mxu0 0.0
    %850 = vmatpush1.msra.mxu0 0.0
    %851 = vmatprep.subr.mxu0 0.0
    %852 = vmatpush1.msra.mxu0 0.0
    %853 = vmatprep.subr.mxu0 0.0
    %854 = vmatpush1.msra.mxu0 0.0
    %855 = vmatprep.subr.mxu0 0.0
    %856 = vmatpush1.msra.mxu0 0.0
    %857 = vmatprep.subr.mxu0 0.0
    %858 = vmatpush1.msra.mxu0 0.0
    %859 = vmatprep.subr.mxu0 0.0
    %860 = vmatpush1.msra.mxu0 0.0
    %861 = vmatprep.subr.mxu0 0.0
    %862 = vmatpush1.msra.mxu0 0.0
    %863 = vmatprep.subr.mxu0 0.0
    %864 = vmatpush1.msra.mxu0 0.0
    %865 = vmatprep.subr.mxu0 0.0
    %866 = vmatpush1.msra.mxu0 0.0
    %867 = vmatprep.subr.mxu0 0.0
    %868 = vmatpush1.msra.mxu0 0.0
    %869 = vmatprep.subr.mxu0 0.0
    %870 = vmatpush1.msra.mxu0 0.0
    %871 = vmatprep.subr.mxu0 0.0
    %872 = vmatpush1.msra.mxu0 0.0
    %873 = vmatprep.subr.mxu0 0.0
    %874 = vmatpush1.msra.mxu0 0.0
    %875 = vmatprep.subr.mxu0 0.0
    %876 = vmatpush1.msra.mxu0 0.0
    %877 = vmatprep.mubr.f32.mxu0 0.0
    %878 = vmatmul.mubr.f32.gmra.mrb[0].mxu0 %v605
    %v879 = vpop.f32.mrb[0].mxu0
    %v880 = vadd.f32 %v596, %v879
    %v881 = vpop.f32.mrb[0].mxu0
    %v882 = vadd.f32 %v596, %v881
    %883 = vmatprep.mubr.f32.mxu0 0.0
    %884 = vmatmul.mubr.f32.gmra.mrb[0].mxu0 %v608
    %v885 = vpop.f32.mrb[0].mxu0
    %v886 = vadd.f32 %v601, %v885
    %v887 = vpop.f32.mrb[0].mxu0
    %v888 = vadd.f32 %v601, %v887
    %889 = vdwg.mxu0
    %890 = vmatprep.subr.mxu0 %v534
    %891 = vmatpush1.msra.mxu0 %v533
    %892 = vmatprep.subr.mxu0 %v550
    %893 = vmatpush1.msra.mxu0 %v549
    %894 = vmatprep.subr.mxu0 %v566
    %895 = vmatpush1.msra.mxu0 %v565
    %896 = vmatprep.subr.mxu0 %v633
    %897 = vmatpush1.msra.mxu0 %v630
    %898 = vmatprep.subr.mxu0 0.0
    %899 = vmatpush1.msra.mxu0 0.0
    %900 = vmatprep.subr.mxu0 0.0
    %901 = vmatpush1.msra.mxu0 0.0
    %902 = vmatprep.subr.mxu0 0.0
    %903 = vmatpush1.msra.mxu0 0.0
    %904 = vmatprep.subr.mxu0 0.0
    %905 = vmatpush1.msra.mxu0 0.0
    %906 = vmatprep.subr.mxu0 0.0
    %907 = vmatpush1.msra.mxu0 0.0
    %908 = vmatprep.subr.mxu0 0.0
    %909 = vmatpush1.msra.mxu0 0.0
    %910 = vmatprep.subr.mxu0 0.0
    %911 = vmatpush1.msra.mxu0 0.0
    %912 = vmatprep.subr.mxu0 0.0
    %913 = vmatpush1.msra.mxu0 0.0
    %914 = vmatprep.subr.mxu0 0.0
    %915 = vmatpush1.msra.mxu0 0.0
    %916 = vmatprep.subr.mxu0 0.0
    %917 = vmatpush1.msra.mxu0 0.0
    %918 = vmatprep.subr.mxu0 0.0
    %919 = vmatpush1.msra.mxu0 0.0
    %920 = vmatprep.subr.mxu0 0.0
    %921 = vmatpush1.msra.mxu0 0.0
    %922 = vmatprep.subr.mxu0 0.0
    %923 = vmatpush1.msra.mxu0 0.0
    %924 = vmatprep.subr.mxu0 0.0
    %925 = vmatpush1.msra.mxu0 0.0
    %926 = vmatprep.subr.mxu0 0.0
    %927 = vmatpush1.msra.mxu0 0.0
    %928 = vmatprep.subr.mxu0 0.0
    %929 = vmatpush1.msra.mxu0 0.0
    %930 = vmatprep.subr.mxu0 0.0
    %931 = vmatpush1.msra.mxu0 0.0
    %932 = vmatprep.subr.mxu0 0.0
    %933 = vmatpush1.msra.mxu0 0.0
    %934 = vmatprep.subr.mxu0 0.0
    %935 = vmatpush1.msra.mxu0 0.0
    %936 = vmatprep.subr.mxu0 0.0
    %937 = vmatpush1.msra.mxu0 0.0
    %938 = vmatprep.subr.mxu0 0.0
    %939 = vmatpush1.msra.mxu0 0.0
    %940 = vmatprep.subr.mxu0 0.0
    %941 = vmatpush1.msra.mxu0 0.0
    %942 = vmatprep.subr.mxu0 0.0
    %943 = vmatpush1.msra.mxu0 0.0
    %944 = vmatprep.subr.mxu0 0.0
    %945 = vmatpush1.msra.mxu0 0.0
    %946 = vmatprep.subr.mxu0 0.0
    %947 = vmatpush1.msra.mxu0 0.0
    %948 = vmatprep.subr.mxu0 0.0
    %949 = vmatpush1.msra.mxu0 0.0
    %950 = vmatprep.subr.mxu0 0.0
    %951 = vmatpush1.msra.mxu0 0.0
    %952 = vmatprep.subr.mxu0 0.0
    %953 = vmatpush1.msra.mxu0 0.0
    %954 = vmatprep.mubr.f32.mxu0 0.0
    %955 = vmatmul.mubr.f32.gmra.mrb[0].mxu0 %v605
    %v956 = vpop.f32.mrb[0].mxu0
    %v957 = vadd.f32 %v596, %v956
    %v958 = vpop.f32.mrb[0].mxu0
    %v959 = vadd.f32 %v596, %v958
    %960 = vmatprep.mubr.f32.mxu0 0.0
    %961 = vmatmul.mubr.f32.gmra.mrb[0].mxu0 %v608
    %v962 = vpop.f32.mrb[0].mxu0
    %v963 = vadd.f32 %v601, %v962
    %v964 = vpop.f32.mrb[0].mxu0
    %v965 = vadd.f32 %v601, %v964
    %966 = vdwg.mxu0
    %967 = vmatprep.subr.mxu0 %v536
    %968 = vmatpush1.msra.mxu0 %v535
    %969 = vmatprep.subr.mxu0 %v552
    %970 = vmatpush1.msra.mxu0 %v551
    %971 = vmatprep.subr.mxu0 %v568
    %972 = vmatpush1.msra.mxu0 %v567
    %973 = vmatprep.subr.mxu0 %v639
    %974 = vmatpush1.msra.mxu0 %v636
    %975 = vmatprep.subr.mxu0 0.0
    %976 = vmatpush1.msra.mxu0 0.0
    %977 = vmatprep.subr.mxu0 0.0
    %978 = vmatpush1.msra.mxu0 0.0
    %979 = vmatprep.subr.mxu0 0.0
    %980 = vmatpush1.msra.mxu0 0.0
    %981 = vmatprep.subr.mxu0 0.0
    %982 = vmatpush1.msra.mxu0 0.0
    %983 = vmatprep.subr.mxu0 0.0
    %984 = vmatpush1.msra.mxu0 0.0
    %985 = vmatprep.subr.mxu0 0.0
    %986 = vmatpush1.msra.mxu0 0.0
    %987 = vmatprep.subr.mxu0 0.0
    %988 = vmatpush1.msra.mxu0 0.0
    %989 = vmatprep.subr.mxu0 0.0
    %990 = vmatpush1.msra.mxu0 0.0
    %991 = vmatprep.subr.mxu0 0.0
    %992 = vmatpush1.msra.mxu0 0.0
    %993 = vmatprep.subr.mxu0 0.0
    %994 = vmatpush1.msra.mxu0 0.0
    %995 = vmatprep.subr.mxu0 0.0
    %996 = vmatpush1.msra.mxu0 0.0
    %997 = vmatprep.subr.mxu0 0.0
    %998 = vmatpush1.msra.mxu0 0.0
    %999 = vmatprep.subr.mxu0 0.0
    %1000 = vmatpush1.msra.mxu0 0.0
    %1001 = vmatprep.subr.mxu0 0.0
    %1002 = vmatpush1.msra.mxu0 0.0
    %1003 = vmatprep.subr.mxu0 0.0
    %1004 = vmatpush1.msra.mxu0 0.0
    %1005 = vmatprep.subr.mxu0 0.0
    %1006 = vmatpush1.msra.mxu0 0.0
    %1007 = vmatprep.subr.mxu0 0.0
    %1008 = vmatpush1.msra.mxu0 0.0
    %1009 = vmatprep.subr.mxu0 0.0
    %1010 = vmatpush1.msra.mxu0 0.0
    %1011 = vmatprep.subr.mxu0 0.0
    %1012 = vmatpush1.msra.mxu0 0.0
    %1013 = vmatprep.subr.mxu0 0.0
    %1014 = vmatpush1.msra.mxu0 0.0
    %1015 = vmatprep.subr.mxu0 0.0
    %1016 = vmatpush1.msra.mxu0 0.0
    %1017 = vmatprep.subr.mxu0 0.0
    %1018 = vmatpush1.msra.mxu0 0.0
    %1019 = vmatprep.subr.mxu0 0.0
    %1020 = vmatpush1.msra.mxu0 0.0
    %1021 = vmatprep.subr.mxu0 0.0
    %1022 = vmatpush1.msra.mxu0 0.0
    %1023 = vmatprep.subr.mxu0 0.0
    %1024 = vmatpush1.msra.mxu0 0.0
    %1025 = vmatprep.subr.mxu0 0.0
    %1026 = vmatpush1.msra.mxu0 0.0
    %1027 = vmatprep.subr.mxu0 0.0
    %1028 = vmatpush1.msra.mxu0 0.0
    %1029 = vmatprep.subr.mxu0 0.0
    %1030 = vmatpush1.msra.mxu0 0.0
    %1031 = vmatprep.mubr.f32.mxu0 0.0
    %1032 = vmatmul.mubr.f32.gmra.mrb[0].mxu0 %v605
    %v1033 = vpop.f32.mrb[0].mxu0
    %v1034 = vadd.f32 %v596, %v1033
    %v1035 = vpop.f32.mrb[0].mxu0
    %v1036 = vadd.f32 %v596, %v1035
    %1037 = vmatprep.mubr.f32.mxu0 0.0
    %1038 = vmatmul.mubr.f32.gmra.mrb[0].mxu0 %v608
    %v1039 = vpop.f32.mrb[0].mxu0
    %v1040 = vadd.f32 %v601, %v1039
    %v1041 = vpop.f32.mrb[0].mxu0
    %v1042 = vadd.f32 %v601, %v1041
    %1043 = vdwg.mxu0
    %1044 = vmatprep.subr.mxu0 %v538
    %1045 = vmatpush1.msra.mxu0 %v537
    %1046 = vmatprep.subr.mxu0 %v554
    %1047 = vmatpush1.msra.mxu0 %v553
    %1048 = vmatprep.subr.mxu0 %v570
    %1049 = vmatpush1.msra.mxu0 %v569
    %1050 = vmatprep.subr.mxu0 %v645
    %1051 = vmatpush1.msra.mxu0 %v642
    %1052 = vmatprep.subr.mxu0 0.0
    %1053 = vmatpush1.msra.mxu0 0.0
    %1054 = vmatprep.subr.mxu0 0.0
    %1055 = vmatpush1.msra.mxu0 0.0
    %1056 = vmatprep.subr.mxu0 0.0
    %1057 = vmatpush1.msra.mxu0 0.0
    %1058 = vmatprep.subr.mxu0 0.0
    %1059 = vmatpush1.msra.mxu0 0.0
    %1060 = vmatprep.subr.mxu0 0.0
    %1061 = vmatpush1.msra.mxu0 0.0
    %1062 = vmatprep.subr.mxu0 0.0
    %1063 = vmatpush1.msra.mxu0 0.0
    %1064 = vmatprep.subr.mxu0 0.0
    %1065 = vmatpush1.msra.mxu0 0.0
    %1066 = vmatprep.subr.mxu0 0.0
    %1067 = vmatpush1.msra.mxu0 0.0
    %1068 = vmatprep.subr.mxu0 0.0
    %1069 = vmatpush1.msra.mxu0 0.0
    %1070 = vmatprep.subr.mxu0 0.0
    %1071 = vmatpush1.msra.mxu0 0.0
    %1072 = vmatprep.subr.mxu0 0.0
    %1073 = vmatpush1.msra.mxu0 0.0
    %1074 = vmatprep.subr.mxu0 0.0
    %1075 = vmatpush1.msra.mxu0 0.0
    %1076 = vmatprep.subr.mxu0 0.0
    %1077 = vmatpush1.msra.mxu0 0.0
    %1078 = vmatprep.subr.mxu0 0.0
    %1079 = vmatpush1.msra.mxu0 0.0
    %1080 = vmatprep.subr.mxu0 0.0
    %1081 = vmatpush1.msra.mxu0 0.0
    %1082 = vmatprep.subr.mxu0 0.0
    %1083 = vmatpush1.msra.mxu0 0.0
    %1084 = vmatprep.subr.mxu0 0.0
    %1085 = vmatpush1.msra.mxu0 0.0
    %1086 = vmatprep.subr.mxu0 0.0
    %1087 = vmatpush1.msra.mxu0 0.0
    %1088 = vmatprep.subr.mxu0 0.0
    %1089 = vmatpush1.msra.mxu0 0.0
    %1090 = vmatprep.subr.mxu0 0.0
    %1091 = vmatpush1.msra.mxu0 0.0
    %1092 = vmatprep.subr.mxu0 0.0
    %1093 = vmatpush1.msra.mxu0 0.0
    %1094 = vmatprep.subr.mxu0 0.0
    %1095 = vmatpush1.msra.mxu0 0.0
    %1096 = vmatprep.subr.mxu0 0.0
    %1097 = vmatpush1.msra.mxu0 0.0
    %1098 = vmatprep.subr.mxu0 0.0
    %1099 = vmatpush1.msra.mxu0 0.0
    %1100 = vmatprep.subr.mxu0 0.0
    %1101 = vmatpush1.msra.mxu0 0.0
    %1102 = vmatprep.subr.mxu0 0.0
    %1103 = vmatpush1.msra.mxu0 0.0
    %1104 = vmatprep.subr.mxu0 0.0
    %1105 = vmatpush1.msra.mxu0 0.0
    %1106 = vmatprep.subr.mxu0 0.0
    %1107 = vmatpush1.msra.mxu0 0.0
    %1108 = vmatprep.mubr.f32.mxu0 0.0
    %1109 = vmatmul.mubr.f32.gmra.mrb[0].mxu0 %v605
    %v1110 = vpop.f32.mrb[0].mxu0
    %v1111 = vadd.f32 %v596, %v1110
    %v1112 = vpop.f32.mrb[0].mxu0
    %v1113 = vadd.f32 %v596, %v1112
    %1114 = vmatprep.mubr.f32.mxu0 0.0
    %1115 = vmatmul.mubr.f32.gmra.mrb[0].mxu0 %v608
    %v1116 = vpop.f32.mrb[0].mxu0
    %v1117 = vadd.f32 %v601, %v1116
    %v1118 = vpop.f32.mrb[0].mxu0
    %v1119 = vadd.f32 %v601, %v1118
    %1120 = vdwg.mxu0
    %1121 = vmatprep.subr.mxu0 %v540
    %1122 = vmatpush1.msra.mxu0 %v539
    %1123 = vmatprep.subr.mxu0 %v556
    %1124 = vmatpush1.msra.mxu0 %v555
    %1125 = vmatprep.subr.mxu0 %v572
    %1126 = vmatpush1.msra.mxu0 %v571
    %1127 = vmatprep.subr.mxu0 %v651
    %1128 = vmatpush1.msra.mxu0 %v648
    %1129 = vmatprep.subr.mxu0 0.0
    %1130 = vmatpush1.msra.mxu0 0.0
    %1131 = vmatprep.subr.mxu0 0.0
    %1132 = vmatpush1.msra.mxu0 0.0
    %1133 = vmatprep.subr.mxu0 0.0
    %1134 = vmatpush1.msra.mxu0 0.0
    %1135 = vmatprep.subr.mxu0 0.0
    %1136 = vmatpush1.msra.mxu0 0.0
    %1137 = vmatprep.subr.mxu0 0.0
    %1138 = vmatpush1.msra.mxu0 0.0
    %1139 = vmatprep.subr.mxu0 0.0
    %1140 = vmatpush1.msra.mxu0 0.0
    %1141 = vmatprep.subr.mxu0 0.0
    %1142 = vmatpush1.msra.mxu0 0.0
    %1143 = vmatprep.subr.mxu0 0.0
    %1144 = vmatpush1.msra.mxu0 0.0
    %1145 = vmatprep.subr.mxu0 0.0
    %1146 = vmatpush1.msra.mxu0 0.0
    %1147 = vmatprep.subr.mxu0 0.0
    %1148 = vmatpush1.msra.mxu0 0.0
    %1149 = vmatprep.subr.mxu0 0.0
    %1150 = vmatpush1.msra.mxu0 0.0
    %1151 = vmatprep.subr.mxu0 0.0
    %1152 = vmatpush1.msra.mxu0 0.0
    %1153 = vmatprep.subr.mxu0 0.0
    %1154 = vmatpush1.msra.mxu0 0.0
    %1155 = vmatprep.subr.mxu0 0.0
    %1156 = vmatpush1.msra.mxu0 0.0
    %1157 = vmatprep.subr.mxu0 0.0
    %1158 = vmatpush1.msra.mxu0 0.0
    %1159 = vmatprep.subr.mxu0 0.0
    %1160 = vmatpush1.msra.mxu0 0.0
    %1161 = vmatprep.subr.mxu0 0.0
    %1162 = vmatpush1.msra.mxu0 0.0
    %1163 = vmatprep.subr.mxu0 0.0
    %1164 = vmatpush1.msra.mxu0 0.0
    %1165 = vmatprep.subr.mxu0 0.0
    %1166 = vmatpush1.msra.mxu0 0.0
    %1167 = vmatprep.subr.mxu0 0.0
    %1168 = vmatpush1.msra.mxu0 0.0
    %1169 = vmatprep.subr.mxu0 0.0
    %1170 = vmatpush1.msra.mxu0 0.0
    %1171 = vmatprep.subr.mxu0 0.0
    %1172 = vmatpush1.msra.mxu0 0.0
    %1173 = vmatprep.subr.mxu0 0.0
    %1174 = vmatpush1.msra.mxu0 0.0
    %1175 = vmatprep.subr.mxu0 0.0
    %1176 = vmatpush1.msra.mxu0 0.0
    %1177 = vmatprep.subr.mxu0 0.0
    %1178 = vmatpush1.msra.mxu0 0.0
    %1179 = vmatprep.subr.mxu0 0.0
    %1180 = vmatpush1.msra.mxu0 0.0
    %1181 = vmatprep.subr.mxu0 0.0
    %1182 = vmatpush1.msra.mxu0 0.0
    %1183 = vmatprep.subr.mxu0 0.0
    %1184 = vmatpush1.msra.mxu0 0.0
    %1185 = vmatprep.mubr.f32.mxu0 0.0
    %1186 = vmatmul.mubr.f32.gmra.mrb[0].mxu0 %v605
    %v1187 = vpop.f32.mrb[0].mxu0
    %v1188 = vadd.f32 %v596, %v1187
    %v1189 = vpop.f32.mrb[0].mxu0
    %v1190 = vadd.f32 %v596, %v1189
    %1191 = vmatprep.mubr.f32.mxu0 0.0
    %1192 = vmatmul.mubr.f32.gmra.mrb[0].mxu0 %v608
    %v1193 = vpop.f32.mrb[0].mxu0
    %v1194 = vadd.f32 %v601, %v1193
    %v1195 = vpop.f32.mrb[0].mxu0
    %v1196 = vadd.f32 %v601, %v1195
    %1197 = vdwg.mxu0
    %1198 = vmatprep.subr.mxu0 %v542
    %1199 = vmatpush1.msra.mxu0 %v541
    %1200 = vmatprep.subr.mxu0 %v558
    %1201 = vmatpush1.msra.mxu0 %v557
    %1202 = vmatprep.subr.mxu0 %v574
    %1203 = vmatpush1.msra.mxu0 %v573
    %1204 = vmatprep.subr.mxu0 %v657
    %1205 = vmatpush1.msra.mxu0 %v654
    %1206 = vmatprep.subr.mxu0 0.0
    %1207 = vmatpush1.msra.mxu0 0.0
    %1208 = vmatprep.subr.mxu0 0.0
    %1209 = vmatpush1.msra.mxu0 0.0
    %1210 = vmatprep.subr.mxu0 0.0
    %1211 = vmatpush1.msra.mxu0 0.0
    %1212 = vmatprep.subr.mxu0 0.0
    %1213 = vmatpush1.msra.mxu0 0.0
    %1214 = vmatprep.subr.mxu0 0.0
    %1215 = vmatpush1.msra.mxu0 0.0
    %1216 = vmatprep.subr.mxu0 0.0
    %1217 = vmatpush1.msra.mxu0 0.0
    %1218 = vmatprep.subr.mxu0 0.0
    %1219 = vmatpush1.msra.mxu0 0.0
    %1220 = vmatprep.subr.mxu0 0.0
    %1221 = vmatpush1.msra.mxu0 0.0
    %1222 = vmatprep.subr.mxu0 0.0
    %1223 = vmatpush1.msra.mxu0 0.0
    %1224 = vmatprep.subr.mxu0 0.0
    %1225 = vmatpush1.msra.mxu0 0.0
    %1226 = vmatprep.subr.mxu0 0.0
    %1227 = vmatpush1.msra.mxu0 0.0
    %1228 = vmatprep.subr.mxu0 0.0
    %1229 = vmatpush1.msra.mxu0 0.0
    %1230 = vmatprep.subr.mxu0 0.0
    %1231 = vmatpush1.msra.mxu0 0.0
    %1232 = vmatprep.subr.mxu0 0.0
    %1233 = vmatpush1.msra.mxu0 0.0
    %1234 = vmatprep.subr.mxu0 0.0
    %1235 = vmatpush1.msra.mxu0 0.0
    %1236 = vmatprep.subr.mxu0 0.0
    %1237 = vmatpush1.msra.mxu0 0.0
    %1238 = vmatprep.subr.mxu0 0.0
    %1239 = vmatpush1.msra.mxu0 0.0
    %1240 = vmatprep.subr.mxu0 0.0
    %1241 = vmatpush1.msra.mxu0 0.0
    %1242 = vmatprep.subr.mxu0 0.0
    %1243 = vmatpush1.msra.mxu0 0.0
    %1244 = vmatprep.subr.mxu0 0.0
    %1245 = vmatpush1.msra.mxu0 0.0
    %1246 = vmatprep.subr.mxu0 0.0
    %1247 = vmatpush1.msra.mxu0 0.0
    %1248 = vmatprep.subr.mxu0 0.0
    %1249 = vmatpush1.msra.mxu0 0.0
    %1250 = vmatprep.subr.mxu0 0.0
    %1251 = vmatpush1.msra.mxu0 0.0
    %1252 = vmatprep.subr.mxu0 0.0
    %1253 = vmatpush1.msra.mxu0 0.0
    %1254 = vmatprep.subr.mxu0 0.0
    %1255 = vmatpush1.msra.mxu0 0.0
    %1256 = vmatprep.subr.mxu0 0.0
    %1257 = vmatpush1.msra.mxu0 0.0
    %1258 = vmatprep.subr.mxu0 0.0
    %1259 = vmatpush1.msra.mxu0 0.0
    %1260 = vmatprep.subr.mxu0 0.0
    %1261 = vmatpush1.msra.mxu0 0.0
    %1262 = vmatprep.mubr.f32.mxu0 0.0
    %1263 = vmatmul.mubr.f32.gmra.mrb[0].mxu0 %v605
    %v1264 = vpop.f32.mrb[0].mxu0
    %v1265 = vadd.f32 %v596, %v1264
    %v1266 = vpop.f32.mrb[0].mxu0
    %v1267 = vadd.f32 %v596, %v1266
    %1268 = vmatprep.mubr.f32.mxu0 0.0
    %1269 = vmatmul.mubr.f32.gmra.mrb[0].mxu0 %v608
    %v1270 = vpop.f32.mrb[0].mxu0
    %v1271 = vadd.f32 %v601, %v1270
    %v1272 = vpop.f32.mrb[0].mxu0
    %v1273 = vadd.f32 %v601, %v1272
    %1274 = vdwg.mxu0
    %v1275 = vmax.f32 %v726, 0.0
    %v1276 = vmax.f32 %v728, 0.0
    %v1277 = vmax.f32 %v803, 0.0
    %v1278 = vmax.f32 %v805, 0.0
    %v1279 = vmax.f32 %v880, 0.0
    %v1280 = vmax.f32 %v882, 0.0
    %v1281 = vmax.f32 %v957, 0.0
    %v1282 = vmax.f32 %v959, 0.0
    %v1283 = vmax.f32 %v1034, 0.0
    %v1284 = vmax.f32 %v1036, 0.0
    %v1285 = vmax.f32 %v1111, 0.0
    %v1286 = vmax.f32 %v1113, 0.0
    %v1287 = vmax.f32 %v1188, 0.0
    %v1288 = vmax.f32 %v1190, 0.0
    %v1289 = vmax.f32 %v1265, 0.0
    %v1290 = vmax.f32 %v1267, 0.0
    %v1291 = vmax.f32 %v732, 0.0
    %v1292 = vmax.f32 %v734, 0.0
    %v1293 = vmax.f32 %v809, 0.0
    %v1294 = vmax.f32 %v811, 0.0
    %v1295 = vmax.f32 %v886, 0.0
    %v1296 = vmax.f32 %v888, 0.0
    %v1297 = vmax.f32 %v963, 0.0
    %v1298 = vmax.f32 %v965, 0.0
    %v1299 = vmax.f32 %v1040, 0.0
    %v1300 = vmax.f32 %v1042, 0.0
    %v1301 = vmax.f32 %v1117, 0.0
    %v1302 = vmax.f32 %v1119, 0.0
    %v1303 = vmax.f32 %v1194, 0.0
    %v1304 = vmax.f32 %v1196, 0.0
    %v1305 = vmax.f32 %v1271, 0.0
    %v1306 = vmax.f32 %v1273, 0.0
    %v1323 = vcombine.low %v1275, %v1276
    %v1324 = vcombine.high %v1275, %v1276
    %v1325 = vcombine.low %v1277, %v1278
    %v1326 = vcombine.high %v1277, %v1278
    %v1327 = vcombine.low %v1279, %v1280
    %v1328 = vcombine.high %v1279, %v1280
    %v1329 = vcombine.low %v1281, %v1282
    %v1330 = vcombine.high %v1281, %v1282
    %v1332 = vunpack.c.l.s4 1966171168
    %v1333 = vunpack.c.0.s8 %v1332
    %v1334 = vlaneseq
    %v1335 = vshrl.u32 %v1334, 7
    %v1336 = vsub.s32 %v1333, %v1335
    %v1337 = vrot.slane %v1323, %v1336
    %v1339 = vunpack.c.l.s4 1966171168
    %v1340 = vunpack.c.0.s8 %v1339
    %v1341 = vlaneseq
    %v1342 = vshrl.u32 %v1341, 7
    %v1343 = vsub.s32 %v1340, %v1342
    %v1344 = vrot.slane %v1324, %v1343
    %v1346 = vunpack.c.l.s4 1966171168
    %v1347 = vunpack.c.0.s8 %v1346
    %v1348 = vlaneseq
    %v1349 = vshrl.u32 %v1348, 7
    %v1350 = vsub.s32 %v1347, %v1349
    %v1351 = vrot.slane %v1325, %v1350
    %v1353 = vunpack.c.l.s4 1966171168
    %v1354 = vunpack.c.0.s8 %v1353
    %v1355 = vlaneseq
    %v1356 = vshrl.u32 %v1355, 7
    %v1357 = vsub.s32 %v1354, %v1356
    %v1358 = vrot.slane %v1326, %v1357
    %v1360 = vunpack.c.l.s4 1966171168
    %v1361 = vunpack.c.0.s8 %v1360
    %v1362 = vlaneseq
    %v1363 = vshrl.u32 %v1362, 7
    %v1364 = vsub.s32 %v1361, %v1363
    %v1365 = vrot.slane %v1327, %v1364
    %v1367 = vunpack.c.l.s4 1966171168
    %v1368 = vunpack.c.0.s8 %v1367
    %v1369 = vlaneseq
    %v1370 = vshrl.u32 %v1369, 7
    %v1371 = vsub.s32 %v1368, %v1370
    %v1372 = vrot.slane %v1328, %v1371
    %v1374 = vunpack.c.l.s4 1966171168
    %v1375 = vunpack.c.0.s8 %v1374
    %v1376 = vlaneseq
    %v1377 = vshrl.u32 %v1376, 7
    %v1378 = vsub.s32 %v1375, %v1377
    %v1379 = vrot.slane %v1329, %v1378
    %v1381 = vunpack.c.l.s4 1966171168
    %v1382 = vunpack.c.0.s8 %v1381
    %v1383 = vlaneseq
    %v1384 = vshrl.u32 %v1383, 7
    %v1385 = vsub.s32 %v1382, %v1384
    %v1386 = vrot.slane %v1330, %v1385
    %v1387 = vcombine.low %v1337, %v1351
    %v1388 = vcombine.high %v1337, %v1351
    %v1389 = vcombine.low %v1344, %v1358
    %v1390 = vcombine.high %v1344, %v1358
    %v1391 = vcombine.low %v1365, %v1379
    %v1392 = vcombine.high %v1365, %v1379
    %v1393 = vcombine.low %v1372, %v1386
    %v1394 = vcombine.high %v1372, %v1386
    %v1396 = vunpack.c.l.s4 1966171168
    %v1397 = vunpack.c.0.s8 %v1396
    %v1398 = vlaneseq
    %v1399 = vshrl.u32 %v1398, 7
    %v1400 = vsub.s32 %v1397, %v1399
    %v1401 = vrot.slane %v1387, %v1400
    %v1403 = vunpack.c.l.s4 1966171168
    %v1404 = vunpack.c.0.s8 %v1403
    %v1405 = vlaneseq
    %v1406 = vshrl.u32 %v1405, 7
    %v1407 = vsub.s32 %v1404, %v1406
    %v1408 = vrot.slane %v1389, %v1407
    %v1410 = vunpack.c.l.s4 1966171168
    %v1411 = vunpack.c.0.s8 %v1410
    %v1412 = vlaneseq
    %v1413 = vshrl.u32 %v1412, 7
    %v1414 = vsub.s32 %v1411, %v1413
    %v1415 = vrot.slane %v1388, %v1414
    %v1417 = vunpack.c.l.s4 1966171168
    %v1418 = vunpack.c.0.s8 %v1417
    %v1419 = vlaneseq
    %v1420 = vshrl.u32 %v1419, 7
    %v1421 = vsub.s32 %v1418, %v1420
    %v1422 = vrot.slane %v1390, %v1421
    %v1424 = vunpack.c.l.s4 1966171168
    %v1425 = vunpack.c.0.s8 %v1424
    %v1426 = vlaneseq
    %v1427 = vshrl.u32 %v1426, 7
    %v1428 = vsub.s32 %v1425, %v1427
    %v1429 = vrot.slane %v1391, %v1428
    %v1431 = vunpack.c.l.s4 1966171168
    %v1432 = vunpack.c.0.s8 %v1431
    %v1433 = vlaneseq
    %v1434 = vshrl.u32 %v1433, 7
    %v1435 = vsub.s32 %v1432, %v1434
    %v1436 = vrot.slane %v1393, %v1435
    %v1438 = vunpack.c.l.s4 1966171168
    %v1439 = vunpack.c.0.s8 %v1438
    %v1440 = vlaneseq
    %v1441 = vshrl.u32 %v1440, 7
    %v1442 = vsub.s32 %v1439, %v1441
    %v1443 = vrot.slane %v1392, %v1442
    %v1445 = vunpack.c.l.s4 1966171168
    %v1446 = vunpack.c.0.s8 %v1445
    %v1447 = vlaneseq
    %v1448 = vshrl.u32 %v1447, 7
    %v1449 = vsub.s32 %v1446, %v1448
    %v1450 = vrot.slane %v1394, %v1449
    %v1451 = vcombine.low %v1401, %v1429
    %v1452 = vcombine.high %v1401, %v1429
    %v1453 = vcombine.low %v1408, %v1436
    %v1454 = vcombine.high %v1408, %v1436
    %v1455 = vcombine.low %v1415, %v1443
    %v1456 = vcombine.high %v1415, %v1443
    %v1457 = vcombine.low %v1422, %v1450
    %v1458 = vcombine.high %v1422, %v1450
    %v1459 = vcombine.low %v1291, %v1292
    %v1460 = vcombine.high %v1291, %v1292
    %v1461 = vcombine.low %v1293, %v1294
    %v1462 = vcombine.high %v1293, %v1294
    %v1463 = vcombine.low %v1295, %v1296
    %v1464 = vcombine.high %v1295, %v1296
    %v1465 = vcombine.low %v1297, %v1298
    %v1466 = vcombine.high %v1297, %v1298
    %v1468 = vunpack.c.l.s4 1966171168
    %v1469 = vunpack.c.0.s8 %v1468
    %v1470 = vlaneseq
    %v1471 = vshrl.u32 %v1470, 7
    %v1472 = vsub.s32 %v1469, %v1471
    %v1473 = vrot.slane %v1459, %v1472
    %v1475 = vunpack.c.l.s4 1966171168
    %v1476 = vunpack.c.0.s8 %v1475
    %v1477 = vlaneseq
    %v1478 = vshrl.u32 %v1477, 7
    %v1479 = vsub.s32 %v1476, %v1478
    %v1480 = vrot.slane %v1460, %v1479
    %v1482 = vunpack.c.l.s4 1966171168
    %v1483 = vunpack.c.0.s8 %v1482
    %v1484 = vlaneseq
    %v1485 = vshrl.u32 %v1484, 7
    %v1486 = vsub.s32 %v1483, %v1485
    %v1487 = vrot.slane %v1461, %v1486
    %v1489 = vunpack.c.l.s4 1966171168
    %v1490 = vunpack.c.0.s8 %v1489
    %v1491 = vlaneseq
    %v1492 = vshrl.u32 %v1491, 7
    %v1493 = vsub.s32 %v1490, %v1492
    %v1494 = vrot.slane %v1462, %v1493
    %v1496 = vunpack.c.l.s4 1966171168
    %v1497 = vunpack.c.0.s8 %v1496
    %v1498 = vlaneseq
    %v1499 = vshrl.u32 %v1498, 7
    %v1500 = vsub.s32 %v1497, %v1499
    %v1501 = vrot.slane %v1463, %v1500
    %v1503 = vunpack.c.l.s4 1966171168
    %v1504 = vunpack.c.0.s8 %v1503
    %v1505 = vlaneseq
    %v1506 = vshrl.u32 %v1505, 7
    %v1507 = vsub.s32 %v1504, %v1506
    %v1508 = vrot.slane %v1464, %v1507
    %v1510 = vunpack.c.l.s4 1966171168
    %v1511 = vunpack.c.0.s8 %v1510
    %v1512 = vlaneseq
    %v1513 = vshrl.u32 %v1512, 7
    %v1514 = vsub.s32 %v1511, %v1513
    %v1515 = vrot.slane %v1465, %v1514
    %v1517 = vunpack.c.l.s4 1966171168
    %v1518 = vunpack.c.0.s8 %v1517
    %v1519 = vlaneseq
    %v1520 = vshrl.u32 %v1519, 7
    %v1521 = vsub.s32 %v1518, %v1520
    %v1522 = vrot.slane %v1466, %v1521
    %v1523 = vcombine.low %v1473, %v1487
    %v1524 = vcombine.high %v1473, %v1487
    %v1525 = vcombine.low %v1480, %v1494
    %v1526 = vcombine.high %v1480, %v1494
    %v1527 = vcombine.low %v1501, %v1515
    %v1528 = vcombine.high %v1501, %v1515
    %v1529 = vcombine.low %v1508, %v1522
    %v1530 = vcombine.high %v1508, %v1522
    %v1532 = vunpack.c.l.s4 1966171168
    %v1533 = vunpack.c.0.s8 %v1532
    %v1534 = vlaneseq
    %v1535 = vshrl.u32 %v1534, 7
    %v1536 = vsub.s32 %v1533, %v1535
    %v1537 = vrot.slane %v1523, %v1536
    %v1539 = vunpack.c.l.s4 1966171168
    %v1540 = vunpack.c.0.s8 %v1539
    %v1541 = vlaneseq
    %v1542 = vshrl.u32 %v1541, 7
    %v1543 = vsub.s32 %v1540, %v1542
    %v1544 = vrot.slane %v1525, %v1543
    %v1546 = vunpack.c.l.s4 1966171168
    %v1547 = vunpack.c.0.s8 %v1546
    %v1548 = vlaneseq
    %v1549 = vshrl.u32 %v1548, 7
    %v1550 = vsub.s32 %v1547, %v1549
    %v1551 = vrot.slane %v1524, %v1550
    %v1553 = vunpack.c.l.s4 1966171168
    %v1554 = vunpack.c.0.s8 %v1553
    %v1555 = vlaneseq
    %v1556 = vshrl.u32 %v1555, 7
    %v1557 = vsub.s32 %v1554, %v1556
    %v1558 = vrot.slane %v1526, %v1557
    %v1560 = vunpack.c.l.s4 1966171168
    %v1561 = vunpack.c.0.s8 %v1560
    %v1562 = vlaneseq
    %v1563 = vshrl.u32 %v1562, 7
    %v1564 = vsub.s32 %v1561, %v1563
    %v1565 = vrot.slane %v1527, %v1564
    %v1567 = vunpack.c.l.s4 1966171168
    %v1568 = vunpack.c.0.s8 %v1567
    %v1569 = vlaneseq
    %v1570 = vshrl.u32 %v1569, 7
    %v1571 = vsub.s32 %v1568, %v1570
    %v1572 = vrot.slane %v1529, %v1571
    %v1574 = vunpack.c.l.s4 1966171168
    %v1575 = vunpack.c.0.s8 %v1574
    %v1576 = vlaneseq
    %v1577 = vshrl.u32 %v1576, 7
    %v1578 = vsub.s32 %v1575, %v1577
    %v1579 = vrot.slane %v1528, %v1578
    %v1581 = vunpack.c.l.s4 1966171168
    %v1582 = vunpack.c.0.s8 %v1581
    %v1583 = vlaneseq
    %v1584 = vshrl.u32 %v1583, 7
    %v1585 = vsub.s32 %v1582, %v1584
    %v1586 = vrot.slane %v1530, %v1585
    %v1587 = vcombine.low %v1537, %v1565
    %v1588 = vcombine.high %v1537, %v1565
    %v1589 = vcombine.low %v1544, %v1572
    %v1590 = vcombine.high %v1544, %v1572
    %v1591 = vcombine.low %v1551, %v1579
    %v1592 = vcombine.high %v1551, %v1579
    %v1593 = vcombine.low %v1558, %v1586
    %v1594 = vcombine.high %v1558, %v1586
    %1611 = vst [vmem:[#allocation3] ss:$2 sm:$0xff] %v1451
    %s1612 = scalar_lea.vmem [#allocation3], 16
    %1613 = vst [vmem:[%s1612] ss:$2 sm:$0xff] %v1455
    %s1614 = scalar_lea.vmem [#allocation3], 32
    %1615 = vst [vmem:[%s1614] ss:$2 sm:$0xff] %v1452
    %s1616 = scalar_lea.vmem [#allocation3], 48
    %1617 = vst [vmem:[%s1616] ss:$2 sm:$0xff] %v1456
    %s1618 = scalar_lea.vmem [#allocation3], 64
    %1619 = vst [vmem:[%s1618] ss:$2 sm:$0xff] %v1453
    %s1620 = scalar_lea.vmem [#allocation3], 80
    %1621 = vst [vmem:[%s1620] ss:$2 sm:$0xff] %v1457
    %s1622 = scalar_lea.vmem [#allocation3], 96
    %1623 = vst [vmem:[%s1622] ss:$2 sm:$0xff] %v1454
    %s1624 = scalar_lea.vmem [#allocation3], 112
    %1625 = vst [vmem:[%s1624] ss:$2 sm:$0xff] %v1458
    %s1626 = scalar_lea.vmem [#allocation3], 128
    %1627 = vst [vmem:[%s1626] ss:$2 sm:$0xff] %v1587
    %s1628 = scalar_lea.vmem [#allocation3], 144
    %1629 = vst [vmem:[%s1628] ss:$2 sm:$0xff] %v1591
    %s1630 = scalar_lea.vmem [#allocation3], 160
    %1631 = vst [vmem:[%s1630] ss:$2 sm:$0xff] %v1588
    %s1632 = scalar_lea.vmem [#allocation3], 176
    %1633 = vst [vmem:[%s1632] ss:$2 sm:$0xff] %v1592
    %s1634 = scalar_lea.vmem [#allocation3], 192
    %1635 = vst [vmem:[%s1634] ss:$2 sm:$0xff] %v1589
    %s1636 = scalar_lea.vmem [#allocation3], 208
    %1637 = vst [vmem:[%s1636] ss:$2 sm:$0xff] %v1593
    %s1638 = scalar_lea.vmem [#allocation3], 224
    %1639 = vst [vmem:[%s1638] ss:$2 sm:$0xff] %v1590
    %s1640 = scalar_lea.vmem [#allocation3], 240
    %1641 = vst [vmem:[%s1640] ss:$2 sm:$0xff] %v1594
    %v1658 = vcombine.low %v1283, %v1284
    %v1659 = vcombine.high %v1283, %v1284
    %v1660 = vcombine.low %v1285, %v1286
    %v1661 = vcombine.high %v1285, %v1286
    %v1662 = vcombine.low %v1287, %v1288
    %v1663 = vcombine.high %v1287, %v1288
    %v1664 = vcombine.low %v1289, %v1290
    %v1665 = vcombine.high %v1289, %v1290
    %v1667 = vunpack.c.l.s4 1966171168
    %v1668 = vunpack.c.0.s8 %v1667
    %v1669 = vlaneseq
    %v1670 = vshrl.u32 %v1669, 7
    %v1671 = vsub.s32 %v1668, %v1670
    %v1672 = vrot.slane %v1658, %v1671
    %v1674 = vunpack.c.l.s4 1966171168
    %v1675 = vunpack.c.0.s8 %v1674
    %v1676 = vlaneseq
    %v1677 = vshrl.u32 %v1676, 7
    %v1678 = vsub.s32 %v1675, %v1677
    %v1679 = vrot.slane %v1659, %v1678
    %v1681 = vunpack.c.l.s4 1966171168
    %v1682 = vunpack.c.0.s8 %v1681
    %v1683 = vlaneseq
    %v1684 = vshrl.u32 %v1683, 7
    %v1685 = vsub.s32 %v1682, %v1684
    %v1686 = vrot.slane %v1660, %v1685
    %v1688 = vunpack.c.l.s4 1966171168
    %v1689 = vunpack.c.0.s8 %v1688
    %v1690 = vlaneseq
    %v1691 = vshrl.u32 %v1690, 7
    %v1692 = vsub.s32 %v1689, %v1691
    %v1693 = vrot.slane %v1661, %v1692
    %v1695 = vunpack.c.l.s4 1966171168
    %v1696 = vunpack.c.0.s8 %v1695
    %v1697 = vlaneseq
    %v1698 = vshrl.u32 %v1697, 7
    %v1699 = vsub.s32 %v1696, %v1698
    %v1700 = vrot.slane %v1662, %v1699
    %v1702 = vunpack.c.l.s4 1966171168
    %v1703 = vunpack.c.0.s8 %v1702
    %v1704 = vlaneseq
    %v1705 = vshrl.u32 %v1704, 7
    %v1706 = vsub.s32 %v1703, %v1705
    %v1707 = vrot.slane %v1663, %v1706
    %v1709 = vunpack.c.l.s4 1966171168
    %v1710 = vunpack.c.0.s8 %v1709
    %v1711 = vlaneseq
    %v1712 = vshrl.u32 %v1711, 7
    %v1713 = vsub.s32 %v1710, %v1712
    %v1714 = vrot.slane %v1664, %v1713
    %v1716 = vunpack.c.l.s4 1966171168
    %v1717 = vunpack.c.0.s8 %v1716
    %v1718 = vlaneseq
    %v1719 = vshrl.u32 %v1718, 7
    %v1720 = vsub.s32 %v1717, %v1719
    %v1721 = vrot.slane %v1665, %v1720
    %v1722 = vcombine.low %v1672, %v1686
    %v1723 = vcombine.high %v1672, %v1686
    %v1724 = vcombine.low %v1679, %v1693
    %v1725 = vcombine.high %v1679, %v1693
    %v1726 = vcombine.low %v1700, %v1714
    %v1727 = vcombine.high %v1700, %v1714
    %v1728 = vcombine.low %v1707, %v1721
    %v1729 = vcombine.high %v1707, %v1721
    %v1731 = vunpack.c.l.s4 1966171168
    %v1732 = vunpack.c.0.s8 %v1731
    %v1733 = vlaneseq
    %v1734 = vshrl.u32 %v1733, 7
    %v1735 = vsub.s32 %v1732, %v1734
    %v1736 = vrot.slane %v1722, %v1735
    %v1738 = vunpack.c.l.s4 1966171168
    %v1739 = vunpack.c.0.s8 %v1738
    %v1740 = vlaneseq
    %v1741 = vshrl.u32 %v1740, 7
    %v1742 = vsub.s32 %v1739, %v1741
    %v1743 = vrot.slane %v1724, %v1742
    %v1745 = vunpack.c.l.s4 1966171168
    %v1746 = vunpack.c.0.s8 %v1745
    %v1747 = vlaneseq
    %v1748 = vshrl.u32 %v1747, 7
    %v1749 = vsub.s32 %v1746, %v1748
    %v1750 = vrot.slane %v1723, %v1749
    %v1752 = vunpack.c.l.s4 1966171168
    %v1753 = vunpack.c.0.s8 %v1752
    %v1754 = vlaneseq
    %v1755 = vshrl.u32 %v1754, 7
    %v1756 = vsub.s32 %v1753, %v1755
    %v1757 = vrot.slane %v1725, %v1756
    %v1759 = vunpack.c.l.s4 1966171168
    %v1760 = vunpack.c.0.s8 %v1759
    %v1761 = vlaneseq
    %v1762 = vshrl.u32 %v1761, 7
    %v1763 = vsub.s32 %v1760, %v1762
    %v1764 = vrot.slane %v1726, %v1763
    %v1766 = vunpack.c.l.s4 1966171168
    %v1767 = vunpack.c.0.s8 %v1766
    %v1768 = vlaneseq
    %v1769 = vshrl.u32 %v1768, 7
    %v1770 = vsub.s32 %v1767, %v1769
    %v1771 = vrot.slane %v1728, %v1770
    %v1773 = vunpack.c.l.s4 1966171168
    %v1774 = vunpack.c.0.s8 %v1773
    %v1775 = vlaneseq
    %v1776 = vshrl.u32 %v1775, 7
    %v1777 = vsub.s32 %v1774, %v1776
    %v1778 = vrot.slane %v1727, %v1777
    %v1780 = vunpack.c.l.s4 1966171168
    %v1781 = vunpack.c.0.s8 %v1780
    %v1782 = vlaneseq
    %v1783 = vshrl.u32 %v1782, 7
    %v1784 = vsub.s32 %v1781, %v1783
    %v1785 = vrot.slane %v1729, %v1784
    %v1786 = vcombine.low %v1736, %v1764
    %v1787 = vcombine.high %v1736, %v1764
    %v1788 = vcombine.low %v1743, %v1771
    %v1789 = vcombine.high %v1743, %v1771
    %v1790 = vcombine.low %v1750, %v1778
    %v1791 = vcombine.high %v1750, %v1778
    %v1792 = vcombine.low %v1757, %v1785
    %v1793 = vcombine.high %v1757, %v1785
    %v1794 = vcombine.low %v1299, %v1300
    %v1795 = vcombine.high %v1299, %v1300
    %v1796 = vcombine.low %v1301, %v1302
    %v1797 = vcombine.high %v1301, %v1302
    %v1798 = vcombine.low %v1303, %v1304
    %v1799 = vcombine.high %v1303, %v1304
    %v1800 = vcombine.low %v1305, %v1306
    %v1801 = vcombine.high %v1305, %v1306
    %v1803 = vunpack.c.l.s4 1966171168
    %v1804 = vunpack.c.0.s8 %v1803
    %v1805 = vlaneseq
    %v1806 = vshrl.u32 %v1805, 7
    %v1807 = vsub.s32 %v1804, %v1806
    %v1808 = vrot.slane %v1794, %v1807
    %v1810 = vunpack.c.l.s4 1966171168
    %v1811 = vunpack.c.0.s8 %v1810
    %v1812 = vlaneseq
    %v1813 = vshrl.u32 %v1812, 7
    %v1814 = vsub.s32 %v1811, %v1813
    %v1815 = vrot.slane %v1795, %v1814
    %v1817 = vunpack.c.l.s4 1966171168
    %v1818 = vunpack.c.0.s8 %v1817
    %v1819 = vlaneseq
    %v1820 = vshrl.u32 %v1819, 7
    %v1821 = vsub.s32 %v1818, %v1820
    %v1822 = vrot.slane %v1796, %v1821
    %v1824 = vunpack.c.l.s4 1966171168
    %v1825 = vunpack.c.0.s8 %v1824
    %v1826 = vlaneseq
    %v1827 = vshrl.u32 %v1826, 7
    %v1828 = vsub.s32 %v1825, %v1827
    %v1829 = vrot.slane %v1797, %v1828
    %v1831 = vunpack.c.l.s4 1966171168
    %v1832 = vunpack.c.0.s8 %v1831
    %v1833 = vlaneseq
    %v1834 = vshrl.u32 %v1833, 7
    %v1835 = vsub.s32 %v1832, %v1834
    %v1836 = vrot.slane %v1798, %v1835
    %v1838 = vunpack.c.l.s4 1966171168
    %v1839 = vunpack.c.0.s8 %v1838
    %v1840 = vlaneseq
    %v1841 = vshrl.u32 %v1840, 7
    %v1842 = vsub.s32 %v1839, %v1841
    %v1843 = vrot.slane %v1799, %v1842
    %v1845 = vunpack.c.l.s4 1966171168
    %v1846 = vunpack.c.0.s8 %v1845
    %v1847 = vlaneseq
    %v1848 = vshrl.u32 %v1847, 7
    %v1849 = vsub.s32 %v1846, %v1848
    %v1850 = vrot.slane %v1800, %v1849
    %v1852 = vunpack.c.l.s4 1966171168
    %v1853 = vunpack.c.0.s8 %v1852
    %v1854 = vlaneseq
    %v1855 = vshrl.u32 %v1854, 7
    %v1856 = vsub.s32 %v1853, %v1855
    %v1857 = vrot.slane %v1801, %v1856
    %v1858 = vcombine.low %v1808, %v1822
    %v1859 = vcombine.high %v1808, %v1822
    %v1860 = vcombine.low %v1815, %v1829
    %v1861 = vcombine.high %v1815, %v1829
    %v1862 = vcombine.low %v1836, %v1850
    %v1863 = vcombine.high %v1836, %v1850
    %v1864 = vcombine.low %v1843, %v1857
    %v1865 = vcombine.high %v1843, %v1857
    %v1867 = vunpack.c.l.s4 1966171168
    %v1868 = vunpack.c.0.s8 %v1867
    %v1869 = vlaneseq
    %v1870 = vshrl.u32 %v1869, 7
    %v1871 = vsub.s32 %v1868, %v1870
    %v1872 = vrot.slane %v1858, %v1871
    %v1874 = vunpack.c.l.s4 1966171168
    %v1875 = vunpack.c.0.s8 %v1874
    %v1876 = vlaneseq
    %v1877 = vshrl.u32 %v1876, 7
    %v1878 = vsub.s32 %v1875, %v1877
    %v1879 = vrot.slane %v1860, %v1878
    %v1881 = vunpack.c.l.s4 1966171168
    %v1882 = vunpack.c.0.s8 %v1881
    %v1883 = vlaneseq
    %v1884 = vshrl.u32 %v1883, 7
    %v1885 = vsub.s32 %v1882, %v1884
    %v1886 = vrot.slane %v1859, %v1885
    %v1888 = vunpack.c.l.s4 1966171168
    %v1889 = vunpack.c.0.s8 %v1888
    %v1890 = vlaneseq
    %v1891 = vshrl.u32 %v1890, 7
    %v1892 = vsub.s32 %v1889, %v1891
    %v1893 = vrot.slane %v1861, %v1892
    %v1895 = vunpack.c.l.s4 1966171168
    %v1896 = vunpack.c.0.s8 %v1895
    %v1897 = vlaneseq
    %v1898 = vshrl.u32 %v1897, 7
    %v1899 = vsub.s32 %v1896, %v1898
    %v1900 = vrot.slane %v1862, %v1899
    %v1902 = vunpack.c.l.s4 1966171168
    %v1903 = vunpack.c.0.s8 %v1902
    %v1904 = vlaneseq
    %v1905 = vshrl.u32 %v1904, 7
    %v1906 = vsub.s32 %v1903, %v1905
    %v1907 = vrot.slane %v1864, %v1906
    %v1909 = vunpack.c.l.s4 1966171168
    %v1910 = vunpack.c.0.s8 %v1909
    %v1911 = vlaneseq
    %v1912 = vshrl.u32 %v1911, 7
    %v1913 = vsub.s32 %v1910, %v1912
    %v1914 = vrot.slane %v1863, %v1913
    %v1916 = vunpack.c.l.s4 1966171168
    %v1917 = vunpack.c.0.s8 %v1916
    %v1918 = vlaneseq
    %v1919 = vshrl.u32 %v1918, 7
    %v1920 = vsub.s32 %v1917, %v1919
    %v1921 = vrot.slane %v1865, %v1920
    %v1922 = vcombine.low %v1872, %v1900
    %v1923 = vcombine.high %v1872, %v1900
    %v1924 = vcombine.low %v1879, %v1907
    %v1925 = vcombine.high %v1879, %v1907
    %v1926 = vcombine.low %v1886, %v1914
    %v1927 = vcombine.high %v1886, %v1914
    %v1928 = vcombine.low %v1893, %v1921
    %v1929 = vcombine.high %v1893, %v1921
    %s1946 = scalar_lea.vmem [#allocation3], 1
    %1947 = vst [vmem:[%s1946] ss:$2 sm:$0xff] %v1786
    %s1948 = scalar_lea.vmem [#allocation3], 17
    %1949 = vst [vmem:[%s1948] ss:$2 sm:$0xff] %v1790
    %s1950 = scalar_lea.vmem [#allocation3], 33
    %1951 = vst [vmem:[%s1950] ss:$2 sm:$0xff] %v1787
    %s1952 = scalar_lea.vmem [#allocation3], 49
    %1953 = vst [vmem:[%s1952] ss:$2 sm:$0xff] %v1791
    %s1954 = scalar_lea.vmem [#allocation3], 65
    %1955 = vst [vmem:[%s1954] ss:$2 sm:$0xff] %v1788
    %s1956 = scalar_lea.vmem [#allocation3], 81
    %1957 = vst [vmem:[%s1956] ss:$2 sm:$0xff] %v1792
    %s1958 = scalar_lea.vmem [#allocation3], 97
    %1959 = vst [vmem:[%s1958] ss:$2 sm:$0xff] %v1789
    %s1960 = scalar_lea.vmem [#allocation3], 113
    %1961 = vst [vmem:[%s1960] ss:$2 sm:$0xff] %v1793
    %s1962 = scalar_lea.vmem [#allocation3], 129
    %1963 = vst [vmem:[%s1962] ss:$2 sm:$0xff] %v1922
    %s1964 = scalar_lea.vmem [#allocation3], 145
    %1965 = vst [vmem:[%s1964] ss:$2 sm:$0xff] %v1926
    %s1966 = scalar_lea.vmem [#allocation3], 161
    %1967 = vst [vmem:[%s1966] ss:$2 sm:$0xff] %v1923
    %s1968 = scalar_lea.vmem [#allocation3], 177
    %1969 = vst [vmem:[%s1968] ss:$2 sm:$0xff] %v1927
    %s1970 = scalar_lea.vmem [#allocation3], 193
    %1971 = vst [vmem:[%s1970] ss:$2 sm:$0xff] %v1924
    %s1972 = scalar_lea.vmem [#allocation3], 209
    %1973 = vst [vmem:[%s1972] ss:$2 sm:$0xff] %v1928
    %s1974 = scalar_lea.vmem [#allocation3], 225
    %1975 = vst [vmem:[%s1974] ss:$2 sm:$0xff] %v1925
    %s1976 = scalar_lea.vmem [#allocation3], 241
    %1977 = vst [vmem:[%s1976] ss:$2 sm:$0xff] %v1929
    %v1978 = vld [vmem:[#allocation3] sm:$0xff]
    %v1979 = vld [vmem:[#allocation3 + $0x8] sm:$0xff]
    %v1980 = vld [vmem:[#allocation3 + $0x10] sm:$0xff]
    %v1981 = vld [vmem:[#allocation3 + $0x18] sm:$0xff]
    %v1982 = vld [vmem:[#allocation3 + $0x20] sm:$0xff]
    %v1983 = vld [vmem:[#allocation3 + $0x28] sm:$0xff]
    %v1984 = vld [vmem:[#allocation3 + $0x30] sm:$0xff]
    %v1985 = vld [vmem:[#allocation3 + $0x38] sm:$0xff]
    %v1986 = vld [vmem:[#allocation3 + $0x40] sm:$0xff]
    %v1987 = vld [vmem:[#allocation3 + $0x48] sm:$0xff]
    %v1988 = vld [vmem:[#allocation3 + $0x50] sm:$0xff]
    %v1989 = vld [vmem:[#allocation3 + $0x58] sm:$0xff]
    %v1990 = vld [vmem:[#allocation3 + $0x60] sm:$0xff]
    %v1991 = vld [vmem:[#allocation3 + $0x68] sm:$0xff]
    %v1992 = vld [vmem:[#allocation3 + $0x70] sm:$0xff]
    %v1993 = vld [vmem:[#allocation3 + $0x78] sm:$0xff]
    %v1994 = vld [vmem:[#allocation3 + $0x80] sm:$0xff]
    %v1995 = vld [vmem:[#allocation3 + $0x88] sm:$0xff]
    %v1996 = vld [vmem:[#allocation3 + $0x90] sm:$0xff]
    %v1997 = vld [vmem:[#allocation3 + $0x98] sm:$0xff]
    %v1998 = vld [vmem:[#allocation3 + $0xa0] sm:$0xff]
    %v1999 = vld [vmem:[#allocation3 + $0xa8] sm:$0xff]
    %v2000 = vld [vmem:[#allocation3 + $0xb0] sm:$0xff]
    %v2001 = vld [vmem:[#allocation3 + $0xb8] sm:$0xff]
    %v2002 = vld [vmem:[#allocation3 + $0xc0] sm:$0xff]
    %v2003 = vld [vmem:[#allocation3 + $0xc8] sm:$0xff]
    %v2004 = vld [vmem:[#allocation3 + $0xd0] sm:$0xff]
    %v2005 = vld [vmem:[#allocation3 + $0xd8] sm:$0xff]
    %v2006 = vld [vmem:[#allocation3 + $0xe0] sm:$0xff]
    %v2007 = vld [vmem:[#allocation3 + $0xe8] sm:$0xff]
    %v2008 = vld [vmem:[#allocation3 + $0xf0] sm:$0xff]
    %v2009 = vld [vmem:[#allocation3 + $0xf8] sm:$0xff]
    %2042 = vrot.lane.b32.xlu0 %v1978, 127
    %v2043 = vpop.permute.xlu0 %2042
    %2044 = vrot.lane.b32.xlu0 %v1979, 127
    %v2045 = vpop.permute.xlu0 %2044
    %2046 = vrot.lane.b32.xlu0 %v1980, 127
    %v2047 = vpop.permute.xlu0 %2046
    %2048 = vrot.lane.b32.xlu0 %v1981, 127
    %v2049 = vpop.permute.xlu0 %2048
    %2050 = vrot.lane.b32.xlu0 %v1982, 127
    %v2051 = vpop.permute.xlu0 %2050
    %2052 = vrot.lane.b32.xlu0 %v1983, 127
    %v2053 = vpop.permute.xlu0 %2052
    %2054 = vrot.lane.b32.xlu0 %v1984, 127
    %v2055 = vpop.permute.xlu0 %2054
    %2056 = vrot.lane.b32.xlu0 %v1985, 127
    %v2057 = vpop.permute.xlu0 %2056
    %2058 = vrot.lane.b32.xlu0 %v1986, 127
    %v2059 = vpop.permute.xlu0 %2058
    %2060 = vrot.lane.b32.xlu0 %v1987, 127
    %v2061 = vpop.permute.xlu0 %2060
    %2062 = vrot.lane.b32.xlu0 %v1988, 127
    %v2063 = vpop.permute.xlu0 %2062
    %2064 = vrot.lane.b32.xlu0 %v1989, 127
    %v2065 = vpop.permute.xlu0 %2064
    %2066 = vrot.lane.b32.xlu0 %v1990, 127
    %v2067 = vpop.permute.xlu0 %2066
    %2068 = vrot.lane.b32.xlu0 %v1991, 127
    %v2069 = vpop.permute.xlu0 %2068
    %2070 = vrot.lane.b32.xlu0 %v1992, 127
    %v2071 = vpop.permute.xlu0 %2070
    %2072 = vrot.lane.b32.xlu0 %v1993, 127
    %v2073 = vpop.permute.xlu0 %2072
    %2074 = vrot.lane.b32.xlu0 %v1994, 127
    %v2075 = vpop.permute.xlu0 %2074
    %2076 = vrot.lane.b32.xlu0 %v1995, 127
    %v2077 = vpop.permute.xlu0 %2076
    %2078 = vrot.lane.b32.xlu0 %v1996, 127
    %v2079 = vpop.permute.xlu0 %2078
    %2080 = vrot.lane.b32.xlu0 %v1997, 127
    %v2081 = vpop.permute.xlu0 %2080
    %2082 = vrot.lane.b32.xlu0 %v1998, 127
    %v2083 = vpop.permute.xlu0 %2082
    %2084 = vrot.lane.b32.xlu0 %v1999, 127
    %v2085 = vpop.permute.xlu0 %2084
    %2086 = vrot.lane.b32.xlu0 %v2000, 127
    %v2087 = vpop.permute.xlu0 %2086
    %2088 = vrot.lane.b32.xlu0 %v2001, 127
    %v2089 = vpop.permute.xlu0 %2088
    %2090 = vrot.lane.b32.xlu0 %v2002, 127
    %v2091 = vpop.permute.xlu0 %2090
    %2092 = vrot.lane.b32.xlu0 %v2003, 127
    %v2093 = vpop.permute.xlu0 %2092
    %2094 = vrot.lane.b32.xlu0 %v2004, 127
    %v2095 = vpop.permute.xlu0 %2094
    %2096 = vrot.lane.b32.xlu0 %v2005, 127
    %v2097 = vpop.permute.xlu0 %2096
    %2098 = vrot.lane.b32.xlu0 %v2006, 127
    %v2099 = vpop.permute.xlu0 %2098
    %2100 = vrot.lane.b32.xlu0 %v2007, 127
    %v2101 = vpop.permute.xlu0 %2100
    %2102 = vrot.lane.b32.xlu0 %v2008, 127
    %v2103 = vpop.permute.xlu0 %2102
    %2104 = vrot.lane.b32.xlu0 %v2009, 127
    %v2105 = vpop.permute.xlu0 %2104
    %v2106 = vrot.slane %v2043, 2
    %v2107 = vrot.slane %v2045, 2
    %v2108 = vrot.slane %v2047, 2
    %v2109 = vrot.slane %v2049, 2
    %v2110 = vrot.slane %v2051, 2
    %v2111 = vrot.slane %v2053, 2
    %v2112 = vrot.slane %v2055, 2
    %v2113 = vrot.slane %v2057, 2
    %v2114 = vrot.slane %v2059, 2
    %v2115 = vrot.slane %v2061, 2
    %v2116 = vrot.slane %v2063, 2
    %v2117 = vrot.slane %v2065, 2
    %v2118 = vrot.slane %v2067, 2
    %v2119 = vrot.slane %v2069, 2
    %v2120 = vrot.slane %v2071, 2
    %v2121 = vrot.slane %v2073, 2
    %v2122 = vrot.slane %v2075, 2
    %v2123 = vrot.slane %v2077, 2
    %v2124 = vrot.slane %v2079, 2
    %v2125 = vrot.slane %v2081, 2
    %v2126 = vrot.slane %v2083, 2
    %v2127 = vrot.slane %v2085, 2
    %v2128 = vrot.slane %v2087, 2
    %v2129 = vrot.slane %v2089, 2
    %v2130 = vrot.slane %v2091, 2
    %v2131 = vrot.slane %v2093, 2
    %v2132 = vrot.slane %v2095, 2
    %v2133 = vrot.slane %v2097, 2
    %v2134 = vrot.slane %v2099, 2
    %v2135 = vrot.slane %v2101, 2
    %v2136 = vrot.slane %v2103, 2
    %v2137 = vrot.slane %v2105, 2
    %v2138 = vsel %vm467, %v2106, %v2107
    %v2139 = vsel %vm43, %v2043, %v2138
    %v2140 = vsel %vm43, %v2045, %v2107
    %v2141 = vsel %vm467, %v2108, %v2109
    %v2142 = vsel %vm43, %v2047, %v2141
    %v2143 = vsel %vm43, %v2049, %v2109
    %v2144 = vsel %vm467, %v2110, %v2111
    %v2145 = vsel %vm43, %v2051, %v2144
    %v2146 = vsel %vm43, %v2053, %v2111
    %v2147 = vsel %vm467, %v2112, %v2113
    %v2148 = vsel %vm43, %v2055, %v2147
    %v2149 = vsel %vm43, %v2057, %v2113
    %v2150 = vsel %vm467, %v2114, %v2115
    %v2151 = vsel %vm43, %v2059, %v2150
    %v2152 = vsel %vm43, %v2061, %v2115
    %v2153 = vsel %vm467, %v2116, %v2117
    %v2154 = vsel %vm43, %v2063, %v2153
    %v2155 = vsel %vm43, %v2065, %v2117
    %v2156 = vsel %vm467, %v2118, %v2119
    %v2157 = vsel %vm43, %v2067, %v2156
    %v2158 = vsel %vm43, %v2069, %v2119
    %v2159 = vsel %vm467, %v2120, %v2121
    %v2160 = vsel %vm43, %v2071, %v2159
    %v2161 = vsel %vm43, %v2073, %v2121
    %v2162 = vsel %vm467, %v2122, %v2123
    %v2163 = vsel %vm43, %v2075, %v2162
    %v2164 = vsel %vm43, %v2077, %v2123
    %v2165 = vsel %vm467, %v2124, %v2125
    %v2166 = vsel %vm43, %v2079, %v2165
    %v2167 = vsel %vm43, %v2081, %v2125
    %v2168 = vsel %vm467, %v2126, %v2127
    %v2169 = vsel %vm43, %v2083, %v2168
    %v2170 = vsel %vm43, %v2085, %v2127
    %v2171 = vsel %vm467, %v2128, %v2129
    %v2172 = vsel %vm43, %v2087, %v2171
    %v2173 = vsel %vm43, %v2089, %v2129
    %v2174 = vsel %vm467, %v2130, %v2131
    %v2175 = vsel %vm43, %v2091, %v2174
    %v2176 = vsel %vm43, %v2093, %v2131
    %v2177 = vsel %vm467, %v2132, %v2133
    %v2178 = vsel %vm43, %v2095, %v2177
    %v2179 = vsel %vm43, %v2097, %v2133
    %v2180 = vsel %vm467, %v2134, %v2135
    %v2181 = vsel %vm43, %v2099, %v2180
    %v2182 = vsel %vm43, %v2101, %v2135
    %v2183 = vsel %vm467, %v2136, %v2137
    %v2184 = vsel %vm43, %v2103, %v2183
    %v2185 = vsel %vm43, %v2105, %v2137
    %v2218 = vmax.f32 %v1978, %v2139
    %v2219 = vmax.f32 %v1979, %v2140
    %v2220 = vmax.f32 %v1980, %v2142
    %v2221 = vmax.f32 %v1981, %v2143
    %v2222 = vmax.f32 %v1982, %v2145
    %v2223 = vmax.f32 %v1983, %v2146
    %v2224 = vmax.f32 %v1984, %v2148
    %v2225 = vmax.f32 %v1985, %v2149
    %v2226 = vmax.f32 %v1986, %v2151
    %v2227 = vmax.f32 %v1987, %v2152
    %v2228 = vmax.f32 %v1988, %v2154
    %v2229 = vmax.f32 %v1989, %v2155
    %v2230 = vmax.f32 %v1990, %v2157
    %v2231 = vmax.f32 %v1991, %v2158
    %v2232 = vmax.f32 %v1992, %v2160
    %v2233 = vmax.f32 %v1993, %v2161
    %v2234 = vmax.f32 %v1994, %v2163
    %v2235 = vmax.f32 %v1995, %v2164
    %v2236 = vmax.f32 %v1996, %v2166
    %v2237 = vmax.f32 %v1997, %v2167
    %v2238 = vmax.f32 %v1998, %v2169
    %v2239 = vmax.f32 %v1999, %v2170
    %v2240 = vmax.f32 %v2000, %v2172
    %v2241 = vmax.f32 %v2001, %v2173
    %v2242 = vmax.f32 %v2002, %v2175
    %v2243 = vmax.f32 %v2003, %v2176
    %v2244 = vmax.f32 %v2004, %v2178
    %v2245 = vmax.f32 %v2005, %v2179
    %v2246 = vmax.f32 %v2006, %v2181
    %v2247 = vmax.f32 %v2007, %v2182
    %v2248 = vmax.f32 %v2008, %v2184
    %v2249 = vmax.f32 %v2009, %v2185
    %2250 = vrot.lane.b32.xlu0 %v1978, 126
    %v2251 = vpop.permute.xlu0 %2250
    %2252 = vrot.lane.b32.xlu0 %v1979, 126
    %v2253 = vpop.permute.xlu0 %2252
    %2254 = vrot.lane.b32.xlu0 %v1980, 126
    %v2255 = vpop.permute.xlu0 %2254
    %2256 = vrot.lane.b32.xlu0 %v1981, 126
    %v2257 = vpop.permute.xlu0 %2256
    %2258 = vrot.lane.b32.xlu0 %v1982, 126
    %v2259 = vpop.permute.xlu0 %2258
    %2260 = vrot.lane.b32.xlu0 %v1983, 126
    %v2261 = vpop.permute.xlu0 %2260
    %2262 = vrot.lane.b32.xlu0 %v1984, 126
    %v2263 = vpop.permute.xlu0 %2262
    %2264 = vrot.lane.b32.xlu0 %v1985, 126
    %v2265 = vpop.permute.xlu0 %2264
    %2266 = vrot.lane.b32.xlu0 %v1986, 126
    %v2267 = vpop.permute.xlu0 %2266
    %2268 = vrot.lane.b32.xlu0 %v1987, 126
    %v2269 = vpop.permute.xlu0 %2268
    %2270 = vrot.lane.b32.xlu0 %v1988, 126
    %v2271 = vpop.permute.xlu0 %2270
    %2272 = vrot.lane.b32.xlu0 %v1989, 126
    %v2273 = vpop.permute.xlu0 %2272
    %2274 = vrot.lane.b32.xlu0 %v1990, 126
    %v2275 = vpop.permute.xlu0 %2274
    %2276 = vrot.lane.b32.xlu0 %v1991, 126
    %v2277 = vpop.permute.xlu0 %2276
    %2278 = vrot.lane.b32.xlu0 %v1992, 126
    %v2279 = vpop.permute.xlu0 %2278
    %2280 = vrot.lane.b32.xlu0 %v1993, 126
    %v2281 = vpop.permute.xlu0 %2280
    %2282 = vrot.lane.b32.xlu0 %v1994, 126
    %v2283 = vpop.permute.xlu0 %2282
    %2284 = vrot.lane.b32.xlu0 %v1995, 126
    %v2285 = vpop.permute.xlu0 %2284
    %2286 = vrot.lane.b32.xlu0 %v1996, 126
    %v2287 = vpop.permute.xlu0 %2286
    %2288 = vrot.lane.b32.xlu0 %v1997, 126
    %v2289 = vpop.permute.xlu0 %2288
    %2290 = vrot.lane.b32.xlu0 %v1998, 126
    %v2291 = vpop.permute.xlu0 %2290
    %2292 = vrot.lane.b32.xlu0 %v1999, 126
    %v2293 = vpop.permute.xlu0 %2292
    %2294 = vrot.lane.b32.xlu0 %v2000, 126
    %v2295 = vpop.permute.xlu0 %2294
    %2296 = vrot.lane.b32.xlu0 %v2001, 126
    %v2297 = vpop.permute.xlu0 %2296
    %2298 = vrot.lane.b32.xlu0 %v2002, 126
    %v2299 = vpop.permute.xlu0 %2298
    %2300 = vrot.lane.b32.xlu0 %v2003, 126
    %v2301 = vpop.permute.xlu0 %2300
    %2302 = vrot.lane.b32.xlu0 %v2004, 126
    %v2303 = vpop.permute.xlu0 %2302
    %2304 = vrot.lane.b32.xlu0 %v2005, 126
    %v2305 = vpop.permute.xlu0 %2304
    %2306 = vrot.lane.b32.xlu0 %v2006, 126
    %v2307 = vpop.permute.xlu0 %2306
    %2308 = vrot.lane.b32.xlu0 %v2007, 126
    %v2309 = vpop.permute.xlu0 %2308
    %2310 = vrot.lane.b32.xlu0 %v2008, 126
    %v2311 = vpop.permute.xlu0 %2310
    %2312 = vrot.lane.b32.xlu0 %v2009, 126
    %v2313 = vpop.permute.xlu0 %2312
    %v2314 = vrot.slane %v2251, 2
    %v2315 = vrot.slane %v2253, 2
    %v2316 = vrot.slane %v2255, 2
    %v2317 = vrot.slane %v2257, 2
    %v2318 = vrot.slane %v2259, 2
    %v2319 = vrot.slane %v2261, 2
    %v2320 = vrot.slane %v2263, 2
    %v2321 = vrot.slane %v2265, 2
    %v2322 = vrot.slane %v2267, 2
    %v2323 = vrot.slane %v2269, 2
    %v2324 = vrot.slane %v2271, 2
    %v2325 = vrot.slane %v2273, 2
    %v2326 = vrot.slane %v2275, 2
    %v2327 = vrot.slane %v2277, 2
    %v2328 = vrot.slane %v2279, 2
    %v2329 = vrot.slane %v2281, 2
    %v2330 = vrot.slane %v2283, 2
    %v2331 = vrot.slane %v2285, 2
    %v2332 = vrot.slane %v2287, 2
    %v2333 = vrot.slane %v2289, 2
    %v2334 = vrot.slane %v2291, 2
    %v2335 = vrot.slane %v2293, 2
    %v2336 = vrot.slane %v2295, 2
    %v2337 = vrot.slane %v2297, 2
    %v2338 = vrot.slane %v2299, 2
    %v2339 = vrot.slane %v2301, 2
    %v2340 = vrot.slane %v2303, 2
    %v2341 = vrot.slane %v2305, 2
    %v2342 = vrot.slane %v2307, 2
    %v2343 = vrot.slane %v2309, 2
    %v2344 = vrot.slane %v2311, 2
    %v2345 = vrot.slane %v2313, 2
    %v2346 = vsel %vm467, %v2314, %v2315
    %v2347 = vsel %vm65, %v2251, %v2346
    %v2348 = vsel %vm65, %v2253, %v2315
    %v2349 = vsel %vm467, %v2316, %v2317
    %v2350 = vsel %vm65, %v2255, %v2349
    %v2351 = vsel %vm65, %v2257, %v2317
    %v2352 = vsel %vm467, %v2318, %v2319
    %v2353 = vsel %vm65, %v2259, %v2352
    %v2354 = vsel %vm65, %v2261, %v2319
    %v2355 = vsel %vm467, %v2320, %v2321
    %v2356 = vsel %vm65, %v2263, %v2355
    %v2357 = vsel %vm65, %v2265, %v2321
    %v2358 = vsel %vm467, %v2322, %v2323
    %v2359 = vsel %vm65, %v2267, %v2358
    %v2360 = vsel %vm65, %v2269, %v2323
    %v2361 = vsel %vm467, %v2324, %v2325
    %v2362 = vsel %vm65, %v2271, %v2361
    %v2363 = vsel %vm65, %v2273, %v2325
    %v2364 = vsel %vm467, %v2326, %v2327
    %v2365 = vsel %vm65, %v2275, %v2364
    %v2366 = vsel %vm65, %v2277, %v2327
    %v2367 = vsel %vm467, %v2328, %v2329
    %v2368 = vsel %vm65, %v2279, %v2367
    %v2369 = vsel %vm65, %v2281, %v2329
    %v2370 = vsel %vm467, %v2330, %v2331
    %v2371 = vsel %vm65, %v2283, %v2370
    %v2372 = vsel %vm65, %v2285, %v2331
    %v2373 = vsel %vm467, %v2332, %v2333
    %v2374 = vsel %vm65, %v2287, %v2373
    %v2375 = vsel %vm65, %v2289, %v2333
    %v2376 = vsel %vm467, %v2334, %v2335
    %v2377 = vsel %vm65, %v2291, %v2376
    %v2378 = vsel %vm65, %v2293, %v2335
    %v2379 = vsel %vm467, %v2336, %v2337
    %v2380 = vsel %vm65, %v2295, %v2379
    %v2381 = vsel %vm65, %v2297, %v2337
    %v2382 = vsel %vm467, %v2338, %v2339
    %v2383 = vsel %vm65, %v2299, %v2382
    %v2384 = vsel %vm65, %v2301, %v2339
    %v2385 = vsel %vm467, %v2340, %v2341
    %v2386 = vsel %vm65, %v2303, %v2385
    %v2387 = vsel %vm65, %v2305, %v2341
    %v2388 = vsel %vm467, %v2342, %v2343
    %v2389 = vsel %vm65, %v2307, %v2388
    %v2390 = vsel %vm65, %v2309, %v2343
    %v2391 = vsel %vm467, %v2344, %v2345
    %v2392 = vsel %vm65, %v2311, %v2391
    %v2393 = vsel %vm65, %v2313, %v2345
    %v2426 = vmax.f32 %v2218, %v2347
    %v2427 = vmax.f32 %v2219, %v2348
    %v2428 = vmax.f32 %v2220, %v2350
    %v2429 = vmax.f32 %v2221, %v2351
    %v2430 = vmax.f32 %v2222, %v2353
    %v2431 = vmax.f32 %v2223, %v2354
    %v2432 = vmax.f32 %v2224, %v2356
    %v2433 = vmax.f32 %v2225, %v2357
    %v2434 = vmax.f32 %v2226, %v2359
    %v2435 = vmax.f32 %v2227, %v2360
    %v2436 = vmax.f32 %v2228, %v2362
    %v2437 = vmax.f32 %v2229, %v2363
    %v2438 = vmax.f32 %v2230, %v2365
    %v2439 = vmax.f32 %v2231, %v2366
    %v2440 = vmax.f32 %v2232, %v2368
    %v2441 = vmax.f32 %v2233, %v2369
    %v2442 = vmax.f32 %v2234, %v2371
    %v2443 = vmax.f32 %v2235, %v2372
    %v2444 = vmax.f32 %v2236, %v2374
    %v2445 = vmax.f32 %v2237, %v2375
    %v2446 = vmax.f32 %v2238, %v2377
    %v2447 = vmax.f32 %v2239, %v2378
    %v2448 = vmax.f32 %v2240, %v2380
    %v2449 = vmax.f32 %v2241, %v2381
    %v2450 = vmax.f32 %v2242, %v2383
    %v2451 = vmax.f32 %v2243, %v2384
    %v2452 = vmax.f32 %v2244, %v2386
    %v2453 = vmax.f32 %v2245, %v2387
    %v2454 = vmax.f32 %v2246, %v2389
    %v2455 = vmax.f32 %v2247, %v2390
    %v2456 = vmax.f32 %v2248, %v2392
    %v2457 = vmax.f32 %v2249, %v2393
    %2458 = vrot.lane.b32.xlu0 %v1978, 125
    %v2459 = vpop.permute.xlu0 %2458
    %2460 = vrot.lane.b32.xlu0 %v1979, 125
    %v2461 = vpop.permute.xlu0 %2460
    %2462 = vrot.lane.b32.xlu0 %v1980, 125
    %v2463 = vpop.permute.xlu0 %2462
    %2464 = vrot.lane.b32.xlu0 %v1981, 125
    %v2465 = vpop.permute.xlu0 %2464
    %2466 = vrot.lane.b32.xlu0 %v1982, 125
    %v2467 = vpop.permute.xlu0 %2466
    %2468 = vrot.lane.b32.xlu0 %v1983, 125
    %v2469 = vpop.permute.xlu0 %2468
    %2470 = vrot.lane.b32.xlu0 %v1984, 125
    %v2471 = vpop.permute.xlu0 %2470
    %2472 = vrot.lane.b32.xlu0 %v1985, 125
    %v2473 = vpop.permute.xlu0 %2472
    %2474 = vrot.lane.b32.xlu0 %v1986, 125
    %v2475 = vpop.permute.xlu0 %2474
    %2476 = vrot.lane.b32.xlu0 %v1987, 125
    %v2477 = vpop.permute.xlu0 %2476
    %2478 = vrot.lane.b32.xlu0 %v1988, 125
    %v2479 = vpop.permute.xlu0 %2478
    %2480 = vrot.lane.b32.xlu0 %v1989, 125
    %v2481 = vpop.permute.xlu0 %2480
    %2482 = vrot.lane.b32.xlu0 %v1990, 125
    %v2483 = vpop.permute.xlu0 %2482
    %2484 = vrot.lane.b32.xlu0 %v1991, 125
    %v2485 = vpop.permute.xlu0 %2484
    %2486 = vrot.lane.b32.xlu0 %v1992, 125
    %v2487 = vpop.permute.xlu0 %2486
    %2488 = vrot.lane.b32.xlu0 %v1993, 125
    %v2489 = vpop.permute.xlu0 %2488
    %2490 = vrot.lane.b32.xlu0 %v1994, 125
    %v2491 = vpop.permute.xlu0 %2490
    %2492 = vrot.lane.b32.xlu0 %v1995, 125
    %v2493 = vpop.permute.xlu0 %2492
    %2494 = vrot.lane.b32.xlu0 %v1996, 125
    %v2495 = vpop.permute.xlu0 %2494
    %2496 = vrot.lane.b32.xlu0 %v1997, 125
    %v2497 = vpop.permute.xlu0 %2496
    %2498 = vrot.lane.b32.xlu0 %v1998, 125
    %v2499 = vpop.permute.xlu0 %2498
    %2500 = vrot.lane.b32.xlu0 %v1999, 125
    %v2501 = vpop.permute.xlu0 %2500
    %2502 = vrot.lane.b32.xlu0 %v2000, 125
    %v2503 = vpop.permute.xlu0 %2502
    %2504 = vrot.lane.b32.xlu0 %v2001, 125
    %v2505 = vpop.permute.xlu0 %2504
    %2506 = vrot.lane.b32.xlu0 %v2002, 125
    %v2507 = vpop.permute.xlu0 %2506
    %2508 = vrot.lane.b32.xlu0 %v2003, 125
    %v2509 = vpop.permute.xlu0 %2508
    %2510 = vrot.lane.b32.xlu0 %v2004, 125
    %v2511 = vpop.permute.xlu0 %2510
    %2512 = vrot.lane.b32.xlu0 %v2005, 125
    %v2513 = vpop.permute.xlu0 %2512
    %2514 = vrot.lane.b32.xlu0 %v2006, 125
    %v2515 = vpop.permute.xlu0 %2514
    %2516 = vrot.lane.b32.xlu0 %v2007, 125
    %v2517 = vpop.permute.xlu0 %2516
    %2518 = vrot.lane.b32.xlu0 %v2008, 125
    %v2519 = vpop.permute.xlu0 %2518
    %2520 = vrot.lane.b32.xlu0 %v2009, 125
    %v2521 = vpop.permute.xlu0 %2520
    %v2522 = vrot.slane %v2459, 2
    %v2523 = vrot.slane %v2461, 2
    %v2524 = vrot.slane %v2463, 2
    %v2525 = vrot.slane %v2465, 2
    %v2526 = vrot.slane %v2467, 2
    %v2527 = vrot.slane %v2469, 2
    %v2528 = vrot.slane %v2471, 2
    %v2529 = vrot.slane %v2473, 2
    %v2530 = vrot.slane %v2475, 2
    %v2531 = vrot.slane %v2477, 2
    %v2532 = vrot.slane %v2479, 2
    %v2533 = vrot.slane %v2481, 2
    %v2534 = vrot.slane %v2483, 2
    %v2535 = vrot.slane %v2485, 2
    %v2536 = vrot.slane %v2487, 2
    %v2537 = vrot.slane %v2489, 2
    %v2538 = vrot.slane %v2491, 2
    %v2539 = vrot.slane %v2493, 2
    %v2540 = vrot.slane %v2495, 2
    %v2541 = vrot.slane %v2497, 2
    %v2542 = vrot.slane %v2499, 2
    %v2543 = vrot.slane %v2501, 2
    %v2544 = vrot.slane %v2503, 2
    %v2545 = vrot.slane %v2505, 2
    %v2546 = vrot.slane %v2507, 2
    %v2547 = vrot.slane %v2509, 2
    %v2548 = vrot.slane %v2511, 2
    %v2549 = vrot.slane %v2513, 2
    %v2550 = vrot.slane %v2515, 2
    %v2551 = vrot.slane %v2517, 2
    %v2552 = vrot.slane %v2519, 2
    %v2553 = vrot.slane %v2521, 2
    %v2554 = vsel %vm467, %v2522, %v2523
    %v2555 = vsel %vm87, %v2459, %v2554
    %v2556 = vsel %vm87, %v2461, %v2523
    %v2557 = vsel %vm467, %v2524, %v2525
    %v2558 = vsel %vm87, %v2463, %v2557
    %v2559 = vsel %vm87, %v2465, %v2525
    %v2560 = vsel %vm467, %v2526, %v2527
    %v2561 = vsel %vm87, %v2467, %v2560
    %v2562 = vsel %vm87, %v2469, %v2527
    %v2563 = vsel %vm467, %v2528, %v2529
    %v2564 = vsel %vm87, %v2471, %v2563
    %v2565 = vsel %vm87, %v2473, %v2529
    %v2566 = vsel %vm467, %v2530, %v2531
    %v2567 = vsel %vm87, %v2475, %v2566
    %v2568 = vsel %vm87, %v2477, %v2531
    %v2569 = vsel %vm467, %v2532, %v2533
    %v2570 = vsel %vm87, %v2479, %v2569
    %v2571 = vsel %vm87, %v2481, %v2533
    %v2572 = vsel %vm467, %v2534, %v2535
    %v2573 = vsel %vm87, %v2483, %v2572
    %v2574 = vsel %vm87, %v2485, %v2535
    %v2575 = vsel %vm467, %v2536, %v2537
    %v2576 = vsel %vm87, %v2487, %v2575
    %v2577 = vsel %vm87, %v2489, %v2537
    %v2578 = vsel %vm467, %v2538, %v2539
    %v2579 = vsel %vm87, %v2491, %v2578
    %v2580 = vsel %vm87, %v2493, %v2539
    %v2581 = vsel %vm467, %v2540, %v2541
    %v2582 = vsel %vm87, %v2495, %v2581
    %v2583 = vsel %vm87, %v2497, %v2541
    %v2584 = vsel %vm467, %v2542, %v2543
    %v2585 = vsel %vm87, %v2499, %v2584
    %v2586 = vsel %vm87, %v2501, %v2543
    %v2587 = vsel %vm467, %v2544, %v2545
    %v2588 = vsel %vm87, %v2503, %v2587
    %v2589 = vsel %vm87, %v2505, %v2545
    %v2590 = vsel %vm467, %v2546, %v2547
    %v2591 = vsel %vm87, %v2507, %v2590
    %v2592 = vsel %vm87, %v2509, %v2547
    %v2593 = vsel %vm467, %v2548, %v2549
    %v2594 = vsel %vm87, %v2511, %v2593
    %v2595 = vsel %vm87, %v2513, %v2549
    %v2596 = vsel %vm467, %v2550, %v2551
    %v2597 = vsel %vm87, %v2515, %v2596
    %v2598 = vsel %vm87, %v2517, %v2551
    %v2599 = vsel %vm467, %v2552, %v2553
    %v2600 = vsel %vm87, %v2519, %v2599
    %v2601 = vsel %vm87, %v2521, %v2553
    %v2634 = vmax.f32 %v2426, %v2555
    %v2635 = vmax.f32 %v2427, %v2556
    %v2636 = vmax.f32 %v2428, %v2558
    %v2637 = vmax.f32 %v2429, %v2559
    %v2638 = vmax.f32 %v2430, %v2561
    %v2639 = vmax.f32 %v2431, %v2562
    %v2640 = vmax.f32 %v2432, %v2564
    %v2641 = vmax.f32 %v2433, %v2565
    %v2642 = vmax.f32 %v2434, %v2567
    %v2643 = vmax.f32 %v2435, %v2568
    %v2644 = vmax.f32 %v2436, %v2570
    %v2645 = vmax.f32 %v2437, %v2571
    %v2646 = vmax.f32 %v2438, %v2573
    %v2647 = vmax.f32 %v2439, %v2574
    %v2648 = vmax.f32 %v2440, %v2576
    %v2649 = vmax.f32 %v2441, %v2577
    %v2650 = vmax.f32 %v2442, %v2579
    %v2651 = vmax.f32 %v2443, %v2580
    %v2652 = vmax.f32 %v2444, %v2582
    %v2653 = vmax.f32 %v2445, %v2583
    %v2654 = vmax.f32 %v2446, %v2585
    %v2655 = vmax.f32 %v2447, %v2586
    %v2656 = vmax.f32 %v2448, %v2588
    %v2657 = vmax.f32 %v2449, %v2589
    %v2658 = vmax.f32 %v2450, %v2591
    %v2659 = vmax.f32 %v2451, %v2592
    %v2660 = vmax.f32 %v2452, %v2594
    %v2661 = vmax.f32 %v2453, %v2595
    %v2662 = vmax.f32 %v2454, %v2597
    %v2663 = vmax.f32 %v2455, %v2598
    %v2664 = vmax.f32 %v2456, %v2600
    %v2665 = vmax.f32 %v2457, %v2601
    %2698 = vrot.lane.b32.xlu0 %v2634, 96
    %v2699 = vpop.permute.xlu0 %2698
    %2700 = vrot.lane.b32.xlu0 %v2635, 96
    %v2701 = vpop.permute.xlu0 %2700
    %2702 = vrot.lane.b32.xlu0 %v2636, 96
    %v2703 = vpop.permute.xlu0 %2702
    %2704 = vrot.lane.b32.xlu0 %v2637, 96
    %v2705 = vpop.permute.xlu0 %2704
    %2706 = vrot.lane.b32.xlu0 %v2638, 96
    %v2707 = vpop.permute.xlu0 %2706
    %2708 = vrot.lane.b32.xlu0 %v2639, 96
    %v2709 = vpop.permute.xlu0 %2708
    %2710 = vrot.lane.b32.xlu0 %v2640, 96
    %v2711 = vpop.permute.xlu0 %2710
    %2712 = vrot.lane.b32.xlu0 %v2641, 96
    %v2713 = vpop.permute.xlu0 %2712
    %2714 = vrot.lane.b32.xlu0 %v2642, 96
    %v2715 = vpop.permute.xlu0 %2714
    %2716 = vrot.lane.b32.xlu0 %v2643, 96
    %v2717 = vpop.permute.xlu0 %2716
    %2718 = vrot.lane.b32.xlu0 %v2644, 96
    %v2719 = vpop.permute.xlu0 %2718
    %2720 = vrot.lane.b32.xlu0 %v2645, 96
    %v2721 = vpop.permute.xlu0 %2720
    %2722 = vrot.lane.b32.xlu0 %v2646, 96
    %v2723 = vpop.permute.xlu0 %2722
    %2724 = vrot.lane.b32.xlu0 %v2647, 96
    %v2725 = vpop.permute.xlu0 %2724
    %2726 = vrot.lane.b32.xlu0 %v2648, 96
    %v2727 = vpop.permute.xlu0 %2726
    %2728 = vrot.lane.b32.xlu0 %v2649, 96
    %v2729 = vpop.permute.xlu0 %2728
    %2730 = vrot.lane.b32.xlu0 %v2650, 96
    %v2731 = vpop.permute.xlu0 %2730
    %2732 = vrot.lane.b32.xlu0 %v2651, 96
    %v2733 = vpop.permute.xlu0 %2732
    %2734 = vrot.lane.b32.xlu0 %v2652, 96
    %v2735 = vpop.permute.xlu0 %2734
    %2736 = vrot.lane.b32.xlu0 %v2653, 96
    %v2737 = vpop.permute.xlu0 %2736
    %2738 = vrot.lane.b32.xlu0 %v2654, 96
    %v2739 = vpop.permute.xlu0 %2738
    %2740 = vrot.lane.b32.xlu0 %v2655, 96
    %v2741 = vpop.permute.xlu0 %2740
    %2742 = vrot.lane.b32.xlu0 %v2656, 96
    %v2743 = vpop.permute.xlu0 %2742
    %2744 = vrot.lane.b32.xlu0 %v2657, 96
    %v2745 = vpop.permute.xlu0 %2744
    %2746 = vrot.lane.b32.xlu0 %v2658, 96
    %v2747 = vpop.permute.xlu0 %2746
    %2748 = vrot.lane.b32.xlu0 %v2659, 96
    %v2749 = vpop.permute.xlu0 %2748
    %2750 = vrot.lane.b32.xlu0 %v2660, 96
    %v2751 = vpop.permute.xlu0 %2750
    %2752 = vrot.lane.b32.xlu0 %v2661, 96
    %v2753 = vpop.permute.xlu0 %2752
    %2754 = vrot.lane.b32.xlu0 %v2662, 96
    %v2755 = vpop.permute.xlu0 %2754
    %2756 = vrot.lane.b32.xlu0 %v2663, 96
    %v2757 = vpop.permute.xlu0 %2756
    %2758 = vrot.lane.b32.xlu0 %v2664, 96
    %v2759 = vpop.permute.xlu0 %2758
    %2760 = vrot.lane.b32.xlu0 %v2665, 96
    %v2761 = vpop.permute.xlu0 %2760
    %v2762 = vrot.slane %v2699, 2
    %v2763 = vrot.slane %v2701, 2
    %v2764 = vrot.slane %v2703, 2
    %v2765 = vrot.slane %v2705, 2
    %v2766 = vrot.slane %v2707, 2
    %v2767 = vrot.slane %v2709, 2
    %v2768 = vrot.slane %v2711, 2
    %v2769 = vrot.slane %v2713, 2
    %v2770 = vrot.slane %v2715, 2
    %v2771 = vrot.slane %v2717, 2
    %v2772 = vrot.slane %v2719, 2
    %v2773 = vrot.slane %v2721, 2
    %v2774 = vrot.slane %v2723, 2
    %v2775 = vrot.slane %v2725, 2
    %v2776 = vrot.slane %v2727, 2
    %v2777 = vrot.slane %v2729, 2
    %v2778 = vrot.slane %v2731, 2
    %v2779 = vrot.slane %v2733, 2
    %v2780 = vrot.slane %v2735, 2
    %v2781 = vrot.slane %v2737, 2
    %v2782 = vrot.slane %v2739, 2
    %v2783 = vrot.slane %v2741, 2
    %v2784 = vrot.slane %v2743, 2
    %v2785 = vrot.slane %v2745, 2
    %v2786 = vrot.slane %v2747, 2
    %v2787 = vrot.slane %v2749, 2
    %v2788 = vrot.slane %v2751, 2
    %v2789 = vrot.slane %v2753, 2
    %v2790 = vrot.slane %v2755, 2
    %v2791 = vrot.slane %v2757, 2
    %v2792 = vrot.slane %v2759, 2
    %v2793 = vrot.slane %v2761, 2
    %v2794 = vsel %vm467, %v2762, %v2763
    %v2795 = vsel %vm131, %v2699, %v2794
    %v2796 = vsel %vm131, %v2701, %v2763
    %v2797 = vsel %vm467, %v2764, %v2765
    %v2798 = vsel %vm131, %v2703, %v2797
    %v2799 = vsel %vm131, %v2705, %v2765
    %v2800 = vsel %vm467, %v2766, %v2767
    %v2801 = vsel %vm131, %v2707, %v2800
    %v2802 = vsel %vm131, %v2709, %v2767
    %v2803 = vsel %vm467, %v2768, %v2769
    %v2804 = vsel %vm131, %v2711, %v2803
    %v2805 = vsel %vm131, %v2713, %v2769
    %v2806 = vsel %vm467, %v2770, %v2771
    %v2807 = vsel %vm131, %v2715, %v2806
    %v2808 = vsel %vm131, %v2717, %v2771
    %v2809 = vsel %vm467, %v2772, %v2773
    %v2810 = vsel %vm131, %v2719, %v2809
    %v2811 = vsel %vm131, %v2721, %v2773
    %v2812 = vsel %vm467, %v2774, %v2775
    %v2813 = vsel %vm131, %v2723, %v2812
    %v2814 = vsel %vm131, %v2725, %v2775
    %v2815 = vsel %vm467, %v2776, %v2777
    %v2816 = vsel %vm131, %v2727, %v2815
    %v2817 = vsel %vm131, %v2729, %v2777
    %v2818 = vsel %vm467, %v2778, %v2779
    %v2819 = vsel %vm131, %v2731, %v2818
    %v2820 = vsel %vm131, %v2733, %v2779
    %v2821 = vsel %vm467, %v2780, %v2781
    %v2822 = vsel %vm131, %v2735, %v2821
    %v2823 = vsel %vm131, %v2737, %v2781
    %v2824 = vsel %vm467, %v2782, %v2783
    %v2825 = vsel %vm131, %v2739, %v2824
    %v2826 = vsel %vm131, %v2741, %v2783
    %v2827 = vsel %vm467, %v2784, %v2785
    %v2828 = vsel %vm131, %v2743, %v2827
    %v2829 = vsel %vm131, %v2745, %v2785
    %v2830 = vsel %vm467, %v2786, %v2787
    %v2831 = vsel %vm131, %v2747, %v2830
    %v2832 = vsel %vm131, %v2749, %v2787
    %v2833 = vsel %vm467, %v2788, %v2789
    %v2834 = vsel %vm131, %v2751, %v2833
    %v2835 = vsel %vm131, %v2753, %v2789
    %v2836 = vsel %vm467, %v2790, %v2791
    %v2837 = vsel %vm131, %v2755, %v2836
    %v2838 = vsel %vm131, %v2757, %v2791
    %v2839 = vsel %vm467, %v2792, %v2793
    %v2840 = vsel %vm131, %v2759, %v2839
    %v2841 = vsel %vm131, %v2761, %v2793
    %v2874 = vmax.f32 %v2634, %v2795
    %v2875 = vmax.f32 %v2635, %v2796
    %v2876 = vmax.f32 %v2636, %v2798
    %v2877 = vmax.f32 %v2637, %v2799
    %v2878 = vmax.f32 %v2638, %v2801
    %v2879 = vmax.f32 %v2639, %v2802
    %v2880 = vmax.f32 %v2640, %v2804
    %v2881 = vmax.f32 %v2641, %v2805
    %v2882 = vmax.f32 %v2642, %v2807
    %v2883 = vmax.f32 %v2643, %v2808
    %v2884 = vmax.f32 %v2644, %v2810
    %v2885 = vmax.f32 %v2645, %v2811
    %v2886 = vmax.f32 %v2646, %v2813
    %v2887 = vmax.f32 %v2647, %v2814
    %v2888 = vmax.f32 %v2648, %v2816
    %v2889 = vmax.f32 %v2649, %v2817
    %v2890 = vmax.f32 %v2650, %v2819
    %v2891 = vmax.f32 %v2651, %v2820
    %v2892 = vmax.f32 %v2652, %v2822
    %v2893 = vmax.f32 %v2653, %v2823
    %v2894 = vmax.f32 %v2654, %v2825
    %v2895 = vmax.f32 %v2655, %v2826
    %v2896 = vmax.f32 %v2656, %v2828
    %v2897 = vmax.f32 %v2657, %v2829
    %v2898 = vmax.f32 %v2658, %v2831
    %v2899 = vmax.f32 %v2659, %v2832
    %v2900 = vmax.f32 %v2660, %v2834
    %v2901 = vmax.f32 %v2661, %v2835
    %v2902 = vmax.f32 %v2662, %v2837
    %v2903 = vmax.f32 %v2663, %v2838
    %v2904 = vmax.f32 %v2664, %v2840
    %v2905 = vmax.f32 %v2665, %v2841
    %2906 = vrot.lane.b32.xlu0 %v2634, 64
    %v2907 = vpop.permute.xlu0 %2906
    %2908 = vrot.lane.b32.xlu0 %v2635, 64
    %v2909 = vpop.permute.xlu0 %2908
    %2910 = vrot.lane.b32.xlu0 %v2636, 64
    %v2911 = vpop.permute.xlu0 %2910
    %2912 = vrot.lane.b32.xlu0 %v2637, 64
    %v2913 = vpop.permute.xlu0 %2912
    %2914 = vrot.lane.b32.xlu0 %v2638, 64
    %v2915 = vpop.permute.xlu0 %2914
    %2916 = vrot.lane.b32.xlu0 %v2639, 64
    %v2917 = vpop.permute.xlu0 %2916
    %2918 = vrot.lane.b32.xlu0 %v2640, 64
    %v2919 = vpop.permute.xlu0 %2918
    %2920 = vrot.lane.b32.xlu0 %v2641, 64
    %v2921 = vpop.permute.xlu0 %2920
    %2922 = vrot.lane.b32.xlu0 %v2642, 64
    %v2923 = vpop.permute.xlu0 %2922
    %2924 = vrot.lane.b32.xlu0 %v2643, 64
    %v2925 = vpop.permute.xlu0 %2924
    %2926 = vrot.lane.b32.xlu0 %v2644, 64
    %v2927 = vpop.permute.xlu0 %2926
    %2928 = vrot.lane.b32.xlu0 %v2645, 64
    %v2929 = vpop.permute.xlu0 %2928
    %2930 = vrot.lane.b32.xlu0 %v2646, 64
    %v2931 = vpop.permute.xlu0 %2930
    %2932 = vrot.lane.b32.xlu0 %v2647, 64
    %v2933 = vpop.permute.xlu0 %2932
    %2934 = vrot.lane.b32.xlu0 %v2648, 64
    %v2935 = vpop.permute.xlu0 %2934
    %2936 = vrot.lane.b32.xlu0 %v2649, 64
    %v2937 = vpop.permute.xlu0 %2936
    %2938 = vrot.lane.b32.xlu0 %v2650, 64
    %v2939 = vpop.permute.xlu0 %2938
    %2940 = vrot.lane.b32.xlu0 %v2651, 64
    %v2941 = vpop.permute.xlu0 %2940
    %2942 = vrot.lane.b32.xlu0 %v2652, 64
    %v2943 = vpop.permute.xlu0 %2942
    %2944 = vrot.lane.b32.xlu0 %v2653, 64
    %v2945 = vpop.permute.xlu0 %2944
    %2946 = vrot.lane.b32.xlu0 %v2654, 64
    %v2947 = vpop.permute.xlu0 %2946
    %2948 = vrot.lane.b32.xlu0 %v2655, 64
    %v2949 = vpop.permute.xlu0 %2948
    %2950 = vrot.lane.b32.xlu0 %v2656, 64
    %v2951 = vpop.permute.xlu0 %2950
    %2952 = vrot.lane.b32.xlu0 %v2657, 64
    %v2953 = vpop.permute.xlu0 %2952
    %2954 = vrot.lane.b32.xlu0 %v2658, 64
    %v2955 = vpop.permute.xlu0 %2954
    %2956 = vrot.lane.b32.xlu0 %v2659, 64
    %v2957 = vpop.permute.xlu0 %2956
    %2958 = vrot.lane.b32.xlu0 %v2660, 64
    %v2959 = vpop.permute.xlu0 %2958
    %2960 = vrot.lane.b32.xlu0 %v2661, 64
    %v2961 = vpop.permute.xlu0 %2960
    %2962 = vrot.lane.b32.xlu0 %v2662, 64
    %v2963 = vpop.permute.xlu0 %2962
    %2964 = vrot.lane.b32.xlu0 %v2663, 64
    %v2965 = vpop.permute.xlu0 %2964
    %2966 = vrot.lane.b32.xlu0 %v2664, 64
    %v2967 = vpop.permute.xlu0 %2966
    %2968 = vrot.lane.b32.xlu0 %v2665, 64
    %v2969 = vpop.permute.xlu0 %2968
    %v2970 = vrot.slane %v2907, 2
    %v2971 = vrot.slane %v2909, 2
    %v2972 = vrot.slane %v2911, 2
    %v2973 = vrot.slane %v2913, 2
    %v2974 = vrot.slane %v2915, 2
    %v2975 = vrot.slane %v2917, 2
    %v2976 = vrot.slane %v2919, 2
    %v2977 = vrot.slane %v2921, 2
    %v2978 = vrot.slane %v2923, 2
    %v2979 = vrot.slane %v2925, 2
    %v2980 = vrot.slane %v2927, 2
    %v2981 = vrot.slane %v2929, 2
    %v2982 = vrot.slane %v2931, 2
    %v2983 = vrot.slane %v2933, 2
    %v2984 = vrot.slane %v2935, 2
    %v2985 = vrot.slane %v2937, 2
    %v2986 = vrot.slane %v2939, 2
    %v2987 = vrot.slane %v2941, 2
    %v2988 = vrot.slane %v2943, 2
    %v2989 = vrot.slane %v2945, 2
    %v2990 = vrot.slane %v2947, 2
    %v2991 = vrot.slane %v2949, 2
    %v2992 = vrot.slane %v2951, 2
    %v2993 = vrot.slane %v2953, 2
    %v2994 = vrot.slane %v2955, 2
    %v2995 = vrot.slane %v2957, 2
    %v2996 = vrot.slane %v2959, 2
    %v2997 = vrot.slane %v2961, 2
    %v2998 = vrot.slane %v2963, 2
    %v2999 = vrot.slane %v2965, 2
    %v3000 = vrot.slane %v2967, 2
    %v3001 = vrot.slane %v2969, 2
    %v3002 = vsel %vm467, %v2970, %v2971
    %v3003 = vsel %vm241, %v2907, %v3002
    %v3004 = vsel %vm241, %v2909, %v2971
    %v3005 = vsel %vm467, %v2972, %v2973
    %v3006 = vsel %vm241, %v2911, %v3005
    %v3007 = vsel %vm241, %v2913, %v2973
    %v3008 = vsel %vm467, %v2974, %v2975
    %v3009 = vsel %vm241, %v2915, %v3008
    %v3010 = vsel %vm241, %v2917, %v2975
    %v3011 = vsel %vm467, %v2976, %v2977
    %v3012 = vsel %vm241, %v2919, %v3011
    %v3013 = vsel %vm241, %v2921, %v2977
    %v3014 = vsel %vm467, %v2978, %v2979
    %v3015 = vsel %vm241, %v2923, %v3014
    %v3016 = vsel %vm241, %v2925, %v2979
    %v3017 = vsel %vm467, %v2980, %v2981
    %v3018 = vsel %vm241, %v2927, %v3017
    %v3019 = vsel %vm241, %v2929, %v2981
    %v3020 = vsel %vm467, %v2982, %v2983
    %v3021 = vsel %vm241, %v2931, %v3020
    %v3022 = vsel %vm241, %v2933, %v2983
    %v3023 = vsel %vm467, %v2984, %v2985
    %v3024 = vsel %vm241, %v2935, %v3023
    %v3025 = vsel %vm241, %v2937, %v2985
    %v3026 = vsel %vm467, %v2986, %v2987
    %v3027 = vsel %vm241, %v2939, %v3026
    %v3028 = vsel %vm241, %v2941, %v2987
    %v3029 = vsel %vm467, %v2988, %v2989
    %v3030 = vsel %vm241, %v2943, %v3029
    %v3031 = vsel %vm241, %v2945, %v2989
    %v3032 = vsel %vm467, %v2990, %v2991
    %v3033 = vsel %vm241, %v2947, %v3032
    %v3034 = vsel %vm241, %v2949, %v2991
    %v3035 = vsel %vm467, %v2992, %v2993
    %v3036 = vsel %vm241, %v2951, %v3035
    %v3037 = vsel %vm241, %v2953, %v2993
    %v3038 = vsel %vm467, %v2994, %v2995
    %v3039 = vsel %vm241, %v2955, %v3038
    %v3040 = vsel %vm241, %v2957, %v2995
    %v3041 = vsel %vm467, %v2996, %v2997
    %v3042 = vsel %vm241, %v2959, %v3041
    %v3043 = vsel %vm241, %v2961, %v2997
    %v3044 = vsel %vm467, %v2998, %v2999
    %v3045 = vsel %vm241, %v2963, %v3044
    %v3046 = vsel %vm241, %v2965, %v2999
    %v3047 = vsel %vm467, %v3000, %v3001
    %v3048 = vsel %vm241, %v2967, %v3047
    %v3049 = vsel %vm241, %v2969, %v3001
    %v3082 = vmax.f32 %v2874, %v3003
    %v3083 = vmax.f32 %v2875, %v3004
    %v3084 = vmax.f32 %v2876, %v3006
    %v3085 = vmax.f32 %v2877, %v3007
    %v3086 = vmax.f32 %v2878, %v3009
    %v3087 = vmax.f32 %v2879, %v3010
    %v3088 = vmax.f32 %v2880, %v3012
    %v3089 = vmax.f32 %v2881, %v3013
    %v3090 = vmax.f32 %v2882, %v3015
    %v3091 = vmax.f32 %v2883, %v3016
    %v3092 = vmax.f32 %v2884, %v3018
    %v3093 = vmax.f32 %v2885, %v3019
    %v3094 = vmax.f32 %v2886, %v3021
    %v3095 = vmax.f32 %v2887, %v3022
    %v3096 = vmax.f32 %v2888, %v3024
    %v3097 = vmax.f32 %v2889, %v3025
    %v3098 = vmax.f32 %v2890, %v3027
    %v3099 = vmax.f32 %v2891, %v3028
    %v3100 = vmax.f32 %v2892, %v3030
    %v3101 = vmax.f32 %v2893, %v3031
    %v3102 = vmax.f32 %v2894, %v3033
    %v3103 = vmax.f32 %v2895, %v3034
    %v3104 = vmax.f32 %v2896, %v3036
    %v3105 = vmax.f32 %v2897, %v3037
    %v3106 = vmax.f32 %v2898, %v3039
    %v3107 = vmax.f32 %v2899, %v3040
    %v3108 = vmax.f32 %v2900, %v3042
    %v3109 = vmax.f32 %v2901, %v3043
    %v3110 = vmax.f32 %v2902, %v3045
    %v3111 = vmax.f32 %v2903, %v3046
    %v3112 = vmax.f32 %v2904, %v3048
    %v3113 = vmax.f32 %v2905, %v3049
    %3114 = vrot.lane.b32.xlu0 %v2634, 32
    %v3115 = vpop.permute.xlu0 %3114
    %3116 = vrot.lane.b32.xlu0 %v2635, 32
    %v3117 = vpop.permute.xlu0 %3116
    %3118 = vrot.lane.b32.xlu0 %v2636, 32
    %v3119 = vpop.permute.xlu0 %3118
    %3120 = vrot.lane.b32.xlu0 %v2637, 32
    %v3121 = vpop.permute.xlu0 %3120
    %3122 = vrot.lane.b32.xlu0 %v2638, 32
    %v3123 = vpop.permute.xlu0 %3122
    %3124 = vrot.lane.b32.xlu0 %v2639, 32
    %v3125 = vpop.permute.xlu0 %3124
    %3126 = vrot.lane.b32.xlu0 %v2640, 32
    %v3127 = vpop.permute.xlu0 %3126
    %3128 = vrot.lane.b32.xlu0 %v2641, 32
    %v3129 = vpop.permute.xlu0 %3128
    %3130 = vrot.lane.b32.xlu0 %v2642, 32
    %v3131 = vpop.permute.xlu0 %3130
    %3132 = vrot.lane.b32.xlu0 %v2643, 32
    %v3133 = vpop.permute.xlu0 %3132
    %3134 = vrot.lane.b32.xlu0 %v2644, 32
    %v3135 = vpop.permute.xlu0 %3134
    %3136 = vrot.lane.b32.xlu0 %v2645, 32
    %v3137 = vpop.permute.xlu0 %3136
    %3138 = vrot.lane.b32.xlu0 %v2646, 32
    %v3139 = vpop.permute.xlu0 %3138
    %3140 = vrot.lane.b32.xlu0 %v2647, 32
    %v3141 = vpop.permute.xlu0 %3140
    %3142 = vrot.lane.b32.xlu0 %v2648, 32
    %v3143 = vpop.permute.xlu0 %3142
    %3144 = vrot.lane.b32.xlu0 %v2649, 32
    %v3145 = vpop.permute.xlu0 %3144
    %3146 = vrot.lane.b32.xlu0 %v2650, 32
    %v3147 = vpop.permute.xlu0 %3146
    %3148 = vrot.lane.b32.xlu0 %v2651, 32
    %v3149 = vpop.permute.xlu0 %3148
    %3150 = vrot.lane.b32.xlu0 %v2652, 32
    %v3151 = vpop.permute.xlu0 %3150
    %3152 = vrot.lane.b32.xlu0 %v2653, 32
    %v3153 = vpop.permute.xlu0 %3152
    %3154 = vrot.lane.b32.xlu0 %v2654, 32
    %v3155 = vpop.permute.xlu0 %3154
    %3156 = vrot.lane.b32.xlu0 %v2655, 32
    %v3157 = vpop.permute.xlu0 %3156
    %3158 = vrot.lane.b32.xlu0 %v2656, 32
    %v3159 = vpop.permute.xlu0 %3158
    %3160 = vrot.lane.b32.xlu0 %v2657, 32
    %v3161 = vpop.permute.xlu0 %3160
    %3162 = vrot.lane.b32.xlu0 %v2658, 32
    %v3163 = vpop.permute.xlu0 %3162
    %3164 = vrot.lane.b32.xlu0 %v2659, 32
    %v3165 = vpop.permute.xlu0 %3164
    %3166 = vrot.lane.b32.xlu0 %v2660, 32
    %v3167 = vpop.permute.xlu0 %3166
    %3168 = vrot.lane.b32.xlu0 %v2661, 32
    %v3169 = vpop.permute.xlu0 %3168
    %3170 = vrot.lane.b32.xlu0 %v2662, 32
    %v3171 = vpop.permute.xlu0 %3170
    %3172 = vrot.lane.b32.xlu0 %v2663, 32
    %v3173 = vpop.permute.xlu0 %3172
    %3174 = vrot.lane.b32.xlu0 %v2664, 32
    %v3175 = vpop.permute.xlu0 %3174
    %3176 = vrot.lane.b32.xlu0 %v2665, 32
    %v3177 = vpop.permute.xlu0 %3176
    %v3178 = vrot.slane %v3115, 2
    %v3179 = vrot.slane %v3117, 2
    %v3180 = vrot.slane %v3119, 2
    %v3181 = vrot.slane %v3121, 2
    %v3182 = vrot.slane %v3123, 2
    %v3183 = vrot.slane %v3125, 2
    %v3184 = vrot.slane %v3127, 2
    %v3185 = vrot.slane %v3129, 2
    %v3186 = vrot.slane %v3131, 2
    %v3187 = vrot.slane %v3133, 2
    %v3188 = vrot.slane %v3135, 2
    %v3189 = vrot.slane %v3137, 2
    %v3190 = vrot.slane %v3139, 2
    %v3191 = vrot.slane %v3141, 2
    %v3192 = vrot.slane %v3143, 2
    %v3193 = vrot.slane %v3145, 2
    %v3194 = vrot.slane %v3147, 2
    %v3195 = vrot.slane %v3149, 2
    %v3196 = vrot.slane %v3151, 2
    %v3197 = vrot.slane %v3153, 2
    %v3198 = vrot.slane %v3155, 2
    %v3199 = vrot.slane %v3157, 2
    %v3200 = vrot.slane %v3159, 2
    %v3201 = vrot.slane %v3161, 2
    %v3202 = vrot.slane %v3163, 2
    %v3203 = vrot.slane %v3165, 2
    %v3204 = vrot.slane %v3167, 2
    %v3205 = vrot.slane %v3169, 2
    %v3206 = vrot.slane %v3171, 2
    %v3207 = vrot.slane %v3173, 2
    %v3208 = vrot.slane %v3175, 2
    %v3209 = vrot.slane %v3177, 2
    %v3210 = vsel %vm467, %v3178, %v3179
    %v3211 = vsel %vm351, %v3115, %v3210
    %v3212 = vsel %vm351, %v3117, %v3179
    %v3213 = vsel %vm467, %v3180, %v3181
    %v3214 = vsel %vm351, %v3119, %v3213
    %v3215 = vsel %vm351, %v3121, %v3181
    %v3216 = vsel %vm467, %v3182, %v3183
    %v3217 = vsel %vm351, %v3123, %v3216
    %v3218 = vsel %vm351, %v3125, %v3183
    %v3219 = vsel %vm467, %v3184, %v3185
    %v3220 = vsel %vm351, %v3127, %v3219
    %v3221 = vsel %vm351, %v3129, %v3185
    %v3222 = vsel %vm467, %v3186, %v3187
    %v3223 = vsel %vm351, %v3131, %v3222
    %v3224 = vsel %vm351, %v3133, %v3187
    %v3225 = vsel %vm467, %v3188, %v3189
    %v3226 = vsel %vm351, %v3135, %v3225
    %v3227 = vsel %vm351, %v3137, %v3189
    %v3228 = vsel %vm467, %v3190, %v3191
    %v3229 = vsel %vm351, %v3139, %v3228
    %v3230 = vsel %vm351, %v3141, %v3191
    %v3231 = vsel %vm467, %v3192, %v3193
    %v3232 = vsel %vm351, %v3143, %v3231
    %v3233 = vsel %vm351, %v3145, %v3193
    %v3234 = vsel %vm467, %v3194, %v3195
    %v3235 = vsel %vm351, %v3147, %v3234
    %v3236 = vsel %vm351, %v3149, %v3195
    %v3237 = vsel %vm467, %v3196, %v3197
    %v3238 = vsel %vm351, %v3151, %v3237
    %v3239 = vsel %vm351, %v3153, %v3197
    %v3240 = vsel %vm467, %v3198, %v3199
    %v3241 = vsel %vm351, %v3155, %v3240
    %v3242 = vsel %vm351, %v3157, %v3199
    %v3243 = vsel %vm467, %v3200, %v3201
    %v3244 = vsel %vm351, %v3159, %v3243
    %v3245 = vsel %vm351, %v3161, %v3201
    %v3246 = vsel %vm467, %v3202, %v3203
    %v3247 = vsel %vm351, %v3163, %v3246
    %v3248 = vsel %vm351, %v3165, %v3203
    %v3249 = vsel %vm467, %v3204, %v3205
    %v3250 = vsel %vm351, %v3167, %v3249
    %v3251 = vsel %vm351, %v3169, %v3205
    %v3252 = vsel %vm467, %v3206, %v3207
    %v3253 = vsel %vm351, %v3171, %v3252
    %v3254 = vsel %vm351, %v3173, %v3207
    %v3255 = vsel %vm467, %v3208, %v3209
    %v3256 = vsel %vm351, %v3175, %v3255
    %v3257 = vsel %vm351, %v3177, %v3209
    %v3290 = vmax.f32 %v3082, %v3211
    %v3291 = vmax.f32 %v3083, %v3212
    %v3292 = vmax.f32 %v3084, %v3214
    %v3293 = vmax.f32 %v3085, %v3215
    %v3294 = vmax.f32 %v3086, %v3217
    %v3295 = vmax.f32 %v3087, %v3218
    %v3296 = vmax.f32 %v3088, %v3220
    %v3297 = vmax.f32 %v3089, %v3221
    %v3298 = vmax.f32 %v3090, %v3223
    %v3299 = vmax.f32 %v3091, %v3224
    %v3300 = vmax.f32 %v3092, %v3226
    %v3301 = vmax.f32 %v3093, %v3227
    %v3302 = vmax.f32 %v3094, %v3229
    %v3303 = vmax.f32 %v3095, %v3230
    %v3304 = vmax.f32 %v3096, %v3232
    %v3305 = vmax.f32 %v3097, %v3233
    %v3306 = vmax.f32 %v3098, %v3235
    %v3307 = vmax.f32 %v3099, %v3236
    %v3308 = vmax.f32 %v3100, %v3238
    %v3309 = vmax.f32 %v3101, %v3239
    %v3310 = vmax.f32 %v3102, %v3241
    %v3311 = vmax.f32 %v3103, %v3242
    %v3312 = vmax.f32 %v3104, %v3244
    %v3313 = vmax.f32 %v3105, %v3245
    %v3314 = vmax.f32 %v3106, %v3247
    %v3315 = vmax.f32 %v3107, %v3248
    %v3316 = vmax.f32 %v3108, %v3250
    %v3317 = vmax.f32 %v3109, %v3251
    %v3318 = vmax.f32 %v3110, %v3253
    %v3319 = vmax.f32 %v3111, %v3254
    %v3320 = vmax.f32 %v3112, %v3256
    %v3321 = vmax.f32 %v3113, %v3257
    %v3322 = vld [vmem:[%s3] sm:$0xff]
    %v3323 = vld [vmem:[%s3 + $0x8] sm:$0xff]
    %v3324 = vld [vmem:[%s3 + $0x10] sm:$0xff]
    %v3325 = vld [vmem:[%s3 + $0x18] sm:$0xff]
    %v3326 = vld [vmem:[%s3 + $0x20] sm:$0xff]
    %v3327 = vld [vmem:[%s3 + $0x28] sm:$0xff]
    %v3328 = vld [vmem:[%s3 + $0x30] sm:$0xff]
    %v3329 = vld [vmem:[%s3 + $0x38] sm:$0xff]
    %v3330 = vld [vmem:[%s3 + $0x40] sm:$0xff]
    %v3331 = vld [vmem:[%s3 + $0x48] sm:$0xff]
    %v3332 = vld [vmem:[%s3 + $0x50] sm:$0xff]
    %v3333 = vld [vmem:[%s3 + $0x58] sm:$0xff]
    %v3334 = vld [vmem:[%s3 + $0x60] sm:$0xff]
    %v3335 = vld [vmem:[%s3 + $0x68] sm:$0xff]
    %v3336 = vld [vmem:[%s3 + $0x70] sm:$0xff]
    %v3337 = vld [vmem:[%s3 + $0x78] sm:$0xff]
    %v3338 = vld [vmem:[%s3 + $0x80] sm:$0xff]
    %v3339 = vld [vmem:[%s3 + $0x88] sm:$0xff]
    %v3340 = vld [vmem:[%s3 + $0x90] sm:$0xff]
    %v3341 = vld [vmem:[%s3 + $0x98] sm:$0xff]
    %v3342 = vld [vmem:[%s3 + $0xa0] sm:$0xff]
    %v3343 = vld [vmem:[%s3 + $0xa8] sm:$0xff]
    %v3344 = vld [vmem:[%s3 + $0xb0] sm:$0xff]
    %v3345 = vld [vmem:[%s3 + $0xb8] sm:$0xff]
    %v3346 = vld [vmem:[%s3 + $0xc0] sm:$0x3]
    %v3347 = vld [vmem:[%s3 + $0xc8] sm:$0x3]
    %v3348 = vld [vmem:[%s3 + $0xd0] sm:$0x3]
    %v3349 = vld [vmem:[%s3 + $0xd8] sm:$0x3]
    %v3350 = vld [vmem:[%s3 + $0xe0] sm:$0x3]
    %v3351 = vld [vmem:[%s3 + $0xe8] sm:$0x3]
    %v3352 = vld [vmem:[%s3 + $0xf0] sm:$0x3]
    %v3353 = vld [vmem:[%s3 + $0xf8] sm:$0x3]
    %v3354 = vld [vmem:[%s3 + $0x100] sm:$0xff]
    %v3355 = vld [vmem:[%s3 + $0x108] sm:$0xff]
    %v3356 = vld [vmem:[%s3 + $0x110] sm:$0xff]
    %v3357 = vld [vmem:[%s3 + $0x118] sm:$0xff]
    %v3358 = vld [vmem:[%s3 + $0x120] sm:$0xff]
    %v3359 = vld [vmem:[%s3 + $0x128] sm:$0xff]
    %v3360 = vld [vmem:[%s3 + $0x130] sm:$0xff]
    %v3361 = vld [vmem:[%s3 + $0x138] sm:$0xff]
    %v3362 = vld [vmem:[%s3 + $0x140] sm:$0xff]
    %v3363 = vld [vmem:[%s3 + $0x148] sm:$0xff]
    %v3364 = vld [vmem:[%s3 + $0x150] sm:$0xff]
    %v3365 = vld [vmem:[%s3 + $0x158] sm:$0xff]
    %v3366 = vld [vmem:[%s3 + $0x160] sm:$0xff]
    %v3367 = vld [vmem:[%s3 + $0x168] sm:$0xff]
    %v3368 = vld [vmem:[%s3 + $0x170] sm:$0xff]
    %v3369 = vld [vmem:[%s3 + $0x178] sm:$0xff]
    %v3370 = vld [vmem:[%s3 + $0x180] sm:$0xff]
    %v3371 = vld [vmem:[%s3 + $0x188] sm:$0xff]
    %v3372 = vld [vmem:[%s3 + $0x190] sm:$0xff]
    %v3373 = vld [vmem:[%s3 + $0x198] sm:$0xff]
    %v3374 = vld [vmem:[%s3 + $0x1a0] sm:$0xff]
    %v3375 = vld [vmem:[%s3 + $0x1a8] sm:$0xff]
    %v3376 = vld [vmem:[%s3 + $0x1b0] sm:$0xff]
    %v3377 = vld [vmem:[%s3 + $0x1b8] sm:$0xff]
    %v3378 = vld [vmem:[%s3 + $0x1c0] sm:$0x3]
    %v3379 = vld [vmem:[%s3 + $0x1c8] sm:$0x3]
    %v3380 = vld [vmem:[%s3 + $0x1d0] sm:$0x3]
    %v3381 = vld [vmem:[%s3 + $0x1d8] sm:$0x3]
    %v3382 = vld [vmem:[%s3 + $0x1e0] sm:$0x3]
    %v3383 = vld [vmem:[%s3 + $0x1e8] sm:$0x3]
    %v3384 = vld [vmem:[%s3 + $0x1f0] sm:$0x3]
    %v3385 = vld [vmem:[%s3 + $0x1f8] sm:$0x3]
    %v3386 = vld [vmem:[%s3 + $0x200] sm:$0xff]
    %v3387 = vld [vmem:[%s3 + $0x208] sm:$0xff]
    %v3388 = vld [vmem:[%s3 + $0x210] sm:$0xff]
    %v3389 = vld [vmem:[%s3 + $0x218] sm:$0xff]
    %v3390 = vld [vmem:[%s3 + $0x220] sm:$0xff]
    %v3391 = vld [vmem:[%s3 + $0x228] sm:$0xff]
    %v3392 = vld [vmem:[%s3 + $0x230] sm:$0xff]
    %v3393 = vld [vmem:[%s3 + $0x238] sm:$0xff]
    %v3394 = vld [vmem:[%s3 + $0x240] sm:$0xff]
    %v3395 = vld [vmem:[%s3 + $0x248] sm:$0xff]
    %v3396 = vld [vmem:[%s3 + $0x250] sm:$0xff]
    %v3397 = vld [vmem:[%s3 + $0x258] sm:$0xff]
    %v3398 = vld [vmem:[%s3 + $0x260] sm:$0xff]
    %v3399 = vld [vmem:[%s3 + $0x268] sm:$0xff]
    %v3400 = vld [vmem:[%s3 + $0x270] sm:$0xff]
    %v3401 = vld [vmem:[%s3 + $0x278] sm:$0xff]
    %v3402 = vld [vmem:[%s3 + $0x280] sm:$0xff]
    %v3403 = vld [vmem:[%s3 + $0x288] sm:$0xff]
    %v3404 = vld [vmem:[%s3 + $0x290] sm:$0xff]
    %v3405 = vld [vmem:[%s3 + $0x298] sm:$0xff]
    %v3406 = vld [vmem:[%s3 + $0x2a0] sm:$0xff]
    %v3407 = vld [vmem:[%s3 + $0x2a8] sm:$0xff]
    %v3408 = vld [vmem:[%s3 + $0x2b0] sm:$0xff]
    %v3409 = vld [vmem:[%s3 + $0x2b8] sm:$0xff]
    %v3410 = vld [vmem:[%s3 + $0x2c0] sm:$0x3]
    %v3411 = vld [vmem:[%s3 + $0x2c8] sm:$0x3]
    %v3412 = vld [vmem:[%s3 + $0x2d0] sm:$0x3]
    %v3413 = vld [vmem:[%s3 + $0x2d8] sm:$0x3]
    %v3414 = vld [vmem:[%s3 + $0x2e0] sm:$0x3]
    %v3415 = vld [vmem:[%s3 + $0x2e8] sm:$0x3]
    %v3416 = vld [vmem:[%s3 + $0x2f0] sm:$0x3]
    %v3417 = vld [vmem:[%s3 + $0x2f8] sm:$0x3]
    %v3418 = vld [vmem:[%s3 + $0x300] sm:$0xff]
    %v3419 = vld [vmem:[%s3 + $0x308] sm:$0xff]
    %v3420 = vld [vmem:[%s3 + $0x310] sm:$0xff]
    %v3421 = vld [vmem:[%s3 + $0x318] sm:$0xff]
    %v3422 = vld [vmem:[%s3 + $0x320] sm:$0xff]
    %v3423 = vld [vmem:[%s3 + $0x328] sm:$0xff]
    %v3424 = vld [vmem:[%s3 + $0x330] sm:$0xff]
    %v3425 = vld [vmem:[%s3 + $0x338] sm:$0xff]
    %v3426 = vld [vmem:[%s3 + $0x340] sm:$0xff]
    %v3427 = vld [vmem:[%s3 + $0x348] sm:$0xff]
    %v3428 = vld [vmem:[%s3 + $0x350] sm:$0xff]
    %v3429 = vld [vmem:[%s3 + $0x358] sm:$0xff]
    %v3430 = vld [vmem:[%s3 + $0x360] sm:$0xff]
    %v3431 = vld [vmem:[%s3 + $0x368] sm:$0xff]
    %v3432 = vld [vmem:[%s3 + $0x370] sm:$0xff]
    %v3433 = vld [vmem:[%s3 + $0x378] sm:$0xff]
    %v3434 = vld [vmem:[%s3 + $0x380] sm:$0xff]
    %v3435 = vld [vmem:[%s3 + $0x388] sm:$0xff]
    %v3436 = vld [vmem:[%s3 + $0x390] sm:$0xff]
    %v3437 = vld [vmem:[%s3 + $0x398] sm:$0xff]
    %v3438 = vld [vmem:[%s3 + $0x3a0] sm:$0xff]
    %v3439 = vld [vmem:[%s3 + $0x3a8] sm:$0xff]
    %v3440 = vld [vmem:[%s3 + $0x3b0] sm:$0xff]
    %v3441 = vld [vmem:[%s3 + $0x3b8] sm:$0xff]
    %v3442 = vld [vmem:[%s3 + $0x3c0] sm:$0x3]
    %v3443 = vld [vmem:[%s3 + $0x3c8] sm:$0x3]
    %v3444 = vld [vmem:[%s3 + $0x3d0] sm:$0x3]
    %v3445 = vld [vmem:[%s3 + $0x3d8] sm:$0x3]
    %v3446 = vld [vmem:[%s3 + $0x3e0] sm:$0x3]
    %v3447 = vld [vmem:[%s3 + $0x3e8] sm:$0x3]
    %v3448 = vld [vmem:[%s3 + $0x3f0] sm:$0x3]
    %v3449 = vld [vmem:[%s3 + $0x3f8] sm:$0x3]
    %v3450 = vld [vmem:[%s3 + $0x400] sm:$0xff]
    %v3451 = vld [vmem:[%s3 + $0x408] sm:$0xff]
    %v3452 = vld [vmem:[%s3 + $0x410] sm:$0xff]
    %v3453 = vld [vmem:[%s3 + $0x418] sm:$0xff]
    %v3454 = vld [vmem:[%s3 + $0x420] sm:$0xff]
    %v3455 = vld [vmem:[%s3 + $0x428] sm:$0xff]
    %v3456 = vld [vmem:[%s3 + $0x430] sm:$0xff]
    %v3457 = vld [vmem:[%s3 + $0x438] sm:$0xff]
    %v3458 = vld [vmem:[%s3 + $0x440] sm:$0xff]
    %v3459 = vld [vmem:[%s3 + $0x448] sm:$0xff]
    %v3460 = vld [vmem:[%s3 + $0x450] sm:$0xff]
    %v3461 = vld [vmem:[%s3 + $0x458] sm:$0xff]
    %v3462 = vld [vmem:[%s3 + $0x460] sm:$0xff]
    %v3463 = vld [vmem:[%s3 + $0x468] sm:$0xff]
    %v3464 = vld [vmem:[%s3 + $0x470] sm:$0xff]
    %v3465 = vld [vmem:[%s3 + $0x478] sm:$0xff]
    %v3466 = vld [vmem:[%s3 + $0x480] sm:$0xff]
    %v3467 = vld [vmem:[%s3 + $0x488] sm:$0xff]
    %v3468 = vld [vmem:[%s3 + $0x490] sm:$0xff]
    %v3469 = vld [vmem:[%s3 + $0x498] sm:$0xff]
    %v3470 = vld [vmem:[%s3 + $0x4a0] sm:$0xff]
    %v3471 = vld [vmem:[%s3 + $0x4a8] sm:$0xff]
    %v3472 = vld [vmem:[%s3 + $0x4b0] sm:$0xff]
    %v3473 = vld [vmem:[%s3 + $0x4b8] sm:$0xff]
    %v3474 = vld [vmem:[%s3 + $0x4c0] sm:$0x3]
    %v3475 = vld [vmem:[%s3 + $0x4c8] sm:$0x3]
    %v3476 = vld [vmem:[%s3 + $0x4d0] sm:$0x3]
    %v3477 = vld [vmem:[%s3 + $0x4d8] sm:$0x3]
    %v3478 = vld [vmem:[%s3 + $0x4e0] sm:$0x3]
    %v3479 = vld [vmem:[%s3 + $0x4e8] sm:$0x3]
    %v3480 = vld [vmem:[%s3 + $0x4f0] sm:$0x3]
    %v3481 = vld [vmem:[%s3 + $0x4f8] sm:$0x3]
    %v3482 = vld [vmem:[%s3 + $0x500] sm:$0xff]
    %v3483 = vld [vmem:[%s3 + $0x508] sm:$0xff]
    %v3484 = vld [vmem:[%s3 + $0x510] sm:$0xff]
    %v3485 = vld [vmem:[%s3 + $0x518] sm:$0xff]
    %v3486 = vld [vmem:[%s3 + $0x520] sm:$0xff]
    %v3487 = vld [vmem:[%s3 + $0x528] sm:$0xff]
    %v3488 = vld [vmem:[%s3 + $0x530] sm:$0xff]
    %v3489 = vld [vmem:[%s3 + $0x538] sm:$0xff]
    %v3490 = vld [vmem:[%s3 + $0x540] sm:$0xff]
    %v3491 = vld [vmem:[%s3 + $0x548] sm:$0xff]
    %v3492 = vld [vmem:[%s3 + $0x550] sm:$0xff]
    %v3493 = vld [vmem:[%s3 + $0x558] sm:$0xff]
    %v3494 = vld [vmem:[%s3 + $0x560] sm:$0xff]
    %v3495 = vld [vmem:[%s3 + $0x568] sm:$0xff]
    %v3496 = vld [vmem:[%s3 + $0x570] sm:$0xff]
    %v3497 = vld [vmem:[%s3 + $0x578] sm:$0xff]
    %v3498 = vld [vmem:[%s3 + $0x580] sm:$0xff]
    %v3499 = vld [vmem:[%s3 + $0x588] sm:$0xff]
    %v3500 = vld [vmem:[%s3 + $0x590] sm:$0xff]
    %v3501 = vld [vmem:[%s3 + $0x598] sm:$0xff]
    %v3502 = vld [vmem:[%s3 + $0x5a0] sm:$0xff]
    %v3503 = vld [vmem:[%s3 + $0x5a8] sm:$0xff]
    %v3504 = vld [vmem:[%s3 + $0x5b0] sm:$0xff]
    %v3505 = vld [vmem:[%s3 + $0x5b8] sm:$0xff]
    %v3506 = vld [vmem:[%s3 + $0x5c0] sm:$0x3]
    %v3507 = vld [vmem:[%s3 + $0x5c8] sm:$0x3]
    %v3508 = vld [vmem:[%s3 + $0x5d0] sm:$0x3]
    %v3509 = vld [vmem:[%s3 + $0x5d8] sm:$0x3]
    %v3510 = vld [vmem:[%s3 + $0x5e0] sm:$0x3]
    %v3511 = vld [vmem:[%s3 + $0x5e8] sm:$0x3]
    %v3512 = vld [vmem:[%s3 + $0x5f0] sm:$0x3]
    %v3513 = vld [vmem:[%s3 + $0x5f8] sm:$0x3]
    %v3514 = vld [vmem:[%s3 + $0x600] sm:$0xff]
    %v3515 = vld [vmem:[%s3 + $0x608] sm:$0xff]
    %v3516 = vld [vmem:[%s3 + $0x610] sm:$0xff]
    %v3517 = vld [vmem:[%s3 + $0x618] sm:$0xff]
    %v3518 = vld [vmem:[%s3 + $0x620] sm:$0xff]
    %v3519 = vld [vmem:[%s3 + $0x628] sm:$0xff]
    %v3520 = vld [vmem:[%s3 + $0x630] sm:$0xff]
    %v3521 = vld [vmem:[%s3 + $0x638] sm:$0xff]
    %v3522 = vld [vmem:[%s3 + $0x640] sm:$0xff]
    %v3523 = vld [vmem:[%s3 + $0x648] sm:$0xff]
    %v3524 = vld [vmem:[%s3 + $0x650] sm:$0xff]
    %v3525 = vld [vmem:[%s3 + $0x658] sm:$0xff]
    %v3526 = vld [vmem:[%s3 + $0x660] sm:$0xff]
    %v3527 = vld [vmem:[%s3 + $0x668] sm:$0xff]
    %v3528 = vld [vmem:[%s3 + $0x670] sm:$0xff]
    %v3529 = vld [vmem:[%s3 + $0x678] sm:$0xff]
    %v3530 = vld [vmem:[%s3 + $0x680] sm:$0xff]
    %v3531 = vld [vmem:[%s3 + $0x688] sm:$0xff]
    %v3532 = vld [vmem:[%s3 + $0x690] sm:$0xff]
    %v3533 = vld [vmem:[%s3 + $0x698] sm:$0xff]
    %v3534 = vld [vmem:[%s3 + $0x6a0] sm:$0xff]
    %v3535 = vld [vmem:[%s3 + $0x6a8] sm:$0xff]
    %v3536 = vld [vmem:[%s3 + $0x6b0] sm:$0xff]
    %v3537 = vld [vmem:[%s3 + $0x6b8] sm:$0xff]
    %v3538 = vld [vmem:[%s3 + $0x6c0] sm:$0x3]
    %v3539 = vld [vmem:[%s3 + $0x6c8] sm:$0x3]
    %v3540 = vld [vmem:[%s3 + $0x6d0] sm:$0x3]
    %v3541 = vld [vmem:[%s3 + $0x6d8] sm:$0x3]
    %v3542 = vld [vmem:[%s3 + $0x6e0] sm:$0x3]
    %v3543 = vld [vmem:[%s3 + $0x6e8] sm:$0x3]
    %v3544 = vld [vmem:[%s3 + $0x6f0] sm:$0x3]
    %v3545 = vld [vmem:[%s3 + $0x6f8] sm:$0x3]
    %v3546 = vld [vmem:[%s3 + $0x700] sm:$0xff]
    %v3547 = vld [vmem:[%s3 + $0x708] sm:$0xff]
    %v3548 = vld [vmem:[%s3 + $0x710] sm:$0xff]
    %v3549 = vld [vmem:[%s3 + $0x718] sm:$0xff]
    %v3550 = vld [vmem:[%s3 + $0x720] sm:$0xff]
    %v3551 = vld [vmem:[%s3 + $0x728] sm:$0xff]
    %v3552 = vld [vmem:[%s3 + $0x730] sm:$0xff]
    %v3553 = vld [vmem:[%s3 + $0x738] sm:$0xff]
    %v3554 = vld [vmem:[%s3 + $0x740] sm:$0xff]
    %v3555 = vld [vmem:[%s3 + $0x748] sm:$0xff]
    %v3556 = vld [vmem:[%s3 + $0x750] sm:$0xff]
    %v3557 = vld [vmem:[%s3 + $0x758] sm:$0xff]
    %v3558 = vld [vmem:[%s3 + $0x760] sm:$0xff]
    %v3559 = vld [vmem:[%s3 + $0x768] sm:$0xff]
    %v3560 = vld [vmem:[%s3 + $0x770] sm:$0xff]
    %v3561 = vld [vmem:[%s3 + $0x778] sm:$0xff]
    %v3562 = vld [vmem:[%s3 + $0x780] sm:$0xff]
    %v3563 = vld [vmem:[%s3 + $0x788] sm:$0xff]
    %v3564 = vld [vmem:[%s3 + $0x790] sm:$0xff]
    %v3565 = vld [vmem:[%s3 + $0x798] sm:$0xff]
    %v3566 = vld [vmem:[%s3 + $0x7a0] sm:$0xff]
    %v3567 = vld [vmem:[%s3 + $0x7a8] sm:$0xff]
    %v3568 = vld [vmem:[%s3 + $0x7b0] sm:$0xff]
    %v3569 = vld [vmem:[%s3 + $0x7b8] sm:$0xff]
    %v3570 = vld [vmem:[%s3 + $0x7c0] sm:$0x3]
    %v3571 = vld [vmem:[%s3 + $0x7c8] sm:$0x3]
    %v3572 = vld [vmem:[%s3 + $0x7d0] sm:$0x3]
    %v3573 = vld [vmem:[%s3 + $0x7d8] sm:$0x3]
    %v3574 = vld [vmem:[%s3 + $0x7e0] sm:$0x3]
    %v3575 = vld [vmem:[%s3 + $0x7e8] sm:$0x3]
    %v3576 = vld [vmem:[%s3 + $0x7f0] sm:$0x3]
    %v3577 = vld [vmem:[%s3 + $0x7f8] sm:$0x3]
    %v3578 = vld [vmem:[%s3 + $0x800] sm:$0xff]
    %v3579 = vld [vmem:[%s3 + $0x808] sm:$0xff]
    %v3580 = vld [vmem:[%s3 + $0x810] sm:$0xff]
    %v3581 = vld [vmem:[%s3 + $0x818] sm:$0xff]
    %v3582 = vld [vmem:[%s3 + $0x820] sm:$0xff]
    %v3583 = vld [vmem:[%s3 + $0x828] sm:$0xff]
    %v3584 = vld [vmem:[%s3 + $0x830] sm:$0xff]
    %v3585 = vld [vmem:[%s3 + $0x838] sm:$0xff]
    %v3586 = vld [vmem:[%s3 + $0x840] sm:$0xff]
    %v3587 = vld [vmem:[%s3 + $0x848] sm:$0xff]
    %v3588 = vld [vmem:[%s3 + $0x850] sm:$0xff]
    %v3589 = vld [vmem:[%s3 + $0x858] sm:$0xff]
    %v3590 = vld [vmem:[%s3 + $0x860] sm:$0xff]
    %v3591 = vld [vmem:[%s3 + $0x868] sm:$0xff]
    %v3592 = vld [vmem:[%s3 + $0x870] sm:$0xff]
    %v3593 = vld [vmem:[%s3 + $0x878] sm:$0xff]
    %v3594 = vld [vmem:[%s3 + $0x880] sm:$0xff]
    %v3595 = vld [vmem:[%s3 + $0x888] sm:$0xff]
    %v3596 = vld [vmem:[%s3 + $0x890] sm:$0xff]
    %v3597 = vld [vmem:[%s3 + $0x898] sm:$0xff]
    %v3598 = vld [vmem:[%s3 + $0x8a0] sm:$0xff]
    %v3599 = vld [vmem:[%s3 + $0x8a8] sm:$0xff]
    %v3600 = vld [vmem:[%s3 + $0x8b0] sm:$0xff]
    %v3601 = vld [vmem:[%s3 + $0x8b8] sm:$0xff]
    %v3602 = vld [vmem:[%s3 + $0x8c0] sm:$0x3]
    %v3603 = vld [vmem:[%s3 + $0x8c8] sm:$0x3]
    %v3604 = vld [vmem:[%s3 + $0x8d0] sm:$0x3]
    %v3605 = vld [vmem:[%s3 + $0x8d8] sm:$0x3]
    %v3606 = vld [vmem:[%s3 + $0x8e0] sm:$0x3]
    %v3607 = vld [vmem:[%s3 + $0x8e8] sm:$0x3]
    %v3608 = vld [vmem:[%s3 + $0x8f0] sm:$0x3]
    %v3609 = vld [vmem:[%s3 + $0x8f8] sm:$0x3]
    %v3610 = vld [vmem:[%s3 + $0x900] sm:$0xff]
    %v3611 = vld [vmem:[%s3 + $0x908] sm:$0xff]
    %v3612 = vld [vmem:[%s3 + $0x910] sm:$0xff]
    %v3613 = vld [vmem:[%s3 + $0x918] sm:$0xff]
    %v3614 = vld [vmem:[%s3 + $0x920] sm:$0xff]
    %v3615 = vld [vmem:[%s3 + $0x928] sm:$0xff]
    %v3616 = vld [vmem:[%s3 + $0x930] sm:$0xff]
    %v3617 = vld [vmem:[%s3 + $0x938] sm:$0xff]
    %v3618 = vld [vmem:[%s3 + $0x940] sm:$0xff]
    %v3619 = vld [vmem:[%s3 + $0x948] sm:$0xff]
    %v3620 = vld [vmem:[%s3 + $0x950] sm:$0xff]
    %v3621 = vld [vmem:[%s3 + $0x958] sm:$0xff]
    %v3622 = vld [vmem:[%s3 + $0x960] sm:$0xff]
    %v3623 = vld [vmem:[%s3 + $0x968] sm:$0xff]
    %v3624 = vld [vmem:[%s3 + $0x970] sm:$0xff]
    %v3625 = vld [vmem:[%s3 + $0x978] sm:$0xff]
    %v3626 = vld [vmem:[%s3 + $0x980] sm:$0xff]
    %v3627 = vld [vmem:[%s3 + $0x988] sm:$0xff]
    %v3628 = vld [vmem:[%s3 + $0x990] sm:$0xff]
    %v3629 = vld [vmem:[%s3 + $0x998] sm:$0xff]
    %v3630 = vld [vmem:[%s3 + $0x9a0] sm:$0xff]
    %v3631 = vld [vmem:[%s3 + $0x9a8] sm:$0xff]
    %v3632 = vld [vmem:[%s3 + $0x9b0] sm:$0xff]
    %v3633 = vld [vmem:[%s3 + $0x9b8] sm:$0xff]
    %v3634 = vld [vmem:[%s3 + $0x9c0] sm:$0x3]
    %v3635 = vld [vmem:[%s3 + $0x9c8] sm:$0x3]
    %v3636 = vld [vmem:[%s3 + $0x9d0] sm:$0x3]
    %v3637 = vld [vmem:[%s3 + $0x9d8] sm:$0x3]
    %v3638 = vld [vmem:[%s3 + $0x9e0] sm:$0x3]
    %v3639 = vld [vmem:[%s3 + $0x9e8] sm:$0x3]
    %v3640 = vld [vmem:[%s3 + $0x9f0] sm:$0x3]
    %v3641 = vld [vmem:[%s3 + $0x9f8] sm:$0x3]
    %v3642 = vld [vmem:[%s3 + $0xa00] sm:$0xff]
    %v3643 = vld [vmem:[%s3 + $0xa08] sm:$0xff]
    %v3644 = vld [vmem:[%s3 + $0xa10] sm:$0xff]
    %v3645 = vld [vmem:[%s3 + $0xa18] sm:$0xff]
    %v3646 = vld [vmem:[%s3 + $0xa20] sm:$0xff]
    %v3647 = vld [vmem:[%s3 + $0xa28] sm:$0xff]
    %v3648 = vld [vmem:[%s3 + $0xa30] sm:$0xff]
    %v3649 = vld [vmem:[%s3 + $0xa38] sm:$0xff]
    %v3650 = vld [vmem:[%s3 + $0xa40] sm:$0xff]
    %v3651 = vld [vmem:[%s3 + $0xa48] sm:$0xff]
    %v3652 = vld [vmem:[%s3 + $0xa50] sm:$0xff]
    %v3653 = vld [vmem:[%s3 + $0xa58] sm:$0xff]
    %v3654 = vld [vmem:[%s3 + $0xa60] sm:$0xff]
    %v3655 = vld [vmem:[%s3 + $0xa68] sm:$0xff]
    %v3656 = vld [vmem:[%s3 + $0xa70] sm:$0xff]
    %v3657 = vld [vmem:[%s3 + $0xa78] sm:$0xff]
    %v3658 = vld [vmem:[%s3 + $0xa80] sm:$0xff]
    %v3659 = vld [vmem:[%s3 + $0xa88] sm:$0xff]
    %v3660 = vld [vmem:[%s3 + $0xa90] sm:$0xff]
    %v3661 = vld [vmem:[%s3 + $0xa98] sm:$0xff]
    %v3662 = vld [vmem:[%s3 + $0xaa0] sm:$0xff]
    %v3663 = vld [vmem:[%s3 + $0xaa8] sm:$0xff]
    %v3664 = vld [vmem:[%s3 + $0xab0] sm:$0xff]
    %v3665 = vld [vmem:[%s3 + $0xab8] sm:$0xff]
    %v3666 = vld [vmem:[%s3 + $0xac0] sm:$0x3]
    %v3667 = vld [vmem:[%s3 + $0xac8] sm:$0x3]
    %v3668 = vld [vmem:[%s3 + $0xad0] sm:$0x3]
    %v3669 = vld [vmem:[%s3 + $0xad8] sm:$0x3]
    %v3670 = vld [vmem:[%s3 + $0xae0] sm:$0x3]
    %v3671 = vld [vmem:[%s3 + $0xae8] sm:$0x3]
    %v3672 = vld [vmem:[%s3 + $0xaf0] sm:$0x3]
    %v3673 = vld [vmem:[%s3 + $0xaf8] sm:$0x3]
    %v3674 = vld [vmem:[%s3 + $0xb00] sm:$0xff]
    %v3675 = vld [vmem:[%s3 + $0xb08] sm:$0xff]
    %v3676 = vld [vmem:[%s3 + $0xb10] sm:$0xff]
    %v3677 = vld [vmem:[%s3 + $0xb18] sm:$0xff]
    %v3678 = vld [vmem:[%s3 + $0xb20] sm:$0xff]
    %v3679 = vld [vmem:[%s3 + $0xb28] sm:$0xff]
    %v3680 = vld [vmem:[%s3 + $0xb30] sm:$0xff]
    %v3681 = vld [vmem:[%s3 + $0xb38] sm:$0xff]
    %v3682 = vld [vmem:[%s3 + $0xb40] sm:$0xff]
    %v3683 = vld [vmem:[%s3 + $0xb48] sm:$0xff]
    %v3684 = vld [vmem:[%s3 + $0xb50] sm:$0xff]
    %v3685 = vld [vmem:[%s3 + $0xb58] sm:$0xff]
    %v3686 = vld [vmem:[%s3 + $0xb60] sm:$0xff]
    %v3687 = vld [vmem:[%s3 + $0xb68] sm:$0xff]
    %v3688 = vld [vmem:[%s3 + $0xb70] sm:$0xff]
    %v3689 = vld [vmem:[%s3 + $0xb78] sm:$0xff]
    %v3690 = vld [vmem:[%s3 + $0xb80] sm:$0xff]
    %v3691 = vld [vmem:[%s3 + $0xb88] sm:$0xff]
    %v3692 = vld [vmem:[%s3 + $0xb90] sm:$0xff]
    %v3693 = vld [vmem:[%s3 + $0xb98] sm:$0xff]
    %v3694 = vld [vmem:[%s3 + $0xba0] sm:$0xff]
    %v3695 = vld [vmem:[%s3 + $0xba8] sm:$0xff]
    %v3696 = vld [vmem:[%s3 + $0xbb0] sm:$0xff]
    %v3697 = vld [vmem:[%s3 + $0xbb8] sm:$0xff]
    %v3698 = vld [vmem:[%s3 + $0xbc0] sm:$0x3]
    %v3699 = vld [vmem:[%s3 + $0xbc8] sm:$0x3]
    %v3700 = vld [vmem:[%s3 + $0xbd0] sm:$0x3]
    %v3701 = vld [vmem:[%s3 + $0xbd8] sm:$0x3]
    %v3702 = vld [vmem:[%s3 + $0xbe0] sm:$0x3]
    %v3703 = vld [vmem:[%s3 + $0xbe8] sm:$0x3]
    %v3704 = vld [vmem:[%s3 + $0xbf0] sm:$0x3]
    %v3705 = vld [vmem:[%s3 + $0xbf8] sm:$0x3]
    %v3706 = vld [vmem:[%s3 + $0xc00] sm:$0xff]
    %v3707 = vld [vmem:[%s3 + $0xc08] sm:$0xff]
    %v3708 = vld [vmem:[%s3 + $0xc10] sm:$0xff]
    %v3709 = vld [vmem:[%s3 + $0xc18] sm:$0xff]
    %v3710 = vld [vmem:[%s3 + $0xc20] sm:$0xff]
    %v3711 = vld [vmem:[%s3 + $0xc28] sm:$0xff]
    %v3712 = vld [vmem:[%s3 + $0xc30] sm:$0xff]
    %v3713 = vld [vmem:[%s3 + $0xc38] sm:$0xff]
    %v3714 = vld [vmem:[%s3 + $0xc40] sm:$0xff]
    %v3715 = vld [vmem:[%s3 + $0xc48] sm:$0xff]
    %v3716 = vld [vmem:[%s3 + $0xc50] sm:$0xff]
    %v3717 = vld [vmem:[%s3 + $0xc58] sm:$0xff]
    %v3718 = vld [vmem:[%s3 + $0xc60] sm:$0xff]
    %v3719 = vld [vmem:[%s3 + $0xc68] sm:$0xff]
    %v3720 = vld [vmem:[%s3 + $0xc70] sm:$0xff]
    %v3721 = vld [vmem:[%s3 + $0xc78] sm:$0xff]
    %v3722 = vld [vmem:[%s3 + $0xc80] sm:$0xff]
    %v3723 = vld [vmem:[%s3 + $0xc88] sm:$0xff]
    %v3724 = vld [vmem:[%s3 + $0xc90] sm:$0xff]
    %v3725 = vld [vmem:[%s3 + $0xc98] sm:$0xff]
    %v3726 = vld [vmem:[%s3 + $0xca0] sm:$0xff]
    %v3727 = vld [vmem:[%s3 + $0xca8] sm:$0xff]
    %v3728 = vld [vmem:[%s3 + $0xcb0] sm:$0xff]
    %v3729 = vld [vmem:[%s3 + $0xcb8] sm:$0xff]
    %v3730 = vld [vmem:[%s3 + $0xcc0] sm:$0x3]
    %v3731 = vld [vmem:[%s3 + $0xcc8] sm:$0x3]
    %v3732 = vld [vmem:[%s3 + $0xcd0] sm:$0x3]
    %v3733 = vld [vmem:[%s3 + $0xcd8] sm:$0x3]
    %v3734 = vld [vmem:[%s3 + $0xce0] sm:$0x3]
    %v3735 = vld [vmem:[%s3 + $0xce8] sm:$0x3]
    %v3736 = vld [vmem:[%s3 + $0xcf0] sm:$0x3]
    %v3737 = vld [vmem:[%s3 + $0xcf8] sm:$0x3]
    %v3738 = vld [vmem:[%s3 + $0xd00] sm:$0xff]
    %v3739 = vld [vmem:[%s3 + $0xd08] sm:$0xff]
    %v3740 = vld [vmem:[%s3 + $0xd10] sm:$0xff]
    %v3741 = vld [vmem:[%s3 + $0xd18] sm:$0xff]
    %v3742 = vld [vmem:[%s3 + $0xd20] sm:$0xff]
    %v3743 = vld [vmem:[%s3 + $0xd28] sm:$0xff]
    %v3744 = vld [vmem:[%s3 + $0xd30] sm:$0xff]
    %v3745 = vld [vmem:[%s3 + $0xd38] sm:$0xff]
    %v3746 = vld [vmem:[%s3 + $0xd40] sm:$0xff]
    %v3747 = vld [vmem:[%s3 + $0xd48] sm:$0xff]
    %v3748 = vld [vmem:[%s3 + $0xd50] sm:$0xff]
    %v3749 = vld [vmem:[%s3 + $0xd58] sm:$0xff]
    %v3750 = vld [vmem:[%s3 + $0xd60] sm:$0xff]
    %v3751 = vld [vmem:[%s3 + $0xd68] sm:$0xff]
    %v3752 = vld [vmem:[%s3 + $0xd70] sm:$0xff]
    %v3753 = vld [vmem:[%s3 + $0xd78] sm:$0xff]
    %v3754 = vld [vmem:[%s3 + $0xd80] sm:$0xff]
    %v3755 = vld [vmem:[%s3 + $0xd88] sm:$0xff]
    %v3756 = vld [vmem:[%s3 + $0xd90] sm:$0xff]
    %v3757 = vld [vmem:[%s3 + $0xd98] sm:$0xff]
    %v3758 = vld [vmem:[%s3 + $0xda0] sm:$0xff]
    %v3759 = vld [vmem:[%s3 + $0xda8] sm:$0xff]
    %v3760 = vld [vmem:[%s3 + $0xdb0] sm:$0xff]
    %v3761 = vld [vmem:[%s3 + $0xdb8] sm:$0xff]
    %v3762 = vld [vmem:[%s3 + $0xdc0] sm:$0x3]
    %v3763 = vld [vmem:[%s3 + $0xdc8] sm:$0x3]
    %v3764 = vld [vmem:[%s3 + $0xdd0] sm:$0x3]
    %v3765 = vld [vmem:[%s3 + $0xdd8] sm:$0x3]
    %v3766 = vld [vmem:[%s3 + $0xde0] sm:$0x3]
    %v3767 = vld [vmem:[%s3 + $0xde8] sm:$0x3]
    %v3768 = vld [vmem:[%s3 + $0xdf0] sm:$0x3]
    %v3769 = vld [vmem:[%s3 + $0xdf8] sm:$0x3]
    %v3770 = vld [vmem:[%s3 + $0xe00] sm:$0xff]
    %v3771 = vld [vmem:[%s3 + $0xe08] sm:$0xff]
    %v3772 = vld [vmem:[%s3 + $0xe10] sm:$0xff]
    %v3773 = vld [vmem:[%s3 + $0xe18] sm:$0xff]
    %v3774 = vld [vmem:[%s3 + $0xe20] sm:$0xff]
    %v3775 = vld [vmem:[%s3 + $0xe28] sm:$0xff]
    %v3776 = vld [vmem:[%s3 + $0xe30] sm:$0xff]
    %v3777 = vld [vmem:[%s3 + $0xe38] sm:$0xff]
    %v3778 = vld [vmem:[%s3 + $0xe40] sm:$0xff]
    %v3779 = vld [vmem:[%s3 + $0xe48] sm:$0xff]
    %v3780 = vld [vmem:[%s3 + $0xe50] sm:$0xff]
    %v3781 = vld [vmem:[%s3 + $0xe58] sm:$0xff]
    %v3782 = vld [vmem:[%s3 + $0xe60] sm:$0xff]
    %v3783 = vld [vmem:[%s3 + $0xe68] sm:$0xff]
    %v3784 = vld [vmem:[%s3 + $0xe70] sm:$0xff]
    %v3785 = vld [vmem:[%s3 + $0xe78] sm:$0xff]
    %v3786 = vld [vmem:[%s3 + $0xe80] sm:$0xff]
    %v3787 = vld [vmem:[%s3 + $0xe88] sm:$0xff]
    %v3788 = vld [vmem:[%s3 + $0xe90] sm:$0xff]
    %v3789 = vld [vmem:[%s3 + $0xe98] sm:$0xff]
    %v3790 = vld [vmem:[%s3 + $0xea0] sm:$0xff]
    %v3791 = vld [vmem:[%s3 + $0xea8] sm:$0xff]
    %v3792 = vld [vmem:[%s3 + $0xeb0] sm:$0xff]
    %v3793 = vld [vmem:[%s3 + $0xeb8] sm:$0xff]
    %v3794 = vld [vmem:[%s3 + $0xec0] sm:$0x3]
    %v3795 = vld [vmem:[%s3 + $0xec8] sm:$0x3]
    %v3796 = vld [vmem:[%s3 + $0xed0] sm:$0x3]
    %v3797 = vld [vmem:[%s3 + $0xed8] sm:$0x3]
    %v3798 = vld [vmem:[%s3 + $0xee0] sm:$0x3]
    %v3799 = vld [vmem:[%s3 + $0xee8] sm:$0x3]
    %v3800 = vld [vmem:[%s3 + $0xef0] sm:$0x3]
    %v3801 = vld [vmem:[%s3 + $0xef8] sm:$0x3]
    %v3802 = vld [vmem:[%s3 + $0xf00] sm:$0xff]
    %v3803 = vld [vmem:[%s3 + $0xf08] sm:$0xff]
    %v3804 = vld [vmem:[%s3 + $0xf10] sm:$0xff]
    %v3805 = vld [vmem:[%s3 + $0xf18] sm:$0xff]
    %v3806 = vld [vmem:[%s3 + $0xf20] sm:$0xff]
    %v3807 = vld [vmem:[%s3 + $0xf28] sm:$0xff]
    %v3808 = vld [vmem:[%s3 + $0xf30] sm:$0xff]
    %v3809 = vld [vmem:[%s3 + $0xf38] sm:$0xff]
    %v3810 = vld [vmem:[%s3 + $0xf40] sm:$0xff]
    %v3811 = vld [vmem:[%s3 + $0xf48] sm:$0xff]
    %v3812 = vld [vmem:[%s3 + $0xf50] sm:$0xff]
    %v3813 = vld [vmem:[%s3 + $0xf58] sm:$0xff]
    %v3814 = vld [vmem:[%s3 + $0xf60] sm:$0xff]
    %v3815 = vld [vmem:[%s3 + $0xf68] sm:$0xff]
    %v3816 = vld [vmem:[%s3 + $0xf70] sm:$0xff]
    %v3817 = vld [vmem:[%s3 + $0xf78] sm:$0xff]
    %v3818 = vld [vmem:[%s3 + $0xf80] sm:$0xff]
    %v3819 = vld [vmem:[%s3 + $0xf88] sm:$0xff]
    %v3820 = vld [vmem:[%s3 + $0xf90] sm:$0xff]
    %v3821 = vld [vmem:[%s3 + $0xf98] sm:$0xff]
    %v3822 = vld [vmem:[%s3 + $0xfa0] sm:$0xff]
    %v3823 = vld [vmem:[%s3 + $0xfa8] sm:$0xff]
    %v3824 = vld [vmem:[%s3 + $0xfb0] sm:$0xff]
    %v3825 = vld [vmem:[%s3 + $0xfb8] sm:$0xff]
    %v3826 = vld [vmem:[%s3 + $0xfc0] sm:$0x3]
    %v3827 = vld [vmem:[%s3 + $0xfc8] sm:$0x3]
    %v3828 = vld [vmem:[%s3 + $0xfd0] sm:$0x3]
    %v3829 = vld [vmem:[%s3 + $0xfd8] sm:$0x3]
    %v3830 = vld [vmem:[%s3 + $0xfe0] sm:$0x3]
    %v3831 = vld [vmem:[%s3 + $0xfe8] sm:$0x3]
    %v3832 = vld [vmem:[%s3 + $0xff0] sm:$0x3]
    %v3833 = vld [vmem:[%s3 + $0xff8] sm:$0x3]
    %v3836 = vcombine.high %v3290, %v3290
    %v3838 = vunpack.c.l.s4 1983009808
    %v3839 = vunpack.c.0.s8 %v3838
    %v3840 = vlaneseq
    %v3841 = vshrl.u32 %v3840, 7
    %v3842 = vsub.s32 %v3839, %v3841
    %v3843 = vrot.slane %v3290, %v3842
    %v3845 = vunpack.c.l.s4 1983009808
    %v3846 = vunpack.c.0.s8 %v3845
    %v3847 = vlaneseq
    %v3848 = vshrl.u32 %v3847, 7
    %v3849 = vsub.s32 %v3846, %v3848
    %v3850 = vrot.slane %v3836, %v3849
    %v3851 = vcombine.high %v3843, %v3843
    %v3852 = vcombine.high %v3850, %v3850
    %v3853 = vcombine.high %v3291, %v3291
    %v3855 = vunpack.c.l.s4 1983009808
    %v3856 = vunpack.c.0.s8 %v3855
    %v3857 = vlaneseq
    %v3858 = vshrl.u32 %v3857, 7
    %v3859 = vsub.s32 %v3856, %v3858
    %v3860 = vrot.slane %v3291, %v3859
    %v3862 = vunpack.c.l.s4 1983009808
    %v3863 = vunpack.c.0.s8 %v3862
    %v3864 = vlaneseq
    %v3865 = vshrl.u32 %v3864, 7
    %v3866 = vsub.s32 %v3863, %v3865
    %v3867 = vrot.slane %v3853, %v3866
    %v3868 = vcombine.high %v3860, %v3860
    %v3869 = vcombine.high %v3867, %v3867
    %v3877 = vsel %vm417, %v3869, 0
    %v3880 = vsel %vm417, %v3329, 0
    %v3883 = vsel %vm417, %v3337, 0
    %v3886 = vsel %vm417, %v3345, 0
    %v3889 = vsel %vm417, %v3353, 0
    %3891 = vmatprep.subr.mxu0 %v3323
    %3892 = vmatpush1.xpose.msra.mxu0 %v3322
    %3893 = vmatprep.subr.mxu0 %v3331
    %3894 = vmatpush1.xpose.msra.mxu0 %v3330
    %3895 = vmatprep.subr.mxu0 %v3339
    %3896 = vmatpush1.xpose.msra.mxu0 %v3338
    %3897 = vmatprep.subr.mxu0 %v3347
    %3898 = vmatpush1.xpose.msra.mxu0 %v3346
    %3899 = vmatprep.subr.mxu0 0.0
    %3900 = vmatpush1.xpose.msra.mxu0 0.0
    %3901 = vmatprep.subr.mxu0 0.0
    %3902 = vmatpush1.xpose.msra.mxu0 0.0
    %3903 = vmatprep.subr.mxu0 0.0
    %3904 = vmatpush1.xpose.msra.mxu0 0.0
    %3905 = vmatprep.subr.mxu0 0.0
    %3906 = vmatpush1.xpose.msra.mxu0 0.0
    %3907 = vmatprep.subr.mxu0 0.0
    %3908 = vmatpush1.xpose.msra.mxu0 0.0
    %3909 = vmatprep.subr.mxu0 0.0
    %3910 = vmatpush1.xpose.msra.mxu0 0.0
    %3911 = vmatprep.subr.mxu0 0.0
    %3912 = vmatpush1.xpose.msra.mxu0 0.0
    %3913 = vmatprep.subr.mxu0 0.0
    %3914 = vmatpush1.xpose.msra.mxu0 0.0
    %3915 = vmatprep.subr.mxu0 0.0
    %3916 = vmatpush1.xpose.msra.mxu0 0.0
    %3917 = vmatprep.subr.mxu0 0.0
    %3918 = vmatpush1.xpose.msra.mxu0 0.0
    %3919 = vmatprep.subr.mxu0 0.0
    %3920 = vmatpush1.xpose.msra.mxu0 0.0
    %3921 = vmatprep.subr.mxu0 0.0
    %3922 = vmatpush1.xpose.msra.mxu0 0.0
    %3923 = vmatprep.subr.mxu0 0.0
    %3924 = vmatpush1.xpose.msra.mxu0 0.0
    %3925 = vmatprep.subr.mxu0 0.0
    %3926 = vmatpush1.xpose.msra.mxu0 0.0
    %3927 = vmatprep.subr.mxu0 0.0
    %3928 = vmatpush1.xpose.msra.mxu0 0.0
    %3929 = vmatprep.subr.mxu0 0.0
    %3930 = vmatpush1.xpose.msra.mxu0 0.0
    %3931 = vmatprep.subr.mxu0 0.0
    %3932 = vmatpush1.xpose.msra.mxu0 0.0
    %3933 = vmatprep.subr.mxu0 0.0
    %3934 = vmatpush1.xpose.msra.mxu0 0.0
    %3935 = vmatprep.subr.mxu0 0.0
    %3936 = vmatpush1.xpose.msra.mxu0 0.0
    %3937 = vmatprep.subr.mxu0 0.0
    %3938 = vmatpush1.xpose.msra.mxu0 0.0
    %3939 = vmatprep.subr.mxu0 0.0
    %3940 = vmatpush1.xpose.msra.mxu0 0.0
    %3941 = vmatprep.subr.mxu0 0.0
    %3942 = vmatpush1.xpose.msra.mxu0 0.0
    %3943 = vmatprep.subr.mxu0 0.0
    %3944 = vmatpush1.xpose.msra.mxu0 0.0
    %3945 = vmatprep.subr.mxu0 0.0
    %3946 = vmatpush1.xpose.msra.mxu0 0.0
    %3947 = vmatprep.subr.mxu0 0.0
    %3948 = vmatpush1.xpose.msra.mxu0 0.0
    %3949 = vmatprep.subr.mxu0 0.0
    %3950 = vmatpush1.xpose.msra.mxu0 0.0
    %3951 = vmatprep.subr.mxu0 0.0
    %3952 = vmatpush1.xpose.msra.mxu0 0.0
    %3953 = vmatprep.subr.mxu0 0.0
    %3954 = vmatpush1.xpose.msra.mxu0 0.0
    %3955 = vmatprep.mubr.f32.mxu0 %v3851
    %3956 = vmatmul.mubr.f32.gmra.mrb[0].mxu0 %v3843
    %v3957 = vpop.f32.mrb[0].mxu0
    %v3958 = vadd.f32 0.0, %v3957
    %v3959 = vpop.f32.mrb[0].mxu0
    %3960 = vdwg.mxu0
    %3961 = vmatprep.subr.mxu0 %v3325
    %3962 = vmatpush1.xpose.msra.mxu0 %v3324
    %3963 = vmatprep.subr.mxu0 %v3333
    %3964 = vmatpush1.xpose.msra.mxu0 %v3332
    %3965 = vmatprep.subr.mxu0 %v3341
    %3966 = vmatpush1.xpose.msra.mxu0 %v3340
    %3967 = vmatprep.subr.mxu0 %v3349
    %3968 = vmatpush1.xpose.msra.mxu0 %v3348
    %3969 = vmatprep.subr.mxu0 0.0
    %3970 = vmatpush1.xpose.msra.mxu0 0.0
    %3971 = vmatprep.subr.mxu0 0.0
    %3972 = vmatpush1.xpose.msra.mxu0 0.0
    %3973 = vmatprep.subr.mxu0 0.0
    %3974 = vmatpush1.xpose.msra.mxu0 0.0
    %3975 = vmatprep.subr.mxu0 0.0
    %3976 = vmatpush1.xpose.msra.mxu0 0.0
    %3977 = vmatprep.subr.mxu0 0.0
    %3978 = vmatpush1.xpose.msra.mxu0 0.0
    %3979 = vmatprep.subr.mxu0 0.0
    %3980 = vmatpush1.xpose.msra.mxu0 0.0
    %3981 = vmatprep.subr.mxu0 0.0
    %3982 = vmatpush1.xpose.msra.mxu0 0.0
    %3983 = vmatprep.subr.mxu0 0.0
    %3984 = vmatpush1.xpose.msra.mxu0 0.0
    %3985 = vmatprep.subr.mxu0 0.0
    %3986 = vmatpush1.xpose.msra.mxu0 0.0
    %3987 = vmatprep.subr.mxu0 0.0
    %3988 = vmatpush1.xpose.msra.mxu0 0.0
    %3989 = vmatprep.subr.mxu0 0.0
    %3990 = vmatpush1.xpose.msra.mxu0 0.0
    %3991 = vmatprep.subr.mxu0 0.0
    %3992 = vmatpush1.xpose.msra.mxu0 0.0
    %3993 = vmatprep.subr.mxu0 0.0
    %3994 = vmatpush1.xpose.msra.mxu0 0.0
    %3995 = vmatprep.subr.mxu0 0.0
    %3996 = vmatpush1.xpose.msra.mxu0 0.0
    %3997 = vmatprep.subr.mxu0 0.0
    %3998 = vmatpush1.xpose.msra.mxu0 0.0
    %3999 = vmatprep.subr.mxu0 0.0
    %4000 = vmatpush1.xpose.msra.mxu0 0.0
    %4001 = vmatprep.subr.mxu0 0.0
    %4002 = vmatpush1.xpose.msra.mxu0 0.0
    %4003 = vmatprep.subr.mxu0 0.0
    %4004 = vmatpush1.xpose.msra.mxu0 0.0
    %4005 = vmatprep.subr.mxu0 0.0
    %4006 = vmatpush1.xpose.msra.mxu0 0.0
    %4007 = vmatprep.subr.mxu0 0.0
    %4008 = vmatpush1.xpose.msra.mxu0 0.0
    %4009 = vmatprep.subr.mxu0 0.0
    %4010 = vmatpush1.xpose.msra.mxu0 0.0
    %4011 = vmatprep.subr.mxu0 0.0
    %4012 = vmatpush1.xpose.msra.mxu0 0.0
    %4013 = vmatprep.subr.mxu0 0.0
    %4014 = vmatpush1.xpose.msra.mxu0 0.0
    %4015 = vmatprep.subr.mxu0 0.0
    %4016 = vmatpush1.xpose.msra.mxu0 0.0
    %4017 = vmatprep.subr.mxu0 0.0
    %4018 = vmatpush1.xpose.msra.mxu0 0.0
    %4019 = vmatprep.subr.mxu0 0.0
    %4020 = vmatpush1.xpose.msra.mxu0 0.0
    %4021 = vmatprep.subr.mxu0 0.0
    %4022 = vmatpush1.xpose.msra.mxu0 0.0
    %4023 = vmatprep.subr.mxu0 0.0
    %4024 = vmatpush1.xpose.msra.mxu0 0.0
    %4025 = vmatprep.mubr.f32.mxu0 %v3852
    %4026 = vmatmul.mubr.f32.gmra.mrb[0].mxu0 %v3850
    %v4027 = vpop.f32.mrb[0].mxu0
    %v4028 = vadd.f32 %v3958, %v4027
    %v4029 = vpop.f32.mrb[0].mxu0
    %4030 = vdwg.mxu0
    %4031 = vmatprep.subr.mxu0 %v3327
    %4032 = vmatpush1.xpose.msra.mxu0 %v3326
    %4033 = vmatprep.subr.mxu0 %v3335
    %4034 = vmatpush1.xpose.msra.mxu0 %v3334
    %4035 = vmatprep.subr.mxu0 %v3343
    %4036 = vmatpush1.xpose.msra.mxu0 %v3342
    %4037 = vmatprep.subr.mxu0 %v3351
    %4038 = vmatpush1.xpose.msra.mxu0 %v3350
    %4039 = vmatprep.subr.mxu0 0.0
    %4040 = vmatpush1.xpose.msra.mxu0 0.0
    %4041 = vmatprep.subr.mxu0 0.0
    %4042 = vmatpush1.xpose.msra.mxu0 0.0
    %4043 = vmatprep.subr.mxu0 0.0
    %4044 = vmatpush1.xpose.msra.mxu0 0.0
    %4045 = vmatprep.subr.mxu0 0.0
    %4046 = vmatpush1.xpose.msra.mxu0 0.0
    %4047 = vmatprep.subr.mxu0 0.0
    %4048 = vmatpush1.xpose.msra.mxu0 0.0
    %4049 = vmatprep.subr.mxu0 0.0
    %4050 = vmatpush1.xpose.msra.mxu0 0.0
    %4051 = vmatprep.subr.mxu0 0.0
    %4052 = vmatpush1.xpose.msra.mxu0 0.0
    %4053 = vmatprep.subr.mxu0 0.0
    %4054 = vmatpush1.xpose.msra.mxu0 0.0
    %4055 = vmatprep.subr.mxu0 0.0
    %4056 = vmatpush1.xpose.msra.mxu0 0.0
    %4057 = vmatprep.subr.mxu0 0.0
    %4058 = vmatpush1.xpose.msra.mxu0 0.0
    %4059 = vmatprep.subr.mxu0 0.0
    %4060 = vmatpush1.xpose.msra.mxu0 0.0
    %4061 = vmatprep.subr.mxu0 0.0
    %4062 = vmatpush1.xpose.msra.mxu0 0.0
    %4063 = vmatprep.subr.mxu0 0.0
    %4064 = vmatpush1.xpose.msra.mxu0 0.0
    %4065 = vmatprep.subr.mxu0 0.0
    %4066 = vmatpush1.xpose.msra.mxu0 0.0
    %4067 = vmatprep.subr.mxu0 0.0
    %4068 = vmatpush1.xpose.msra.mxu0 0.0
    %4069 = vmatprep.subr.mxu0 0.0
    %4070 = vmatpush1.xpose.msra.mxu0 0.0
    %4071 = vmatprep.subr.mxu0 0.0
    %4072 = vmatpush1.xpose.msra.mxu0 0.0
    %4073 = vmatprep.subr.mxu0 0.0
    %4074 = vmatpush1.xpose.msra.mxu0 0.0
    %4075 = vmatprep.subr.mxu0 0.0
    %4076 = vmatpush1.xpose.msra.mxu0 0.0
    %4077 = vmatprep.subr.mxu0 0.0
    %4078 = vmatpush1.xpose.msra.mxu0 0.0
    %4079 = vmatprep.subr.mxu0 0.0
    %4080 = vmatpush1.xpose.msra.mxu0 0.0
    %4081 = vmatprep.subr.mxu0 0.0
    %4082 = vmatpush1.xpose.msra.mxu0 0.0
    %4083 = vmatprep.subr.mxu0 0.0
    %4084 = vmatpush1.xpose.msra.mxu0 0.0
    %4085 = vmatprep.subr.mxu0 0.0
    %4086 = vmatpush1.xpose.msra.mxu0 0.0
    %4087 = vmatprep.subr.mxu0 0.0
    %4088 = vmatpush1.xpose.msra.mxu0 0.0
    %4089 = vmatprep.subr.mxu0 0.0
    %4090 = vmatpush1.xpose.msra.mxu0 0.0
    %4091 = vmatprep.subr.mxu0 0.0
    %4092 = vmatpush1.xpose.msra.mxu0 0.0
    %4093 = vmatprep.subr.mxu0 0.0
    %4094 = vmatpush1.xpose.msra.mxu0 0.0
    %4095 = vmatprep.mubr.f32.mxu0 %v3868
    %4096 = vmatmul.mubr.f32.gmra.mrb[0].mxu0 %v3860
    %v4097 = vpop.f32.mrb[0].mxu0
    %v4098 = vadd.f32 %v4028, %v4097
    %v4099 = vpop.f32.mrb[0].mxu0
    %4100 = vdwg.mxu0
    %4101 = vmatprep.subr.mxu0 %v3880
    %4102 = vmatpush1.xpose.msra.mxu0 %v3328
    %4103 = vmatprep.subr.mxu0 %v3883
    %4104 = vmatpush1.xpose.msra.mxu0 %v3336
    %4105 = vmatprep.subr.mxu0 %v3886
    %4106 = vmatpush1.xpose.msra.mxu0 %v3344
    %4107 = vmatprep.subr.mxu0 %v3889
    %4108 = vmatpush1.xpose.msra.mxu0 %v3352
    %4109 = vmatprep.subr.mxu0 0.0
    %4110 = vmatpush1.xpose.msra.mxu0 0.0
    %4111 = vmatprep.subr.mxu0 0.0
    %4112 = vmatpush1.xpose.msra.mxu0 0.0
    %4113 = vmatprep.subr.mxu0 0.0
    %4114 = vmatpush1.xpose.msra.mxu0 0.0
    %4115 = vmatprep.subr.mxu0 0.0
    %4116 = vmatpush1.xpose.msra.mxu0 0.0
    %4117 = vmatprep.subr.mxu0 0.0
    %4118 = vmatpush1.xpose.msra.mxu0 0.0
    %4119 = vmatprep.subr.mxu0 0.0
    %4120 = vmatpush1.xpose.msra.mxu0 0.0
    %4121 = vmatprep.subr.mxu0 0.0
    %4122 = vmatpush1.xpose.msra.mxu0 0.0
    %4123 = vmatprep.subr.mxu0 0.0
    %4124 = vmatpush1.xpose.msra.mxu0 0.0
    %4125 = vmatprep.subr.mxu0 0.0
    %4126 = vmatpush1.xpose.msra.mxu0 0.0
    %4127 = vmatprep.subr.mxu0 0.0
    %4128 = vmatpush1.xpose.msra.mxu0 0.0
    %4129 = vmatprep.subr.mxu0 0.0
    %4130 = vmatpush1.xpose.msra.mxu0 0.0
    %4131 = vmatprep.subr.mxu0 0.0
    %4132 = vmatpush1.xpose.msra.mxu0 0.0
    %4133 = vmatprep.subr.mxu0 0.0
    %4134 = vmatpush1.xpose.msra.mxu0 0.0
    %4135 = vmatprep.subr.mxu0 0.0
    %4136 = vmatpush1.xpose.msra.mxu0 0.0
    %4137 = vmatprep.subr.mxu0 0.0
    %4138 = vmatpush1.xpose.msra.mxu0 0.0
    %4139 = vmatprep.subr.mxu0 0.0
    %4140 = vmatpush1.xpose.msra.mxu0 0.0
    %4141 = vmatprep.subr.mxu0 0.0
    %4142 = vmatpush1.xpose.msra.mxu0 0.0
    %4143 = vmatprep.subr.mxu0 0.0
    %4144 = vmatpush1.xpose.msra.mxu0 0.0
    %4145 = vmatprep.subr.mxu0 0.0
    %4146 = vmatpush1.xpose.msra.mxu0 0.0
    %4147 = vmatprep.subr.mxu0 0.0
    %4148 = vmatpush1.xpose.msra.mxu0 0.0
    %4149 = vmatprep.subr.mxu0 0.0
    %4150 = vmatpush1.xpose.msra.mxu0 0.0
    %4151 = vmatprep.subr.mxu0 0.0
    %4152 = vmatpush1.xpose.msra.mxu0 0.0
    %4153 = vmatprep.subr.mxu0 0.0
    %4154 = vmatpush1.xpose.msra.mxu0 0.0
    %4155 = vmatprep.subr.mxu0 0.0
    %4156 = vmatpush1.xpose.msra.mxu0 0.0
    %4157 = vmatprep.subr.mxu0 0.0
    %4158 = vmatpush1.xpose.msra.mxu0 0.0
    %4159 = vmatprep.subr.mxu0 0.0
    %4160 = vmatpush1.xpose.msra.mxu0 0.0
    %4161 = vmatprep.subr.mxu0 0.0
    %4162 = vmatpush1.xpose.msra.mxu0 0.0
    %4163 = vmatprep.subr.mxu0 0.0
    %4164 = vmatpush1.xpose.msra.mxu0 0.0
    %4165 = vmatprep.mubr.f32.mxu0 %v3877
    %4166 = vmatmul.mubr.f32.gmra.mrb[0].mxu0 %v3867
    %v4167 = vpop.f32.mrb[0].mxu0
    %v4168 = vadd.f32 %v4098, %v4167
    %v4169 = vpop.f32.mrb[0].mxu0
    %4170 = vdwg.mxu0
    %v4173 = vcombine.high %v3292, %v3292
    %v4175 = vunpack.c.l.s4 1983009808
    %v4176 = vunpack.c.0.s8 %v4175
    %v4177 = vlaneseq
    %v4178 = vshrl.u32 %v4177, 7
    %v4179 = vsub.s32 %v4176, %v4178
    %v4180 = vrot.slane %v3292, %v4179
    %v4182 = vunpack.c.l.s4 1983009808
    %v4183 = vunpack.c.0.s8 %v4182
    %v4184 = vlaneseq
    %v4185 = vshrl.u32 %v4184, 7
    %v4186 = vsub.s32 %v4183, %v4185
    %v4187 = vrot.slane %v4173, %v4186
    %v4188 = vcombine.high %v4180, %v4180
    %v4189 = vcombine.high %v4187, %v4187
    %v4190 = vcombine.high %v3293, %v3293
    %v4192 = vunpack.c.l.s4 1983009808
    %v4193 = vunpack.c.0.s8 %v4192
    %v4194 = vlaneseq
    %v4195 = vshrl.u32 %v4194, 7
    %v4196 = vsub.s32 %v4193, %v4195
    %v4197 = vrot.slane %v3293, %v4196
    %v4199 = vunpack.c.l.s4 1983009808
    %v4200 = vunpack.c.0.s8 %v4199
    %v4201 = vlaneseq
    %v4202 = vshrl.u32 %v4201, 7
    %v4203 = vsub.s32 %v4200, %v4202
    %v4204 = vrot.slane %v4190, %v4203
    %v4205 = vcombine.high %v4197, %v4197
    %v4206 = vcombine.high %v4204, %v4204
    %v4214 = vsel %vm417, %v4206, 0
    %v4217 = vsel %vm417, %v3361, 0
    %v4220 = vsel %vm417, %v3369, 0
    %v4223 = vsel %vm417, %v3377, 0
    %v4226 = vsel %vm417, %v3385, 0
    %4228 = vmatprep.subr.mxu0 %v3355
    %4229 = vmatpush1.xpose.msra.mxu0 %v3354
    %4230 = vmatprep.subr.mxu0 %v3363
    %4231 = vmatpush1.xpose.msra.mxu0 %v3362
    %4232 = vmatprep.subr.mxu0 %v3371
    %4233 = vmatpush1.xpose.msra.mxu0 %v3370
    %4234 = vmatprep.subr.mxu0 %v3379
    %4235 = vmatpush1.xpose.msra.mxu0 %v3378
    %4236 = vmatprep.subr.mxu0 0.0
    %4237 = vmatpush1.xpose.msra.mxu0 0.0
    %4238 = vmatprep.subr.mxu0 0.0
    %4239 = vmatpush1.xpose.msra.mxu0 0.0
    %4240 = vmatprep.subr.mxu0 0.0
    %4241 = vmatpush1.xpose.msra.mxu0 0.0
    %4242 = vmatprep.subr.mxu0 0.0
    %4243 = vmatpush1.xpose.msra.mxu0 0.0
    %4244 = vmatprep.subr.mxu0 0.0
    %4245 = vmatpush1.xpose.msra.mxu0 0.0
    %4246 = vmatprep.subr.mxu0 0.0
    %4247 = vmatpush1.xpose.msra.mxu0 0.0
    %4248 = vmatprep.subr.mxu0 0.0
    %4249 = vmatpush1.xpose.msra.mxu0 0.0
    %4250 = vmatprep.subr.mxu0 0.0
    %4251 = vmatpush1.xpose.msra.mxu0 0.0
    %4252 = vmatprep.subr.mxu0 0.0
    %4253 = vmatpush1.xpose.msra.mxu0 0.0
    %4254 = vmatprep.subr.mxu0 0.0
    %4255 = vmatpush1.xpose.msra.mxu0 0.0
    %4256 = vmatprep.subr.mxu0 0.0
    %4257 = vmatpush1.xpose.msra.mxu0 0.0
    %4258 = vmatprep.subr.mxu0 0.0
    %4259 = vmatpush1.xpose.msra.mxu0 0.0
    %4260 = vmatprep.subr.mxu0 0.0
    %4261 = vmatpush1.xpose.msra.mxu0 0.0
    %4262 = vmatprep.subr.mxu0 0.0
    %4263 = vmatpush1.xpose.msra.mxu0 0.0
    %4264 = vmatprep.subr.mxu0 0.0
    %4265 = vmatpush1.xpose.msra.mxu0 0.0
    %4266 = vmatprep.subr.mxu0 0.0
    %4267 = vmatpush1.xpose.msra.mxu0 0.0
    %4268 = vmatprep.subr.mxu0 0.0
    %4269 = vmatpush1.xpose.msra.mxu0 0.0
    %4270 = vmatprep.subr.mxu0 0.0
    %4271 = vmatpush1.xpose.msra.mxu0 0.0
    %4272 = vmatprep.subr.mxu0 0.0
    %4273 = vmatpush1.xpose.msra.mxu0 0.0
    %4274 = vmatprep.subr.mxu0 0.0
    %4275 = vmatpush1.xpose.msra.mxu0 0.0
    %4276 = vmatprep.subr.mxu0 0.0
    %4277 = vmatpush1.xpose.msra.mxu0 0.0
    %4278 = vmatprep.subr.mxu0 0.0
    %4279 = vmatpush1.xpose.msra.mxu0 0.0
    %4280 = vmatprep.subr.mxu0 0.0
    %4281 = vmatpush1.xpose.msra.mxu0 0.0
    %4282 = vmatprep.subr.mxu0 0.0
    %4283 = vmatpush1.xpose.msra.mxu0 0.0
    %4284 = vmatprep.subr.mxu0 0.0
    %4285 = vmatpush1.xpose.msra.mxu0 0.0
    %4286 = vmatprep.subr.mxu0 0.0
    %4287 = vmatpush1.xpose.msra.mxu0 0.0
    %4288 = vmatprep.subr.mxu0 0.0
    %4289 = vmatpush1.xpose.msra.mxu0 0.0
    %4290 = vmatprep.subr.mxu0 0.0
    %4291 = vmatpush1.xpose.msra.mxu0 0.0
    %4292 = vmatprep.mubr.f32.mxu0 %v4188
    %4293 = vmatmul.mubr.f32.gmra.mrb[0].mxu0 %v4180
    %v4294 = vpop.f32.mrb[0].mxu0
    %v4295 = vadd.f32 0.0, %v4294
    %v4296 = vpop.f32.mrb[0].mxu0
    %4297 = vdwg.mxu0
    %4298 = vmatprep.subr.mxu0 %v3357
    %4299 = vmatpush1.xpose.msra.mxu0 %v3356
    %4300 = vmatprep.subr.mxu0 %v3365
    %4301 = vmatpush1.xpose.msra.mxu0 %v3364
    %4302 = vmatprep.subr.mxu0 %v3373
    %4303 = vmatpush1.xpose.msra.mxu0 %v3372
    %4304 = vmatprep.subr.mxu0 %v3381
    %4305 = vmatpush1.xpose.msra.mxu0 %v3380
    %4306 = vmatprep.subr.mxu0 0.0
    %4307 = vmatpush1.xpose.msra.mxu0 0.0
    %4308 = vmatprep.subr.mxu0 0.0
    %4309 = vmatpush1.xpose.msra.mxu0 0.0
    %4310 = vmatprep.subr.mxu0 0.0
    %4311 = vmatpush1.xpose.msra.mxu0 0.0
    %4312 = vmatprep.subr.mxu0 0.0
    %4313 = vmatpush1.xpose.msra.mxu0 0.0
    %4314 = vmatprep.subr.mxu0 0.0
    %4315 = vmatpush1.xpose.msra.mxu0 0.0
    %4316 = vmatprep.subr.mxu0 0.0
    %4317 = vmatpush1.xpose.msra.mxu0 0.0
    %4318 = vmatprep.subr.mxu0 0.0
    %4319 = vmatpush1.xpose.msra.mxu0 0.0
    %4320 = vmatprep.subr.mxu0 0.0
    %4321 = vmatpush1.xpose.msra.mxu0 0.0
    %4322 = vmatprep.subr.mxu0 0.0
    %4323 = vmatpush1.xpose.msra.mxu0 0.0
    %4324 = vmatprep.subr.mxu0 0.0
    %4325 = vmatpush1.xpose.msra.mxu0 0.0
    %4326 = vmatprep.subr.mxu0 0.0
    %4327 = vmatpush1.xpose.msra.mxu0 0.0
    %4328 = vmatprep.subr.mxu0 0.0
    %4329 = vmatpush1.xpose.msra.mxu0 0.0
    %4330 = vmatprep.subr.mxu0 0.0
    %4331 = vmatpush1.xpose.msra.mxu0 0.0
    %4332 = vmatprep.subr.mxu0 0.0
    %4333 = vmatpush1.xpose.msra.mxu0 0.0
    %4334 = vmatprep.subr.mxu0 0.0
    %4335 = vmatpush1.xpose.msra.mxu0 0.0
    %4336 = vmatprep.subr.mxu0 0.0
    %4337 = vmatpush1.xpose.msra.mxu0 0.0
    %4338 = vmatprep.subr.mxu0 0.0
    %4339 = vmatpush1.xpose.msra.mxu0 0.0
    %4340 = vmatprep.subr.mxu0 0.0
    %4341 = vmatpush1.xpose.msra.mxu0 0.0
    %4342 = vmatprep.subr.mxu0 0.0
    %4343 = vmatpush1.xpose.msra.mxu0 0.0
    %4344 = vmatprep.subr.mxu0 0.0
    %4345 = vmatpush1.xpose.msra.mxu0 0.0
    %4346 = vmatprep.subr.mxu0 0.0
    %4347 = vmatpush1.xpose.msra.mxu0 0.0
    %4348 = vmatprep.subr.mxu0 0.0
    %4349 = vmatpush1.xpose.msra.mxu0 0.0
    %4350 = vmatprep.subr.mxu0 0.0
    %4351 = vmatpush1.xpose.msra.mxu0 0.0
    %4352 = vmatprep.subr.mxu0 0.0
    %4353 = vmatpush1.xpose.msra.mxu0 0.0
    %4354 = vmatprep.subr.mxu0 0.0
    %4355 = vmatpush1.xpose.msra.mxu0 0.0
    %4356 = vmatprep.subr.mxu0 0.0
    %4357 = vmatpush1.xpose.msra.mxu0 0.0
    %4358 = vmatprep.subr.mxu0 0.0
    %4359 = vmatpush1.xpose.msra.mxu0 0.0
    %4360 = vmatprep.subr.mxu0 0.0
    %4361 = vmatpush1.xpose.msra.mxu0 0.0
    %4362 = vmatprep.mubr.f32.mxu0 %v4189
    %4363 = vmatmul.mubr.f32.gmra.mrb[0].mxu0 %v4187
    %v4364 = vpop.f32.mrb[0].mxu0
    %v4365 = vadd.f32 %v4295, %v4364
    %v4366 = vpop.f32.mrb[0].mxu0
    %4367 = vdwg.mxu0
    %4368 = vmatprep.subr.mxu0 %v3359
    %4369 = vmatpush1.xpose.msra.mxu0 %v3358
    %4370 = vmatprep.subr.mxu0 %v3367
    %4371 = vmatpush1.xpose.msra.mxu0 %v3366
    %4372 = vmatprep.subr.mxu0 %v3375
    %4373 = vmatpush1.xpose.msra.mxu0 %v3374
    %4374 = vmatprep.subr.mxu0 %v3383
    %4375 = vmatpush1.xpose.msra.mxu0 %v3382
    %4376 = vmatprep.subr.mxu0 0.0
    %4377 = vmatpush1.xpose.msra.mxu0 0.0
    %4378 = vmatprep.subr.mxu0 0.0
    %4379 = vmatpush1.xpose.msra.mxu0 0.0
    %4380 = vmatprep.subr.mxu0 0.0
    %4381 = vmatpush1.xpose.msra.mxu0 0.0
    %4382 = vmatprep.subr.mxu0 0.0
    %4383 = vmatpush1.xpose.msra.mxu0 0.0
    %4384 = vmatprep.subr.mxu0 0.0
    %4385 = vmatpush1.xpose.msra.mxu0 0.0
    %4386 = vmatprep.subr.mxu0 0.0
    %4387 = vmatpush1.xpose.msra.mxu0 0.0
    %4388 = vmatprep.subr.mxu0 0.0
    %4389 = vmatpush1.xpose.msra.mxu0 0.0
    %4390 = vmatprep.subr.mxu0 0.0
    %4391 = vmatpush1.xpose.msra.mxu0 0.0
    %4392 = vmatprep.subr.mxu0 0.0
    %4393 = vmatpush1.xpose.msra.mxu0 0.0
    %4394 = vmatprep.subr.mxu0 0.0
    %4395 = vmatpush1.xpose.msra.mxu0 0.0
    %4396 = vmatprep.subr.mxu0 0.0
    %4397 = vmatpush1.xpose.msra.mxu0 0.0
    %4398 = vmatprep.subr.mxu0 0.0
    %4399 = vmatpush1.xpose.msra.mxu0 0.0
    %4400 = vmatprep.subr.mxu0 0.0
    %4401 = vmatpush1.xpose.msra.mxu0 0.0
    %4402 = vmatprep.subr.mxu0 0.0
    %4403 = vmatpush1.xpose.msra.mxu0 0.0
    %4404 = vmatprep.subr.mxu0 0.0
    %4405 = vmatpush1.xpose.msra.mxu0 0.0
    %4406 = vmatprep.subr.mxu0 0.0
    %4407 = vmatpush1.xpose.msra.mxu0 0.0
    %4408 = vmatprep.subr.mxu0 0.0
    %4409 = vmatpush1.xpose.msra.mxu0 0.0
    %4410 = vmatprep.subr.mxu0 0.0
    %4411 = vmatpush1.xpose.msra.mxu0 0.0
    %4412 = vmatprep.subr.mxu0 0.0
    %4413 = vmatpush1.xpose.msra.mxu0 0.0
    %4414 = vmatprep.subr.mxu0 0.0
    %4415 = vmatpush1.xpose.msra.mxu0 0.0
    %4416 = vmatprep.subr.mxu0 0.0
    %4417 = vmatpush1.xpose.msra.mxu0 0.0
    %4418 = vmatprep.subr.mxu0 0.0
    %4419 = vmatpush1.xpose.msra.mxu0 0.0
    %4420 = vmatprep.subr.mxu0 0.0
    %4421 = vmatpush1.xpose.msra.mxu0 0.0
    %4422 = vmatprep.subr.mxu0 0.0
    %4423 = vmatpush1.xpose.msra.mxu0 0.0
    %4424 = vmatprep.subr.mxu0 0.0
    %4425 = vmatpush1.xpose.msra.mxu0 0.0
    %4426 = vmatprep.subr.mxu0 0.0
    %4427 = vmatpush1.xpose.msra.mxu0 0.0
    %4428 = vmatprep.subr.mxu0 0.0
    %4429 = vmatpush1.xpose.msra.mxu0 0.0
    %4430 = vmatprep.subr.mxu0 0.0
    %4431 = vmatpush1.xpose.msra.mxu0 0.0
    %4432 = vmatprep.mubr.f32.mxu0 %v4205
    %4433 = vmatmul.mubr.f32.gmra.mrb[0].mxu0 %v4197
    %v4434 = vpop.f32.mrb[0].mxu0
    %v4435 = vadd.f32 %v4365, %v4434
    %v4436 = vpop.f32.mrb[0].mxu0
    %4437 = vdwg.mxu0
    %4438 = vmatprep.subr.mxu0 %v4217
    %4439 = vmatpush1.xpose.msra.mxu0 %v3360
    %4440 = vmatprep.subr.mxu0 %v4220
    %4441 = vmatpush1.xpose.msra.mxu0 %v3368
    %4442 = vmatprep.subr.mxu0 %v4223
    %4443 = vmatpush1.xpose.msra.mxu0 %v3376
    %4444 = vmatprep.subr.mxu0 %v4226
    %4445 = vmatpush1.xpose.msra.mxu0 %v3384
    %4446 = vmatprep.subr.mxu0 0.0
    %4447 = vmatpush1.xpose.msra.mxu0 0.0
    %4448 = vmatprep.subr.mxu0 0.0
    %4449 = vmatpush1.xpose.msra.mxu0 0.0
    %4450 = vmatprep.subr.mxu0 0.0
    %4451 = vmatpush1.xpose.msra.mxu0 0.0
    %4452 = vmatprep.subr.mxu0 0.0
    %4453 = vmatpush1.xpose.msra.mxu0 0.0
    %4454 = vmatprep.subr.mxu0 0.0
    %4455 = vmatpush1.xpose.msra.mxu0 0.0
    %4456 = vmatprep.subr.mxu0 0.0
    %4457 = vmatpush1.xpose.msra.mxu0 0.0
    %4458 = vmatprep.subr.mxu0 0.0
    %4459 = vmatpush1.xpose.msra.mxu0 0.0
    %4460 = vmatprep.subr.mxu0 0.0
    %4461 = vmatpush1.xpose.msra.mxu0 0.0
    %4462 = vmatprep.subr.mxu0 0.0
    %4463 = vmatpush1.xpose.msra.mxu0 0.0
    %4464 = vmatprep.subr.mxu0 0.0
    %4465 = vmatpush1.xpose.msra.mxu0 0.0
    %4466 = vmatprep.subr.mxu0 0.0
    %4467 = vmatpush1.xpose.msra.mxu0 0.0
    %4468 = vmatprep.subr.mxu0 0.0
    %4469 = vmatpush1.xpose.msra.mxu0 0.0
    %4470 = vmatprep.subr.mxu0 0.0
    %4471 = vmatpush1.xpose.msra.mxu0 0.0
    %4472 = vmatprep.subr.mxu0 0.0
    %4473 = vmatpush1.xpose.msra.mxu0 0.0
    %4474 = vmatprep.subr.mxu0 0.0
    %4475 = vmatpush1.xpose.msra.mxu0 0.0
    %4476 = vmatprep.subr.mxu0 0.0
    %4477 = vmatpush1.xpose.msra.mxu0 0.0
    %4478 = vmatprep.subr.mxu0 0.0
    %4479 = vmatpush1.xpose.msra.mxu0 0.0
    %4480 = vmatprep.subr.mxu0 0.0
    %4481 = vmatpush1.xpose.msra.mxu0 0.0
    %4482 = vmatprep.subr.mxu0 0.0
    %4483 = vmatpush1.xpose.msra.mxu0 0.0
    %4484 = vmatprep.subr.mxu0 0.0
    %4485 = vmatpush1.xpose.msra.mxu0 0.0
    %4486 = vmatprep.subr.mxu0 0.0
    %4487 = vmatpush1.xpose.msra.mxu0 0.0
    %4488 = vmatprep.subr.mxu0 0.0
    %4489 = vmatpush1.xpose.msra.mxu0 0.0
    %4490 = vmatprep.subr.mxu0 0.0
    %4491 = vmatpush1.xpose.msra.mxu0 0.0
    %4492 = vmatprep.subr.mxu0 0.0
    %4493 = vmatpush1.xpose.msra.mxu0 0.0
    %4494 = vmatprep.subr.mxu0 0.0
    %4495 = vmatpush1.xpose.msra.mxu0 0.0
    %4496 = vmatprep.subr.mxu0 0.0
    %4497 = vmatpush1.xpose.msra.mxu0 0.0
    %4498 = vmatprep.subr.mxu0 0.0
    %4499 = vmatpush1.xpose.msra.mxu0 0.0
    %4500 = vmatprep.subr.mxu0 0.0
    %4501 = vmatpush1.xpose.msra.mxu0 0.0
    %4502 = vmatprep.mubr.f32.mxu0 %v4214
    %4503 = vmatmul.mubr.f32.gmra.mrb[0].mxu0 %v4204
    %v4504 = vpop.f32.mrb[0].mxu0
    %v4505 = vadd.f32 %v4435, %v4504
    %v4506 = vpop.f32.mrb[0].mxu0
    %4507 = vdwg.mxu0
    %v4510 = vcombine.high %v3294, %v3294
    %v4512 = vunpack.c.l.s4 1983009808
    %v4513 = vunpack.c.0.s8 %v4512
    %v4514 = vlaneseq
    %v4515 = vshrl.u32 %v4514, 7
    %v4516 = vsub.s32 %v4513, %v4515
    %v4517 = vrot.slane %v3294, %v4516
    %v4519 = vunpack.c.l.s4 1983009808
    %v4520 = vunpack.c.0.s8 %v4519
    %v4521 = vlaneseq
    %v4522 = vshrl.u32 %v4521, 7
    %v4523 = vsub.s32 %v4520, %v4522
    %v4524 = vrot.slane %v4510, %v4523
    %v4525 = vcombine.high %v4517, %v4517
    %v4526 = vcombine.high %v4524, %v4524
    %v4527 = vcombine.high %v3295, %v3295
    %v4529 = vunpack.c.l.s4 1983009808
    %v4530 = vunpack.c.0.s8 %v4529
    %v4531 = vlaneseq
    %v4532 = vshrl.u32 %v4531, 7
    %v4533 = vsub.s32 %v4530, %v4532
    %v4534 = vrot.slane %v3295, %v4533
    %v4536 = vunpack.c.l.s4 1983009808
    %v4537 = vunpack.c.0.s8 %v4536
    %v4538 = vlaneseq
    %v4539 = vshrl.u32 %v4538, 7
    %v4540 = vsub.s32 %v4537, %v4539
    %v4541 = vrot.slane %v4527, %v4540
    %v4542 = vcombine.high %v4534, %v4534
    %v4543 = vcombine.high %v4541, %v4541
    %v4551 = vsel %vm417, %v4543, 0
    %v4554 = vsel %vm417, %v3393, 0
    %v4557 = vsel %vm417, %v3401, 0
    %v4560 = vsel %vm417, %v3409, 0
    %v4563 = vsel %vm417, %v3417, 0
    %4565 = vmatprep.subr.mxu0 %v3387
    %4566 = vmatpush1.xpose.msra.mxu0 %v3386
    %4567 = vmatprep.subr.mxu0 %v3395
    %4568 = vmatpush1.xpose.msra.mxu0 %v3394
    %4569 = vmatprep.subr.mxu0 %v3403
    %4570 = vmatpush1.xpose.msra.mxu0 %v3402
    %4571 = vmatprep.subr.mxu0 %v3411
    %4572 = vmatpush1.xpose.msra.mxu0 %v3410
    %4573 = vmatprep.subr.mxu0 0.0
    %4574 = vmatpush1.xpose.msra.mxu0 0.0
    %4575 = vmatprep.subr.mxu0 0.0
    %4576 = vmatpush1.xpose.msra.mxu0 0.0
    %4577 = vmatprep.subr.mxu0 0.0
    %4578 = vmatpush1.xpose.msra.mxu0 0.0
    %4579 = vmatprep.subr.mxu0 0.0
    %4580 = vmatpush1.xpose.msra.mxu0 0.0
    %4581 = vmatprep.subr.mxu0 0.0
    %4582 = vmatpush1.xpose.msra.mxu0 0.0
    %4583 = vmatprep.subr.mxu0 0.0
    %4584 = vmatpush1.xpose.msra.mxu0 0.0
    %4585 = vmatprep.subr.mxu0 0.0
    %4586 = vmatpush1.xpose.msra.mxu0 0.0
    %4587 = vmatprep.subr.mxu0 0.0
    %4588 = vmatpush1.xpose.msra.mxu0 0.0
    %4589 = vmatprep.subr.mxu0 0.0
    %4590 = vmatpush1.xpose.msra.mxu0 0.0
    %4591 = vmatprep.subr.mxu0 0.0
    %4592 = vmatpush1.xpose.msra.mxu0 0.0
    %4593 = vmatprep.subr.mxu0 0.0
    %4594 = vmatpush1.xpose.msra.mxu0 0.0
    %4595 = vmatprep.subr.mxu0 0.0
    %4596 = vmatpush1.xpose.msra.mxu0 0.0
    %4597 = vmatprep.subr.mxu0 0.0
    %4598 = vmatpush1.xpose.msra.mxu0 0.0
    %4599 = vmatprep.subr.mxu0 0.0
    %4600 = vmatpush1.xpose.msra.mxu0 0.0
    %4601 = vmatprep.subr.mxu0 0.0
    %4602 = vmatpush1.xpose.msra.mxu0 0.0
    %4603 = vmatprep.subr.mxu0 0.0
    %4604 = vmatpush1.xpose.msra.mxu0 0.0
    %4605 = vmatprep.subr.mxu0 0.0
    %4606 = vmatpush1.xpose.msra.mxu0 0.0
    %4607 = vmatprep.subr.mxu0 0.0
    %4608 = vmatpush1.xpose.msra.mxu0 0.0
    %4609 = vmatprep.subr.mxu0 0.0
    %4610 = vmatpush1.xpose.msra.mxu0 0.0
    %4611 = vmatprep.subr.mxu0 0.0
    %4612 = vmatpush1.xpose.msra.mxu0 0.0
    %4613 = vmatprep.subr.mxu0 0.0
    %4614 = vmatpush1.xpose.msra.mxu0 0.0
    %4615 = vmatprep.subr.mxu0 0.0
    %4616 = vmatpush1.xpose.msra.mxu0 0.0
    %4617 = vmatprep.subr.mxu0 0.0
    %4618 = vmatpush1.xpose.msra.mxu0 0.0
    %4619 = vmatprep.subr.mxu0 0.0
    %4620 = vmatpush1.xpose.msra.mxu0 0.0
    %4621 = vmatprep.subr.mxu0 0.0
    %4622 = vmatpush1.xpose.msra.mxu0 0.0
    %4623 = vmatprep.subr.mxu0 0.0
    %4624 = vmatpush1.xpose.msra.mxu0 0.0
    %4625 = vmatprep.subr.mxu0 0.0
    %4626 = vmatpush1.xpose.msra.mxu0 0.0
    %4627 = vmatprep.subr.mxu0 0.0
    %4628 = vmatpush1.xpose.msra.mxu0 0.0
    %4629 = vmatprep.mubr.f32.mxu0 %v4525
    %4630 = vmatmul.mubr.f32.gmra.mrb[0].mxu0 %v4517
    %v4631 = vpop.f32.mrb[0].mxu0
    %v4632 = vadd.f32 0.0, %v4631
    %v4633 = vpop.f32.mrb[0].mxu0
    %4634 = vdwg.mxu0
    %4635 = vmatprep.subr.mxu0 %v3389
    %4636 = vmatpush1.xpose.msra.mxu0 %v3388
    %4637 = vmatprep.subr.mxu0 %v3397
    %4638 = vmatpush1.xpose.msra.mxu0 %v3396
    %4639 = vmatprep.subr.mxu0 %v3405
    %4640 = vmatpush1.xpose.msra.mxu0 %v3404
    %4641 = vmatprep.subr.mxu0 %v3413
    %4642 = vmatpush1.xpose.msra.mxu0 %v3412
    %4643 = vmatprep.subr.mxu0 0.0
    %4644 = vmatpush1.xpose.msra.mxu0 0.0
    %4645 = vmatprep.subr.mxu0 0.0
    %4646 = vmatpush1.xpose.msra.mxu0 0.0
    %4647 = vmatprep.subr.mxu0 0.0
    %4648 = vmatpush1.xpose.msra.mxu0 0.0
    %4649 = vmatprep.subr.mxu0 0.0
    %4650 = vmatpush1.xpose.msra.mxu0 0.0
    %4651 = vmatprep.subr.mxu0 0.0
    %4652 = vmatpush1.xpose.msra.mxu0 0.0
    %4653 = vmatprep.subr.mxu0 0.0
    %4654 = vmatpush1.xpose.msra.mxu0 0.0
    %4655 = vmatprep.subr.mxu0 0.0
    %4656 = vmatpush1.xpose.msra.mxu0 0.0
    %4657 = vmatprep.subr.mxu0 0.0
    %4658 = vmatpush1.xpose.msra.mxu0 0.0
    %4659 = vmatprep.subr.mxu0 0.0
    %4660 = vmatpush1.xpose.msra.mxu0 0.0
    %4661 = vmatprep.subr.mxu0 0.0
    %4662 = vmatpush1.xpose.msra.mxu0 0.0
    %4663 = vmatprep.subr.mxu0 0.0
    %4664 = vmatpush1.xpose.msra.mxu0 0.0
    %4665 = vmatprep.subr.mxu0 0.0
    %4666 = vmatpush1.xpose.msra.mxu0 0.0
    %4667 = vmatprep.subr.mxu0 0.0
    %4668 = vmatpush1.xpose.msra.mxu0 0.0
    %4669 = vmatprep.subr.mxu0 0.0
    %4670 = vmatpush1.xpose.msra.mxu0 0.0
    %4671 = vmatprep.subr.mxu0 0.0
    %4672 = vmatpush1.xpose.msra.mxu0 0.0
    %4673 = vmatprep.subr.mxu0 0.0
    %4674 = vmatpush1.xpose.msra.mxu0 0.0
    %4675 = vmatprep.subr.mxu0 0.0
    %4676 = vmatpush1.xpose.msra.mxu0 0.0
    %4677 = vmatprep.subr.mxu0 0.0
    %4678 = vmatpush1.xpose.msra.mxu0 0.0
    %4679 = vmatprep.subr.mxu0 0.0
    %4680 = vmatpush1.xpose.msra.mxu0 0.0
    %4681 = vmatprep.subr.mxu0 0.0
    %4682 = vmatpush1.xpose.msra.mxu0 0.0
    %4683 = vmatprep.subr.mxu0 0.0
    %4684 = vmatpush1.xpose.msra.mxu0 0.0
    %4685 = vmatprep.subr.mxu0 0.0
    %4686 = vmatpush1.xpose.msra.mxu0 0.0
    %4687 = vmatprep.subr.mxu0 0.0
    %4688 = vmatpush1.xpose.msra.mxu0 0.0
    %4689 = vmatprep.subr.mxu0 0.0
    %4690 = vmatpush1.xpose.msra.mxu0 0.0
    %4691 = vmatprep.subr.mxu0 0.0
    %4692 = vmatpush1.xpose.msra.mxu0 0.0
    %4693 = vmatprep.subr.mxu0 0.0
    %4694 = vmatpush1.xpose.msra.mxu0 0.0
    %4695 = vmatprep.subr.mxu0 0.0
    %4696 = vmatpush1.xpose.msra.mxu0 0.0
    %4697 = vmatprep.subr.mxu0 0.0
    %4698 = vmatpush1.xpose.msra.mxu0 0.0
    %4699 = vmatprep.mubr.f32.mxu0 %v4526
    %4700 = vmatmul.mubr.f32.gmra.mrb[0].mxu0 %v4524
    %v4701 = vpop.f32.mrb[0].mxu0
    %v4702 = vadd.f32 %v4632, %v4701
    %v4703 = vpop.f32.mrb[0].mxu0
    %4704 = vdwg.mxu0
    %4705 = vmatprep.subr.mxu0 %v3391
    %4706 = vmatpush1.xpose.msra.mxu0 %v3390
    %4707 = vmatprep.subr.mxu0 %v3399
    %4708 = vmatpush1.xpose.msra.mxu0 %v3398
    %4709 = vmatprep.subr.mxu0 %v3407
    %4710 = vmatpush1.xpose.msra.mxu0 %v3406
    %4711 = vmatprep.subr.mxu0 %v3415
    %4712 = vmatpush1.xpose.msra.mxu0 %v3414
    %4713 = vmatprep.subr.mxu0 0.0
    %4714 = vmatpush1.xpose.msra.mxu0 0.0
    %4715 = vmatprep.subr.mxu0 0.0
    %4716 = vmatpush1.xpose.msra.mxu0 0.0
    %4717 = vmatprep.subr.mxu0 0.0
    %4718 = vmatpush1.xpose.msra.mxu0 0.0
    %4719 = vmatprep.subr.mxu0 0.0
    %4720 = vmatpush1.xpose.msra.mxu0 0.0
    %4721 = vmatprep.subr.mxu0 0.0
    %4722 = vmatpush1.xpose.msra.mxu0 0.0
    %4723 = vmatprep.subr.mxu0 0.0
    %4724 = vmatpush1.xpose.msra.mxu0 0.0
    %4725 = vmatprep.subr.mxu0 0.0
    %4726 = vmatpush1.xpose.msra.mxu0 0.0
    %4727 = vmatprep.subr.mxu0 0.0
    %4728 = vmatpush1.xpose.msra.mxu0 0.0
    %4729 = vmatprep.subr.mxu0 0.0
    %4730 = vmatpush1.xpose.msra.mxu0 0.0
    %4731 = vmatprep.subr.mxu0 0.0
    %4732 = vmatpush1.xpose.msra.mxu0 0.0
    %4733 = vmatprep.subr.mxu0 0.0
    %4734 = vmatpush1.xpose.msra.mxu0 0.0
    %4735 = vmatprep.subr.mxu0 0.0
    %4736 = vmatpush1.xpose.msra.mxu0 0.0
    %4737 = vmatprep.subr.mxu0 0.0
    %4738 = vmatpush1.xpose.msra.mxu0 0.0
    %4739 = vmatprep.subr.mxu0 0.0
    %4740 = vmatpush1.xpose.msra.mxu0 0.0
    %4741 = vmatprep.subr.mxu0 0.0
    %4742 = vmatpush1.xpose.msra.mxu0 0.0
    %4743 = vmatprep.subr.mxu0 0.0
    %4744 = vmatpush1.xpose.msra.mxu0 0.0
    %4745 = vmatprep.subr.mxu0 0.0
    %4746 = vmatpush1.xpose.msra.mxu0 0.0
    %4747 = vmatprep.subr.mxu0 0.0
    %4748 = vmatpush1.xpose.msra.mxu0 0.0
    %4749 = vmatprep.subr.mxu0 0.0
    %4750 = vmatpush1.xpose.msra.mxu0 0.0
    %4751 = vmatprep.subr.mxu0 0.0
    %4752 = vmatpush1.xpose.msra.mxu0 0.0
    %4753 = vmatprep.subr.mxu0 0.0
    %4754 = vmatpush1.xpose.msra.mxu0 0.0
    %4755 = vmatprep.subr.mxu0 0.0
    %4756 = vmatpush1.xpose.msra.mxu0 0.0
    %4757 = vmatprep.subr.mxu0 0.0
    %4758 = vmatpush1.xpose.msra.mxu0 0.0
    %4759 = vmatprep.subr.mxu0 0.0
    %4760 = vmatpush1.xpose.msra.mxu0 0.0
    %4761 = vmatprep.subr.mxu0 0.0
    %4762 = vmatpush1.xpose.msra.mxu0 0.0
    %4763 = vmatprep.subr.mxu0 0.0
    %4764 = vmatpush1.xpose.msra.mxu0 0.0
    %4765 = vmatprep.subr.mxu0 0.0
    %4766 = vmatpush1.xpose.msra.mxu0 0.0
    %4767 = vmatprep.subr.mxu0 0.0
    %4768 = vmatpush1.xpose.msra.mxu0 0.0
    %4769 = vmatprep.mubr.f32.mxu0 %v4542
    %4770 = vmatmul.mubr.f32.gmra.mrb[0].mxu0 %v4534
    %v4771 = vpop.f32.mrb[0].mxu0
    %v4772 = vadd.f32 %v4702, %v4771
    %v4773 = vpop.f32.mrb[0].mxu0
    %4774 = vdwg.mxu0
    %4775 = vmatprep.subr.mxu0 %v4554
    %4776 = vmatpush1.xpose.msra.mxu0 %v3392
    %4777 = vmatprep.subr.mxu0 %v4557
    %4778 = vmatpush1.xpose.msra.mxu0 %v3400
    %4779 = vmatprep.subr.mxu0 %v4560
    %4780 = vmatpush1.xpose.msra.mxu0 %v3408
    %4781 = vmatprep.subr.mxu0 %v4563
    %4782 = vmatpush1.xpose.msra.mxu0 %v3416
    %4783 = vmatprep.subr.mxu0 0.0
    %4784 = vmatpush1.xpose.msra.mxu0 0.0
    %4785 = vmatprep.subr.mxu0 0.0
    %4786 = vmatpush1.xpose.msra.mxu0 0.0
    %4787 = vmatprep.subr.mxu0 0.0
    %4788 = vmatpush1.xpose.msra.mxu0 0.0
    %4789 = vmatprep.subr.mxu0 0.0
    %4790 = vmatpush1.xpose.msra.mxu0 0.0
    %4791 = vmatprep.subr.mxu0 0.0
    %4792 = vmatpush1.xpose.msra.mxu0 0.0
    %4793 = vmatprep.subr.mxu0 0.0
    %4794 = vmatpush1.xpose.msra.mxu0 0.0
    %4795 = vmatprep.subr.mxu0 0.0
    %4796 = vmatpush1.xpose.msra.mxu0 0.0
    %4797 = vmatprep.subr.mxu0 0.0
    %4798 = vmatpush1.xpose.msra.mxu0 0.0
    %4799 = vmatprep.subr.mxu0 0.0
    %4800 = vmatpush1.xpose.msra.mxu0 0.0
    %4801 = vmatprep.subr.mxu0 0.0
    %4802 = vmatpush1.xpose.msra.mxu0 0.0
    %4803 = vmatprep.subr.mxu0 0.0
    %4804 = vmatpush1.xpose.msra.mxu0 0.0
    %4805 = vmatprep.subr.mxu0 0.0
    %4806 = vmatpush1.xpose.msra.mxu0 0.0
    %4807 = vmatprep.subr.mxu0 0.0
    %4808 = vmatpush1.xpose.msra.mxu0 0.0
    %4809 = vmatprep.subr.mxu0 0.0
    %4810 = vmatpush1.xpose.msra.mxu0 0.0
    %4811 = vmatprep.subr.mxu0 0.0
    %4812 = vmatpush1.xpose.msra.mxu0 0.0
    %4813 = vmatprep.subr.mxu0 0.0
    %4814 = vmatpush1.xpose.msra.mxu0 0.0
    %4815 = vmatprep.subr.mxu0 0.0
    %4816 = vmatpush1.xpose.msra.mxu0 0.0
    %4817 = vmatprep.subr.mxu0 0.0
    %4818 = vmatpush1.xpose.msra.mxu0 0.0
    %4819 = vmatprep.subr.mxu0 0.0
    %4820 = vmatpush1.xpose.msra.mxu0 0.0
    %4821 = vmatprep.subr.mxu0 0.0
    %4822 = vmatpush1.xpose.msra.mxu0 0.0
    %4823 = vmatprep.subr.mxu0 0.0
    %4824 = vmatpush1.xpose.msra.mxu0 0.0
    %4825 = vmatprep.subr.mxu0 0.0
    %4826 = vmatpush1.xpose.msra.mxu0 0.0
    %4827 = vmatprep.subr.mxu0 0.0
    %4828 = vmatpush1.xpose.msra.mxu0 0.0
    %4829 = vmatprep.subr.mxu0 0.0
    %4830 = vmatpush1.xpose.msra.mxu0 0.0
    %4831 = vmatprep.subr.mxu0 0.0
    %4832 = vmatpush1.xpose.msra.mxu0 0.0
    %4833 = vmatprep.subr.mxu0 0.0
    %4834 = vmatpush1.xpose.msra.mxu0 0.0
    %4835 = vmatprep.subr.mxu0 0.0
    %4836 = vmatpush1.xpose.msra.mxu0 0.0
    %4837 = vmatprep.subr.mxu0 0.0
    %4838 = vmatpush1.xpose.msra.mxu0 0.0
    %4839 = vmatprep.mubr.f32.mxu0 %v4551
    %4840 = vmatmul.mubr.f32.gmra.mrb[0].mxu0 %v4541
    %v4841 = vpop.f32.mrb[0].mxu0
    %v4842 = vadd.f32 %v4772, %v4841
    %v4843 = vpop.f32.mrb[0].mxu0
    %4844 = vdwg.mxu0
    %v4847 = vcombine.high %v3296, %v3296
    %v4849 = vunpack.c.l.s4 1983009808
    %v4850 = vunpack.c.0.s8 %v4849
    %v4851 = vlaneseq
    %v4852 = vshrl.u32 %v4851, 7
    %v4853 = vsub.s32 %v4850, %v4852
    %v4854 = vrot.slane %v3296, %v4853
    %v4856 = vunpack.c.l.s4 1983009808
    %v4857 = vunpack.c.0.s8 %v4856
    %v4858 = vlaneseq
    %v4859 = vshrl.u32 %v4858, 7
    %v4860 = vsub.s32 %v4857, %v4859
    %v4861 = vrot.slane %v4847, %v4860
    %v4862 = vcombine.high %v4854, %v4854
    %v4863 = vcombine.high %v4861, %v4861
    %v4864 = vcombine.high %v3297, %v3297
    %v4866 = vunpack.c.l.s4 1983009808
    %v4867 = vunpack.c.0.s8 %v4866
    %v4868 = vlaneseq
    %v4869 = vshrl.u32 %v4868, 7
    %v4870 = vsub.s32 %v4867, %v4869
    %v4871 = vrot.slane %v3297, %v4870
    %v4873 = vunpack.c.l.s4 1983009808
    %v4874 = vunpack.c.0.s8 %v4873
    %v4875 = vlaneseq
    %v4876 = vshrl.u32 %v4875, 7
    %v4877 = vsub.s32 %v4874, %v4876
    %v4878 = vrot.slane %v4864, %v4877
    %v4879 = vcombine.high %v4871, %v4871
    %v4880 = vcombine.high %v4878, %v4878
    %v4888 = vsel %vm417, %v4880, 0
    %v4891 = vsel %vm417, %v3425, 0
    %v4894 = vsel %vm417, %v3433, 0
    %v4897 = vsel %vm417, %v3441, 0
    %v4900 = vsel %vm417, %v3449, 0
    %4902 = vmatprep.subr.mxu0 %v3419
    %4903 = vmatpush1.xpose.msra.mxu0 %v3418
    %4904 = vmatprep.subr.mxu0 %v3427
    %4905 = vmatpush1.xpose.msra.mxu0 %v3426
    %4906 = vmatprep.subr.mxu0 %v3435
    %4907 = vmatpush1.xpose.msra.mxu0 %v3434
    %4908 = vmatprep.subr.mxu0 %v3443
    %4909 = vmatpush1.xpose.msra.mxu0 %v3442
    %4910 = vmatprep.subr.mxu0 0.0
    %4911 = vmatpush1.xpose.msra.mxu0 0.0
    %4912 = vmatprep.subr.mxu0 0.0
    %4913 = vmatpush1.xpose.msra.mxu0 0.0
    %4914 = vmatprep.subr.mxu0 0.0
    %4915 = vmatpush1.xpose.msra.mxu0 0.0
    %4916 = vmatprep.subr.mxu0 0.0
    %4917 = vmatpush1.xpose.msra.mxu0 0.0
    %4918 = vmatprep.subr.mxu0 0.0
    %4919 = vmatpush1.xpose.msra.mxu0 0.0
    %4920 = vmatprep.subr.mxu0 0.0
    %4921 = vmatpush1.xpose.msra.mxu0 0.0
    %4922 = vmatprep.subr.mxu0 0.0
    %4923 = vmatpush1.xpose.msra.mxu0 0.0
    %4924 = vmatprep.subr.mxu0 0.0
    %4925 = vmatpush1.xpose.msra.mxu0 0.0
    %4926 = vmatprep.subr.mxu0 0.0
    %4927 = vmatpush1.xpose.msra.mxu0 0.0
    %4928 = vmatprep.subr.mxu0 0.0
    %4929 = vmatpush1.xpose.msra.mxu0 0.0
    %4930 = vmatprep.subr.mxu0 0.0
    %4931 = vmatpush1.xpose.msra.mxu0 0.0
    %4932 = vmatprep.subr.mxu0 0.0
    %4933 = vmatpush1.xpose.msra.mxu0 0.0
    %4934 = vmatprep.subr.mxu0 0.0
    %4935 = vmatpush1.xpose.msra.mxu0 0.0
    %4936 = vmatprep.subr.mxu0 0.0
    %4937 = vmatpush1.xpose.msra.mxu0 0.0
    %4938 = vmatprep.subr.mxu0 0.0
    %4939 = vmatpush1.xpose.msra.mxu0 0.0
    %4940 = vmatprep.subr.mxu0 0.0
    %4941 = vmatpush1.xpose.msra.mxu0 0.0
    %4942 = vmatprep.subr.mxu0 0.0
    %4943 = vmatpush1.xpose.msra.mxu0 0.0
    %4944 = vmatprep.subr.mxu0 0.0
    %4945 = vmatpush1.xpose.msra.mxu0 0.0
    %4946 = vmatprep.subr.mxu0 0.0
    %4947 = vmatpush1.xpose.msra.mxu0 0.0
    %4948 = vmatprep.subr.mxu0 0.0
    %4949 = vmatpush1.xpose.msra.mxu0 0.0
    %4950 = vmatprep.subr.mxu0 0.0
    %4951 = vmatpush1.xpose.msra.mxu0 0.0
    %4952 = vmatprep.subr.mxu0 0.0
    %4953 = vmatpush1.xpose.msra.mxu0 0.0
    %4954 = vmatprep.subr.mxu0 0.0
    %4955 = vmatpush1.xpose.msra.mxu0 0.0
    %4956 = vmatprep.subr.mxu0 0.0
    %4957 = vmatpush1.xpose.msra.mxu0 0.0
    %4958 = vmatprep.subr.mxu0 0.0
    %4959 = vmatpush1.xpose.msra.mxu0 0.0
    %4960 = vmatprep.subr.mxu0 0.0
    %4961 = vmatpush1.xpose.msra.mxu0 0.0
    %4962 = vmatprep.subr.mxu0 0.0
    %4963 = vmatpush1.xpose.msra.mxu0 0.0
    %4964 = vmatprep.subr.mxu0 0.0
    %4965 = vmatpush1.xpose.msra.mxu0 0.0
    %4966 = vmatprep.mubr.f32.mxu0 %v4862
    %4967 = vmatmul.mubr.f32.gmra.mrb[0].mxu0 %v4854
    %v4968 = vpop.f32.mrb[0].mxu0
    %v4969 = vadd.f32 0.0, %v4968
    %v4970 = vpop.f32.mrb[0].mxu0
    %4971 = vdwg.mxu0
    %4972 = vmatprep.subr.mxu0 %v3421
    %4973 = vmatpush1.xpose.msra.mxu0 %v3420
    %4974 = vmatprep.subr.mxu0 %v3429
    %4975 = vmatpush1.xpose.msra.mxu0 %v3428
    %4976 = vmatprep.subr.mxu0 %v3437
    %4977 = vmatpush1.xpose.msra.mxu0 %v3436
    %4978 = vmatprep.subr.mxu0 %v3445
    %4979 = vmatpush1.xpose.msra.mxu0 %v3444
    %4980 = vmatprep.subr.mxu0 0.0
    %4981 = vmatpush1.xpose.msra.mxu0 0.0
    %4982 = vmatprep.subr.mxu0 0.0
    %4983 = vmatpush1.xpose.msra.mxu0 0.0
    %4984 = vmatprep.subr.mxu0 0.0
    %4985 = vmatpush1.xpose.msra.mxu0 0.0
    %4986 = vmatprep.subr.mxu0 0.0
    %4987 = vmatpush1.xpose.msra.mxu0 0.0
    %4988 = vmatprep.subr.mxu0 0.0
    %4989 = vmatpush1.xpose.msra.mxu0 0.0
    %4990 = vmatprep.subr.mxu0 0.0
    %4991 = vmatpush1.xpose.msra.mxu0 0.0
    %4992 = vmatprep.subr.mxu0 0.0
    %4993 = vmatpush1.xpose.msra.mxu0 0.0
    %4994 = vmatprep.subr.mxu0 0.0
    %4995 = vmatpush1.xpose.msra.mxu0 0.0
    %4996 = vmatprep.subr.mxu0 0.0
    %4997 = vmatpush1.xpose.msra.mxu0 0.0
    %4998 = vmatprep.subr.mxu0 0.0
    %4999 = vmatpush1.xpose.msra.mxu0 0.0
    %5000 = vmatprep.subr.mxu0 0.0
    %5001 = vmatpush1.xpose.msra.mxu0 0.0
    %5002 = vmatprep.subr.mxu0 0.0
    %5003 = vmatpush1.xpose.msra.mxu0 0.0
    %5004 = vmatprep.subr.mxu0 0.0
    %5005 = vmatpush1.xpose.msra.mxu0 0.0
    %5006 = vmatprep.subr.mxu0 0.0
    %5007 = vmatpush1.xpose.msra.mxu0 0.0
    %5008 = vmatprep.subr.mxu0 0.0
    %5009 = vmatpush1.xpose.msra.mxu0 0.0
    %5010 = vmatprep.subr.mxu0 0.0
    %5011 = vmatpush1.xpose.msra.mxu0 0.0
    %5012 = vmatprep.subr.mxu0 0.0
    %5013 = vmatpush1.xpose.msra.mxu0 0.0
    %5014 = vmatprep.subr.mxu0 0.0
    %5015 = vmatpush1.xpose.msra.mxu0 0.0
    %5016 = vmatprep.subr.mxu0 0.0
    %5017 = vmatpush1.xpose.msra.mxu0 0.0
    %5018 = vmatprep.subr.mxu0 0.0
    %5019 = vmatpush1.xpose.msra.mxu0 0.0
    %5020 = vmatprep.subr.mxu0 0.0
    %5021 = vmatpush1.xpose.msra.mxu0 0.0
    %5022 = vmatprep.subr.mxu0 0.0
    %5023 = vmatpush1.xpose.msra.mxu0 0.0
    %5024 = vmatprep.subr.mxu0 0.0
    %5025 = vmatpush1.xpose.msra.mxu0 0.0
    %5026 = vmatprep.subr.mxu0 0.0
    %5027 = vmatpush1.xpose.msra.mxu0 0.0
    %5028 = vmatprep.subr.mxu0 0.0
    %5029 = vmatpush1.xpose.msra.mxu0 0.0
    %5030 = vmatprep.subr.mxu0 0.0
    %5031 = vmatpush1.xpose.msra.mxu0 0.0
    %5032 = vmatprep.subr.mxu0 0.0
    %5033 = vmatpush1.xpose.msra.mxu0 0.0
    %5034 = vmatprep.subr.mxu0 0.0
    %5035 = vmatpush1.xpose.msra.mxu0 0.0
    %5036 = vmatprep.mubr.f32.mxu0 %v4863
    %5037 = vmatmul.mubr.f32.gmra.mrb[0].mxu0 %v4861
    %v5038 = vpop.f32.mrb[0].mxu0
    %v5039 = vadd.f32 %v4969, %v5038
    %v5040 = vpop.f32.mrb[0].mxu0
    %5041 = vdwg.mxu0
    %5042 = vmatprep.subr.mxu0 %v3423
    %5043 = vmatpush1.xpose.msra.mxu0 %v3422
    %5044 = vmatprep.subr.mxu0 %v3431
    %5045 = vmatpush1.xpose.msra.mxu0 %v3430
    %5046 = vmatprep.subr.mxu0 %v3439
    %5047 = vmatpush1.xpose.msra.mxu0 %v3438
    %5048 = vmatprep.subr.mxu0 %v3447
    %5049 = vmatpush1.xpose.msra.mxu0 %v3446
    %5050 = vmatprep.subr.mxu0 0.0
    %5051 = vmatpush1.xpose.msra.mxu0 0.0
    %5052 = vmatprep.subr.mxu0 0.0
    %5053 = vmatpush1.xpose.msra.mxu0 0.0
    %5054 = vmatprep.subr.mxu0 0.0
    %5055 = vmatpush1.xpose.msra.mxu0 0.0
    %5056 = vmatprep.subr.mxu0 0.0
    %5057 = vmatpush1.xpose.msra.mxu0 0.0
    %5058 = vmatprep.subr.mxu0 0.0
    %5059 = vmatpush1.xpose.msra.mxu0 0.0
    %5060 = vmatprep.subr.mxu0 0.0
    %5061 = vmatpush1.xpose.msra.mxu0 0.0
    %5062 = vmatprep.subr.mxu0 0.0
    %5063 = vmatpush1.xpose.msra.mxu0 0.0
    %5064 = vmatprep.subr.mxu0 0.0
    %5065 = vmatpush1.xpose.msra.mxu0 0.0
    %5066 = vmatprep.subr.mxu0 0.0
    %5067 = vmatpush1.xpose.msra.mxu0 0.0
    %5068 = vmatprep.subr.mxu0 0.0
    %5069 = vmatpush1.xpose.msra.mxu0 0.0
    %5070 = vmatprep.subr.mxu0 0.0
    %5071 = vmatpush1.xpose.msra.mxu0 0.0
    %5072 = vmatprep.subr.mxu0 0.0
    %5073 = vmatpush1.xpose.msra.mxu0 0.0
    %5074 = vmatprep.subr.mxu0 0.0
    %5075 = vmatpush1.xpose.msra.mxu0 0.0
    %5076 = vmatprep.subr.mxu0 0.0
    %5077 = vmatpush1.xpose.msra.mxu0 0.0
    %5078 = vmatprep.subr.mxu0 0.0
    %5079 = vmatpush1.xpose.msra.mxu0 0.0
    %5080 = vmatprep.subr.mxu0 0.0
    %5081 = vmatpush1.xpose.msra.mxu0 0.0
    %5082 = vmatprep.subr.mxu0 0.0
    %5083 = vmatpush1.xpose.msra.mxu0 0.0
    %5084 = vmatprep.subr.mxu0 0.0
    %5085 = vmatpush1.xpose.msra.mxu0 0.0
    %5086 = vmatprep.subr.mxu0 0.0
    %5087 = vmatpush1.xpose.msra.mxu0 0.0
    %5088 = vmatprep.subr.mxu0 0.0
    %5089 = vmatpush1.xpose.msra.mxu0 0.0
    %5090 = vmatprep.subr.mxu0 0.0
    %5091 = vmatpush1.xpose.msra.mxu0 0.0
    %5092 = vmatprep.subr.mxu0 0.0
    %5093 = vmatpush1.xpose.msra.mxu0 0.0
    %5094 = vmatprep.subr.mxu0 0.0
    %5095 = vmatpush1.xpose.msra.mxu0 0.0
    %5096 = vmatprep.subr.mxu0 0.0
    %5097 = vmatpush1.xpose.msra.mxu0 0.0
    %5098 = vmatprep.subr.mxu0 0.0
    %5099 = vmatpush1.xpose.msra.mxu0 0.0
    %5100 = vmatprep.subr.mxu0 0.0
    %5101 = vmatpush1.xpose.msra.mxu0 0.0
    %5102 = vmatprep.subr.mxu0 0.0
    %5103 = vmatpush1.xpose.msra.mxu0 0.0
    %5104 = vmatprep.subr.mxu0 0.0
    %5105 = vmatpush1.xpose.msra.mxu0 0.0
    %5106 = vmatprep.mubr.f32.mxu0 %v4879
    %5107 = vmatmul.mubr.f32.gmra.mrb[0].mxu0 %v4871
    %v5108 = vpop.f32.mrb[0].mxu0
    %v5109 = vadd.f32 %v5039, %v5108
    %v5110 = vpop.f32.mrb[0].mxu0
    %5111 = vdwg.mxu0
    %5112 = vmatprep.subr.mxu0 %v4891
    %5113 = vmatpush1.xpose.msra.mxu0 %v3424
    %5114 = vmatprep.subr.mxu0 %v4894
    %5115 = vmatpush1.xpose.msra.mxu0 %v3432
    %5116 = vmatprep.subr.mxu0 %v4897
    %5117 = vmatpush1.xpose.msra.mxu0 %v3440
    %5118 = vmatprep.subr.mxu0 %v4900
    %5119 = vmatpush1.xpose.msra.mxu0 %v3448
    %5120 = vmatprep.subr.mxu0 0.0
    %5121 = vmatpush1.xpose.msra.mxu0 0.0
    %5122 = vmatprep.subr.mxu0 0.0
    %5123 = vmatpush1.xpose.msra.mxu0 0.0
    %5124 = vmatprep.subr.mxu0 0.0
    %5125 = vmatpush1.xpose.msra.mxu0 0.0
    %5126 = vmatprep.subr.mxu0 0.0
    %5127 = vmatpush1.xpose.msra.mxu0 0.0
    %5128 = vmatprep.subr.mxu0 0.0
    %5129 = vmatpush1.xpose.msra.mxu0 0.0
    %5130 = vmatprep.subr.mxu0 0.0
    %5131 = vmatpush1.xpose.msra.mxu0 0.0
    %5132 = vmatprep.subr.mxu0 0.0
    %5133 = vmatpush1.xpose.msra.mxu0 0.0
    %5134 = vmatprep.subr.mxu0 0.0
    %5135 = vmatpush1.xpose.msra.mxu0 0.0
    %5136 = vmatprep.subr.mxu0 0.0
    %5137 = vmatpush1.xpose.msra.mxu0 0.0
    %5138 = vmatprep.subr.mxu0 0.0
    %5139 = vmatpush1.xpose.msra.mxu0 0.0
    %5140 = vmatprep.subr.mxu0 0.0
    %5141 = vmatpush1.xpose.msra.mxu0 0.0
    %5142 = vmatprep.subr.mxu0 0.0
    %5143 = vmatpush1.xpose.msra.mxu0 0.0
    %5144 = vmatprep.subr.mxu0 0.0
    %5145 = vmatpush1.xpose.msra.mxu0 0.0
    %5146 = vmatprep.subr.mxu0 0.0
    %5147 = vmatpush1.xpose.msra.mxu0 0.0
    %5148 = vmatprep.subr.mxu0 0.0
    %5149 = vmatpush1.xpose.msra.mxu0 0.0
    %5150 = vmatprep.subr.mxu0 0.0
    %5151 = vmatpush1.xpose.msra.mxu0 0.0
    %5152 = vmatprep.subr.mxu0 0.0
    %5153 = vmatpush1.xpose.msra.mxu0 0.0
    %5154 = vmatprep.subr.mxu0 0.0
    %5155 = vmatpush1.xpose.msra.mxu0 0.0
    %5156 = vmatprep.subr.mxu0 0.0
    %5157 = vmatpush1.xpose.msra.mxu0 0.0
    %5158 = vmatprep.subr.mxu0 0.0
    %5159 = vmatpush1.xpose.msra.mxu0 0.0
    %5160 = vmatprep.subr.mxu0 0.0
    %5161 = vmatpush1.xpose.msra.mxu0 0.0
    %5162 = vmatprep.subr.mxu0 0.0
    %5163 = vmatpush1.xpose.msra.mxu0 0.0
    %5164 = vmatprep.subr.mxu0 0.0
    %5165 = vmatpush1.xpose.msra.mxu0 0.0
    %5166 = vmatprep.subr.mxu0 0.0
    %5167 = vmatpush1.xpose.msra.mxu0 0.0
    %5168 = vmatprep.subr.mxu0 0.0
    %5169 = vmatpush1.xpose.msra.mxu0 0.0
    %5170 = vmatprep.subr.mxu0 0.0
    %5171 = vmatpush1.xpose.msra.mxu0 0.0
    %5172 = vmatprep.subr.mxu0 0.0
    %5173 = vmatpush1.xpose.msra.mxu0 0.0
    %5174 = vmatprep.subr.mxu0 0.0
    %5175 = vmatpush1.xpose.msra.mxu0 0.0
    %5176 = vmatprep.mubr.f32.mxu0 %v4888
    %5177 = vmatmul.mubr.f32.gmra.mrb[0].mxu0 %v4878
    %v5178 = vpop.f32.mrb[0].mxu0
    %v5179 = vadd.f32 %v5109, %v5178
    %v5180 = vpop.f32.mrb[0].mxu0
    %5181 = vdwg.mxu0
    %v5184 = vcombine.high %v3298, %v3298
    %v5186 = vunpack.c.l.s4 1983009808
    %v5187 = vunpack.c.0.s8 %v5186
    %v5188 = vlaneseq
    %v5189 = vshrl.u32 %v5188, 7
    %v5190 = vsub.s32 %v5187, %v5189
    %v5191 = vrot.slane %v3298, %v5190
    %v5193 = vunpack.c.l.s4 1983009808
    %v5194 = vunpack.c.0.s8 %v5193
    %v5195 = vlaneseq
    %v5196 = vshrl.u32 %v5195, 7
    %v5197 = vsub.s32 %v5194, %v5196
    %v5198 = vrot.slane %v5184, %v5197
    %v5199 = vcombine.high %v5191, %v5191
    %v5200 = vcombine.high %v5198, %v5198
    %v5201 = vcombine.high %v3299, %v3299
    %v5203 = vunpack.c.l.s4 1983009808
    %v5204 = vunpack.c.0.s8 %v5203
    %v5205 = vlaneseq
    %v5206 = vshrl.u32 %v5205, 7
    %v5207 = vsub.s32 %v5204, %v5206
    %v5208 = vrot.slane %v3299, %v5207
    %v5210 = vunpack.c.l.s4 1983009808
    %v5211 = vunpack.c.0.s8 %v5210
    %v5212 = vlaneseq
    %v5213 = vshrl.u32 %v5212, 7
    %v5214 = vsub.s32 %v5211, %v5213
    %v5215 = vrot.slane %v5201, %v5214
    %v5216 = vcombine.high %v5208, %v5208
    %v5217 = vcombine.high %v5215, %v5215
    %v5225 = vsel %vm417, %v5217, 0
    %v5228 = vsel %vm417, %v3457, 0
    %v5231 = vsel %vm417, %v3465, 0
    %v5234 = vsel %vm417, %v3473, 0
    %v5237 = vsel %vm417, %v3481, 0
    %5239 = vmatprep.subr.mxu0 %v3451
    %5240 = vmatpush1.xpose.msra.mxu0 %v3450
    %5241 = vmatprep.subr.mxu0 %v3459
    %5242 = vmatpush1.xpose.msra.mxu0 %v3458
    %5243 = vmatprep.subr.mxu0 %v3467
    %5244 = vmatpush1.xpose.msra.mxu0 %v3466
    %5245 = vmatprep.subr.mxu0 %v3475
    %5246 = vmatpush1.xpose.msra.mxu0 %v3474
    %5247 = vmatprep.subr.mxu0 0.0
    %5248 = vmatpush1.xpose.msra.mxu0 0.0
    %5249 = vmatprep.subr.mxu0 0.0
    %5250 = vmatpush1.xpose.msra.mxu0 0.0
    %5251 = vmatprep.subr.mxu0 0.0
    %5252 = vmatpush1.xpose.msra.mxu0 0.0
    %5253 = vmatprep.subr.mxu0 0.0
    %5254 = vmatpush1.xpose.msra.mxu0 0.0
    %5255 = vmatprep.subr.mxu0 0.0
    %5256 = vmatpush1.xpose.msra.mxu0 0.0
    %5257 = vmatprep.subr.mxu0 0.0
    %5258 = vmatpush1.xpose.msra.mxu0 0.0
    %5259 = vmatprep.subr.mxu0 0.0
    %5260 = vmatpush1.xpose.msra.mxu0 0.0
    %5261 = vmatprep.subr.mxu0 0.0
    %5262 = vmatpush1.xpose.msra.mxu0 0.0
    %5263 = vmatprep.subr.mxu0 0.0
    %5264 = vmatpush1.xpose.msra.mxu0 0.0
    %5265 = vmatprep.subr.mxu0 0.0
    %5266 = vmatpush1.xpose.msra.mxu0 0.0
    %5267 = vmatprep.subr.mxu0 0.0
    %5268 = vmatpush1.xpose.msra.mxu0 0.0
    %5269 = vmatprep.subr.mxu0 0.0
    %5270 = vmatpush1.xpose.msra.mxu0 0.0
    %5271 = vmatprep.subr.mxu0 0.0
    %5272 = vmatpush1.xpose.msra.mxu0 0.0
    %5273 = vmatprep.subr.mxu0 0.0
    %5274 = vmatpush1.xpose.msra.mxu0 0.0
    %5275 = vmatprep.subr.mxu0 0.0
    %5276 = vmatpush1.xpose.msra.mxu0 0.0
    %5277 = vmatprep.subr.mxu0 0.0
    %5278 = vmatpush1.xpose.msra.mxu0 0.0
    %5279 = vmatprep.subr.mxu0 0.0
    %5280 = vmatpush1.xpose.msra.mxu0 0.0
    %5281 = vmatprep.subr.mxu0 0.0
    %5282 = vmatpush1.xpose.msra.mxu0 0.0
    %5283 = vmatprep.subr.mxu0 0.0
    %5284 = vmatpush1.xpose.msra.mxu0 0.0
    %5285 = vmatprep.subr.mxu0 0.0
    %5286 = vmatpush1.xpose.msra.mxu0 0.0
    %5287 = vmatprep.subr.mxu0 0.0
    %5288 = vmatpush1.xpose.msra.mxu0 0.0
    %5289 = vmatprep.subr.mxu0 0.0
    %5290 = vmatpush1.xpose.msra.mxu0 0.0
    %5291 = vmatprep.subr.mxu0 0.0
    %5292 = vmatpush1.xpose.msra.mxu0 0.0
    %5293 = vmatprep.subr.mxu0 0.0
    %5294 = vmatpush1.xpose.msra.mxu0 0.0
    %5295 = vmatprep.subr.mxu0 0.0
    %5296 = vmatpush1.xpose.msra.mxu0 0.0
    %5297 = vmatprep.subr.mxu0 0.0
    %5298 = vmatpush1.xpose.msra.mxu0 0.0
    %5299 = vmatprep.subr.mxu0 0.0
    %5300 = vmatpush1.xpose.msra.mxu0 0.0
    %5301 = vmatprep.subr.mxu0 0.0
    %5302 = vmatpush1.xpose.msra.mxu0 0.0
    %5303 = vmatprep.mubr.f32.mxu0 %v5199
    %5304 = vmatmul.mubr.f32.gmra.mrb[0].mxu0 %v5191
    %v5305 = vpop.f32.mrb[0].mxu0
    %v5306 = vadd.f32 0.0, %v5305
    %v5307 = vpop.f32.mrb[0].mxu0
    %5308 = vdwg.mxu0
    %5309 = vmatprep.subr.mxu0 %v3453
    %5310 = vmatpush1.xpose.msra.mxu0 %v3452
    %5311 = vmatprep.subr.mxu0 %v3461
    %5312 = vmatpush1.xpose.msra.mxu0 %v3460
    %5313 = vmatprep.subr.mxu0 %v3469
    %5314 = vmatpush1.xpose.msra.mxu0 %v3468
    %5315 = vmatprep.subr.mxu0 %v3477
    %5316 = vmatpush1.xpose.msra.mxu0 %v3476
    %5317 = vmatprep.subr.mxu0 0.0
    %5318 = vmatpush1.xpose.msra.mxu0 0.0
    %5319 = vmatprep.subr.mxu0 0.0
    %5320 = vmatpush1.xpose.msra.mxu0 0.0
    %5321 = vmatprep.subr.mxu0 0.0
    %5322 = vmatpush1.xpose.msra.mxu0 0.0
    %5323 = vmatprep.subr.mxu0 0.0
    %5324 = vmatpush1.xpose.msra.mxu0 0.0
    %5325 = vmatprep.subr.mxu0 0.0
    %5326 = vmatpush1.xpose.msra.mxu0 0.0
    %5327 = vmatprep.subr.mxu0 0.0
    %5328 = vmatpush1.xpose.msra.mxu0 0.0
    %5329 = vmatprep.subr.mxu0 0.0
    %5330 = vmatpush1.xpose.msra.mxu0 0.0
    %5331 = vmatprep.subr.mxu0 0.0
    %5332 = vmatpush1.xpose.msra.mxu0 0.0
    %5333 = vmatprep.subr.mxu0 0.0
    %5334 = vmatpush1.xpose.msra.mxu0 0.0
    %5335 = vmatprep.subr.mxu0 0.0
    %5336 = vmatpush1.xpose.msra.mxu0 0.0
    %5337 = vmatprep.subr.mxu0 0.0
    %5338 = vmatpush1.xpose.msra.mxu0 0.0
    %5339 = vmatprep.subr.mxu0 0.0
    %5340 = vmatpush1.xpose.msra.mxu0 0.0
    %5341 = vmatprep.subr.mxu0 0.0
    %5342 = vmatpush1.xpose.msra.mxu0 0.0
    %5343 = vmatprep.subr.mxu0 0.0
    %5344 = vmatpush1.xpose.msra.mxu0 0.0
    %5345 = vmatprep.subr.mxu0 0.0
    %5346 = vmatpush1.xpose.msra.mxu0 0.0
    %5347 = vmatprep.subr.mxu0 0.0
    %5348 = vmatpush1.xpose.msra.mxu0 0.0
    %5349 = vmatprep.subr.mxu0 0.0
    %5350 = vmatpush1.xpose.msra.mxu0 0.0
    %5351 = vmatprep.subr.mxu0 0.0
    %5352 = vmatpush1.xpose.msra.mxu0 0.0
    %5353 = vmatprep.subr.mxu0 0.0
    %5354 = vmatpush1.xpose.msra.mxu0 0.0
    %5355 = vmatprep.subr.mxu0 0.0
    %5356 = vmatpush1.xpose.msra.mxu0 0.0
    %5357 = vmatprep.subr.mxu0 0.0
    %5358 = vmatpush1.xpose.msra.mxu0 0.0
    %5359 = vmatprep.subr.mxu0 0.0
    %5360 = vmatpush1.xpose.msra.mxu0 0.0
    %5361 = vmatprep.subr.mxu0 0.0
    %5362 = vmatpush1.xpose.msra.mxu0 0.0
    %5363 = vmatprep.subr.mxu0 0.0
    %5364 = vmatpush1.xpose.msra.mxu0 0.0
    %5365 = vmatprep.subr.mxu0 0.0
    %5366 = vmatpush1.xpose.msra.mxu0 0.0
    %5367 = vmatprep.subr.mxu0 0.0
    %5368 = vmatpush1.xpose.msra.mxu0 0.0
    %5369 = vmatprep.subr.mxu0 0.0
    %5370 = vmatpush1.xpose.msra.mxu0 0.0
    %5371 = vmatprep.subr.mxu0 0.0
    %5372 = vmatpush1.xpose.msra.mxu0 0.0
    %5373 = vmatprep.mubr.f32.mxu0 %v5200
    %5374 = vmatmul.mubr.f32.gmra.mrb[0].mxu0 %v5198
    %v5375 = vpop.f32.mrb[0].mxu0
    %v5376 = vadd.f32 %v5306, %v5375
    %v5377 = vpop.f32.mrb[0].mxu0
    %5378 = vdwg.mxu0
    %5379 = vmatprep.subr.mxu0 %v3455
    %5380 = vmatpush1.xpose.msra.mxu0 %v3454
    %5381 = vmatprep.subr.mxu0 %v3463
    %5382 = vmatpush1.xpose.msra.mxu0 %v3462
    %5383 = vmatprep.subr.mxu0 %v3471
    %5384 = vmatpush1.xpose.msra.mxu0 %v3470
    %5385 = vmatprep.subr.mxu0 %v3479
    %5386 = vmatpush1.xpose.msra.mxu0 %v3478
    %5387 = vmatprep.subr.mxu0 0.0
    %5388 = vmatpush1.xpose.msra.mxu0 0.0
    %5389 = vmatprep.subr.mxu0 0.0
    %5390 = vmatpush1.xpose.msra.mxu0 0.0
    %5391 = vmatprep.subr.mxu0 0.0
    %5392 = vmatpush1.xpose.msra.mxu0 0.0
    %5393 = vmatprep.subr.mxu0 0.0
    %5394 = vmatpush1.xpose.msra.mxu0 0.0
    %5395 = vmatprep.subr.mxu0 0.0
    %5396 = vmatpush1.xpose.msra.mxu0 0.0
    %5397 = vmatprep.subr.mxu0 0.0
    %5398 = vmatpush1.xpose.msra.mxu0 0.0
    %5399 = vmatprep.subr.mxu0 0.0
    %5400 = vmatpush1.xpose.msra.mxu0 0.0
    %5401 = vmatprep.subr.mxu0 0.0
    %5402 = vmatpush1.xpose.msra.mxu0 0.0
    %5403 = vmatprep.subr.mxu0 0.0
    %5404 = vmatpush1.xpose.msra.mxu0 0.0
    %5405 = vmatprep.subr.mxu0 0.0
    %5406 = vmatpush1.xpose.msra.mxu0 0.0
    %5407 = vmatprep.subr.mxu0 0.0
    %5408 = vmatpush1.xpose.msra.mxu0 0.0
    %5409 = vmatprep.subr.mxu0 0.0
    %5410 = vmatpush1.xpose.msra.mxu0 0.0
    %5411 = vmatprep.subr.mxu0 0.0
    %5412 = vmatpush1.xpose.msra.mxu0 0.0
    %5413 = vmatprep.subr.mxu0 0.0
    %5414 = vmatpush1.xpose.msra.mxu0 0.0
    %5415 = vmatprep.subr.mxu0 0.0
    %5416 = vmatpush1.xpose.msra.mxu0 0.0
    %5417 = vmatprep.subr.mxu0 0.0
    %5418 = vmatpush1.xpose.msra.mxu0 0.0
    %5419 = vmatprep.subr.mxu0 0.0
    %5420 = vmatpush1.xpose.msra.mxu0 0.0
    %5421 = vmatprep.subr.mxu0 0.0
    %5422 = vmatpush1.xpose.msra.mxu0 0.0
    %5423 = vmatprep.subr.mxu0 0.0
    %5424 = vmatpush1.xpose.msra.mxu0 0.0
    %5425 = vmatprep.subr.mxu0 0.0
    %5426 = vmatpush1.xpose.msra.mxu0 0.0
    %5427 = vmatprep.subr.mxu0 0.0
    %5428 = vmatpush1.xpose.msra.mxu0 0.0
    %5429 = vmatprep.subr.mxu0 0.0
    %5430 = vmatpush1.xpose.msra.mxu0 0.0
    %5431 = vmatprep.subr.mxu0 0.0
    %5432 = vmatpush1.xpose.msra.mxu0 0.0
    %5433 = vmatprep.subr.mxu0 0.0
    %5434 = vmatpush1.xpose.msra.mxu0 0.0
    %5435 = vmatprep.subr.mxu0 0.0
    %5436 = vmatpush1.xpose.msra.mxu0 0.0
    %5437 = vmatprep.subr.mxu0 0.0
    %5438 = vmatpush1.xpose.msra.mxu0 0.0
    %5439 = vmatprep.subr.mxu0 0.0
    %5440 = vmatpush1.xpose.msra.mxu0 0.0
    %5441 = vmatprep.subr.mxu0 0.0
    %5442 = vmatpush1.xpose.msra.mxu0 0.0
    %5443 = vmatprep.mubr.f32.mxu0 %v5216
    %5444 = vmatmul.mubr.f32.gmra.mrb[0].mxu0 %v5208
    %v5445 = vpop.f32.mrb[0].mxu0
    %v5446 = vadd.f32 %v5376, %v5445
    %v5447 = vpop.f32.mrb[0].mxu0
    %5448 = vdwg.mxu0
    %5449 = vmatprep.subr.mxu0 %v5228
    %5450 = vmatpush1.xpose.msra.mxu0 %v3456
    %5451 = vmatprep.subr.mxu0 %v5231
    %5452 = vmatpush1.xpose.msra.mxu0 %v3464
    %5453 = vmatprep.subr.mxu0 %v5234
    %5454 = vmatpush1.xpose.msra.mxu0 %v3472
    %5455 = vmatprep.subr.mxu0 %v5237
    %5456 = vmatpush1.xpose.msra.mxu0 %v3480
    %5457 = vmatprep.subr.mxu0 0.0
    %5458 = vmatpush1.xpose.msra.mxu0 0.0
    %5459 = vmatprep.subr.mxu0 0.0
    %5460 = vmatpush1.xpose.msra.mxu0 0.0
    %5461 = vmatprep.subr.mxu0 0.0
    %5462 = vmatpush1.xpose.msra.mxu0 0.0
    %5463 = vmatprep.subr.mxu0 0.0
    %5464 = vmatpush1.xpose.msra.mxu0 0.0
    %5465 = vmatprep.subr.mxu0 0.0
    %5466 = vmatpush1.xpose.msra.mxu0 0.0
    %5467 = vmatprep.subr.mxu0 0.0
    %5468 = vmatpush1.xpose.msra.mxu0 0.0
    %5469 = vmatprep.subr.mxu0 0.0
    %5470 = vmatpush1.xpose.msra.mxu0 0.0
    %5471 = vmatprep.subr.mxu0 0.0
    %5472 = vmatpush1.xpose.msra.mxu0 0.0
    %5473 = vmatprep.subr.mxu0 0.0
    %5474 = vmatpush1.xpose.msra.mxu0 0.0
    %5475 = vmatprep.subr.mxu0 0.0
    %5476 = vmatpush1.xpose.msra.mxu0 0.0
    %5477 = vmatprep.subr.mxu0 0.0
    %5478 = vmatpush1.xpose.msra.mxu0 0.0
    %5479 = vmatprep.subr.mxu0 0.0
    %5480 = vmatpush1.xpose.msra.mxu0 0.0
    %5481 = vmatprep.subr.mxu0 0.0
    %5482 = vmatpush1.xpose.msra.mxu0 0.0
    %5483 = vmatprep.subr.mxu0 0.0
    %5484 = vmatpush1.xpose.msra.mxu0 0.0
    %5485 = vmatprep.subr.mxu0 0.0
    %5486 = vmatpush1.xpose.msra.mxu0 0.0
    %5487 = vmatprep.subr.mxu0 0.0
    %5488 = vmatpush1.xpose.msra.mxu0 0.0
    %5489 = vmatprep.subr.mxu0 0.0
    %5490 = vmatpush1.xpose.msra.mxu0 0.0
    %5491 = vmatprep.subr.mxu0 0.0
    %5492 = vmatpush1.xpose.msra.mxu0 0.0
    %5493 = vmatprep.subr.mxu0 0.0
    %5494 = vmatpush1.xpose.msra.mxu0 0.0
    %5495 = vmatprep.subr.mxu0 0.0
    %5496 = vmatpush1.xpose.msra.mxu0 0.0
    %5497 = vmatprep.subr.mxu0 0.0
    %5498 = vmatpush1.xpose.msra.mxu0 0.0
    %5499 = vmatprep.subr.mxu0 0.0
    %5500 = vmatpush1.xpose.msra.mxu0 0.0
    %5501 = vmatprep.subr.mxu0 0.0
    %5502 = vmatpush1.xpose.msra.mxu0 0.0
    %5503 = vmatprep.subr.mxu0 0.0
    %5504 = vmatpush1.xpose.msra.mxu0 0.0
    %5505 = vmatprep.subr.mxu0 0.0
    %5506 = vmatpush1.xpose.msra.mxu0 0.0
    %5507 = vmatprep.subr.mxu0 0.0
    %5508 = vmatpush1.xpose.msra.mxu0 0.0
    %5509 = vmatprep.subr.mxu0 0.0
    %5510 = vmatpush1.xpose.msra.mxu0 0.0
    %5511 = vmatprep.subr.mxu0 0.0
    %5512 = vmatpush1.xpose.msra.mxu0 0.0
    %5513 = vmatprep.mubr.f32.mxu0 %v5225
    %5514 = vmatmul.mubr.f32.gmra.mrb[0].mxu0 %v5215
    %v5515 = vpop.f32.mrb[0].mxu0
    %v5516 = vadd.f32 %v5446, %v5515
    %v5517 = vpop.f32.mrb[0].mxu0
    %5518 = vdwg.mxu0
    %v5521 = vcombine.high %v3300, %v3300
    %v5523 = vunpack.c.l.s4 1983009808
    %v5524 = vunpack.c.0.s8 %v5523
    %v5525 = vlaneseq
    %v5526 = vshrl.u32 %v5525, 7
    %v5527 = vsub.s32 %v5524, %v5526
    %v5528 = vrot.slane %v3300, %v5527
    %v5530 = vunpack.c.l.s4 1983009808
    %v5531 = vunpack.c.0.s8 %v5530
    %v5532 = vlaneseq
    %v5533 = vshrl.u32 %v5532, 7
    %v5534 = vsub.s32 %v5531, %v5533
    %v5535 = vrot.slane %v5521, %v5534
    %v5536 = vcombine.high %v5528, %v5528
    %v5537 = vcombine.high %v5535, %v5535
    %v5538 = vcombine.high %v3301, %v3301
    %v5540 = vunpack.c.l.s4 1983009808
    %v5541 = vunpack.c.0.s8 %v5540
    %v5542 = vlaneseq
    %v5543 = vshrl.u32 %v5542, 7
    %v5544 = vsub.s32 %v5541, %v5543
    %v5545 = vrot.slane %v3301, %v5544
    %v5547 = vunpack.c.l.s4 1983009808
    %v5548 = vunpack.c.0.s8 %v5547
    %v5549 = vlaneseq
    %v5550 = vshrl.u32 %v5549, 7
    %v5551 = vsub.s32 %v5548, %v5550
    %v5552 = vrot.slane %v5538, %v5551
    %v5553 = vcombine.high %v5545, %v5545
    %v5554 = vcombine.high %v5552, %v5552
    %v5562 = vsel %vm417, %v5554, 0
    %v5565 = vsel %vm417, %v3489, 0
    %v5568 = vsel %vm417, %v3497, 0
    %v5571 = vsel %vm417, %v3505, 0
    %v5574 = vsel %vm417, %v3513, 0
    %5576 = vmatprep.subr.mxu0 %v3483
    %5577 = vmatpush1.xpose.msra.mxu0 %v3482
    %5578 = vmatprep.subr.mxu0 %v3491
    %5579 = vmatpush1.xpose.msra.mxu0 %v3490
    %5580 = vmatprep.subr.mxu0 %v3499
    %5581 = vmatpush1.xpose.msra.mxu0 %v3498
    %5582 = vmatprep.subr.mxu0 %v3507
    %5583 = vmatpush1.xpose.msra.mxu0 %v3506
    %5584 = vmatprep.subr.mxu0 0.0
    %5585 = vmatpush1.xpose.msra.mxu0 0.0
    %5586 = vmatprep.subr.mxu0 0.0
    %5587 = vmatpush1.xpose.msra.mxu0 0.0
    %5588 = vmatprep.subr.mxu0 0.0
    %5589 = vmatpush1.xpose.msra.mxu0 0.0
    %5590 = vmatprep.subr.mxu0 0.0
    %5591 = vmatpush1.xpose.msra.mxu0 0.0
    %5592 = vmatprep.subr.mxu0 0.0
    %5593 = vmatpush1.xpose.msra.mxu0 0.0
    %5594 = vmatprep.subr.mxu0 0.0
    %5595 = vmatpush1.xpose.msra.mxu0 0.0
    %5596 = vmatprep.subr.mxu0 0.0
    %5597 = vmatpush1.xpose.msra.mxu0 0.0
    %5598 = vmatprep.subr.mxu0 0.0
    %5599 = vmatpush1.xpose.msra.mxu0 0.0
    %5600 = vmatprep.subr.mxu0 0.0
    %5601 = vmatpush1.xpose.msra.mxu0 0.0
    %5602 = vmatprep.subr.mxu0 0.0
    %5603 = vmatpush1.xpose.msra.mxu0 0.0
    %5604 = vmatprep.subr.mxu0 0.0
    %5605 = vmatpush1.xpose.msra.mxu0 0.0
    %5606 = vmatprep.subr.mxu0 0.0
    %5607 = vmatpush1.xpose.msra.mxu0 0.0
    %5608 = vmatprep.subr.mxu0 0.0
    %5609 = vmatpush1.xpose.msra.mxu0 0.0
    %5610 = vmatprep.subr.mxu0 0.0
    %5611 = vmatpush1.xpose.msra.mxu0 0.0
    %5612 = vmatprep.subr.mxu0 0.0
    %5613 = vmatpush1.xpose.msra.mxu0 0.0
    %5614 = vmatprep.subr.mxu0 0.0
    %5615 = vmatpush1.xpose.msra.mxu0 0.0
    %5616 = vmatprep.subr.mxu0 0.0
    %5617 = vmatpush1.xpose.msra.mxu0 0.0
    %5618 = vmatprep.subr.mxu0 0.0
    %5619 = vmatpush1.xpose.msra.mxu0 0.0
    %5620 = vmatprep.subr.mxu0 0.0
    %5621 = vmatpush1.xpose.msra.mxu0 0.0
    %5622 = vmatprep.subr.mxu0 0.0
    %5623 = vmatpush1.xpose.msra.mxu0 0.0
    %5624 = vmatprep.subr.mxu0 0.0
    %5625 = vmatpush1.xpose.msra.mxu0 0.0
    %5626 = vmatprep.subr.mxu0 0.0
    %5627 = vmatpush1.xpose.msra.mxu0 0.0
    %5628 = vmatprep.subr.mxu0 0.0
    %5629 = vmatpush1.xpose.msra.mxu0 0.0
    %5630 = vmatprep.subr.mxu0 0.0
    %5631 = vmatpush1.xpose.msra.mxu0 0.0
    %5632 = vmatprep.subr.mxu0 0.0
    %5633 = vmatpush1.xpose.msra.mxu0 0.0
    %5634 = vmatprep.subr.mxu0 0.0
    %5635 = vmatpush1.xpose.msra.mxu0 0.0
    %5636 = vmatprep.subr.mxu0 0.0
    %5637 = vmatpush1.xpose.msra.mxu0 0.0
    %5638 = vmatprep.subr.mxu0 0.0
    %5639 = vmatpush1.xpose.msra.mxu0 0.0
    %5640 = vmatprep.mubr.f32.mxu0 %v5536
    %5641 = vmatmul.mubr.f32.gmra.mrb[0].mxu0 %v5528
    %v5642 = vpop.f32.mrb[0].mxu0
    %v5643 = vadd.f32 0.0, %v5642
    %v5644 = vpop.f32.mrb[0].mxu0
    %5645 = vdwg.mxu0
    %5646 = vmatprep.subr.mxu0 %v3485
    %5647 = vmatpush1.xpose.msra.mxu0 %v3484
    %5648 = vmatprep.subr.mxu0 %v3493
    %5649 = vmatpush1.xpose.msra.mxu0 %v3492
    %5650 = vmatprep.subr.mxu0 %v3501
    %5651 = vmatpush1.xpose.msra.mxu0 %v3500
    %5652 = vmatprep.subr.mxu0 %v3509
    %5653 = vmatpush1.xpose.msra.mxu0 %v3508
    %5654 = vmatprep.subr.mxu0 0.0
    %5655 = vmatpush1.xpose.msra.mxu0 0.0
    %5656 = vmatprep.subr.mxu0 0.0
    %5657 = vmatpush1.xpose.msra.mxu0 0.0
    %5658 = vmatprep.subr.mxu0 0.0
    %5659 = vmatpush1.xpose.msra.mxu0 0.0
    %5660 = vmatprep.subr.mxu0 0.0
    %5661 = vmatpush1.xpose.msra.mxu0 0.0
    %5662 = vmatprep.subr.mxu0 0.0
    %5663 = vmatpush1.xpose.msra.mxu0 0.0
    %5664 = vmatprep.subr.mxu0 0.0
    %5665 = vmatpush1.xpose.msra.mxu0 0.0
    %5666 = vmatprep.subr.mxu0 0.0
    %5667 = vmatpush1.xpose.msra.mxu0 0.0
    %5668 = vmatprep.subr.mxu0 0.0
    %5669 = vmatpush1.xpose.msra.mxu0 0.0
    %5670 = vmatprep.subr.mxu0 0.0
    %5671 = vmatpush1.xpose.msra.mxu0 0.0
    %5672 = vmatprep.subr.mxu0 0.0
    %5673 = vmatpush1.xpose.msra.mxu0 0.0
    %5674 = vmatprep.subr.mxu0 0.0
    %5675 = vmatpush1.xpose.msra.mxu0 0.0
    %5676 = vmatprep.subr.mxu0 0.0
    %5677 = vmatpush1.xpose.msra.mxu0 0.0
    %5678 = vmatprep.subr.mxu0 0.0
    %5679 = vmatpush1.xpose.msra.mxu0 0.0
    %5680 = vmatprep.subr.mxu0 0.0
    %5681 = vmatpush1.xpose.msra.mxu0 0.0
    %5682 = vmatprep.subr.mxu0 0.0
    %5683 = vmatpush1.xpose.msra.mxu0 0.0
    %5684 = vmatprep.subr.mxu0 0.0
    %5685 = vmatpush1.xpose.msra.mxu0 0.0
    %5686 = vmatprep.subr.mxu0 0.0
    %5687 = vmatpush1.xpose.msra.mxu0 0.0
    %5688 = vmatprep.subr.mxu0 0.0
    %5689 = vmatpush1.xpose.msra.mxu0 0.0
    %5690 = vmatprep.subr.mxu0 0.0
    %5691 = vmatpush1.xpose.msra.mxu0 0.0
    %5692 = vmatprep.subr.mxu0 0.0
    %5693 = vmatpush1.xpose.msra.mxu0 0.0
    %5694 = vmatprep.subr.mxu0 0.0
    %5695 = vmatpush1.xpose.msra.mxu0 0.0
    %5696 = vmatprep.subr.mxu0 0.0
    %5697 = vmatpush1.xpose.msra.mxu0 0.0
    %5698 = vmatprep.subr.mxu0 0.0
    %5699 = vmatpush1.xpose.msra.mxu0 0.0
    %5700 = vmatprep.subr.mxu0 0.0
    %5701 = vmatpush1.xpose.msra.mxu0 0.0
    %5702 = vmatprep.subr.mxu0 0.0
    %5703 = vmatpush1.xpose.msra.mxu0 0.0
    %5704 = vmatprep.subr.mxu0 0.0
    %5705 = vmatpush1.xpose.msra.mxu0 0.0
    %5706 = vmatprep.subr.mxu0 0.0
    %5707 = vmatpush1.xpose.msra.mxu0 0.0
    %5708 = vmatprep.subr.mxu0 0.0
    %5709 = vmatpush1.xpose.msra.mxu0 0.0
    %5710 = vmatprep.mubr.f32.mxu0 %v5537
    %5711 = vmatmul.mubr.f32.gmra.mrb[0].mxu0 %v5535
    %v5712 = vpop.f32.mrb[0].mxu0
    %v5713 = vadd.f32 %v5643, %v5712
    %v5714 = vpop.f32.mrb[0].mxu0
    %5715 = vdwg.mxu0
    %5716 = vmatprep.subr.mxu0 %v3487
    %5717 = vmatpush1.xpose.msra.mxu0 %v3486
    %5718 = vmatprep.subr.mxu0 %v3495
    %5719 = vmatpush1.xpose.msra.mxu0 %v3494
    %5720 = vmatprep.subr.mxu0 %v3503
    %5721 = vmatpush1.xpose.msra.mxu0 %v3502
    %5722 = vmatprep.subr.mxu0 %v3511
    %5723 = vmatpush1.xpose.msra.mxu0 %v3510
    %5724 = vmatprep.subr.mxu0 0.0
    %5725 = vmatpush1.xpose.msra.mxu0 0.0
    %5726 = vmatprep.subr.mxu0 0.0
    %5727 = vmatpush1.xpose.msra.mxu0 0.0
    %5728 = vmatprep.subr.mxu0 0.0
    %5729 = vmatpush1.xpose.msra.mxu0 0.0
    %5730 = vmatprep.subr.mxu0 0.0
    %5731 = vmatpush1.xpose.msra.mxu0 0.0
    %5732 = vmatprep.subr.mxu0 0.0
    %5733 = vmatpush1.xpose.msra.mxu0 0.0
    %5734 = vmatprep.subr.mxu0 0.0
    %5735 = vmatpush1.xpose.msra.mxu0 0.0
    %5736 = vmatprep.subr.mxu0 0.0
    %5737 = vmatpush1.xpose.msra.mxu0 0.0
    %5738 = vmatprep.subr.mxu0 0.0
    %5739 = vmatpush1.xpose.msra.mxu0 0.0
    %5740 = vmatprep.subr.mxu0 0.0
    %5741 = vmatpush1.xpose.msra.mxu0 0.0
    %5742 = vmatprep.subr.mxu0 0.0
    %5743 = vmatpush1.xpose.msra.mxu0 0.0
    %5744 = vmatprep.subr.mxu0 0.0
    %5745 = vmatpush1.xpose.msra.mxu0 0.0
    %5746 = vmatprep.subr.mxu0 0.0
    %5747 = vmatpush1.xpose.msra.mxu0 0.0
    %5748 = vmatprep.subr.mxu0 0.0
    %5749 = vmatpush1.xpose.msra.mxu0 0.0
    %5750 = vmatprep.subr.mxu0 0.0
    %5751 = vmatpush1.xpose.msra.mxu0 0.0
    %5752 = vmatprep.subr.mxu0 0.0
    %5753 = vmatpush1.xpose.msra.mxu0 0.0
    %5754 = vmatprep.subr.mxu0 0.0
    %5755 = vmatpush1.xpose.msra.mxu0 0.0
    %5756 = vmatprep.subr.mxu0 0.0
    %5757 = vmatpush1.xpose.msra.mxu0 0.0
    %5758 = vmatprep.subr.mxu0 0.0
    %5759 = vmatpush1.xpose.msra.mxu0 0.0
    %5760 = vmatprep.subr.mxu0 0.0
    %5761 = vmatpush1.xpose.msra.mxu0 0.0
    %5762 = vmatprep.subr.mxu0 0.0
    %5763 = vmatpush1.xpose.msra.mxu0 0.0
    %5764 = vmatprep.subr.mxu0 0.0
    %5765 = vmatpush1.xpose.msra.mxu0 0.0
    %5766 = vmatprep.subr.mxu0 0.0
    %5767 = vmatpush1.xpose.msra.mxu0 0.0
    %5768 = vmatprep.subr.mxu0 0.0
    %5769 = vmatpush1.xpose.msra.mxu0 0.0
    %5770 = vmatprep.subr.mxu0 0.0
    %5771 = vmatpush1.xpose.msra.mxu0 0.0
    %5772 = vmatprep.subr.mxu0 0.0
    %5773 = vmatpush1.xpose.msra.mxu0 0.0
    %5774 = vmatprep.subr.mxu0 0.0
    %5775 = vmatpush1.xpose.msra.mxu0 0.0
    %5776 = vmatprep.subr.mxu0 0.0
    %5777 = vmatpush1.xpose.msra.mxu0 0.0
    %5778 = vmatprep.subr.mxu0 0.0
    %5779 = vmatpush1.xpose.msra.mxu0 0.0
    %5780 = vmatprep.mubr.f32.mxu0 %v5553
    %5781 = vmatmul.mubr.f32.gmra.mrb[0].mxu0 %v5545
    %v5782 = vpop.f32.mrb[0].mxu0
    %v5783 = vadd.f32 %v5713, %v5782
    %v5784 = vpop.f32.mrb[0].mxu0
    %5785 = vdwg.mxu0
    %5786 = vmatprep.subr.mxu0 %v5565
    %5787 = vmatpush1.xpose.msra.mxu0 %v3488
    %5788 = vmatprep.subr.mxu0 %v5568
    %5789 = vmatpush1.xpose.msra.mxu0 %v3496
    %5790 = vmatprep.subr.mxu0 %v5571
    %5791 = vmatpush1.xpose.msra.mxu0 %v3504
    %5792 = vmatprep.subr.mxu0 %v5574
    %5793 = vmatpush1.xpose.msra.mxu0 %v3512
    %5794 = vmatprep.subr.mxu0 0.0
    %5795 = vmatpush1.xpose.msra.mxu0 0.0
    %5796 = vmatprep.subr.mxu0 0.0
    %5797 = vmatpush1.xpose.msra.mxu0 0.0
    %5798 = vmatprep.subr.mxu0 0.0
    %5799 = vmatpush1.xpose.msra.mxu0 0.0
    %5800 = vmatprep.subr.mxu0 0.0
    %5801 = vmatpush1.xpose.msra.mxu0 0.0
    %5802 = vmatprep.subr.mxu0 0.0
    %5803 = vmatpush1.xpose.msra.mxu0 0.0
    %5804 = vmatprep.subr.mxu0 0.0
    %5805 = vmatpush1.xpose.msra.mxu0 0.0
    %5806 = vmatprep.subr.mxu0 0.0
    %5807 = vmatpush1.xpose.msra.mxu0 0.0
    %5808 = vmatprep.subr.mxu0 0.0
    %5809 = vmatpush1.xpose.msra.mxu0 0.0
    %5810 = vmatprep.subr.mxu0 0.0
    %5811 = vmatpush1.xpose.msra.mxu0 0.0
    %5812 = vmatprep.subr.mxu0 0.0
    %5813 = vmatpush1.xpose.msra.mxu0 0.0
    %5814 = vmatprep.subr.mxu0 0.0
    %5815 = vmatpush1.xpose.msra.mxu0 0.0
    %5816 = vmatprep.subr.mxu0 0.0
    %5817 = vmatpush1.xpose.msra.mxu0 0.0
    %5818 = vmatprep.subr.mxu0 0.0
    %5819 = vmatpush1.xpose.msra.mxu0 0.0
    %5820 = vmatprep.subr.mxu0 0.0
    %5821 = vmatpush1.xpose.msra.mxu0 0.0
    %5822 = vmatprep.subr.mxu0 0.0
    %5823 = vmatpush1.xpose.msra.mxu0 0.0
    %5824 = vmatprep.subr.mxu0 0.0
    %5825 = vmatpush1.xpose.msra.mxu0 0.0
    %5826 = vmatprep.subr.mxu0 0.0
    %5827 = vmatpush1.xpose.msra.mxu0 0.0
    %5828 = vmatprep.subr.mxu0 0.0
    %5829 = vmatpush1.xpose.msra.mxu0 0.0
    %5830 = vmatprep.subr.mxu0 0.0
    %5831 = vmatpush1.xpose.msra.mxu0 0.0
    %5832 = vmatprep.subr.mxu0 0.0
    %5833 = vmatpush1.xpose.msra.mxu0 0.0
    %5834 = vmatprep.subr.mxu0 0.0
    %5835 = vmatpush1.xpose.msra.mxu0 0.0
    %5836 = vmatprep.subr.mxu0 0.0
    %5837 = vmatpush1.xpose.msra.mxu0 0.0
    %5838 = vmatprep.subr.mxu0 0.0
    %5839 = vmatpush1.xpose.msra.mxu0 0.0
    %5840 = vmatprep.subr.mxu0 0.0
    %5841 = vmatpush1.xpose.msra.mxu0 0.0
    %5842 = vmatprep.subr.mxu0 0.0
    %5843 = vmatpush1.xpose.msra.mxu0 0.0
    %5844 = vmatprep.subr.mxu0 0.0
    %5845 = vmatpush1.xpose.msra.mxu0 0.0
    %5846 = vmatprep.subr.mxu0 0.0
    %5847 = vmatpush1.xpose.msra.mxu0 0.0
    %5848 = vmatprep.subr.mxu0 0.0
    %5849 = vmatpush1.xpose.msra.mxu0 0.0
    %5850 = vmatprep.mubr.f32.mxu0 %v5562
    %5851 = vmatmul.mubr.f32.gmra.mrb[0].mxu0 %v5552
    %v5852 = vpop.f32.mrb[0].mxu0
    %v5853 = vadd.f32 %v5783, %v5852
    %v5854 = vpop.f32.mrb[0].mxu0
    %5855 = vdwg.mxu0
    %v5858 = vcombine.high %v3302, %v3302
    %v5860 = vunpack.c.l.s4 1983009808
    %v5861 = vunpack.c.0.s8 %v5860
    %v5862 = vlaneseq
    %v5863 = vshrl.u32 %v5862, 7
    %v5864 = vsub.s32 %v5861, %v5863
    %v5865 = vrot.slane %v3302, %v5864
    %v5867 = vunpack.c.l.s4 1983009808
    %v5868 = vunpack.c.0.s8 %v5867
    %v5869 = vlaneseq
    %v5870 = vshrl.u32 %v5869, 7
    %v5871 = vsub.s32 %v5868, %v5870
    %v5872 = vrot.slane %v5858, %v5871
    %v5873 = vcombine.high %v5865, %v5865
    %v5874 = vcombine.high %v5872, %v5872
    %v5875 = vcombine.high %v3303, %v3303
    %v5877 = vunpack.c.l.s4 1983009808
    %v5878 = vunpack.c.0.s8 %v5877
    %v5879 = vlaneseq
    %v5880 = vshrl.u32 %v5879, 7
    %v5881 = vsub.s32 %v5878, %v5880
    %v5882 = vrot.slane %v3303, %v5881
    %v5884 = vunpack.c.l.s4 1983009808
    %v5885 = vunpack.c.0.s8 %v5884
    %v5886 = vlaneseq
    %v5887 = vshrl.u32 %v5886, 7
    %v5888 = vsub.s32 %v5885, %v5887
    %v5889 = vrot.slane %v5875, %v5888
    %v5890 = vcombine.high %v5882, %v5882
    %v5891 = vcombine.high %v5889, %v5889
    %v5899 = vsel %vm417, %v5891, 0
    %v5902 = vsel %vm417, %v3521, 0
    %v5905 = vsel %vm417, %v3529, 0
    %v5908 = vsel %vm417, %v3537, 0
    %v5911 = vsel %vm417, %v3545, 0
    %5913 = vmatprep.subr.mxu0 %v3515
    %5914 = vmatpush1.xpose.msra.mxu0 %v3514
    %5915 = vmatprep.subr.mxu0 %v3523
    %5916 = vmatpush1.xpose.msra.mxu0 %v3522
    %5917 = vmatprep.subr.mxu0 %v3531
    %5918 = vmatpush1.xpose.msra.mxu0 %v3530
    %5919 = vmatprep.subr.mxu0 %v3539
    %5920 = vmatpush1.xpose.msra.mxu0 %v3538
    %5921 = vmatprep.subr.mxu0 0.0
    %5922 = vmatpush1.xpose.msra.mxu0 0.0
    %5923 = vmatprep.subr.mxu0 0.0
    %5924 = vmatpush1.xpose.msra.mxu0 0.0
    %5925 = vmatprep.subr.mxu0 0.0
    %5926 = vmatpush1.xpose.msra.mxu0 0.0
    %5927 = vmatprep.subr.mxu0 0.0
    %5928 = vmatpush1.xpose.msra.mxu0 0.0
    %5929 = vmatprep.subr.mxu0 0.0
    %5930 = vmatpush1.xpose.msra.mxu0 0.0
    %5931 = vmatprep.subr.mxu0 0.0
    %5932 = vmatpush1.xpose.msra.mxu0 0.0
    %5933 = vmatprep.subr.mxu0 0.0
    %5934 = vmatpush1.xpose.msra.mxu0 0.0
    %5935 = vmatprep.subr.mxu0 0.0
    %5936 = vmatpush1.xpose.msra.mxu0 0.0
    %5937 = vmatprep.subr.mxu0 0.0
    %5938 = vmatpush1.xpose.msra.mxu0 0.0
    %5939 = vmatprep.subr.mxu0 0.0
    %5940 = vmatpush1.xpose.msra.mxu0 0.0
    %5941 = vmatprep.subr.mxu0 0.0
    %5942 = vmatpush1.xpose.msra.mxu0 0.0
    %5943 = vmatprep.subr.mxu0 0.0
    %5944 = vmatpush1.xpose.msra.mxu0 0.0
    %5945 = vmatprep.subr.mxu0 0.0
    %5946 = vmatpush1.xpose.msra.mxu0 0.0
    %5947 = vmatprep.subr.mxu0 0.0
    %5948 = vmatpush1.xpose.msra.mxu0 0.0
    %5949 = vmatprep.subr.mxu0 0.0
    %5950 = vmatpush1.xpose.msra.mxu0 0.0
    %5951 = vmatprep.subr.mxu0 0.0
    %5952 = vmatpush1.xpose.msra.mxu0 0.0
    %5953 = vmatprep.subr.mxu0 0.0
    %5954 = vmatpush1.xpose.msra.mxu0 0.0
    %5955 = vmatprep.subr.mxu0 0.0
    %5956 = vmatpush1.xpose.msra.mxu0 0.0
    %5957 = vmatprep.subr.mxu0 0.0
    %5958 = vmatpush1.xpose.msra.mxu0 0.0
    %5959 = vmatprep.subr.mxu0 0.0
    %5960 = vmatpush1.xpose.msra.mxu0 0.0
    %5961 = vmatprep.subr.mxu0 0.0
    %5962 = vmatpush1.xpose.msra.mxu0 0.0
    %5963 = vmatprep.subr.mxu0 0.0
    %5964 = vmatpush1.xpose.msra.mxu0 0.0
    %5965 = vmatprep.subr.mxu0 0.0
    %5966 = vmatpush1.xpose.msra.mxu0 0.0
    %5967 = vmatprep.subr.mxu0 0.0
    %5968 = vmatpush1.xpose.msra.mxu0 0.0
    %5969 = vmatprep.subr.mxu0 0.0
    %5970 = vmatpush1.xpose.msra.mxu0 0.0
    %5971 = vmatprep.subr.mxu0 0.0
    %5972 = vmatpush1.xpose.msra.mxu0 0.0
    %5973 = vmatprep.subr.mxu0 0.0
    %5974 = vmatpush1.xpose.msra.mxu0 0.0
    %5975 = vmatprep.subr.mxu0 0.0
    %5976 = vmatpush1.xpose.msra.mxu0 0.0
    %5977 = vmatprep.mubr.f32.mxu0 %v5873
    %5978 = vmatmul.mubr.f32.gmra.mrb[0].mxu0 %v5865
    %v5979 = vpop.f32.mrb[0].mxu0
    %v5980 = vadd.f32 0.0, %v5979
    %v5981 = vpop.f32.mrb[0].mxu0
    %5982 = vdwg.mxu0
    %5983 = vmatprep.subr.mxu0 %v3517
    %5984 = vmatpush1.xpose.msra.mxu0 %v3516
    %5985 = vmatprep.subr.mxu0 %v3525
    %5986 = vmatpush1.xpose.msra.mxu0 %v3524
    %5987 = vmatprep.subr.mxu0 %v3533
    %5988 = vmatpush1.xpose.msra.mxu0 %v3532
    %5989 = vmatprep.subr.mxu0 %v3541
    %5990 = vmatpush1.xpose.msra.mxu0 %v3540
    %5991 = vmatprep.subr.mxu0 0.0
    %5992 = vmatpush1.xpose.msra.mxu0 0.0
    %5993 = vmatprep.subr.mxu0 0.0
    %5994 = vmatpush1.xpose.msra.mxu0 0.0
    %5995 = vmatprep.subr.mxu0 0.0
    %5996 = vmatpush1.xpose.msra.mxu0 0.0
    %5997 = vmatprep.subr.mxu0 0.0
    %5998 = vmatpush1.xpose.msra.mxu0 0.0
    %5999 = vmatprep.subr.mxu0 0.0
    %6000 = vmatpush1.xpose.msra.mxu0 0.0
    %6001 = vmatprep.subr.mxu0 0.0
    %6002 = vmatpush1.xpose.msra.mxu0 0.0
    %6003 = vmatprep.subr.mxu0 0.0
    %6004 = vmatpush1.xpose.msra.mxu0 0.0
    %6005 = vmatprep.subr.mxu0 0.0
    %6006 = vmatpush1.xpose.msra.mxu0 0.0
    %6007 = vmatprep.subr.mxu0 0.0
    %6008 = vmatpush1.xpose.msra.mxu0 0.0
    %6009 = vmatprep.subr.mxu0 0.0
    %6010 = vmatpush1.xpose.msra.mxu0 0.0
    %6011 = vmatprep.subr.mxu0 0.0
    %6012 = vmatpush1.xpose.msra.mxu0 0.0
    %6013 = vmatprep.subr.mxu0 0.0
    %6014 = vmatpush1.xpose.msra.mxu0 0.0
    %6015 = vmatprep.subr.mxu0 0.0
    %6016 = vmatpush1.xpose.msra.mxu0 0.0
    %6017 = vmatprep.subr.mxu0 0.0
    %6018 = vmatpush1.xpose.msra.mxu0 0.0
    %6019 = vmatprep.subr.mxu0 0.0
    %6020 = vmatpush1.xpose.msra.mxu0 0.0
    %6021 = vmatprep.subr.mxu0 0.0
    %6022 = vmatpush1.xpose.msra.mxu0 0.0
    %6023 = vmatprep.subr.mxu0 0.0
    %6024 = vmatpush1.xpose.msra.mxu0 0.0
    %6025 = vmatprep.subr.mxu0 0.0
    %6026 = vmatpush1.xpose.msra.mxu0 0.0
    %6027 = vmatprep.subr.mxu0 0.0
    %6028 = vmatpush1.xpose.msra.mxu0 0.0
    %6029 = vmatprep.subr.mxu0 0.0
    %6030 = vmatpush1.xpose.msra.mxu0 0.0
    %6031 = vmatprep.subr.mxu0 0.0
    %6032 = vmatpush1.xpose.msra.mxu0 0.0
    %6033 = vmatprep.subr.mxu0 0.0
    %6034 = vmatpush1.xpose.msra.mxu0 0.0
    %6035 = vmatprep.subr.mxu0 0.0
    %6036 = vmatpush1.xpose.msra.mxu0 0.0
    %6037 = vmatprep.subr.mxu0 0.0
    %6038 = vmatpush1.xpose.msra.mxu0 0.0
    %6039 = vmatprep.subr.mxu0 0.0
    %6040 = vmatpush1.xpose.msra.mxu0 0.0
    %6041 = vmatprep.subr.mxu0 0.0
    %6042 = vmatpush1.xpose.msra.mxu0 0.0
    %6043 = vmatprep.subr.mxu0 0.0
    %6044 = vmatpush1.xpose.msra.mxu0 0.0
    %6045 = vmatprep.subr.mxu0 0.0
    %6046 = vmatpush1.xpose.msra.mxu0 0.0
    %6047 = vmatprep.mubr.f32.mxu0 %v5874
    %6048 = vmatmul.mubr.f32.gmra.mrb[0].mxu0 %v5872
    %v6049 = vpop.f32.mrb[0].mxu0
    %v6050 = vadd.f32 %v5980, %v6049
    %v6051 = vpop.f32.mrb[0].mxu0
    %6052 = vdwg.mxu0
    %6053 = vmatprep.subr.mxu0 %v3519
    %6054 = vmatpush1.xpose.msra.mxu0 %v3518
    %6055 = vmatprep.subr.mxu0 %v3527
    %6056 = vmatpush1.xpose.msra.mxu0 %v3526
    %6057 = vmatprep.subr.mxu0 %v3535
    %6058 = vmatpush1.xpose.msra.mxu0 %v3534
    %6059 = vmatprep.subr.mxu0 %v3543
    %6060 = vmatpush1.xpose.msra.mxu0 %v3542
    %6061 = vmatprep.subr.mxu0 0.0
    %6062 = vmatpush1.xpose.msra.mxu0 0.0
    %6063 = vmatprep.subr.mxu0 0.0
    %6064 = vmatpush1.xpose.msra.mxu0 0.0
    %6065 = vmatprep.subr.mxu0 0.0
    %6066 = vmatpush1.xpose.msra.mxu0 0.0
    %6067 = vmatprep.subr.mxu0 0.0
    %6068 = vmatpush1.xpose.msra.mxu0 0.0
    %6069 = vmatprep.subr.mxu0 0.0
    %6070 = vmatpush1.xpose.msra.mxu0 0.0
    %6071 = vmatprep.subr.mxu0 0.0
    %6072 = vmatpush1.xpose.msra.mxu0 0.0
    %6073 = vmatprep.subr.mxu0 0.0
    %6074 = vmatpush1.xpose.msra.mxu0 0.0
    %6075 = vmatprep.subr.mxu0 0.0
    %6076 = vmatpush1.xpose.msra.mxu0 0.0
    %6077 = vmatprep.subr.mxu0 0.0
    %6078 = vmatpush1.xpose.msra.mxu0 0.0
    %6079 = vmatprep.subr.mxu0 0.0
    %6080 = vmatpush1.xpose.msra.mxu0 0.0
    %6081 = vmatprep.subr.mxu0 0.0
    %6082 = vmatpush1.xpose.msra.mxu0 0.0
    %6083 = vmatprep.subr.mxu0 0.0
    %6084 = vmatpush1.xpose.msra.mxu0 0.0
    %6085 = vmatprep.subr.mxu0 0.0
    %6086 = vmatpush1.xpose.msra.mxu0 0.0
    %6087 = vmatprep.subr.mxu0 0.0
    %6088 = vmatpush1.xpose.msra.mxu0 0.0
    %6089 = vmatprep.subr.mxu0 0.0
    %6090 = vmatpush1.xpose.msra.mxu0 0.0
    %6091 = vmatprep.subr.mxu0 0.0
    %6092 = vmatpush1.xpose.msra.mxu0 0.0
    %6093 = vmatprep.subr.mxu0 0.0
    %6094 = vmatpush1.xpose.msra.mxu0 0.0
    %6095 = vmatprep.subr.mxu0 0.0
    %6096 = vmatpush1.xpose.msra.mxu0 0.0
    %6097 = vmatprep.subr.mxu0 0.0
    %6098 = vmatpush1.xpose.msra.mxu0 0.0
    %6099 = vmatprep.subr.mxu0 0.0
    %6100 = vmatpush1.xpose.msra.mxu0 0.0
    %6101 = vmatprep.subr.mxu0 0.0
    %6102 = vmatpush1.xpose.msra.mxu0 0.0
    %6103 = vmatprep.subr.mxu0 0.0
    %6104 = vmatpush1.xpose.msra.mxu0 0.0
    %6105 = vmatprep.subr.mxu0 0.0
    %6106 = vmatpush1.xpose.msra.mxu0 0.0
    %6107 = vmatprep.subr.mxu0 0.0
    %6108 = vmatpush1.xpose.msra.mxu0 0.0
    %6109 = vmatprep.subr.mxu0 0.0
    %6110 = vmatpush1.xpose.msra.mxu0 0.0
    %6111 = vmatprep.subr.mxu0 0.0
    %6112 = vmatpush1.xpose.msra.mxu0 0.0
    %6113 = vmatprep.subr.mxu0 0.0
    %6114 = vmatpush1.xpose.msra.mxu0 0.0
    %6115 = vmatprep.subr.mxu0 0.0
    %6116 = vmatpush1.xpose.msra.mxu0 0.0
    %6117 = vmatprep.mubr.f32.mxu0 %v5890
    %6118 = vmatmul.mubr.f32.gmra.mrb[0].mxu0 %v5882
    %v6119 = vpop.f32.mrb[0].mxu0
    %v6120 = vadd.f32 %v6050, %v6119
    %v6121 = vpop.f32.mrb[0].mxu0
    %6122 = vdwg.mxu0
    %6123 = vmatprep.subr.mxu0 %v5902
    %6124 = vmatpush1.xpose.msra.mxu0 %v3520
    %6125 = vmatprep.subr.mxu0 %v5905
    %6126 = vmatpush1.xpose.msra.mxu0 %v3528
    %6127 = vmatprep.subr.mxu0 %v5908
    %6128 = vmatpush1.xpose.msra.mxu0 %v3536
    %6129 = vmatprep.subr.mxu0 %v5911
    %6130 = vmatpush1.xpose.msra.mxu0 %v3544
    %6131 = vmatprep.subr.mxu0 0.0
    %6132 = vmatpush1.xpose.msra.mxu0 0.0
    %6133 = vmatprep.subr.mxu0 0.0
    %6134 = vmatpush1.xpose.msra.mxu0 0.0
    %6135 = vmatprep.subr.mxu0 0.0
    %6136 = vmatpush1.xpose.msra.mxu0 0.0
    %6137 = vmatprep.subr.mxu0 0.0
    %6138 = vmatpush1.xpose.msra.mxu0 0.0
    %6139 = vmatprep.subr.mxu0 0.0
    %6140 = vmatpush1.xpose.msra.mxu0 0.0
    %6141 = vmatprep.subr.mxu0 0.0
    %6142 = vmatpush1.xpose.msra.mxu0 0.0
    %6143 = vmatprep.subr.mxu0 0.0
    %6144 = vmatpush1.xpose.msra.mxu0 0.0
    %6145 = vmatprep.subr.mxu0 0.0
    %6146 = vmatpush1.xpose.msra.mxu0 0.0
    %6147 = vmatprep.subr.mxu0 0.0
    %6148 = vmatpush1.xpose.msra.mxu0 0.0
    %6149 = vmatprep.subr.mxu0 0.0
    %6150 = vmatpush1.xpose.msra.mxu0 0.0
    %6151 = vmatprep.subr.mxu0 0.0
    %6152 = vmatpush1.xpose.msra.mxu0 0.0
    %6153 = vmatprep.subr.mxu0 0.0
    %6154 = vmatpush1.xpose.msra.mxu0 0.0
    %6155 = vmatprep.subr.mxu0 0.0
    %6156 = vmatpush1.xpose.msra.mxu0 0.0
    %6157 = vmatprep.subr.mxu0 0.0
    %6158 = vmatpush1.xpose.msra.mxu0 0.0
    %6159 = vmatprep.subr.mxu0 0.0
    %6160 = vmatpush1.xpose.msra.mxu0 0.0
    %6161 = vmatprep.subr.mxu0 0.0
    %6162 = vmatpush1.xpose.msra.mxu0 0.0
    %6163 = vmatprep.subr.mxu0 0.0
    %6164 = vmatpush1.xpose.msra.mxu0 0.0
    %6165 = vmatprep.subr.mxu0 0.0
    %6166 = vmatpush1.xpose.msra.mxu0 0.0
    %6167 = vmatprep.subr.mxu0 0.0
    %6168 = vmatpush1.xpose.msra.mxu0 0.0
    %6169 = vmatprep.subr.mxu0 0.0
    %6170 = vmatpush1.xpose.msra.mxu0 0.0
    %6171 = vmatprep.subr.mxu0 0.0
    %6172 = vmatpush1.xpose.msra.mxu0 0.0
    %6173 = vmatprep.subr.mxu0 0.0
    %6174 = vmatpush1.xpose.msra.mxu0 0.0
    %6175 = vmatprep.subr.mxu0 0.0
    %6176 = vmatpush1.xpose.msra.mxu0 0.0
    %6177 = vmatprep.subr.mxu0 0.0
    %6178 = vmatpush1.xpose.msra.mxu0 0.0
    %6179 = vmatprep.subr.mxu0 0.0
    %6180 = vmatpush1.xpose.msra.mxu0 0.0
    %6181 = vmatprep.subr.mxu0 0.0
    %6182 = vmatpush1.xpose.msra.mxu0 0.0
    %6183 = vmatprep.subr.mxu0 0.0
    %6184 = vmatpush1.xpose.msra.mxu0 0.0
    %6185 = vmatprep.subr.mxu0 0.0
    %6186 = vmatpush1.xpose.msra.mxu0 0.0
    %6187 = vmatprep.mubr.f32.mxu0 %v5899
    %6188 = vmatmul.mubr.f32.gmra.mrb[0].mxu0 %v5889
    %v6189 = vpop.f32.mrb[0].mxu0
    %v6190 = vadd.f32 %v6120, %v6189
    %v6191 = vpop.f32.mrb[0].mxu0
    %6192 = vdwg.mxu0
    %v6195 = vcombine.high %v3304, %v3304
    %v6197 = vunpack.c.l.s4 1983009808
    %v6198 = vunpack.c.0.s8 %v6197
    %v6199 = vlaneseq
    %v6200 = vshrl.u32 %v6199, 7
    %v6201 = vsub.s32 %v6198, %v6200
    %v6202 = vrot.slane %v3304, %v6201
    %v6204 = vunpack.c.l.s4 1983009808
    %v6205 = vunpack.c.0.s8 %v6204
    %v6206 = vlaneseq
    %v6207 = vshrl.u32 %v6206, 7
    %v6208 = vsub.s32 %v6205, %v6207
    %v6209 = vrot.slane %v6195, %v6208
    %v6210 = vcombine.high %v6202, %v6202
    %v6211 = vcombine.high %v6209, %v6209
    %v6212 = vcombine.high %v3305, %v3305
    %v6214 = vunpack.c.l.s4 1983009808
    %v6215 = vunpack.c.0.s8 %v6214
    %v6216 = vlaneseq
    %v6217 = vshrl.u32 %v6216, 7
    %v6218 = vsub.s32 %v6215, %v6217
    %v6219 = vrot.slane %v3305, %v6218
    %v6221 = vunpack.c.l.s4 1983009808
    %v6222 = vunpack.c.0.s8 %v6221
    %v6223 = vlaneseq
    %v6224 = vshrl.u32 %v6223, 7
    %v6225 = vsub.s32 %v6222, %v6224
    %v6226 = vrot.slane %v6212, %v6225
    %v6227 = vcombine.high %v6219, %v6219
    %v6228 = vcombine.high %v6226, %v6226
    %v6236 = vsel %vm417, %v6228, 0
    %v6239 = vsel %vm417, %v3553, 0
    %v6242 = vsel %vm417, %v3561, 0
    %v6245 = vsel %vm417, %v3569, 0
    %v6248 = vsel %vm417, %v3577, 0
    %6250 = vmatprep.subr.mxu0 %v3547
    %6251 = vmatpush1.xpose.msra.mxu0 %v3546
    %6252 = vmatprep.subr.mxu0 %v3555
    %6253 = vmatpush1.xpose.msra.mxu0 %v3554
    %6254 = vmatprep.subr.mxu0 %v3563
    %6255 = vmatpush1.xpose.msra.mxu0 %v3562
    %6256 = vmatprep.subr.mxu0 %v3571
    %6257 = vmatpush1.xpose.msra.mxu0 %v3570
    %6258 = vmatprep.subr.mxu0 0.0
    %6259 = vmatpush1.xpose.msra.mxu0 0.0
    %6260 = vmatprep.subr.mxu0 0.0
    %6261 = vmatpush1.xpose.msra.mxu0 0.0
    %6262 = vmatprep.subr.mxu0 0.0
    %6263 = vmatpush1.xpose.msra.mxu0 0.0
    %6264 = vmatprep.subr.mxu0 0.0
    %6265 = vmatpush1.xpose.msra.mxu0 0.0
    %6266 = vmatprep.subr.mxu0 0.0
    %6267 = vmatpush1.xpose.msra.mxu0 0.0
    %6268 = vmatprep.subr.mxu0 0.0
    %6269 = vmatpush1.xpose.msra.mxu0 0.0
    %6270 = vmatprep.subr.mxu0 0.0
    %6271 = vmatpush1.xpose.msra.mxu0 0.0
    %6272 = vmatprep.subr.mxu0 0.0
    %6273 = vmatpush1.xpose.msra.mxu0 0.0
    %6274 = vmatprep.subr.mxu0 0.0
    %6275 = vmatpush1.xpose.msra.mxu0 0.0
    %6276 = vmatprep.subr.mxu0 0.0
    %6277 = vmatpush1.xpose.msra.mxu0 0.0
    %6278 = vmatprep.subr.mxu0 0.0
    %6279 = vmatpush1.xpose.msra.mxu0 0.0
    %6280 = vmatprep.subr.mxu0 0.0
    %6281 = vmatpush1.xpose.msra.mxu0 0.0
    %6282 = vmatprep.subr.mxu0 0.0
    %6283 = vmatpush1.xpose.msra.mxu0 0.0
    %6284 = vmatprep.subr.mxu0 0.0
    %6285 = vmatpush1.xpose.msra.mxu0 0.0
    %6286 = vmatprep.subr.mxu0 0.0
    %6287 = vmatpush1.xpose.msra.mxu0 0.0
    %6288 = vmatprep.subr.mxu0 0.0
    %6289 = vmatpush1.xpose.msra.mxu0 0.0
    %6290 = vmatprep.subr.mxu0 0.0
    %6291 = vmatpush1.xpose.msra.mxu0 0.0
    %6292 = vmatprep.subr.mxu0 0.0
    %6293 = vmatpush1.xpose.msra.mxu0 0.0
    %6294 = vmatprep.subr.mxu0 0.0
    %6295 = vmatpush1.xpose.msra.mxu0 0.0
    %6296 = vmatprep.subr.mxu0 0.0
    %6297 = vmatpush1.xpose.msra.mxu0 0.0
    %6298 = vmatprep.subr.mxu0 0.0
    %6299 = vmatpush1.xpose.msra.mxu0 0.0
    %6300 = vmatprep.subr.mxu0 0.0
    %6301 = vmatpush1.xpose.msra.mxu0 0.0
    %6302 = vmatprep.subr.mxu0 0.0
    %6303 = vmatpush1.xpose.msra.mxu0 0.0
    %6304 = vmatprep.subr.mxu0 0.0
    %6305 = vmatpush1.xpose.msra.mxu0 0.0
    %6306 = vmatprep.subr.mxu0 0.0
    %6307 = vmatpush1.xpose.msra.mxu0 0.0
    %6308 = vmatprep.subr.mxu0 0.0
    %6309 = vmatpush1.xpose.msra.mxu0 0.0
    %6310 = vmatprep.subr.mxu0 0.0
    %6311 = vmatpush1.xpose.msra.mxu0 0.0
    %6312 = vmatprep.subr.mxu0 0.0
    %6313 = vmatpush1.xpose.msra.mxu0 0.0
    %6314 = vmatprep.mubr.f32.mxu0 %v6210
    %6315 = vmatmul.mubr.f32.gmra.mrb[0].mxu0 %v6202
    %v6316 = vpop.f32.mrb[0].mxu0
    %v6317 = vadd.f32 0.0, %v6316
    %v6318 = vpop.f32.mrb[0].mxu0
    %6319 = vdwg.mxu0
    %6320 = vmatprep.subr.mxu0 %v3549
    %6321 = vmatpush1.xpose.msra.mxu0 %v3548
    %6322 = vmatprep.subr.mxu0 %v3557
    %6323 = vmatpush1.xpose.msra.mxu0 %v3556
    %6324 = vmatprep.subr.mxu0 %v3565
    %6325 = vmatpush1.xpose.msra.mxu0 %v3564
    %6326 = vmatprep.subr.mxu0 %v3573
    %6327 = vmatpush1.xpose.msra.mxu0 %v3572
    %6328 = vmatprep.subr.mxu0 0.0
    %6329 = vmatpush1.xpose.msra.mxu0 0.0
    %6330 = vmatprep.subr.mxu0 0.0
    %6331 = vmatpush1.xpose.msra.mxu0 0.0
    %6332 = vmatprep.subr.mxu0 0.0
    %6333 = vmatpush1.xpose.msra.mxu0 0.0
    %6334 = vmatprep.subr.mxu0 0.0
    %6335 = vmatpush1.xpose.msra.mxu0 0.0
    %6336 = vmatprep.subr.mxu0 0.0
    %6337 = vmatpush1.xpose.msra.mxu0 0.0
    %6338 = vmatprep.subr.mxu0 0.0
    %6339 = vmatpush1.xpose.msra.mxu0 0.0
    %6340 = vmatprep.subr.mxu0 0.0
    %6341 = vmatpush1.xpose.msra.mxu0 0.0
    %6342 = vmatprep.subr.mxu0 0.0
    %6343 = vmatpush1.xpose.msra.mxu0 0.0
    %6344 = vmatprep.subr.mxu0 0.0
    %6345 = vmatpush1.xpose.msra.mxu0 0.0
    %6346 = vmatprep.subr.mxu0 0.0
    %6347 = vmatpush1.xpose.msra.mxu0 0.0
    %6348 = vmatprep.subr.mxu0 0.0
    %6349 = vmatpush1.xpose.msra.mxu0 0.0
    %6350 = vmatprep.subr.mxu0 0.0
    %6351 = vmatpush1.xpose.msra.mxu0 0.0
    %6352 = vmatprep.subr.mxu0 0.0
    %6353 = vmatpush1.xpose.msra.mxu0 0.0
    %6354 = vmatprep.subr.mxu0 0.0
    %6355 = vmatpush1.xpose.msra.mxu0 0.0
    %6356 = vmatprep.subr.mxu0 0.0
    %6357 = vmatpush1.xpose.msra.mxu0 0.0
    %6358 = vmatprep.subr.mxu0 0.0
    %6359 = vmatpush1.xpose.msra.mxu0 0.0
    %6360 = vmatprep.subr.mxu0 0.0
    %6361 = vmatpush1.xpose.msra.mxu0 0.0
    %6362 = vmatprep.subr.mxu0 0.0
    %6363 = vmatpush1.xpose.msra.mxu0 0.0
    %6364 = vmatprep.subr.mxu0 0.0
    %6365 = vmatpush1.xpose.msra.mxu0 0.0
    %6366 = vmatprep.subr.mxu0 0.0
    %6367 = vmatpush1.xpose.msra.mxu0 0.0
    %6368 = vmatprep.subr.mxu0 0.0
    %6369 = vmatpush1.xpose.msra.mxu0 0.0
    %6370 = vmatprep.subr.mxu0 0.0
    %6371 = vmatpush1.xpose.msra.mxu0 0.0
    %6372 = vmatprep.subr.mxu0 0.0
    %6373 = vmatpush1.xpose.msra.mxu0 0.0
    %6374 = vmatprep.subr.mxu0 0.0
    %6375 = vmatpush1.xpose.msra.mxu0 0.0
    %6376 = vmatprep.subr.mxu0 0.0
    %6377 = vmatpush1.xpose.msra.mxu0 0.0
    %6378 = vmatprep.subr.mxu0 0.0
    %6379 = vmatpush1.xpose.msra.mxu0 0.0
    %6380 = vmatprep.subr.mxu0 0.0
    %6381 = vmatpush1.xpose.msra.mxu0 0.0
    %6382 = vmatprep.subr.mxu0 0.0
    %6383 = vmatpush1.xpose.msra.mxu0 0.0
    %6384 = vmatprep.mubr.f32.mxu0 %v6211
    %6385 = vmatmul.mubr.f32.gmra.mrb[0].mxu0 %v6209
    %v6386 = vpop.f32.mrb[0].mxu0
    %v6387 = vadd.f32 %v6317, %v6386
    %v6388 = vpop.f32.mrb[0].mxu0
    %6389 = vdwg.mxu0
    %6390 = vmatprep.subr.mxu0 %v3551
    %6391 = vmatpush1.xpose.msra.mxu0 %v3550
    %6392 = vmatprep.subr.mxu0 %v3559
    %6393 = vmatpush1.xpose.msra.mxu0 %v3558
    %6394 = vmatprep.subr.mxu0 %v3567
    %6395 = vmatpush1.xpose.msra.mxu0 %v3566
    %6396 = vmatprep.subr.mxu0 %v3575
    %6397 = vmatpush1.xpose.msra.mxu0 %v3574
    %6398 = vmatprep.subr.mxu0 0.0
    %6399 = vmatpush1.xpose.msra.mxu0 0.0
    %6400 = vmatprep.subr.mxu0 0.0
    %6401 = vmatpush1.xpose.msra.mxu0 0.0
    %6402 = vmatprep.subr.mxu0 0.0
    %6403 = vmatpush1.xpose.msra.mxu0 0.0
    %6404 = vmatprep.subr.mxu0 0.0
    %6405 = vmatpush1.xpose.msra.mxu0 0.0
    %6406 = vmatprep.subr.mxu0 0.0
    %6407 = vmatpush1.xpose.msra.mxu0 0.0
    %6408 = vmatprep.subr.mxu0 0.0
    %6409 = vmatpush1.xpose.msra.mxu0 0.0
    %6410 = vmatprep.subr.mxu0 0.0
    %6411 = vmatpush1.xpose.msra.mxu0 0.0
    %6412 = vmatprep.subr.mxu0 0.0
    %6413 = vmatpush1.xpose.msra.mxu0 0.0
    %6414 = vmatprep.subr.mxu0 0.0
    %6415 = vmatpush1.xpose.msra.mxu0 0.0
    %6416 = vmatprep.subr.mxu0 0.0
    %6417 = vmatpush1.xpose.msra.mxu0 0.0
    %6418 = vmatprep.subr.mxu0 0.0
    %6419 = vmatpush1.xpose.msra.mxu0 0.0
    %6420 = vmatprep.subr.mxu0 0.0
    %6421 = vmatpush1.xpose.msra.mxu0 0.0
    %6422 = vmatprep.subr.mxu0 0.0
    %6423 = vmatpush1.xpose.msra.mxu0 0.0
    %6424 = vmatprep.subr.mxu0 0.0
    %6425 = vmatpush1.xpose.msra.mxu0 0.0
    %6426 = vmatprep.subr.mxu0 0.0
    %6427 = vmatpush1.xpose.msra.mxu0 0.0
    %6428 = vmatprep.subr.mxu0 0.0
    %6429 = vmatpush1.xpose.msra.mxu0 0.0
    %6430 = vmatprep.subr.mxu0 0.0
    %6431 = vmatpush1.xpose.msra.mxu0 0.0
    %6432 = vmatprep.subr.mxu0 0.0
    %6433 = vmatpush1.xpose.msra.mxu0 0.0
    %6434 = vmatprep.subr.mxu0 0.0
    %6435 = vmatpush1.xpose.msra.mxu0 0.0
    %6436 = vmatprep.subr.mxu0 0.0
    %6437 = vmatpush1.xpose.msra.mxu0 0.0
    %6438 = vmatprep.subr.mxu0 0.0
    %6439 = vmatpush1.xpose.msra.mxu0 0.0
    %6440 = vmatprep.subr.mxu0 0.0
    %6441 = vmatpush1.xpose.msra.mxu0 0.0
    %6442 = vmatprep.subr.mxu0 0.0
    %6443 = vmatpush1.xpose.msra.mxu0 0.0
    %6444 = vmatprep.subr.mxu0 0.0
    %6445 = vmatpush1.xpose.msra.mxu0 0.0
    %6446 = vmatprep.subr.mxu0 0.0
    %6447 = vmatpush1.xpose.msra.mxu0 0.0
    %6448 = vmatprep.subr.mxu0 0.0
    %6449 = vmatpush1.xpose.msra.mxu0 0.0
    %6450 = vmatprep.subr.mxu0 0.0
    %6451 = vmatpush1.xpose.msra.mxu0 0.0
    %6452 = vmatprep.subr.mxu0 0.0
    %6453 = vmatpush1.xpose.msra.mxu0 0.0
    %6454 = vmatprep.mubr.f32.mxu0 %v6227
    %6455 = vmatmul.mubr.f32.gmra.mrb[0].mxu0 %v6219
    %v6456 = vpop.f32.mrb[0].mxu0
    %v6457 = vadd.f32 %v6387, %v6456
    %v6458 = vpop.f32.mrb[0].mxu0
    %6459 = vdwg.mxu0
    %6460 = vmatprep.subr.mxu0 %v6239
    %6461 = vmatpush1.xpose.msra.mxu0 %v3552
    %6462 = vmatprep.subr.mxu0 %v6242
    %6463 = vmatpush1.xpose.msra.mxu0 %v3560
    %6464 = vmatprep.subr.mxu0 %v6245
    %6465 = vmatpush1.xpose.msra.mxu0 %v3568
    %6466 = vmatprep.subr.mxu0 %v6248
    %6467 = vmatpush1.xpose.msra.mxu0 %v3576
    %6468 = vmatprep.subr.mxu0 0.0
    %6469 = vmatpush1.xpose.msra.mxu0 0.0
    %6470 = vmatprep.subr.mxu0 0.0
    %6471 = vmatpush1.xpose.msra.mxu0 0.0
    %6472 = vmatprep.subr.mxu0 0.0
    %6473 = vmatpush1.xpose.msra.mxu0 0.0
    %6474 = vmatprep.subr.mxu0 0.0
    %6475 = vmatpush1.xpose.msra.mxu0 0.0
    %6476 = vmatprep.subr.mxu0 0.0
    %6477 = vmatpush1.xpose.msra.mxu0 0.0
    %6478 = vmatprep.subr.mxu0 0.0
    %6479 = vmatpush1.xpose.msra.mxu0 0.0
    %6480 = vmatprep.subr.mxu0 0.0
    %6481 = vmatpush1.xpose.msra.mxu0 0.0
    %6482 = vmatprep.subr.mxu0 0.0
    %6483 = vmatpush1.xpose.msra.mxu0 0.0
    %6484 = vmatprep.subr.mxu0 0.0
    %6485 = vmatpush1.xpose.msra.mxu0 0.0
    %6486 = vmatprep.subr.mxu0 0.0
    %6487 = vmatpush1.xpose.msra.mxu0 0.0
    %6488 = vmatprep.subr.mxu0 0.0
    %6489 = vmatpush1.xpose.msra.mxu0 0.0
    %6490 = vmatprep.subr.mxu0 0.0
    %6491 = vmatpush1.xpose.msra.mxu0 0.0
    %6492 = vmatprep.subr.mxu0 0.0
    %6493 = vmatpush1.xpose.msra.mxu0 0.0
    %6494 = vmatprep.subr.mxu0 0.0
    %6495 = vmatpush1.xpose.msra.mxu0 0.0
    %6496 = vmatprep.subr.mxu0 0.0
    %6497 = vmatpush1.xpose.msra.mxu0 0.0
    %6498 = vmatprep.subr.mxu0 0.0
    %6499 = vmatpush1.xpose.msra.mxu0 0.0
    %6500 = vmatprep.subr.mxu0 0.0
    %6501 = vmatpush1.xpose.msra.mxu0 0.0
    %6502 = vmatprep.subr.mxu0 0.0
    %6503 = vmatpush1.xpose.msra.mxu0 0.0
    %6504 = vmatprep.subr.mxu0 0.0
    %6505 = vmatpush1.xpose.msra.mxu0 0.0
    %6506 = vmatprep.subr.mxu0 0.0
    %6507 = vmatpush1.xpose.msra.mxu0 0.0
    %6508 = vmatprep.subr.mxu0 0.0
    %6509 = vmatpush1.xpose.msra.mxu0 0.0
    %6510 = vmatprep.subr.mxu0 0.0
    %6511 = vmatpush1.xpose.msra.mxu0 0.0
    %6512 = vmatprep.subr.mxu0 0.0
    %6513 = vmatpush1.xpose.msra.mxu0 0.0
    %6514 = vmatprep.subr.mxu0 0.0
    %6515 = vmatpush1.xpose.msra.mxu0 0.0
    %6516 = vmatprep.subr.mxu0 0.0
    %6517 = vmatpush1.xpose.msra.mxu0 0.0
    %6518 = vmatprep.subr.mxu0 0.0
    %6519 = vmatpush1.xpose.msra.mxu0 0.0
    %6520 = vmatprep.subr.mxu0 0.0
    %6521 = vmatpush1.xpose.msra.mxu0 0.0
    %6522 = vmatprep.subr.mxu0 0.0
    %6523 = vmatpush1.xpose.msra.mxu0 0.0
    %6524 = vmatprep.mubr.f32.mxu0 %v6236
    %6525 = vmatmul.mubr.f32.gmra.mrb[0].mxu0 %v6226
    %v6526 = vpop.f32.mrb[0].mxu0
    %v6527 = vadd.f32 %v6457, %v6526
    %v6528 = vpop.f32.mrb[0].mxu0
    %6529 = vdwg.mxu0
    %v6532 = vcombine.high %v3306, %v3306
    %v6534 = vunpack.c.l.s4 1983009808
    %v6535 = vunpack.c.0.s8 %v6534
    %v6536 = vlaneseq
    %v6537 = vshrl.u32 %v6536, 7
    %v6538 = vsub.s32 %v6535, %v6537
    %v6539 = vrot.slane %v3306, %v6538
    %v6541 = vunpack.c.l.s4 1983009808
    %v6542 = vunpack.c.0.s8 %v6541
    %v6543 = vlaneseq
    %v6544 = vshrl.u32 %v6543, 7
    %v6545 = vsub.s32 %v6542, %v6544
    %v6546 = vrot.slane %v6532, %v6545
    %v6547 = vcombine.high %v6539, %v6539
    %v6548 = vcombine.high %v6546, %v6546
    %v6549 = vcombine.high %v3307, %v3307
    %v6551 = vunpack.c.l.s4 1983009808
    %v6552 = vunpack.c.0.s8 %v6551
    %v6553 = vlaneseq
    %v6554 = vshrl.u32 %v6553, 7
    %v6555 = vsub.s32 %v6552, %v6554
    %v6556 = vrot.slane %v3307, %v6555
    %v6558 = vunpack.c.l.s4 1983009808
    %v6559 = vunpack.c.0.s8 %v6558
    %v6560 = vlaneseq
    %v6561 = vshrl.u32 %v6560, 7
    %v6562 = vsub.s32 %v6559, %v6561
    %v6563 = vrot.slane %v6549, %v6562
    %v6564 = vcombine.high %v6556, %v6556
    %v6565 = vcombine.high %v6563, %v6563
    %v6573 = vsel %vm417, %v6565, 0
    %v6576 = vsel %vm417, %v3585, 0
    %v6579 = vsel %vm417, %v3593, 0
    %v6582 = vsel %vm417, %v3601, 0
    %v6585 = vsel %vm417, %v3609, 0
    %6587 = vmatprep.subr.mxu0 %v3579
    %6588 = vmatpush1.xpose.msra.mxu0 %v3578
    %6589 = vmatprep.subr.mxu0 %v3587
    %6590 = vmatpush1.xpose.msra.mxu0 %v3586
    %6591 = vmatprep.subr.mxu0 %v3595
    %6592 = vmatpush1.xpose.msra.mxu0 %v3594
    %6593 = vmatprep.subr.mxu0 %v3603
    %6594 = vmatpush1.xpose.msra.mxu0 %v3602
    %6595 = vmatprep.subr.mxu0 0.0
    %6596 = vmatpush1.xpose.msra.mxu0 0.0
    %6597 = vmatprep.subr.mxu0 0.0
    %6598 = vmatpush1.xpose.msra.mxu0 0.0
    %6599 = vmatprep.subr.mxu0 0.0
    %6600 = vmatpush1.xpose.msra.mxu0 0.0
    %6601 = vmatprep.subr.mxu0 0.0
    %6602 = vmatpush1.xpose.msra.mxu0 0.0
    %6603 = vmatprep.subr.mxu0 0.0
    %6604 = vmatpush1.xpose.msra.mxu0 0.0
    %6605 = vmatprep.subr.mxu0 0.0
    %6606 = vmatpush1.xpose.msra.mxu0 0.0
    %6607 = vmatprep.subr.mxu0 0.0
    %6608 = vmatpush1.xpose.msra.mxu0 0.0
    %6609 = vmatprep.subr.mxu0 0.0
    %6610 = vmatpush1.xpose.msra.mxu0 0.0
    %6611 = vmatprep.subr.mxu0 0.0
    %6612 = vmatpush1.xpose.msra.mxu0 0.0
    %6613 = vmatprep.subr.mxu0 0.0
    %6614 = vmatpush1.xpose.msra.mxu0 0.0
    %6615 = vmatprep.subr.mxu0 0.0
    %6616 = vmatpush1.xpose.msra.mxu0 0.0
    %6617 = vmatprep.subr.mxu0 0.0
    %6618 = vmatpush1.xpose.msra.mxu0 0.0
    %6619 = vmatprep.subr.mxu0 0.0
    %6620 = vmatpush1.xpose.msra.mxu0 0.0
    %6621 = vmatprep.subr.mxu0 0.0
    %6622 = vmatpush1.xpose.msra.mxu0 0.0
    %6623 = vmatprep.subr.mxu0 0.0
    %6624 = vmatpush1.xpose.msra.mxu0 0.0
    %6625 = vmatprep.subr.mxu0 0.0
    %6626 = vmatpush1.xpose.msra.mxu0 0.0
    %6627 = vmatprep.subr.mxu0 0.0
    %6628 = vmatpush1.xpose.msra.mxu0 0.0
    %6629 = vmatprep.subr.mxu0 0.0
    %6630 = vmatpush1.xpose.msra.mxu0 0.0
    %6631 = vmatprep.subr.mxu0 0.0
    %6632 = vmatpush1.xpose.msra.mxu0 0.0
    %6633 = vmatprep.subr.mxu0 0.0
    %6634 = vmatpush1.xpose.msra.mxu0 0.0
    %6635 = vmatprep.subr.mxu0 0.0
    %6636 = vmatpush1.xpose.msra.mxu0 0.0
    %6637 = vmatprep.subr.mxu0 0.0
    %6638 = vmatpush1.xpose.msra.mxu0 0.0
    %6639 = vmatprep.subr.mxu0 0.0
    %6640 = vmatpush1.xpose.msra.mxu0 0.0
    %6641 = vmatprep.subr.mxu0 0.0
    %6642 = vmatpush1.xpose.msra.mxu0 0.0
    %6643 = vmatprep.subr.mxu0 0.0
    %6644 = vmatpush1.xpose.msra.mxu0 0.0
    %6645 = vmatprep.subr.mxu0 0.0
    %6646 = vmatpush1.xpose.msra.mxu0 0.0
    %6647 = vmatprep.subr.mxu0 0.0
    %6648 = vmatpush1.xpose.msra.mxu0 0.0
    %6649 = vmatprep.subr.mxu0 0.0
    %6650 = vmatpush1.xpose.msra.mxu0 0.0
    %6651 = vmatprep.mubr.f32.mxu0 %v6547
    %6652 = vmatmul.mubr.f32.gmra.mrb[0].mxu0 %v6539
    %v6653 = vpop.f32.mrb[0].mxu0
    %v6654 = vadd.f32 0.0, %v6653
    %v6655 = vpop.f32.mrb[0].mxu0
    %6656 = vdwg.mxu0
    %6657 = vmatprep.subr.mxu0 %v3581
    %6658 = vmatpush1.xpose.msra.mxu0 %v3580
    %6659 = vmatprep.subr.mxu0 %v3589
    %6660 = vmatpush1.xpose.msra.mxu0 %v3588
    %6661 = vmatprep.subr.mxu0 %v3597
    %6662 = vmatpush1.xpose.msra.mxu0 %v3596
    %6663 = vmatprep.subr.mxu0 %v3605
    %6664 = vmatpush1.xpose.msra.mxu0 %v3604
    %6665 = vmatprep.subr.mxu0 0.0
    %6666 = vmatpush1.xpose.msra.mxu0 0.0
    %6667 = vmatprep.subr.mxu0 0.0
    %6668 = vmatpush1.xpose.msra.mxu0 0.0
    %6669 = vmatprep.subr.mxu0 0.0
    %6670 = vmatpush1.xpose.msra.mxu0 0.0
    %6671 = vmatprep.subr.mxu0 0.0
    %6672 = vmatpush1.xpose.msra.mxu0 0.0
    %6673 = vmatprep.subr.mxu0 0.0
    %6674 = vmatpush1.xpose.msra.mxu0 0.0
    %6675 = vmatprep.subr.mxu0 0.0
    %6676 = vmatpush1.xpose.msra.mxu0 0.0
    %6677 = vmatprep.subr.mxu0 0.0
    %6678 = vmatpush1.xpose.msra.mxu0 0.0
    %6679 = vmatprep.subr.mxu0 0.0
    %6680 = vmatpush1.xpose.msra.mxu0 0.0
    %6681 = vmatprep.subr.mxu0 0.0
    %6682 = vmatpush1.xpose.msra.mxu0 0.0
    %6683 = vmatprep.subr.mxu0 0.0
    %6684 = vmatpush1.xpose.msra.mxu0 0.0
    %6685 = vmatprep.subr.mxu0 0.0
    %6686 = vmatpush1.xpose.msra.mxu0 0.0
    %6687 = vmatprep.subr.mxu0 0.0
    %6688 = vmatpush1.xpose.msra.mxu0 0.0
    %6689 = vmatprep.subr.mxu0 0.0
    %6690 = vmatpush1.xpose.msra.mxu0 0.0
    %6691 = vmatprep.subr.mxu0 0.0
    %6692 = vmatpush1.xpose.msra.mxu0 0.0
    %6693 = vmatprep.subr.mxu0 0.0
    %6694 = vmatpush1.xpose.msra.mxu0 0.0
    %6695 = vmatprep.subr.mxu0 0.0
    %6696 = vmatpush1.xpose.msra.mxu0 0.0
    %6697 = vmatprep.subr.mxu0 0.0
    %6698 = vmatpush1.xpose.msra.mxu0 0.0
    %6699 = vmatprep.subr.mxu0 0.0
    %6700 = vmatpush1.xpose.msra.mxu0 0.0
    %6701 = vmatprep.subr.mxu0 0.0
    %6702 = vmatpush1.xpose.msra.mxu0 0.0
    %6703 = vmatprep.subr.mxu0 0.0
    %6704 = vmatpush1.xpose.msra.mxu0 0.0
    %6705 = vmatprep.subr.mxu0 0.0
    %6706 = vmatpush1.xpose.msra.mxu0 0.0
    %6707 = vmatprep.subr.mxu0 0.0
    %6708 = vmatpush1.xpose.msra.mxu0 0.0
    %6709 = vmatprep.subr.mxu0 0.0
    %6710 = vmatpush1.xpose.msra.mxu0 0.0
    %6711 = vmatprep.subr.mxu0 0.0
    %6712 = vmatpush1.xpose.msra.mxu0 0.0
    %6713 = vmatprep.subr.mxu0 0.0
    %6714 = vmatpush1.xpose.msra.mxu0 0.0
    %6715 = vmatprep.subr.mxu0 0.0
    %6716 = vmatpush1.xpose.msra.mxu0 0.0
    %6717 = vmatprep.subr.mxu0 0.0
    %6718 = vmatpush1.xpose.msra.mxu0 0.0
    %6719 = vmatprep.subr.mxu0 0.0
    %6720 = vmatpush1.xpose.msra.mxu0 0.0
    %6721 = vmatprep.mubr.f32.mxu0 %v6548
    %6722 = vmatmul.mubr.f32.gmra.mrb[0].mxu0 %v6546
    %v6723 = vpop.f32.mrb[0].mxu0
    %v6724 = vadd.f32 %v6654, %v6723
    %v6725 = vpop.f32.mrb[0].mxu0
    %6726 = vdwg.mxu0
    %6727 = vmatprep.subr.mxu0 %v3583
    %6728 = vmatpush1.xpose.msra.mxu0 %v3582
    %6729 = vmatprep.subr.mxu0 %v3591
    %6730 = vmatpush1.xpose.msra.mxu0 %v3590
    %6731 = vmatprep.subr.mxu0 %v3599
    %6732 = vmatpush1.xpose.msra.mxu0 %v3598
    %6733 = vmatprep.subr.mxu0 %v3607
    %6734 = vmatpush1.xpose.msra.mxu0 %v3606
    %6735 = vmatprep.subr.mxu0 0.0
    %6736 = vmatpush1.xpose.msra.mxu0 0.0
    %6737 = vmatprep.subr.mxu0 0.0
    %6738 = vmatpush1.xpose.msra.mxu0 0.0
    %6739 = vmatprep.subr.mxu0 0.0
    %6740 = vmatpush1.xpose.msra.mxu0 0.0
    %6741 = vmatprep.subr.mxu0 0.0
    %6742 = vmatpush1.xpose.msra.mxu0 0.0
    %6743 = vmatprep.subr.mxu0 0.0
    %6744 = vmatpush1.xpose.msra.mxu0 0.0
    %6745 = vmatprep.subr.mxu0 0.0
    %6746 = vmatpush1.xpose.msra.mxu0 0.0
    %6747 = vmatprep.subr.mxu0 0.0
    %6748 = vmatpush1.xpose.msra.mxu0 0.0
    %6749 = vmatprep.subr.mxu0 0.0
    %6750 = vmatpush1.xpose.msra.mxu0 0.0
    %6751 = vmatprep.subr.mxu0 0.0
    %6752 = vmatpush1.xpose.msra.mxu0 0.0
    %6753 = vmatprep.subr.mxu0 0.0
    %6754 = vmatpush1.xpose.msra.mxu0 0.0
    %6755 = vmatprep.subr.mxu0 0.0
    %6756 = vmatpush1.xpose.msra.mxu0 0.0
    %6757 = vmatprep.subr.mxu0 0.0
    %6758 = vmatpush1.xpose.msra.mxu0 0.0
    %6759 = vmatprep.subr.mxu0 0.0
    %6760 = vmatpush1.xpose.msra.mxu0 0.0
    %6761 = vmatprep.subr.mxu0 0.0
    %6762 = vmatpush1.xpose.msra.mxu0 0.0
    %6763 = vmatprep.subr.mxu0 0.0
    %6764 = vmatpush1.xpose.msra.mxu0 0.0
    %6765 = vmatprep.subr.mxu0 0.0
    %6766 = vmatpush1.xpose.msra.mxu0 0.0
    %6767 = vmatprep.subr.mxu0 0.0
    %6768 = vmatpush1.xpose.msra.mxu0 0.0
    %6769 = vmatprep.subr.mxu0 0.0
    %6770 = vmatpush1.xpose.msra.mxu0 0.0
    %6771 = vmatprep.subr.mxu0 0.0
    %6772 = vmatpush1.xpose.msra.mxu0 0.0
    %6773 = vmatprep.subr.mxu0 0.0
    %6774 = vmatpush1.xpose.msra.mxu0 0.0
    %6775 = vmatprep.subr.mxu0 0.0
    %6776 = vmatpush1.xpose.msra.mxu0 0.0
    %6777 = vmatprep.subr.mxu0 0.0
    %6778 = vmatpush1.xpose.msra.mxu0 0.0
    %6779 = vmatprep.subr.mxu0 0.0
    %6780 = vmatpush1.xpose.msra.mxu0 0.0
    %6781 = vmatprep.subr.mxu0 0.0
    %6782 = vmatpush1.xpose.msra.mxu0 0.0
    %6783 = vmatprep.subr.mxu0 0.0
    %6784 = vmatpush1.xpose.msra.mxu0 0.0
    %6785 = vmatprep.subr.mxu0 0.0
    %6786 = vmatpush1.xpose.msra.mxu0 0.0
    %6787 = vmatprep.subr.mxu0 0.0
    %6788 = vmatpush1.xpose.msra.mxu0 0.0
    %6789 = vmatprep.subr.mxu0 0.0
    %6790 = vmatpush1.xpose.msra.mxu0 0.0
    %6791 = vmatprep.mubr.f32.mxu0 %v6564
    %6792 = vmatmul.mubr.f32.gmra.mrb[0].mxu0 %v6556
    %v6793 = vpop.f32.mrb[0].mxu0
    %v6794 = vadd.f32 %v6724, %v6793
    %v6795 = vpop.f32.mrb[0].mxu0
    %6796 = vdwg.mxu0
    %6797 = vmatprep.subr.mxu0 %v6576
    %6798 = vmatpush1.xpose.msra.mxu0 %v3584
    %6799 = vmatprep.subr.mxu0 %v6579
    %6800 = vmatpush1.xpose.msra.mxu0 %v3592
    %6801 = vmatprep.subr.mxu0 %v6582
    %6802 = vmatpush1.xpose.msra.mxu0 %v3600
    %6803 = vmatprep.subr.mxu0 %v6585
    %6804 = vmatpush1.xpose.msra.mxu0 %v3608
    %6805 = vmatprep.subr.mxu0 0.0
    %6806 = vmatpush1.xpose.msra.mxu0 0.0
    %6807 = vmatprep.subr.mxu0 0.0
    %6808 = vmatpush1.xpose.msra.mxu0 0.0
    %6809 = vmatprep.subr.mxu0 0.0
    %6810 = vmatpush1.xpose.msra.mxu0 0.0
    %6811 = vmatprep.subr.mxu0 0.0
    %6812 = vmatpush1.xpose.msra.mxu0 0.0
    %6813 = vmatprep.subr.mxu0 0.0
    %6814 = vmatpush1.xpose.msra.mxu0 0.0
    %6815 = vmatprep.subr.mxu0 0.0
    %6816 = vmatpush1.xpose.msra.mxu0 0.0
    %6817 = vmatprep.subr.mxu0 0.0
    %6818 = vmatpush1.xpose.msra.mxu0 0.0
    %6819 = vmatprep.subr.mxu0 0.0
    %6820 = vmatpush1.xpose.msra.mxu0 0.0
    %6821 = vmatprep.subr.mxu0 0.0
    %6822 = vmatpush1.xpose.msra.mxu0 0.0
    %6823 = vmatprep.subr.mxu0 0.0
    %6824 = vmatpush1.xpose.msra.mxu0 0.0
    %6825 = vmatprep.subr.mxu0 0.0
    %6826 = vmatpush1.xpose.msra.mxu0 0.0
    %6827 = vmatprep.subr.mxu0 0.0
    %6828 = vmatpush1.xpose.msra.mxu0 0.0
    %6829 = vmatprep.subr.mxu0 0.0
    %6830 = vmatpush1.xpose.msra.mxu0 0.0
    %6831 = vmatprep.subr.mxu0 0.0
    %6832 = vmatpush1.xpose.msra.mxu0 0.0
    %6833 = vmatprep.subr.mxu0 0.0
    %6834 = vmatpush1.xpose.msra.mxu0 0.0
    %6835 = vmatprep.subr.mxu0 0.0
    %6836 = vmatpush1.xpose.msra.mxu0 0.0
    %6837 = vmatprep.subr.mxu0 0.0
    %6838 = vmatpush1.xpose.msra.mxu0 0.0
    %6839 = vmatprep.subr.mxu0 0.0
    %6840 = vmatpush1.xpose.msra.mxu0 0.0
    %6841 = vmatprep.subr.mxu0 0.0
    %6842 = vmatpush1.xpose.msra.mxu0 0.0
    %6843 = vmatprep.subr.mxu0 0.0
    %6844 = vmatpush1.xpose.msra.mxu0 0.0
    %6845 = vmatprep.subr.mxu0 0.0
    %6846 = vmatpush1.xpose.msra.mxu0 0.0
    %6847 = vmatprep.subr.mxu0 0.0
    %6848 = vmatpush1.xpose.msra.mxu0 0.0
    %6849 = vmatprep.subr.mxu0 0.0
    %6850 = vmatpush1.xpose.msra.mxu0 0.0
    %6851 = vmatprep.subr.mxu0 0.0
    %6852 = vmatpush1.xpose.msra.mxu0 0.0
    %6853 = vmatprep.subr.mxu0 0.0
    %6854 = vmatpush1.xpose.msra.mxu0 0.0
    %6855 = vmatprep.subr.mxu0 0.0
    %6856 = vmatpush1.xpose.msra.mxu0 0.0
    %6857 = vmatprep.subr.mxu0 0.0
    %6858 = vmatpush1.xpose.msra.mxu0 0.0
    %6859 = vmatprep.subr.mxu0 0.0
    %6860 = vmatpush1.xpose.msra.mxu0 0.0
    %6861 = vmatprep.mubr.f32.mxu0 %v6573
    %6862 = vmatmul.mubr.f32.gmra.mrb[0].mxu0 %v6563
    %v6863 = vpop.f32.mrb[0].mxu0
    %v6864 = vadd.f32 %v6794, %v6863
    %v6865 = vpop.f32.mrb[0].mxu0
    %6866 = vdwg.mxu0
    %v6869 = vcombine.high %v3308, %v3308
    %v6871 = vunpack.c.l.s4 1983009808
    %v6872 = vunpack.c.0.s8 %v6871
    %v6873 = vlaneseq
    %v6874 = vshrl.u32 %v6873, 7
    %v6875 = vsub.s32 %v6872, %v6874
    %v6876 = vrot.slane %v3308, %v6875
    %v6878 = vunpack.c.l.s4 1983009808
    %v6879 = vunpack.c.0.s8 %v6878
    %v6880 = vlaneseq
    %v6881 = vshrl.u32 %v6880, 7
    %v6882 = vsub.s32 %v6879, %v6881
    %v6883 = vrot.slane %v6869, %v6882
    %v6884 = vcombine.high %v6876, %v6876
    %v6885 = vcombine.high %v6883, %v6883
    %v6886 = vcombine.high %v3309, %v3309
    %v6888 = vunpack.c.l.s4 1983009808
    %v6889 = vunpack.c.0.s8 %v6888
    %v6890 = vlaneseq
    %v6891 = vshrl.u32 %v6890, 7
    %v6892 = vsub.s32 %v6889, %v6891
    %v6893 = vrot.slane %v3309, %v6892
    %v6895 = vunpack.c.l.s4 1983009808
    %v6896 = vunpack.c.0.s8 %v6895
    %v6897 = vlaneseq
    %v6898 = vshrl.u32 %v6897, 7
    %v6899 = vsub.s32 %v6896, %v6898
    %v6900 = vrot.slane %v6886, %v6899
    %v6901 = vcombine.high %v6893, %v6893
    %v6902 = vcombine.high %v6900, %v6900
    %v6910 = vsel %vm417, %v6902, 0
    %v6913 = vsel %vm417, %v3617, 0
    %v6916 = vsel %vm417, %v3625, 0
    %v6919 = vsel %vm417, %v3633, 0
    %v6922 = vsel %vm417, %v3641, 0
    %6924 = vmatprep.subr.mxu0 %v3611
    %6925 = vmatpush1.xpose.msra.mxu0 %v3610
    %6926 = vmatprep.subr.mxu0 %v3619
    %6927 = vmatpush1.xpose.msra.mxu0 %v3618
    %6928 = vmatprep.subr.mxu0 %v3627
    %6929 = vmatpush1.xpose.msra.mxu0 %v3626
    %6930 = vmatprep.subr.mxu0 %v3635
    %6931 = vmatpush1.xpose.msra.mxu0 %v3634
    %6932 = vmatprep.subr.mxu0 0.0
    %6933 = vmatpush1.xpose.msra.mxu0 0.0
    %6934 = vmatprep.subr.mxu0 0.0
    %6935 = vmatpush1.xpose.msra.mxu0 0.0
    %6936 = vmatprep.subr.mxu0 0.0
    %6937 = vmatpush1.xpose.msra.mxu0 0.0
    %6938 = vmatprep.subr.mxu0 0.0
    %6939 = vmatpush1.xpose.msra.mxu0 0.0
    %6940 = vmatprep.subr.mxu0 0.0
    %6941 = vmatpush1.xpose.msra.mxu0 0.0
    %6942 = vmatprep.subr.mxu0 0.0
    %6943 = vmatpush1.xpose.msra.mxu0 0.0
    %6944 = vmatprep.subr.mxu0 0.0
    %6945 = vmatpush1.xpose.msra.mxu0 0.0
    %6946 = vmatprep.subr.mxu0 0.0
    %6947 = vmatpush1.xpose.msra.mxu0 0.0
    %6948 = vmatprep.subr.mxu0 0.0
    %6949 = vmatpush1.xpose.msra.mxu0 0.0
    %6950 = vmatprep.subr.mxu0 0.0
    %6951 = vmatpush1.xpose.msra.mxu0 0.0
    %6952 = vmatprep.subr.mxu0 0.0
    %6953 = vmatpush1.xpose.msra.mxu0 0.0
    %6954 = vmatprep.subr.mxu0 0.0
    %6955 = vmatpush1.xpose.msra.mxu0 0.0
    %6956 = vmatprep.subr.mxu0 0.0
    %6957 = vmatpush1.xpose.msra.mxu0 0.0
    %6958 = vmatprep.subr.mxu0 0.0
    %6959 = vmatpush1.xpose.msra.mxu0 0.0
    %6960 = vmatprep.subr.mxu0 0.0
    %6961 = vmatpush1.xpose.msra.mxu0 0.0
    %6962 = vmatprep.subr.mxu0 0.0
    %6963 = vmatpush1.xpose.msra.mxu0 0.0
    %6964 = vmatprep.subr.mxu0 0.0
    %6965 = vmatpush1.xpose.msra.mxu0 0.0
    %6966 = vmatprep.subr.mxu0 0.0
    %6967 = vmatpush1.xpose.msra.mxu0 0.0
    %6968 = vmatprep.subr.mxu0 0.0
    %6969 = vmatpush1.xpose.msra.mxu0 0.0
    %6970 = vmatprep.subr.mxu0 0.0
    %6971 = vmatpush1.xpose.msra.mxu0 0.0
    %6972 = vmatprep.subr.mxu0 0.0
    %6973 = vmatpush1.xpose.msra.mxu0 0.0
    %6974 = vmatprep.subr.mxu0 0.0
    %6975 = vmatpush1.xpose.msra.mxu0 0.0
    %6976 = vmatprep.subr.mxu0 0.0
    %6977 = vmatpush1.xpose.msra.mxu0 0.0
    %6978 = vmatprep.subr.mxu0 0.0
    %6979 = vmatpush1.xpose.msra.mxu0 0.0
    %6980 = vmatprep.subr.mxu0 0.0
    %6981 = vmatpush1.xpose.msra.mxu0 0.0
    %6982 = vmatprep.subr.mxu0 0.0
    %6983 = vmatpush1.xpose.msra.mxu0 0.0
    %6984 = vmatprep.subr.mxu0 0.0
    %6985 = vmatpush1.xpose.msra.mxu0 0.0
    %6986 = vmatprep.subr.mxu0 0.0
    %6987 = vmatpush1.xpose.msra.mxu0 0.0
    %6988 = vmatprep.mubr.f32.mxu0 %v6884
    %6989 = vmatmul.mubr.f32.gmra.mrb[0].mxu0 %v6876
    %v6990 = vpop.f32.mrb[0].mxu0
    %v6991 = vadd.f32 0.0, %v6990
    %v6992 = vpop.f32.mrb[0].mxu0
    %6993 = vdwg.mxu0
    %6994 = vmatprep.subr.mxu0 %v3613
    %6995 = vmatpush1.xpose.msra.mxu0 %v3612
    %6996 = vmatprep.subr.mxu0 %v3621
    %6997 = vmatpush1.xpose.msra.mxu0 %v3620
    %6998 = vmatprep.subr.mxu0 %v3629
    %6999 = vmatpush1.xpose.msra.mxu0 %v3628
    %7000 = vmatprep.subr.mxu0 %v3637
    %7001 = vmatpush1.xpose.msra.mxu0 %v3636
    %7002 = vmatprep.subr.mxu0 0.0
    %7003 = vmatpush1.xpose.msra.mxu0 0.0
    %7004 = vmatprep.subr.mxu0 0.0
    %7005 = vmatpush1.xpose.msra.mxu0 0.0
    %7006 = vmatprep.subr.mxu0 0.0
    %7007 = vmatpush1.xpose.msra.mxu0 0.0
    %7008 = vmatprep.subr.mxu0 0.0
    %7009 = vmatpush1.xpose.msra.mxu0 0.0
    %7010 = vmatprep.subr.mxu0 0.0
    %7011 = vmatpush1.xpose.msra.mxu0 0.0
    %7012 = vmatprep.subr.mxu0 0.0
    %7013 = vmatpush1.xpose.msra.mxu0 0.0
    %7014 = vmatprep.subr.mxu0 0.0
    %7015 = vmatpush1.xpose.msra.mxu0 0.0
    %7016 = vmatprep.subr.mxu0 0.0
    %7017 = vmatpush1.xpose.msra.mxu0 0.0
    %7018 = vmatprep.subr.mxu0 0.0
    %7019 = vmatpush1.xpose.msra.mxu0 0.0
    %7020 = vmatprep.subr.mxu0 0.0
    %7021 = vmatpush1.xpose.msra.mxu0 0.0
    %7022 = vmatprep.subr.mxu0 0.0
    %7023 = vmatpush1.xpose.msra.mxu0 0.0
    %7024 = vmatprep.subr.mxu0 0.0
    %7025 = vmatpush1.xpose.msra.mxu0 0.0
    %7026 = vmatprep.subr.mxu0 0.0
    %7027 = vmatpush1.xpose.msra.mxu0 0.0
    %7028 = vmatprep.subr.mxu0 0.0
    %7029 = vmatpush1.xpose.msra.mxu0 0.0
    %7030 = vmatprep.subr.mxu0 0.0
    %7031 = vmatpush1.xpose.msra.mxu0 0.0
    %7032 = vmatprep.subr.mxu0 0.0
    %7033 = vmatpush1.xpose.msra.mxu0 0.0
    %7034 = vmatprep.subr.mxu0 0.0
    %7035 = vmatpush1.xpose.msra.mxu0 0.0
    %7036 = vmatprep.subr.mxu0 0.0
    %7037 = vmatpush1.xpose.msra.mxu0 0.0
    %7038 = vmatprep.subr.mxu0 0.0
    %7039 = vmatpush1.xpose.msra.mxu0 0.0
    %7040 = vmatprep.subr.mxu0 0.0
    %7041 = vmatpush1.xpose.msra.mxu0 0.0
    %7042 = vmatprep.subr.mxu0 0.0
    %7043 = vmatpush1.xpose.msra.mxu0 0.0
    %7044 = vmatprep.subr.mxu0 0.0
    %7045 = vmatpush1.xpose.msra.mxu0 0.0
    %7046 = vmatprep.subr.mxu0 0.0
    %7047 = vmatpush1.xpose.msra.mxu0 0.0
    %7048 = vmatprep.subr.mxu0 0.0
    %7049 = vmatpush1.xpose.msra.mxu0 0.0
    %7050 = vmatprep.subr.mxu0 0.0
    %7051 = vmatpush1.xpose.msra.mxu0 0.0
    %7052 = vmatprep.subr.mxu0 0.0
    %7053 = vmatpush1.xpose.msra.mxu0 0.0
    %7054 = vmatprep.subr.mxu0 0.0
    %7055 = vmatpush1.xpose.msra.mxu0 0.0
    %7056 = vmatprep.subr.mxu0 0.0
    %7057 = vmatpush1.xpose.msra.mxu0 0.0
    %7058 = vmatprep.mubr.f32.mxu0 %v6885
    %7059 = vmatmul.mubr.f32.gmra.mrb[0].mxu0 %v6883
    %v7060 = vpop.f32.mrb[0].mxu0
    %v7061 = vadd.f32 %v6991, %v7060
    %v7062 = vpop.f32.mrb[0].mxu0
    %7063 = vdwg.mxu0
    %7064 = vmatprep.subr.mxu0 %v3615
    %7065 = vmatpush1.xpose.msra.mxu0 %v3614
    %7066 = vmatprep.subr.mxu0 %v3623
    %7067 = vmatpush1.xpose.msra.mxu0 %v3622
    %7068 = vmatprep.subr.mxu0 %v3631
    %7069 = vmatpush1.xpose.msra.mxu0 %v3630
    %7070 = vmatprep.subr.mxu0 %v3639
    %7071 = vmatpush1.xpose.msra.mxu0 %v3638
    %7072 = vmatprep.subr.mxu0 0.0
    %7073 = vmatpush1.xpose.msra.mxu0 0.0
    %7074 = vmatprep.subr.mxu0 0.0
    %7075 = vmatpush1.xpose.msra.mxu0 0.0
    %7076 = vmatprep.subr.mxu0 0.0
    %7077 = vmatpush1.xpose.msra.mxu0 0.0
    %7078 = vmatprep.subr.mxu0 0.0
    %7079 = vmatpush1.xpose.msra.mxu0 0.0
    %7080 = vmatprep.subr.mxu0 0.0
    %7081 = vmatpush1.xpose.msra.mxu0 0.0
    %7082 = vmatprep.subr.mxu0 0.0
    %7083 = vmatpush1.xpose.msra.mxu0 0.0
    %7084 = vmatprep.subr.mxu0 0.0
    %7085 = vmatpush1.xpose.msra.mxu0 0.0
    %7086 = vmatprep.subr.mxu0 0.0
    %7087 = vmatpush1.xpose.msra.mxu0 0.0
    %7088 = vmatprep.subr.mxu0 0.0
    %7089 = vmatpush1.xpose.msra.mxu0 0.0
    %7090 = vmatprep.subr.mxu0 0.0
    %7091 = vmatpush1.xpose.msra.mxu0 0.0
    %7092 = vmatprep.subr.mxu0 0.0
    %7093 = vmatpush1.xpose.msra.mxu0 0.0
    %7094 = vmatprep.subr.mxu0 0.0
    %7095 = vmatpush1.xpose.msra.mxu0 0.0
    %7096 = vmatprep.subr.mxu0 0.0
    %7097 = vmatpush1.xpose.msra.mxu0 0.0
    %7098 = vmatprep.subr.mxu0 0.0
    %7099 = vmatpush1.xpose.msra.mxu0 0.0
    %7100 = vmatprep.subr.mxu0 0.0
    %7101 = vmatpush1.xpose.msra.mxu0 0.0
    %7102 = vmatprep.subr.mxu0 0.0
    %7103 = vmatpush1.xpose.msra.mxu0 0.0
    %7104 = vmatprep.subr.mxu0 0.0
    %7105 = vmatpush1.xpose.msra.mxu0 0.0
    %7106 = vmatprep.subr.mxu0 0.0
    %7107 = vmatpush1.xpose.msra.mxu0 0.0
    %7108 = vmatprep.subr.mxu0 0.0
    %7109 = vmatpush1.xpose.msra.mxu0 0.0
    %7110 = vmatprep.subr.mxu0 0.0
    %7111 = vmatpush1.xpose.msra.mxu0 0.0
    %7112 = vmatprep.subr.mxu0 0.0
    %7113 = vmatpush1.xpose.msra.mxu0 0.0
    %7114 = vmatprep.subr.mxu0 0.0
    %7115 = vmatpush1.xpose.msra.mxu0 0.0
    %7116 = vmatprep.subr.mxu0 0.0
    %7117 = vmatpush1.xpose.msra.mxu0 0.0
    %7118 = vmatprep.subr.mxu0 0.0
    %7119 = vmatpush1.xpose.msra.mxu0 0.0
    %7120 = vmatprep.subr.mxu0 0.0
    %7121 = vmatpush1.xpose.msra.mxu0 0.0
    %7122 = vmatprep.subr.mxu0 0.0
    %7123 = vmatpush1.xpose.msra.mxu0 0.0
    %7124 = vmatprep.subr.mxu0 0.0
    %7125 = vmatpush1.xpose.msra.mxu0 0.0
    %7126 = vmatprep.subr.mxu0 0.0
    %7127 = vmatpush1.xpose.msra.mxu0 0.0
    %7128 = vmatprep.mubr.f32.mxu0 %v6901
    %7129 = vmatmul.mubr.f32.gmra.mrb[0].mxu0 %v6893
    %v7130 = vpop.f32.mrb[0].mxu0
    %v7131 = vadd.f32 %v7061, %v7130
    %v7132 = vpop.f32.mrb[0].mxu0
    %7133 = vdwg.mxu0
    %7134 = vmatprep.subr.mxu0 %v6913
    %7135 = vmatpush1.xpose.msra.mxu0 %v3616
    %7136 = vmatprep.subr.mxu0 %v6916
    %7137 = vmatpush1.xpose.msra.mxu0 %v3624
    %7138 = vmatprep.subr.mxu0 %v6919
    %7139 = vmatpush1.xpose.msra.mxu0 %v3632
    %7140 = vmatprep.subr.mxu0 %v6922
    %7141 = vmatpush1.xpose.msra.mxu0 %v3640
    %7142 = vmatprep.subr.mxu0 0.0
    %7143 = vmatpush1.xpose.msra.mxu0 0.0
    %7144 = vmatprep.subr.mxu0 0.0
    %7145 = vmatpush1.xpose.msra.mxu0 0.0
    %7146 = vmatprep.subr.mxu0 0.0
    %7147 = vmatpush1.xpose.msra.mxu0 0.0
    %7148 = vmatprep.subr.mxu0 0.0
    %7149 = vmatpush1.xpose.msra.mxu0 0.0
    %7150 = vmatprep.subr.mxu0 0.0
    %7151 = vmatpush1.xpose.msra.mxu0 0.0
    %7152 = vmatprep.subr.mxu0 0.0
    %7153 = vmatpush1.xpose.msra.mxu0 0.0
    %7154 = vmatprep.subr.mxu0 0.0
    %7155 = vmatpush1.xpose.msra.mxu0 0.0
    %7156 = vmatprep.subr.mxu0 0.0
    %7157 = vmatpush1.xpose.msra.mxu0 0.0
    %7158 = vmatprep.subr.mxu0 0.0
    %7159 = vmatpush1.xpose.msra.mxu0 0.0
    %7160 = vmatprep.subr.mxu0 0.0
    %7161 = vmatpush1.xpose.msra.mxu0 0.0
    %7162 = vmatprep.subr.mxu0 0.0
    %7163 = vmatpush1.xpose.msra.mxu0 0.0
    %7164 = vmatprep.subr.mxu0 0.0
    %7165 = vmatpush1.xpose.msra.mxu0 0.0
    %7166 = vmatprep.subr.mxu0 0.0
    %7167 = vmatpush1.xpose.msra.mxu0 0.0
    %7168 = vmatprep.subr.mxu0 0.0
    %7169 = vmatpush1.xpose.msra.mxu0 0.0
    %7170 = vmatprep.subr.mxu0 0.0
    %7171 = vmatpush1.xpose.msra.mxu0 0.0
    %7172 = vmatprep.subr.mxu0 0.0
    %7173 = vmatpush1.xpose.msra.mxu0 0.0
    %7174 = vmatprep.subr.mxu0 0.0
    %7175 = vmatpush1.xpose.msra.mxu0 0.0
    %7176 = vmatprep.subr.mxu0 0.0
    %7177 = vmatpush1.xpose.msra.mxu0 0.0
    %7178 = vmatprep.subr.mxu0 0.0
    %7179 = vmatpush1.xpose.msra.mxu0 0.0
    %7180 = vmatprep.subr.mxu0 0.0
    %7181 = vmatpush1.xpose.msra.mxu0 0.0
    %7182 = vmatprep.subr.mxu0 0.0
    %7183 = vmatpush1.xpose.msra.mxu0 0.0
    %7184 = vmatprep.subr.mxu0 0.0
    %7185 = vmatpush1.xpose.msra.mxu0 0.0
    %7186 = vmatprep.subr.mxu0 0.0
    %7187 = vmatpush1.xpose.msra.mxu0 0.0
    %7188 = vmatprep.subr.mxu0 0.0
    %7189 = vmatpush1.xpose.msra.mxu0 0.0
    %7190 = vmatprep.subr.mxu0 0.0
    %7191 = vmatpush1.xpose.msra.mxu0 0.0
    %7192 = vmatprep.subr.mxu0 0.0
    %7193 = vmatpush1.xpose.msra.mxu0 0.0
    %7194 = vmatprep.subr.mxu0 0.0
    %7195 = vmatpush1.xpose.msra.mxu0 0.0
    %7196 = vmatprep.subr.mxu0 0.0
    %7197 = vmatpush1.xpose.msra.mxu0 0.0
    %7198 = vmatprep.mubr.f32.mxu0 %v6910
    %7199 = vmatmul.mubr.f32.gmra.mrb[0].mxu0 %v6900
    %v7200 = vpop.f32.mrb[0].mxu0
    %v7201 = vadd.f32 %v7131, %v7200
    %v7202 = vpop.f32.mrb[0].mxu0
    %7203 = vdwg.mxu0
    %v7206 = vcombine.high %v3310, %v3310
    %v7208 = vunpack.c.l.s4 1983009808
    %v7209 = vunpack.c.0.s8 %v7208
    %v7210 = vlaneseq
    %v7211 = vshrl.u32 %v7210, 7
    %v7212 = vsub.s32 %v7209, %v7211
    %v7213 = vrot.slane %v3310, %v7212
    %v7215 = vunpack.c.l.s4 1983009808
    %v7216 = vunpack.c.0.s8 %v7215
    %v7217 = vlaneseq
    %v7218 = vshrl.u32 %v7217, 7
    %v7219 = vsub.s32 %v7216, %v7218
    %v7220 = vrot.slane %v7206, %v7219
    %v7221 = vcombine.high %v7213, %v7213
    %v7222 = vcombine.high %v7220, %v7220
    %v7223 = vcombine.high %v3311, %v3311
    %v7225 = vunpack.c.l.s4 1983009808
    %v7226 = vunpack.c.0.s8 %v7225
    %v7227 = vlaneseq
    %v7228 = vshrl.u32 %v7227, 7
    %v7229 = vsub.s32 %v7226, %v7228
    %v7230 = vrot.slane %v3311, %v7229
    %v7232 = vunpack.c.l.s4 1983009808
    %v7233 = vunpack.c.0.s8 %v7232
    %v7234 = vlaneseq
    %v7235 = vshrl.u32 %v7234, 7
    %v7236 = vsub.s32 %v7233, %v7235
    %v7237 = vrot.slane %v7223, %v7236
    %v7238 = vcombine.high %v7230, %v7230
    %v7239 = vcombine.high %v7237, %v7237
    %v7247 = vsel %vm417, %v7239, 0
    %v7250 = vsel %vm417, %v3649, 0
    %v7253 = vsel %vm417, %v3657, 0
    %v7256 = vsel %vm417, %v3665, 0
    %v7259 = vsel %vm417, %v3673, 0
    %7261 = vmatprep.subr.mxu0 %v3643
    %7262 = vmatpush1.xpose.msra.mxu0 %v3642
    %7263 = vmatprep.subr.mxu0 %v3651
    %7264 = vmatpush1.xpose.msra.mxu0 %v3650
    %7265 = vmatprep.subr.mxu0 %v3659
    %7266 = vmatpush1.xpose.msra.mxu0 %v3658
    %7267 = vmatprep.subr.mxu0 %v3667
    %7268 = vmatpush1.xpose.msra.mxu0 %v3666
    %7269 = vmatprep.subr.mxu0 0.0
    %7270 = vmatpush1.xpose.msra.mxu0 0.0
    %7271 = vmatprep.subr.mxu0 0.0
    %7272 = vmatpush1.xpose.msra.mxu0 0.0
    %7273 = vmatprep.subr.mxu0 0.0
    %7274 = vmatpush1.xpose.msra.mxu0 0.0
    %7275 = vmatprep.subr.mxu0 0.0
    %7276 = vmatpush1.xpose.msra.mxu0 0.0
    %7277 = vmatprep.subr.mxu0 0.0
    %7278 = vmatpush1.xpose.msra.mxu0 0.0
    %7279 = vmatprep.subr.mxu0 0.0
    %7280 = vmatpush1.xpose.msra.mxu0 0.0
    %7281 = vmatprep.subr.mxu0 0.0
    %7282 = vmatpush1.xpose.msra.mxu0 0.0
    %7283 = vmatprep.subr.mxu0 0.0
    %7284 = vmatpush1.xpose.msra.mxu0 0.0
    %7285 = vmatprep.subr.mxu0 0.0
    %7286 = vmatpush1.xpose.msra.mxu0 0.0
    %7287 = vmatprep.subr.mxu0 0.0
    %7288 = vmatpush1.xpose.msra.mxu0 0.0
    %7289 = vmatprep.subr.mxu0 0.0
    %7290 = vmatpush1.xpose.msra.mxu0 0.0
    %7291 = vmatprep.subr.mxu0 0.0
    %7292 = vmatpush1.xpose.msra.mxu0 0.0
    %7293 = vmatprep.subr.mxu0 0.0
    %7294 = vmatpush1.xpose.msra.mxu0 0.0
    %7295 = vmatprep.subr.mxu0 0.0
    %7296 = vmatpush1.xpose.msra.mxu0 0.0
    %7297 = vmatprep.subr.mxu0 0.0
    %7298 = vmatpush1.xpose.msra.mxu0 0.0
    %7299 = vmatprep.subr.mxu0 0.0
    %7300 = vmatpush1.xpose.msra.mxu0 0.0
    %7301 = vmatprep.subr.mxu0 0.0
    %7302 = vmatpush1.xpose.msra.mxu0 0.0
    %7303 = vmatprep.subr.mxu0 0.0
    %7304 = vmatpush1.xpose.msra.mxu0 0.0
    %7305 = vmatprep.subr.mxu0 0.0
    %7306 = vmatpush1.xpose.msra.mxu0 0.0
    %7307 = vmatprep.subr.mxu0 0.0
    %7308 = vmatpush1.xpose.msra.mxu0 0.0
    %7309 = vmatprep.subr.mxu0 0.0
    %7310 = vmatpush1.xpose.msra.mxu0 0.0
    %7311 = vmatprep.subr.mxu0 0.0
    %7312 = vmatpush1.xpose.msra.mxu0 0.0
    %7313 = vmatprep.subr.mxu0 0.0
    %7314 = vmatpush1.xpose.msra.mxu0 0.0
    %7315 = vmatprep.subr.mxu0 0.0
    %7316 = vmatpush1.xpose.msra.mxu0 0.0
    %7317 = vmatprep.subr.mxu0 0.0
    %7318 = vmatpush1.xpose.msra.mxu0 0.0
    %7319 = vmatprep.subr.mxu0 0.0
    %7320 = vmatpush1.xpose.msra.mxu0 0.0
    %7321 = vmatprep.subr.mxu0 0.0
    %7322 = vmatpush1.xpose.msra.mxu0 0.0
    %7323 = vmatprep.subr.mxu0 0.0
    %7324 = vmatpush1.xpose.msra.mxu0 0.0
    %7325 = vmatprep.mubr.f32.mxu0 %v7221
    %7326 = vmatmul.mubr.f32.gmra.mrb[0].mxu0 %v7213
    %v7327 = vpop.f32.mrb[0].mxu0
    %v7328 = vadd.f32 0.0, %v7327
    %v7329 = vpop.f32.mrb[0].mxu0
    %7330 = vdwg.mxu0
    %7331 = vmatprep.subr.mxu0 %v3645
    %7332 = vmatpush1.xpose.msra.mxu0 %v3644
    %7333 = vmatprep.subr.mxu0 %v3653
    %7334 = vmatpush1.xpose.msra.mxu0 %v3652
    %7335 = vmatprep.subr.mxu0 %v3661
    %7336 = vmatpush1.xpose.msra.mxu0 %v3660
    %7337 = vmatprep.subr.mxu0 %v3669
    %7338 = vmatpush1.xpose.msra.mxu0 %v3668
    %7339 = vmatprep.subr.mxu0 0.0
    %7340 = vmatpush1.xpose.msra.mxu0 0.0
    %7341 = vmatprep.subr.mxu0 0.0
    %7342 = vmatpush1.xpose.msra.mxu0 0.0
    %7343 = vmatprep.subr.mxu0 0.0
    %7344 = vmatpush1.xpose.msra.mxu0 0.0
    %7345 = vmatprep.subr.mxu0 0.0
    %7346 = vmatpush1.xpose.msra.mxu0 0.0
    %7347 = vmatprep.subr.mxu0 0.0
    %7348 = vmatpush1.xpose.msra.mxu0 0.0
    %7349 = vmatprep.subr.mxu0 0.0
    %7350 = vmatpush1.xpose.msra.mxu0 0.0
    %7351 = vmatprep.subr.mxu0 0.0
    %7352 = vmatpush1.xpose.msra.mxu0 0.0
    %7353 = vmatprep.subr.mxu0 0.0
    %7354 = vmatpush1.xpose.msra.mxu0 0.0
    %7355 = vmatprep.subr.mxu0 0.0
    %7356 = vmatpush1.xpose.msra.mxu0 0.0
    %7357 = vmatprep.subr.mxu0 0.0
    %7358 = vmatpush1.xpose.msra.mxu0 0.0
    %7359 = vmatprep.subr.mxu0 0.0
    %7360 = vmatpush1.xpose.msra.mxu0 0.0
    %7361 = vmatprep.subr.mxu0 0.0
    %7362 = vmatpush1.xpose.msra.mxu0 0.0
    %7363 = vmatprep.subr.mxu0 0.0
    %7364 = vmatpush1.xpose.msra.mxu0 0.0
    %7365 = vmatprep.subr.mxu0 0.0
    %7366 = vmatpush1.xpose.msra.mxu0 0.0
    %7367 = vmatprep.subr.mxu0 0.0
    %7368 = vmatpush1.xpose.msra.mxu0 0.0
    %7369 = vmatprep.subr.mxu0 0.0
    %7370 = vmatpush1.xpose.msra.mxu0 0.0
    %7371 = vmatprep.subr.mxu0 0.0
    %7372 = vmatpush1.xpose.msra.mxu0 0.0
    %7373 = vmatprep.subr.mxu0 0.0
    %7374 = vmatpush1.xpose.msra.mxu0 0.0
    %7375 = vmatprep.subr.mxu0 0.0
    %7376 = vmatpush1.xpose.msra.mxu0 0.0
    %7377 = vmatprep.subr.mxu0 0.0
    %7378 = vmatpush1.xpose.msra.mxu0 0.0
    %7379 = vmatprep.subr.mxu0 0.0
    %7380 = vmatpush1.xpose.msra.mxu0 0.0
    %7381 = vmatprep.subr.mxu0 0.0
    %7382 = vmatpush1.xpose.msra.mxu0 0.0
    %7383 = vmatprep.subr.mxu0 0.0
    %7384 = vmatpush1.xpose.msra.mxu0 0.0
    %7385 = vmatprep.subr.mxu0 0.0
    %7386 = vmatpush1.xpose.msra.mxu0 0.0
    %7387 = vmatprep.subr.mxu0 0.0
    %7388 = vmatpush1.xpose.msra.mxu0 0.0
    %7389 = vmatprep.subr.mxu0 0.0
    %7390 = vmatpush1.xpose.msra.mxu0 0.0
    %7391 = vmatprep.subr.mxu0 0.0
    %7392 = vmatpush1.xpose.msra.mxu0 0.0
    %7393 = vmatprep.subr.mxu0 0.0
    %7394 = vmatpush1.xpose.msra.mxu0 0.0
    %7395 = vmatprep.mubr.f32.mxu0 %v7222
    %7396 = vmatmul.mubr.f32.gmra.mrb[0].mxu0 %v7220
    %v7397 = vpop.f32.mrb[0].mxu0
    %v7398 = vadd.f32 %v7328, %v7397
    %v7399 = vpop.f32.mrb[0].mxu0
    %7400 = vdwg.mxu0
    %7401 = vmatprep.subr.mxu0 %v3647
    %7402 = vmatpush1.xpose.msra.mxu0 %v3646
    %7403 = vmatprep.subr.mxu0 %v3655
    %7404 = vmatpush1.xpose.msra.mxu0 %v3654
    %7405 = vmatprep.subr.mxu0 %v3663
    %7406 = vmatpush1.xpose.msra.mxu0 %v3662
    %7407 = vmatprep.subr.mxu0 %v3671
    %7408 = vmatpush1.xpose.msra.mxu0 %v3670
    %7409 = vmatprep.subr.mxu0 0.0
    %7410 = vmatpush1.xpose.msra.mxu0 0.0
    %7411 = vmatprep.subr.mxu0 0.0
    %7412 = vmatpush1.xpose.msra.mxu0 0.0
    %7413 = vmatprep.subr.mxu0 0.0
    %7414 = vmatpush1.xpose.msra.mxu0 0.0
    %7415 = vmatprep.subr.mxu0 0.0
    %7416 = vmatpush1.xpose.msra.mxu0 0.0
    %7417 = vmatprep.subr.mxu0 0.0
    %7418 = vmatpush1.xpose.msra.mxu0 0.0
    %7419 = vmatprep.subr.mxu0 0.0
    %7420 = vmatpush1.xpose.msra.mxu0 0.0
    %7421 = vmatprep.subr.mxu0 0.0
    %7422 = vmatpush1.xpose.msra.mxu0 0.0
    %7423 = vmatprep.subr.mxu0 0.0
    %7424 = vmatpush1.xpose.msra.mxu0 0.0
    %7425 = vmatprep.subr.mxu0 0.0
    %7426 = vmatpush1.xpose.msra.mxu0 0.0
    %7427 = vmatprep.subr.mxu0 0.0
    %7428 = vmatpush1.xpose.msra.mxu0 0.0
    %7429 = vmatprep.subr.mxu0 0.0
    %7430 = vmatpush1.xpose.msra.mxu0 0.0
    %7431 = vmatprep.subr.mxu0 0.0
    %7432 = vmatpush1.xpose.msra.mxu0 0.0
    %7433 = vmatprep.subr.mxu0 0.0
    %7434 = vmatpush1.xpose.msra.mxu0 0.0
    %7435 = vmatprep.subr.mxu0 0.0
    %7436 = vmatpush1.xpose.msra.mxu0 0.0
    %7437 = vmatprep.subr.mxu0 0.0
    %7438 = vmatpush1.xpose.msra.mxu0 0.0
    %7439 = vmatprep.subr.mxu0 0.0
    %7440 = vmatpush1.xpose.msra.mxu0 0.0
    %7441 = vmatprep.subr.mxu0 0.0
    %7442 = vmatpush1.xpose.msra.mxu0 0.0
    %7443 = vmatprep.subr.mxu0 0.0
    %7444 = vmatpush1.xpose.msra.mxu0 0.0
    %7445 = vmatprep.subr.mxu0 0.0
    %7446 = vmatpush1.xpose.msra.mxu0 0.0
    %7447 = vmatprep.subr.mxu0 0.0
    %7448 = vmatpush1.xpose.msra.mxu0 0.0
    %7449 = vmatprep.subr.mxu0 0.0
    %7450 = vmatpush1.xpose.msra.mxu0 0.0
    %7451 = vmatprep.subr.mxu0 0.0
    %7452 = vmatpush1.xpose.msra.mxu0 0.0
    %7453 = vmatprep.subr.mxu0 0.0
    %7454 = vmatpush1.xpose.msra.mxu0 0.0
    %7455 = vmatprep.subr.mxu0 0.0
    %7456 = vmatpush1.xpose.msra.mxu0 0.0
    %7457 = vmatprep.subr.mxu0 0.0
    %7458 = vmatpush1.xpose.msra.mxu0 0.0
    %7459 = vmatprep.subr.mxu0 0.0
    %7460 = vmatpush1.xpose.msra.mxu0 0.0
    %7461 = vmatprep.subr.mxu0 0.0
    %7462 = vmatpush1.xpose.msra.mxu0 0.0
    %7463 = vmatprep.subr.mxu0 0.0
    %7464 = vmatpush1.xpose.msra.mxu0 0.0
    %7465 = vmatprep.mubr.f32.mxu0 %v7238
    %7466 = vmatmul.mubr.f32.gmra.mrb[0].mxu0 %v7230
    %v7467 = vpop.f32.mrb[0].mxu0
    %v7468 = vadd.f32 %v7398, %v7467
    %v7469 = vpop.f32.mrb[0].mxu0
    %7470 = vdwg.mxu0
    %7471 = vmatprep.subr.mxu0 %v7250
    %7472 = vmatpush1.xpose.msra.mxu0 %v3648
    %7473 = vmatprep.subr.mxu0 %v7253
    %7474 = vmatpush1.xpose.msra.mxu0 %v3656
    %7475 = vmatprep.subr.mxu0 %v7256
    %7476 = vmatpush1.xpose.msra.mxu0 %v3664
    %7477 = vmatprep.subr.mxu0 %v7259
    %7478 = vmatpush1.xpose.msra.mxu0 %v3672
    %7479 = vmatprep.subr.mxu0 0.0
    %7480 = vmatpush1.xpose.msra.mxu0 0.0
    %7481 = vmatprep.subr.mxu0 0.0
    %7482 = vmatpush1.xpose.msra.mxu0 0.0
    %7483 = vmatprep.subr.mxu0 0.0
    %7484 = vmatpush1.xpose.msra.mxu0 0.0
    %7485 = vmatprep.subr.mxu0 0.0
    %7486 = vmatpush1.xpose.msra.mxu0 0.0
    %7487 = vmatprep.subr.mxu0 0.0
    %7488 = vmatpush1.xpose.msra.mxu0 0.0
    %7489 = vmatprep.subr.mxu0 0.0
    %7490 = vmatpush1.xpose.msra.mxu0 0.0
    %7491 = vmatprep.subr.mxu0 0.0
    %7492 = vmatpush1.xpose.msra.mxu0 0.0
    %7493 = vmatprep.subr.mxu0 0.0
    %7494 = vmatpush1.xpose.msra.mxu0 0.0
    %7495 = vmatprep.subr.mxu0 0.0
    %7496 = vmatpush1.xpose.msra.mxu0 0.0
    %7497 = vmatprep.subr.mxu0 0.0
    %7498 = vmatpush1.xpose.msra.mxu0 0.0
    %7499 = vmatprep.subr.mxu0 0.0
    %7500 = vmatpush1.xpose.msra.mxu0 0.0
    %7501 = vmatprep.subr.mxu0 0.0
    %7502 = vmatpush1.xpose.msra.mxu0 0.0
    %7503 = vmatprep.subr.mxu0 0.0
    %7504 = vmatpush1.xpose.msra.mxu0 0.0
    %7505 = vmatprep.subr.mxu0 0.0
    %7506 = vmatpush1.xpose.msra.mxu0 0.0
    %7507 = vmatprep.subr.mxu0 0.0
    %7508 = vmatpush1.xpose.msra.mxu0 0.0
    %7509 = vmatprep.subr.mxu0 0.0
    %7510 = vmatpush1.xpose.msra.mxu0 0.0
    %7511 = vmatprep.subr.mxu0 0.0
    %7512 = vmatpush1.xpose.msra.mxu0 0.0
    %7513 = vmatprep.subr.mxu0 0.0
    %7514 = vmatpush1.xpose.msra.mxu0 0.0
    %7515 = vmatprep.subr.mxu0 0.0
    %7516 = vmatpush1.xpose.msra.mxu0 0.0
    %7517 = vmatprep.subr.mxu0 0.0
    %7518 = vmatpush1.xpose.msra.mxu0 0.0
    %7519 = vmatprep.subr.mxu0 0.0
    %7520 = vmatpush1.xpose.msra.mxu0 0.0
    %7521 = vmatprep.subr.mxu0 0.0
    %7522 = vmatpush1.xpose.msra.mxu0 0.0
    %7523 = vmatprep.subr.mxu0 0.0
    %7524 = vmatpush1.xpose.msra.mxu0 0.0
    %7525 = vmatprep.subr.mxu0 0.0
    %7526 = vmatpush1.xpose.msra.mxu0 0.0
    %7527 = vmatprep.subr.mxu0 0.0
    %7528 = vmatpush1.xpose.msra.mxu0 0.0
    %7529 = vmatprep.subr.mxu0 0.0
    %7530 = vmatpush1.xpose.msra.mxu0 0.0
    %7531 = vmatprep.subr.mxu0 0.0
    %7532 = vmatpush1.xpose.msra.mxu0 0.0
    %7533 = vmatprep.subr.mxu0 0.0
    %7534 = vmatpush1.xpose.msra.mxu0 0.0
    %7535 = vmatprep.mubr.f32.mxu0 %v7247
    %7536 = vmatmul.mubr.f32.gmra.mrb[0].mxu0 %v7237
    %v7537 = vpop.f32.mrb[0].mxu0
    %v7538 = vadd.f32 %v7468, %v7537
    %v7539 = vpop.f32.mrb[0].mxu0
    %7540 = vdwg.mxu0
    %v7543 = vcombine.high %v3312, %v3312
    %v7545 = vunpack.c.l.s4 1983009808
    %v7546 = vunpack.c.0.s8 %v7545
    %v7547 = vlaneseq
    %v7548 = vshrl.u32 %v7547, 7
    %v7549 = vsub.s32 %v7546, %v7548
    %v7550 = vrot.slane %v3312, %v7549
    %v7552 = vunpack.c.l.s4 1983009808
    %v7553 = vunpack.c.0.s8 %v7552
    %v7554 = vlaneseq
    %v7555 = vshrl.u32 %v7554, 7
    %v7556 = vsub.s32 %v7553, %v7555
    %v7557 = vrot.slane %v7543, %v7556
    %v7558 = vcombine.high %v7550, %v7550
    %v7559 = vcombine.high %v7557, %v7557
    %v7560 = vcombine.high %v3313, %v3313
    %v7562 = vunpack.c.l.s4 1983009808
    %v7563 = vunpack.c.0.s8 %v7562
    %v7564 = vlaneseq
    %v7565 = vshrl.u32 %v7564, 7
    %v7566 = vsub.s32 %v7563, %v7565
    %v7567 = vrot.slane %v3313, %v7566
    %v7569 = vunpack.c.l.s4 1983009808
    %v7570 = vunpack.c.0.s8 %v7569
    %v7571 = vlaneseq
    %v7572 = vshrl.u32 %v7571, 7
    %v7573 = vsub.s32 %v7570, %v7572
    %v7574 = vrot.slane %v7560, %v7573
    %v7575 = vcombine.high %v7567, %v7567
    %v7576 = vcombine.high %v7574, %v7574
    %v7584 = vsel %vm417, %v7576, 0
    %v7587 = vsel %vm417, %v3681, 0
    %v7590 = vsel %vm417, %v3689, 0
    %v7593 = vsel %vm417, %v3697, 0
    %v7596 = vsel %vm417, %v3705, 0
    %7598 = vmatprep.subr.mxu0 %v3675
    %7599 = vmatpush1.xpose.msra.mxu0 %v3674
    %7600 = vmatprep.subr.mxu0 %v3683
    %7601 = vmatpush1.xpose.msra.mxu0 %v3682
    %7602 = vmatprep.subr.mxu0 %v3691
    %7603 = vmatpush1.xpose.msra.mxu0 %v3690
    %7604 = vmatprep.subr.mxu0 %v3699
    %7605 = vmatpush1.xpose.msra.mxu0 %v3698
    %7606 = vmatprep.subr.mxu0 0.0
    %7607 = vmatpush1.xpose.msra.mxu0 0.0
    %7608 = vmatprep.subr.mxu0 0.0
    %7609 = vmatpush1.xpose.msra.mxu0 0.0
    %7610 = vmatprep.subr.mxu0 0.0
    %7611 = vmatpush1.xpose.msra.mxu0 0.0
    %7612 = vmatprep.subr.mxu0 0.0
    %7613 = vmatpush1.xpose.msra.mxu0 0.0
    %7614 = vmatprep.subr.mxu0 0.0
    %7615 = vmatpush1.xpose.msra.mxu0 0.0
    %7616 = vmatprep.subr.mxu0 0.0
    %7617 = vmatpush1.xpose.msra.mxu0 0.0
    %7618 = vmatprep.subr.mxu0 0.0
    %7619 = vmatpush1.xpose.msra.mxu0 0.0
    %7620 = vmatprep.subr.mxu0 0.0
    %7621 = vmatpush1.xpose.msra.mxu0 0.0
    %7622 = vmatprep.subr.mxu0 0.0
    %7623 = vmatpush1.xpose.msra.mxu0 0.0
    %7624 = vmatprep.subr.mxu0 0.0
    %7625 = vmatpush1.xpose.msra.mxu0 0.0
    %7626 = vmatprep.subr.mxu0 0.0
    %7627 = vmatpush1.xpose.msra.mxu0 0.0
    %7628 = vmatprep.subr.mxu0 0.0
    %7629 = vmatpush1.xpose.msra.mxu0 0.0
    %7630 = vmatprep.subr.mxu0 0.0
    %7631 = vmatpush1.xpose.msra.mxu0 0.0
    %7632 = vmatprep.subr.mxu0 0.0
    %7633 = vmatpush1.xpose.msra.mxu0 0.0
    %7634 = vmatprep.subr.mxu0 0.0
    %7635 = vmatpush1.xpose.msra.mxu0 0.0
    %7636 = vmatprep.subr.mxu0 0.0
    %7637 = vmatpush1.xpose.msra.mxu0 0.0
    %7638 = vmatprep.subr.mxu0 0.0
    %7639 = vmatpush1.xpose.msra.mxu0 0.0
    %7640 = vmatprep.subr.mxu0 0.0
    %7641 = vmatpush1.xpose.msra.mxu0 0.0
    %7642 = vmatprep.subr.mxu0 0.0
    %7643 = vmatpush1.xpose.msra.mxu0 0.0
    %7644 = vmatprep.subr.mxu0 0.0
    %7645 = vmatpush1.xpose.msra.mxu0 0.0
    %7646 = vmatprep.subr.mxu0 0.0
    %7647 = vmatpush1.xpose.msra.mxu0 0.0
    %7648 = vmatprep.subr.mxu0 0.0
    %7649 = vmatpush1.xpose.msra.mxu0 0.0
    %7650 = vmatprep.subr.mxu0 0.0
    %7651 = vmatpush1.xpose.msra.mxu0 0.0
    %7652 = vmatprep.subr.mxu0 0.0
    %7653 = vmatpush1.xpose.msra.mxu0 0.0
    %7654 = vmatprep.subr.mxu0 0.0
    %7655 = vmatpush1.xpose.msra.mxu0 0.0
    %7656 = vmatprep.subr.mxu0 0.0
    %7657 = vmatpush1.xpose.msra.mxu0 0.0
    %7658 = vmatprep.subr.mxu0 0.0
    %7659 = vmatpush1.xpose.msra.mxu0 0.0
    %7660 = vmatprep.subr.mxu0 0.0
    %7661 = vmatpush1.xpose.msra.mxu0 0.0
    %7662 = vmatprep.mubr.f32.mxu0 %v7558
    %7663 = vmatmul.mubr.f32.gmra.mrb[0].mxu0 %v7550
    %v7664 = vpop.f32.mrb[0].mxu0
    %v7665 = vadd.f32 0.0, %v7664
    %v7666 = vpop.f32.mrb[0].mxu0
    %7667 = vdwg.mxu0
    %7668 = vmatprep.subr.mxu0 %v3677
    %7669 = vmatpush1.xpose.msra.mxu0 %v3676
    %7670 = vmatprep.subr.mxu0 %v3685
    %7671 = vmatpush1.xpose.msra.mxu0 %v3684
    %7672 = vmatprep.subr.mxu0 %v3693
    %7673 = vmatpush1.xpose.msra.mxu0 %v3692
    %7674 = vmatprep.subr.mxu0 %v3701
    %7675 = vmatpush1.xpose.msra.mxu0 %v3700
    %7676 = vmatprep.subr.mxu0 0.0
    %7677 = vmatpush1.xpose.msra.mxu0 0.0
    %7678 = vmatprep.subr.mxu0 0.0
    %7679 = vmatpush1.xpose.msra.mxu0 0.0
    %7680 = vmatprep.subr.mxu0 0.0
    %7681 = vmatpush1.xpose.msra.mxu0 0.0
    %7682 = vmatprep.subr.mxu0 0.0
    %7683 = vmatpush1.xpose.msra.mxu0 0.0
    %7684 = vmatprep.subr.mxu0 0.0
    %7685 = vmatpush1.xpose.msra.mxu0 0.0
    %7686 = vmatprep.subr.mxu0 0.0
    %7687 = vmatpush1.xpose.msra.mxu0 0.0
    %7688 = vmatprep.subr.mxu0 0.0
    %7689 = vmatpush1.xpose.msra.mxu0 0.0
    %7690 = vmatprep.subr.mxu0 0.0
    %7691 = vmatpush1.xpose.msra.mxu0 0.0
    %7692 = vmatprep.subr.mxu0 0.0
    %7693 = vmatpush1.xpose.msra.mxu0 0.0
    %7694 = vmatprep.subr.mxu0 0.0
    %7695 = vmatpush1.xpose.msra.mxu0 0.0
    %7696 = vmatprep.subr.mxu0 0.0
    %7697 = vmatpush1.xpose.msra.mxu0 0.0
    %7698 = vmatprep.subr.mxu0 0.0
    %7699 = vmatpush1.xpose.msra.mxu0 0.0
    %7700 = vmatprep.subr.mxu0 0.0
    %7701 = vmatpush1.xpose.msra.mxu0 0.0
    %7702 = vmatprep.subr.mxu0 0.0
    %7703 = vmatpush1.xpose.msra.mxu0 0.0
    %7704 = vmatprep.subr.mxu0 0.0
    %7705 = vmatpush1.xpose.msra.mxu0 0.0
    %7706 = vmatprep.subr.mxu0 0.0
    %7707 = vmatpush1.xpose.msra.mxu0 0.0
    %7708 = vmatprep.subr.mxu0 0.0
    %7709 = vmatpush1.xpose.msra.mxu0 0.0
    %7710 = vmatprep.subr.mxu0 0.0
    %7711 = vmatpush1.xpose.msra.mxu0 0.0
    %7712 = vmatprep.subr.mxu0 0.0
    %7713 = vmatpush1.xpose.msra.mxu0 0.0
    %7714 = vmatprep.subr.mxu0 0.0
    %7715 = vmatpush1.xpose.msra.mxu0 0.0
    %7716 = vmatprep.subr.mxu0 0.0
    %7717 = vmatpush1.xpose.msra.mxu0 0.0
    %7718 = vmatprep.subr.mxu0 0.0
    %7719 = vmatpush1.xpose.msra.mxu0 0.0
    %7720 = vmatprep.subr.mxu0 0.0
    %7721 = vmatpush1.xpose.msra.mxu0 0.0
    %7722 = vmatprep.subr.mxu0 0.0
    %7723 = vmatpush1.xpose.msra.mxu0 0.0
    %7724 = vmatprep.subr.mxu0 0.0
    %7725 = vmatpush1.xpose.msra.mxu0 0.0
    %7726 = vmatprep.subr.mxu0 0.0
    %7727 = vmatpush1.xpose.msra.mxu0 0.0
    %7728 = vmatprep.subr.mxu0 0.0
    %7729 = vmatpush1.xpose.msra.mxu0 0.0
    %7730 = vmatprep.subr.mxu0 0.0
    %7731 = vmatpush1.xpose.msra.mxu0 0.0
    %7732 = vmatprep.mubr.f32.mxu0 %v7559
    %7733 = vmatmul.mubr.f32.gmra.mrb[0].mxu0 %v7557
    %v7734 = vpop.f32.mrb[0].mxu0
    %v7735 = vadd.f32 %v7665, %v7734
    %v7736 = vpop.f32.mrb[0].mxu0
    %7737 = vdwg.mxu0
    %7738 = vmatprep.subr.mxu0 %v3679
    %7739 = vmatpush1.xpose.msra.mxu0 %v3678
    %7740 = vmatprep.subr.mxu0 %v3687
    %7741 = vmatpush1.xpose.msra.mxu0 %v3686
    %7742 = vmatprep.subr.mxu0 %v3695
    %7743 = vmatpush1.xpose.msra.mxu0 %v3694
    %7744 = vmatprep.subr.mxu0 %v3703
    %7745 = vmatpush1.xpose.msra.mxu0 %v3702
    %7746 = vmatprep.subr.mxu0 0.0
    %7747 = vmatpush1.xpose.msra.mxu0 0.0
    %7748 = vmatprep.subr.mxu0 0.0
    %7749 = vmatpush1.xpose.msra.mxu0 0.0
    %7750 = vmatprep.subr.mxu0 0.0
    %7751 = vmatpush1.xpose.msra.mxu0 0.0
    %7752 = vmatprep.subr.mxu0 0.0
    %7753 = vmatpush1.xpose.msra.mxu0 0.0
    %7754 = vmatprep.subr.mxu0 0.0
    %7755 = vmatpush1.xpose.msra.mxu0 0.0
    %7756 = vmatprep.subr.mxu0 0.0
    %7757 = vmatpush1.xpose.msra.mxu0 0.0
    %7758 = vmatprep.subr.mxu0 0.0
    %7759 = vmatpush1.xpose.msra.mxu0 0.0
    %7760 = vmatprep.subr.mxu0 0.0
    %7761 = vmatpush1.xpose.msra.mxu0 0.0
    %7762 = vmatprep.subr.mxu0 0.0
    %7763 = vmatpush1.xpose.msra.mxu0 0.0
    %7764 = vmatprep.subr.mxu0 0.0
    %7765 = vmatpush1.xpose.msra.mxu0 0.0
    %7766 = vmatprep.subr.mxu0 0.0
    %7767 = vmatpush1.xpose.msra.mxu0 0.0
    %7768 = vmatprep.subr.mxu0 0.0
    %7769 = vmatpush1.xpose.msra.mxu0 0.0
    %7770 = vmatprep.subr.mxu0 0.0
    %7771 = vmatpush1.xpose.msra.mxu0 0.0
    %7772 = vmatprep.subr.mxu0 0.0
    %7773 = vmatpush1.xpose.msra.mxu0 0.0
    %7774 = vmatprep.subr.mxu0 0.0
    %7775 = vmatpush1.xpose.msra.mxu0 0.0
    %7776 = vmatprep.subr.mxu0 0.0
    %7777 = vmatpush1.xpose.msra.mxu0 0.0
    %7778 = vmatprep.subr.mxu0 0.0
    %7779 = vmatpush1.xpose.msra.mxu0 0.0
    %7780 = vmatprep.subr.mxu0 0.0
    %7781 = vmatpush1.xpose.msra.mxu0 0.0
    %7782 = vmatprep.subr.mxu0 0.0
    %7783 = vmatpush1.xpose.msra.mxu0 0.0
    %7784 = vmatprep.subr.mxu0 0.0
    %7785 = vmatpush1.xpose.msra.mxu0 0.0
    %7786 = vmatprep.subr.mxu0 0.0
    %7787 = vmatpush1.xpose.msra.mxu0 0.0
    %7788 = vmatprep.subr.mxu0 0.0
    %7789 = vmatpush1.xpose.msra.mxu0 0.0
    %7790 = vmatprep.subr.mxu0 0.0
    %7791 = vmatpush1.xpose.msra.mxu0 0.0
    %7792 = vmatprep.subr.mxu0 0.0
    %7793 = vmatpush1.xpose.msra.mxu0 0.0
    %7794 = vmatprep.subr.mxu0 0.0
    %7795 = vmatpush1.xpose.msra.mxu0 0.0
    %7796 = vmatprep.subr.mxu0 0.0
    %7797 = vmatpush1.xpose.msra.mxu0 0.0
    %7798 = vmatprep.subr.mxu0 0.0
    %7799 = vmatpush1.xpose.msra.mxu0 0.0
    %7800 = vmatprep.subr.mxu0 0.0
    %7801 = vmatpush1.xpose.msra.mxu0 0.0
    %7802 = vmatprep.mubr.f32.mxu0 %v7575
    %7803 = vmatmul.mubr.f32.gmra.mrb[0].mxu0 %v7567
    %v7804 = vpop.f32.mrb[0].mxu0
    %v7805 = vadd.f32 %v7735, %v7804
    %v7806 = vpop.f32.mrb[0].mxu0
    %7807 = vdwg.mxu0
    %7808 = vmatprep.subr.mxu0 %v7587
    %7809 = vmatpush1.xpose.msra.mxu0 %v3680
    %7810 = vmatprep.subr.mxu0 %v7590
    %7811 = vmatpush1.xpose.msra.mxu0 %v3688
    %7812 = vmatprep.subr.mxu0 %v7593
    %7813 = vmatpush1.xpose.msra.mxu0 %v3696
    %7814 = vmatprep.subr.mxu0 %v7596
    %7815 = vmatpush1.xpose.msra.mxu0 %v3704
    %7816 = vmatprep.subr.mxu0 0.0
    %7817 = vmatpush1.xpose.msra.mxu0 0.0
    %7818 = vmatprep.subr.mxu0 0.0
    %7819 = vmatpush1.xpose.msra.mxu0 0.0
    %7820 = vmatprep.subr.mxu0 0.0
    %7821 = vmatpush1.xpose.msra.mxu0 0.0
    %7822 = vmatprep.subr.mxu0 0.0
    %7823 = vmatpush1.xpose.msra.mxu0 0.0
    %7824 = vmatprep.subr.mxu0 0.0
    %7825 = vmatpush1.xpose.msra.mxu0 0.0
    %7826 = vmatprep.subr.mxu0 0.0
    %7827 = vmatpush1.xpose.msra.mxu0 0.0
    %7828 = vmatprep.subr.mxu0 0.0
    %7829 = vmatpush1.xpose.msra.mxu0 0.0
    %7830 = vmatprep.subr.mxu0 0.0
    %7831 = vmatpush1.xpose.msra.mxu0 0.0
    %7832 = vmatprep.subr.mxu0 0.0
    %7833 = vmatpush1.xpose.msra.mxu0 0.0
    %7834 = vmatprep.subr.mxu0 0.0
    %7835 = vmatpush1.xpose.msra.mxu0 0.0
    %7836 = vmatprep.subr.mxu0 0.0
    %7837 = vmatpush1.xpose.msra.mxu0 0.0
    %7838 = vmatprep.subr.mxu0 0.0
    %7839 = vmatpush1.xpose.msra.mxu0 0.0
    %7840 = vmatprep.subr.mxu0 0.0
    %7841 = vmatpush1.xpose.msra.mxu0 0.0
    %7842 = vmatprep.subr.mxu0 0.0
    %7843 = vmatpush1.xpose.msra.mxu0 0.0
    %7844 = vmatprep.subr.mxu0 0.0
    %7845 = vmatpush1.xpose.msra.mxu0 0.0
    %7846 = vmatprep.subr.mxu0 0.0
    %7847 = vmatpush1.xpose.msra.mxu0 0.0
    %7848 = vmatprep.subr.mxu0 0.0
    %7849 = vmatpush1.xpose.msra.mxu0 0.0
    %7850 = vmatprep.subr.mxu0 0.0
    %7851 = vmatpush1.xpose.msra.mxu0 0.0
    %7852 = vmatprep.subr.mxu0 0.0
    %7853 = vmatpush1.xpose.msra.mxu0 0.0
    %7854 = vmatprep.subr.mxu0 0.0
    %7855 = vmatpush1.xpose.msra.mxu0 0.0
    %7856 = vmatprep.subr.mxu0 0.0
    %7857 = vmatpush1.xpose.msra.mxu0 0.0
    %7858 = vmatprep.subr.mxu0 0.0
    %7859 = vmatpush1.xpose.msra.mxu0 0.0
    %7860 = vmatprep.subr.mxu0 0.0
    %7861 = vmatpush1.xpose.msra.mxu0 0.0
    %7862 = vmatprep.subr.mxu0 0.0
    %7863 = vmatpush1.xpose.msra.mxu0 0.0
    %7864 = vmatprep.subr.mxu0 0.0
    %7865 = vmatpush1.xpose.msra.mxu0 0.0
    %7866 = vmatprep.subr.mxu0 0.0
    %7867 = vmatpush1.xpose.msra.mxu0 0.0
    %7868 = vmatprep.subr.mxu0 0.0
    %7869 = vmatpush1.xpose.msra.mxu0 0.0
    %7870 = vmatprep.subr.mxu0 0.0
    %7871 = vmatpush1.xpose.msra.mxu0 0.0
    %7872 = vmatprep.mubr.f32.mxu0 %v7584
    %7873 = vmatmul.mubr.f32.gmra.mrb[0].mxu0 %v7574
    %v7874 = vpop.f32.mrb[0].mxu0
    %v7875 = vadd.f32 %v7805, %v7874
    %v7876 = vpop.f32.mrb[0].mxu0
    %7877 = vdwg.mxu0
    %v7880 = vcombine.high %v3314, %v3314
    %v7882 = vunpack.c.l.s4 1983009808
    %v7883 = vunpack.c.0.s8 %v7882
    %v7884 = vlaneseq
    %v7885 = vshrl.u32 %v7884, 7
    %v7886 = vsub.s32 %v7883, %v7885
    %v7887 = vrot.slane %v3314, %v7886
    %v7889 = vunpack.c.l.s4 1983009808
    %v7890 = vunpack.c.0.s8 %v7889
    %v7891 = vlaneseq
    %v7892 = vshrl.u32 %v7891, 7
    %v7893 = vsub.s32 %v7890, %v7892
    %v7894 = vrot.slane %v7880, %v7893
    %v7895 = vcombine.high %v7887, %v7887
    %v7896 = vcombine.high %v7894, %v7894
    %v7897 = vcombine.high %v3315, %v3315
    %v7899 = vunpack.c.l.s4 1983009808
    %v7900 = vunpack.c.0.s8 %v7899
    %v7901 = vlaneseq
    %v7902 = vshrl.u32 %v7901, 7
    %v7903 = vsub.s32 %v7900, %v7902
    %v7904 = vrot.slane %v3315, %v7903
    %v7906 = vunpack.c.l.s4 1983009808
    %v7907 = vunpack.c.0.s8 %v7906
    %v7908 = vlaneseq
    %v7909 = vshrl.u32 %v7908, 7
    %v7910 = vsub.s32 %v7907, %v7909
    %v7911 = vrot.slane %v7897, %v7910
    %v7912 = vcombine.high %v7904, %v7904
    %v7913 = vcombine.high %v7911, %v7911
    %v7921 = vsel %vm417, %v7913, 0
    %v7924 = vsel %vm417, %v3713, 0
    %v7927 = vsel %vm417, %v3721, 0
    %v7930 = vsel %vm417, %v3729, 0
    %v7933 = vsel %vm417, %v3737, 0
    %7935 = vmatprep.subr.mxu0 %v3707
    %7936 = vmatpush1.xpose.msra.mxu0 %v3706
    %7937 = vmatprep.subr.mxu0 %v3715
    %7938 = vmatpush1.xpose.msra.mxu0 %v3714
    %7939 = vmatprep.subr.mxu0 %v3723
    %7940 = vmatpush1.xpose.msra.mxu0 %v3722
    %7941 = vmatprep.subr.mxu0 %v3731
    %7942 = vmatpush1.xpose.msra.mxu0 %v3730
    %7943 = vmatprep.subr.mxu0 0.0
    %7944 = vmatpush1.xpose.msra.mxu0 0.0
    %7945 = vmatprep.subr.mxu0 0.0
    %7946 = vmatpush1.xpose.msra.mxu0 0.0
    %7947 = vmatprep.subr.mxu0 0.0
    %7948 = vmatpush1.xpose.msra.mxu0 0.0
    %7949 = vmatprep.subr.mxu0 0.0
    %7950 = vmatpush1.xpose.msra.mxu0 0.0
    %7951 = vmatprep.subr.mxu0 0.0
    %7952 = vmatpush1.xpose.msra.mxu0 0.0
    %7953 = vmatprep.subr.mxu0 0.0
    %7954 = vmatpush1.xpose.msra.mxu0 0.0
    %7955 = vmatprep.subr.mxu0 0.0
    %7956 = vmatpush1.xpose.msra.mxu0 0.0
    %7957 = vmatprep.subr.mxu0 0.0
    %7958 = vmatpush1.xpose.msra.mxu0 0.0
    %7959 = vmatprep.subr.mxu0 0.0
    %7960 = vmatpush1.xpose.msra.mxu0 0.0
    %7961 = vmatprep.subr.mxu0 0.0
    %7962 = vmatpush1.xpose.msra.mxu0 0.0
    %7963 = vmatprep.subr.mxu0 0.0
    %7964 = vmatpush1.xpose.msra.mxu0 0.0
    %7965 = vmatprep.subr.mxu0 0.0
    %7966 = vmatpush1.xpose.msra.mxu0 0.0
    %7967 = vmatprep.subr.mxu0 0.0
    %7968 = vmatpush1.xpose.msra.mxu0 0.0
    %7969 = vmatprep.subr.mxu0 0.0
    %7970 = vmatpush1.xpose.msra.mxu0 0.0
    %7971 = vmatprep.subr.mxu0 0.0
    %7972 = vmatpush1.xpose.msra.mxu0 0.0
    %7973 = vmatprep.subr.mxu0 0.0
    %7974 = vmatpush1.xpose.msra.mxu0 0.0
    %7975 = vmatprep.subr.mxu0 0.0
    %7976 = vmatpush1.xpose.msra.mxu0 0.0
    %7977 = vmatprep.subr.mxu0 0.0
    %7978 = vmatpush1.xpose.msra.mxu0 0.0
    %7979 = vmatprep.subr.mxu0 0.0
    %7980 = vmatpush1.xpose.msra.mxu0 0.0
    %7981 = vmatprep.subr.mxu0 0.0
    %7982 = vmatpush1.xpose.msra.mxu0 0.0
    %7983 = vmatprep.subr.mxu0 0.0
    %7984 = vmatpush1.xpose.msra.mxu0 0.0
    %7985 = vmatprep.subr.mxu0 0.0
    %7986 = vmatpush1.xpose.msra.mxu0 0.0
    %7987 = vmatprep.subr.mxu0 0.0
    %7988 = vmatpush1.xpose.msra.mxu0 0.0
    %7989 = vmatprep.subr.mxu0 0.0
    %7990 = vmatpush1.xpose.msra.mxu0 0.0
    %7991 = vmatprep.subr.mxu0 0.0
    %7992 = vmatpush1.xpose.msra.mxu0 0.0
    %7993 = vmatprep.subr.mxu0 0.0
    %7994 = vmatpush1.xpose.msra.mxu0 0.0
    %7995 = vmatprep.subr.mxu0 0.0
    %7996 = vmatpush1.xpose.msra.mxu0 0.0
    %7997 = vmatprep.subr.mxu0 0.0
    %7998 = vmatpush1.xpose.msra.mxu0 0.0
    %7999 = vmatprep.mubr.f32.mxu0 %v7895
    %8000 = vmatmul.mubr.f32.gmra.mrb[0].mxu0 %v7887
    %v8001 = vpop.f32.mrb[0].mxu0
    %v8002 = vadd.f32 0.0, %v8001
    %v8003 = vpop.f32.mrb[0].mxu0
    %8004 = vdwg.mxu0
    %8005 = vmatprep.subr.mxu0 %v3709
    %8006 = vmatpush1.xpose.msra.mxu0 %v3708
    %8007 = vmatprep.subr.mxu0 %v3717
    %8008 = vmatpush1.xpose.msra.mxu0 %v3716
    %8009 = vmatprep.subr.mxu0 %v3725
    %8010 = vmatpush1.xpose.msra.mxu0 %v3724
    %8011 = vmatprep.subr.mxu0 %v3733
    %8012 = vmatpush1.xpose.msra.mxu0 %v3732
    %8013 = vmatprep.subr.mxu0 0.0
    %8014 = vmatpush1.xpose.msra.mxu0 0.0
    %8015 = vmatprep.subr.mxu0 0.0
    %8016 = vmatpush1.xpose.msra.mxu0 0.0
    %8017 = vmatprep.subr.mxu0 0.0
    %8018 = vmatpush1.xpose.msra.mxu0 0.0
    %8019 = vmatprep.subr.mxu0 0.0
    %8020 = vmatpush1.xpose.msra.mxu0 0.0
    %8021 = vmatprep.subr.mxu0 0.0
    %8022 = vmatpush1.xpose.msra.mxu0 0.0
    %8023 = vmatprep.subr.mxu0 0.0
    %8024 = vmatpush1.xpose.msra.mxu0 0.0
    %8025 = vmatprep.subr.mxu0 0.0
    %8026 = vmatpush1.xpose.msra.mxu0 0.0
    %8027 = vmatprep.subr.mxu0 0.0
    %8028 = vmatpush1.xpose.msra.mxu0 0.0
    %8029 = vmatprep.subr.mxu0 0.0
    %8030 = vmatpush1.xpose.msra.mxu0 0.0
    %8031 = vmatprep.subr.mxu0 0.0
    %8032 = vmatpush1.xpose.msra.mxu0 0.0
    %8033 = vmatprep.subr.mxu0 0.0
    %8034 = vmatpush1.xpose.msra.mxu0 0.0
    %8035 = vmatprep.subr.mxu0 0.0
    %8036 = vmatpush1.xpose.msra.mxu0 0.0
    %8037 = vmatprep.subr.mxu0 0.0
    %8038 = vmatpush1.xpose.msra.mxu0 0.0
    %8039 = vmatprep.subr.mxu0 0.0
    %8040 = vmatpush1.xpose.msra.mxu0 0.0
    %8041 = vmatprep.subr.mxu0 0.0
    %8042 = vmatpush1.xpose.msra.mxu0 0.0
    %8043 = vmatprep.subr.mxu0 0.0
    %8044 = vmatpush1.xpose.msra.mxu0 0.0
    %8045 = vmatprep.subr.mxu0 0.0
    %8046 = vmatpush1.xpose.msra.mxu0 0.0
    %8047 = vmatprep.subr.mxu0 0.0
    %8048 = vmatpush1.xpose.msra.mxu0 0.0
    %8049 = vmatprep.subr.mxu0 0.0
    %8050 = vmatpush1.xpose.msra.mxu0 0.0
    %8051 = vmatprep.subr.mxu0 0.0
    %8052 = vmatpush1.xpose.msra.mxu0 0.0
    %8053 = vmatprep.subr.mxu0 0.0
    %8054 = vmatpush1.xpose.msra.mxu0 0.0
    %8055 = vmatprep.subr.mxu0 0.0
    %8056 = vmatpush1.xpose.msra.mxu0 0.0
    %8057 = vmatprep.subr.mxu0 0.0
    %8058 = vmatpush1.xpose.msra.mxu0 0.0
    %8059 = vmatprep.subr.mxu0 0.0
    %8060 = vmatpush1.xpose.msra.mxu0 0.0
    %8061 = vmatprep.subr.mxu0 0.0
    %8062 = vmatpush1.xpose.msra.mxu0 0.0
    %8063 = vmatprep.subr.mxu0 0.0
    %8064 = vmatpush1.xpose.msra.mxu0 0.0
    %8065 = vmatprep.subr.mxu0 0.0
    %8066 = vmatpush1.xpose.msra.mxu0 0.0
    %8067 = vmatprep.subr.mxu0 0.0
    %8068 = vmatpush1.xpose.msra.mxu0 0.0
    %8069 = vmatprep.mubr.f32.mxu0 %v7896
    %8070 = vmatmul.mubr.f32.gmra.mrb[0].mxu0 %v7894
    %v8071 = vpop.f32.mrb[0].mxu0
    %v8072 = vadd.f32 %v8002, %v8071
    %v8073 = vpop.f32.mrb[0].mxu0
    %8074 = vdwg.mxu0
    %8075 = vmatprep.subr.mxu0 %v3711
    %8076 = vmatpush1.xpose.msra.mxu0 %v3710
    %8077 = vmatprep.subr.mxu0 %v3719
    %8078 = vmatpush1.xpose.msra.mxu0 %v3718
    %8079 = vmatprep.subr.mxu0 %v3727
    %8080 = vmatpush1.xpose.msra.mxu0 %v3726
    %8081 = vmatprep.subr.mxu0 %v3735
    %8082 = vmatpush1.xpose.msra.mxu0 %v3734
    %8083 = vmatprep.subr.mxu0 0.0
    %8084 = vmatpush1.xpose.msra.mxu0 0.0
    %8085 = vmatprep.subr.mxu0 0.0
    %8086 = vmatpush1.xpose.msra.mxu0 0.0
    %8087 = vmatprep.subr.mxu0 0.0
    %8088 = vmatpush1.xpose.msra.mxu0 0.0
    %8089 = vmatprep.subr.mxu0 0.0
    %8090 = vmatpush1.xpose.msra.mxu0 0.0
    %8091 = vmatprep.subr.mxu0 0.0
    %8092 = vmatpush1.xpose.msra.mxu0 0.0
    %8093 = vmatprep.subr.mxu0 0.0
    %8094 = vmatpush1.xpose.msra.mxu0 0.0
    %8095 = vmatprep.subr.mxu0 0.0
    %8096 = vmatpush1.xpose.msra.mxu0 0.0
    %8097 = vmatprep.subr.mxu0 0.0
    %8098 = vmatpush1.xpose.msra.mxu0 0.0
    %8099 = vmatprep.subr.mxu0 0.0
    %8100 = vmatpush1.xpose.msra.mxu0 0.0
    %8101 = vmatprep.subr.mxu0 0.0
    %8102 = vmatpush1.xpose.msra.mxu0 0.0
    %8103 = vmatprep.subr.mxu0 0.0
    %8104 = vmatpush1.xpose.msra.mxu0 0.0
    %8105 = vmatprep.subr.mxu0 0.0
    %8106 = vmatpush1.xpose.msra.mxu0 0.0
    %8107 = vmatprep.subr.mxu0 0.0
    %8108 = vmatpush1.xpose.msra.mxu0 0.0
    %8109 = vmatprep.subr.mxu0 0.0
    %8110 = vmatpush1.xpose.msra.mxu0 0.0
    %8111 = vmatprep.subr.mxu0 0.0
    %8112 = vmatpush1.xpose.msra.mxu0 0.0
    %8113 = vmatprep.subr.mxu0 0.0
    %8114 = vmatpush1.xpose.msra.mxu0 0.0
    %8115 = vmatprep.subr.mxu0 0.0
    %8116 = vmatpush1.xpose.msra.mxu0 0.0
    %8117 = vmatprep.subr.mxu0 0.0
    %8118 = vmatpush1.xpose.msra.mxu0 0.0
    %8119 = vmatprep.subr.mxu0 0.0
    %8120 = vmatpush1.xpose.msra.mxu0 0.0
    %8121 = vmatprep.subr.mxu0 0.0
    %8122 = vmatpush1.xpose.msra.mxu0 0.0
    %8123 = vmatprep.subr.mxu0 0.0
    %8124 = vmatpush1.xpose.msra.mxu0 0.0
    %8125 = vmatprep.subr.mxu0 0.0
    %8126 = vmatpush1.xpose.msra.mxu0 0.0
    %8127 = vmatprep.subr.mxu0 0.0
    %8128 = vmatpush1.xpose.msra.mxu0 0.0
    %8129 = vmatprep.subr.mxu0 0.0
    %8130 = vmatpush1.xpose.msra.mxu0 0.0
    %8131 = vmatprep.subr.mxu0 0.0
    %8132 = vmatpush1.xpose.msra.mxu0 0.0
    %8133 = vmatprep.subr.mxu0 0.0
    %8134 = vmatpush1.xpose.msra.mxu0 0.0
    %8135 = vmatprep.subr.mxu0 0.0
    %8136 = vmatpush1.xpose.msra.mxu0 0.0
    %8137 = vmatprep.subr.mxu0 0.0
    %8138 = vmatpush1.xpose.msra.mxu0 0.0
    %8139 = vmatprep.mubr.f32.mxu0 %v7912
    %8140 = vmatmul.mubr.f32.gmra.mrb[0].mxu0 %v7904
    %v8141 = vpop.f32.mrb[0].mxu0
    %v8142 = vadd.f32 %v8072, %v8141
    %v8143 = vpop.f32.mrb[0].mxu0
    %8144 = vdwg.mxu0
    %8145 = vmatprep.subr.mxu0 %v7924
    %8146 = vmatpush1.xpose.msra.mxu0 %v3712
    %8147 = vmatprep.subr.mxu0 %v7927
    %8148 = vmatpush1.xpose.msra.mxu0 %v3720
    %8149 = vmatprep.subr.mxu0 %v7930
    %8150 = vmatpush1.xpose.msra.mxu0 %v3728
    %8151 = vmatprep.subr.mxu0 %v7933
    %8152 = vmatpush1.xpose.msra.mxu0 %v3736
    %8153 = vmatprep.subr.mxu0 0.0
    %8154 = vmatpush1.xpose.msra.mxu0 0.0
    %8155 = vmatprep.subr.mxu0 0.0
    %8156 = vmatpush1.xpose.msra.mxu0 0.0
    %8157 = vmatprep.subr.mxu0 0.0
    %8158 = vmatpush1.xpose.msra.mxu0 0.0
    %8159 = vmatprep.subr.mxu0 0.0
    %8160 = vmatpush1.xpose.msra.mxu0 0.0
    %8161 = vmatprep.subr.mxu0 0.0
    %8162 = vmatpush1.xpose.msra.mxu0 0.0
    %8163 = vmatprep.subr.mxu0 0.0
    %8164 = vmatpush1.xpose.msra.mxu0 0.0
    %8165 = vmatprep.subr.mxu0 0.0
    %8166 = vmatpush1.xpose.msra.mxu0 0.0
    %8167 = vmatprep.subr.mxu0 0.0
    %8168 = vmatpush1.xpose.msra.mxu0 0.0
    %8169 = vmatprep.subr.mxu0 0.0
    %8170 = vmatpush1.xpose.msra.mxu0 0.0
    %8171 = vmatprep.subr.mxu0 0.0
    %8172 = vmatpush1.xpose.msra.mxu0 0.0
    %8173 = vmatprep.subr.mxu0 0.0
    %8174 = vmatpush1.xpose.msra.mxu0 0.0
    %8175 = vmatprep.subr.mxu0 0.0
    %8176 = vmatpush1.xpose.msra.mxu0 0.0
    %8177 = vmatprep.subr.mxu0 0.0
    %8178 = vmatpush1.xpose.msra.mxu0 0.0
    %8179 = vmatprep.subr.mxu0 0.0
    %8180 = vmatpush1.xpose.msra.mxu0 0.0
    %8181 = vmatprep.subr.mxu0 0.0
    %8182 = vmatpush1.xpose.msra.mxu0 0.0
    %8183 = vmatprep.subr.mxu0 0.0
    %8184 = vmatpush1.xpose.msra.mxu0 0.0
    %8185 = vmatprep.subr.mxu0 0.0
    %8186 = vmatpush1.xpose.msra.mxu0 0.0
    %8187 = vmatprep.subr.mxu0 0.0
    %8188 = vmatpush1.xpose.msra.mxu0 0.0
    %8189 = vmatprep.subr.mxu0 0.0
    %8190 = vmatpush1.xpose.msra.mxu0 0.0
    %8191 = vmatprep.subr.mxu0 0.0
    %8192 = vmatpush1.xpose.msra.mxu0 0.0
    %8193 = vmatprep.subr.mxu0 0.0
    %8194 = vmatpush1.xpose.msra.mxu0 0.0
    %8195 = vmatprep.subr.mxu0 0.0
    %8196 = vmatpush1.xpose.msra.mxu0 0.0
    %8197 = vmatprep.subr.mxu0 0.0
    %8198 = vmatpush1.xpose.msra.mxu0 0.0
    %8199 = vmatprep.subr.mxu0 0.0
    %8200 = vmatpush1.xpose.msra.mxu0 0.0
    %8201 = vmatprep.subr.mxu0 0.0
    %8202 = vmatpush1.xpose.msra.mxu0 0.0
    %8203 = vmatprep.subr.mxu0 0.0
    %8204 = vmatpush1.xpose.msra.mxu0 0.0
    %8205 = vmatprep.subr.mxu0 0.0
    %8206 = vmatpush1.xpose.msra.mxu0 0.0
    %8207 = vmatprep.subr.mxu0 0.0
    %8208 = vmatpush1.xpose.msra.mxu0 0.0
    %8209 = vmatprep.mubr.f32.mxu0 %v7921
    %8210 = vmatmul.mubr.f32.gmra.mrb[0].mxu0 %v7911
    %v8211 = vpop.f32.mrb[0].mxu0
    %v8212 = vadd.f32 %v8142, %v8211
    %v8213 = vpop.f32.mrb[0].mxu0
    %8214 = vdwg.mxu0
    %v8217 = vcombine.high %v3316, %v3316
    %v8219 = vunpack.c.l.s4 1983009808
    %v8220 = vunpack.c.0.s8 %v8219
    %v8221 = vlaneseq
    %v8222 = vshrl.u32 %v8221, 7
    %v8223 = vsub.s32 %v8220, %v8222
    %v8224 = vrot.slane %v3316, %v8223
    %v8226 = vunpack.c.l.s4 1983009808
    %v8227 = vunpack.c.0.s8 %v8226
    %v8228 = vlaneseq
    %v8229 = vshrl.u32 %v8228, 7
    %v8230 = vsub.s32 %v8227, %v8229
    %v8231 = vrot.slane %v8217, %v8230
    %v8232 = vcombine.high %v8224, %v8224
    %v8233 = vcombine.high %v8231, %v8231
    %v8234 = vcombine.high %v3317, %v3317
    %v8236 = vunpack.c.l.s4 1983009808
    %v8237 = vunpack.c.0.s8 %v8236
    %v8238 = vlaneseq
    %v8239 = vshrl.u32 %v8238, 7
    %v8240 = vsub.s32 %v8237, %v8239
    %v8241 = vrot.slane %v3317, %v8240
    %v8243 = vunpack.c.l.s4 1983009808
    %v8244 = vunpack.c.0.s8 %v8243
    %v8245 = vlaneseq
    %v8246 = vshrl.u32 %v8245, 7
    %v8247 = vsub.s32 %v8244, %v8246
    %v8248 = vrot.slane %v8234, %v8247
    %v8249 = vcombine.high %v8241, %v8241
    %v8250 = vcombine.high %v8248, %v8248
    %v8258 = vsel %vm417, %v8250, 0
    %v8261 = vsel %vm417, %v3745, 0
    %v8264 = vsel %vm417, %v3753, 0
    %v8267 = vsel %vm417, %v3761, 0
    %v8270 = vsel %vm417, %v3769, 0
    %8272 = vmatprep.subr.mxu0 %v3739
    %8273 = vmatpush1.xpose.msra.mxu0 %v3738
    %8274 = vmatprep.subr.mxu0 %v3747
    %8275 = vmatpush1.xpose.msra.mxu0 %v3746
    %8276 = vmatprep.subr.mxu0 %v3755
    %8277 = vmatpush1.xpose.msra.mxu0 %v3754
    %8278 = vmatprep.subr.mxu0 %v3763
    %8279 = vmatpush1.xpose.msra.mxu0 %v3762
    %8280 = vmatprep.subr.mxu0 0.0
    %8281 = vmatpush1.xpose.msra.mxu0 0.0
    %8282 = vmatprep.subr.mxu0 0.0
    %8283 = vmatpush1.xpose.msra.mxu0 0.0
    %8284 = vmatprep.subr.mxu0 0.0
    %8285 = vmatpush1.xpose.msra.mxu0 0.0
    %8286 = vmatprep.subr.mxu0 0.0
    %8287 = vmatpush1.xpose.msra.mxu0 0.0
    %8288 = vmatprep.subr.mxu0 0.0
    %8289 = vmatpush1.xpose.msra.mxu0 0.0
    %8290 = vmatprep.subr.mxu0 0.0
    %8291 = vmatpush1.xpose.msra.mxu0 0.0
    %8292 = vmatprep.subr.mxu0 0.0
    %8293 = vmatpush1.xpose.msra.mxu0 0.0
    %8294 = vmatprep.subr.mxu0 0.0
    %8295 = vmatpush1.xpose.msra.mxu0 0.0
    %8296 = vmatprep.subr.mxu0 0.0
    %8297 = vmatpush1.xpose.msra.mxu0 0.0
    %8298 = vmatprep.subr.mxu0 0.0
    %8299 = vmatpush1.xpose.msra.mxu0 0.0
    %8300 = vmatprep.subr.mxu0 0.0
    %8301 = vmatpush1.xpose.msra.mxu0 0.0
    %8302 = vmatprep.subr.mxu0 0.0
    %8303 = vmatpush1.xpose.msra.mxu0 0.0
    %8304 = vmatprep.subr.mxu0 0.0
    %8305 = vmatpush1.xpose.msra.mxu0 0.0
    %8306 = vmatprep.subr.mxu0 0.0
    %8307 = vmatpush1.xpose.msra.mxu0 0.0
    %8308 = vmatprep.subr.mxu0 0.0
    %8309 = vmatpush1.xpose.msra.mxu0 0.0
    %8310 = vmatprep.subr.mxu0 0.0
    %8311 = vmatpush1.xpose.msra.mxu0 0.0
    %8312 = vmatprep.subr.mxu0 0.0
    %8313 = vmatpush1.xpose.msra.mxu0 0.0
    %8314 = vmatprep.subr.mxu0 0.0
    %8315 = vmatpush1.xpose.msra.mxu0 0.0
    %8316 = vmatprep.subr.mxu0 0.0
    %8317 = vmatpush1.xpose.msra.mxu0 0.0
    %8318 = vmatprep.subr.mxu0 0.0
    %8319 = vmatpush1.xpose.msra.mxu0 0.0
    %8320 = vmatprep.subr.mxu0 0.0
    %8321 = vmatpush1.xpose.msra.mxu0 0.0
    %8322 = vmatprep.subr.mxu0 0.0
    %8323 = vmatpush1.xpose.msra.mxu0 0.0
    %8324 = vmatprep.subr.mxu0 0.0
    %8325 = vmatpush1.xpose.msra.mxu0 0.0
    %8326 = vmatprep.subr.mxu0 0.0
    %8327 = vmatpush1.xpose.msra.mxu0 0.0
    %8328 = vmatprep.subr.mxu0 0.0
    %8329 = vmatpush1.xpose.msra.mxu0 0.0
    %8330 = vmatprep.subr.mxu0 0.0
    %8331 = vmatpush1.xpose.msra.mxu0 0.0
    %8332 = vmatprep.subr.mxu0 0.0
    %8333 = vmatpush1.xpose.msra.mxu0 0.0
    %8334 = vmatprep.subr.mxu0 0.0
    %8335 = vmatpush1.xpose.msra.mxu0 0.0
    %8336 = vmatprep.mubr.f32.mxu0 %v8232
    %8337 = vmatmul.mubr.f32.gmra.mrb[0].mxu0 %v8224
    %v8338 = vpop.f32.mrb[0].mxu0
    %v8339 = vadd.f32 0.0, %v8338
    %v8340 = vpop.f32.mrb[0].mxu0
    %8341 = vdwg.mxu0
    %8342 = vmatprep.subr.mxu0 %v3741
    %8343 = vmatpush1.xpose.msra.mxu0 %v3740
    %8344 = vmatprep.subr.mxu0 %v3749
    %8345 = vmatpush1.xpose.msra.mxu0 %v3748
    %8346 = vmatprep.subr.mxu0 %v3757
    %8347 = vmatpush1.xpose.msra.mxu0 %v3756
    %8348 = vmatprep.subr.mxu0 %v3765
    %8349 = vmatpush1.xpose.msra.mxu0 %v3764
    %8350 = vmatprep.subr.mxu0 0.0
    %8351 = vmatpush1.xpose.msra.mxu0 0.0
    %8352 = vmatprep.subr.mxu0 0.0
    %8353 = vmatpush1.xpose.msra.mxu0 0.0
    %8354 = vmatprep.subr.mxu0 0.0
    %8355 = vmatpush1.xpose.msra.mxu0 0.0
    %8356 = vmatprep.subr.mxu0 0.0
    %8357 = vmatpush1.xpose.msra.mxu0 0.0
    %8358 = vmatprep.subr.mxu0 0.0
    %8359 = vmatpush1.xpose.msra.mxu0 0.0
    %8360 = vmatprep.subr.mxu0 0.0
    %8361 = vmatpush1.xpose.msra.mxu0 0.0
    %8362 = vmatprep.subr.mxu0 0.0
    %8363 = vmatpush1.xpose.msra.mxu0 0.0
    %8364 = vmatprep.subr.mxu0 0.0
    %8365 = vmatpush1.xpose.msra.mxu0 0.0
    %8366 = vmatprep.subr.mxu0 0.0
    %8367 = vmatpush1.xpose.msra.mxu0 0.0
    %8368 = vmatprep.subr.mxu0 0.0
    %8369 = vmatpush1.xpose.msra.mxu0 0.0
    %8370 = vmatprep.subr.mxu0 0.0
    %8371 = vmatpush1.xpose.msra.mxu0 0.0
    %8372 = vmatprep.subr.mxu0 0.0
    %8373 = vmatpush1.xpose.msra.mxu0 0.0
    %8374 = vmatprep.subr.mxu0 0.0
    %8375 = vmatpush1.xpose.msra.mxu0 0.0
    %8376 = vmatprep.subr.mxu0 0.0
    %8377 = vmatpush1.xpose.msra.mxu0 0.0
    %8378 = vmatprep.subr.mxu0 0.0
    %8379 = vmatpush1.xpose.msra.mxu0 0.0
    %8380 = vmatprep.subr.mxu0 0.0
    %8381 = vmatpush1.xpose.msra.mxu0 0.0
    %8382 = vmatprep.subr.mxu0 0.0
    %8383 = vmatpush1.xpose.msra.mxu0 0.0
    %8384 = vmatprep.subr.mxu0 0.0
    %8385 = vmatpush1.xpose.msra.mxu0 0.0
    %8386 = vmatprep.subr.mxu0 0.0
    %8387 = vmatpush1.xpose.msra.mxu0 0.0
    %8388 = vmatprep.subr.mxu0 0.0
    %8389 = vmatpush1.xpose.msra.mxu0 0.0
    %8390 = vmatprep.subr.mxu0 0.0
    %8391 = vmatpush1.xpose.msra.mxu0 0.0
    %8392 = vmatprep.subr.mxu0 0.0
    %8393 = vmatpush1.xpose.msra.mxu0 0.0
    %8394 = vmatprep.subr.mxu0 0.0
    %8395 = vmatpush1.xpose.msra.mxu0 0.0
    %8396 = vmatprep.subr.mxu0 0.0
    %8397 = vmatpush1.xpose.msra.mxu0 0.0
    %8398 = vmatprep.subr.mxu0 0.0
    %8399 = vmatpush1.xpose.msra.mxu0 0.0
    %8400 = vmatprep.subr.mxu0 0.0
    %8401 = vmatpush1.xpose.msra.mxu0 0.0
    %8402 = vmatprep.subr.mxu0 0.0
    %8403 = vmatpush1.xpose.msra.mxu0 0.0
    %8404 = vmatprep.subr.mxu0 0.0
    %8405 = vmatpush1.xpose.msra.mxu0 0.0
    %8406 = vmatprep.mubr.f32.mxu0 %v8233
    %8407 = vmatmul.mubr.f32.gmra.mrb[0].mxu0 %v8231
    %v8408 = vpop.f32.mrb[0].mxu0
    %v8409 = vadd.f32 %v8339, %v8408
    %v8410 = vpop.f32.mrb[0].mxu0
    %8411 = vdwg.mxu0
    %8412 = vmatprep.subr.mxu0 %v3743
    %8413 = vmatpush1.xpose.msra.mxu0 %v3742
    %8414 = vmatprep.subr.mxu0 %v3751
    %8415 = vmatpush1.xpose.msra.mxu0 %v3750
    %8416 = vmatprep.subr.mxu0 %v3759
    %8417 = vmatpush1.xpose.msra.mxu0 %v3758
    %8418 = vmatprep.subr.mxu0 %v3767
    %8419 = vmatpush1.xpose.msra.mxu0 %v3766
    %8420 = vmatprep.subr.mxu0 0.0
    %8421 = vmatpush1.xpose.msra.mxu0 0.0
    %8422 = vmatprep.subr.mxu0 0.0
    %8423 = vmatpush1.xpose.msra.mxu0 0.0
    %8424 = vmatprep.subr.mxu0 0.0
    %8425 = vmatpush1.xpose.msra.mxu0 0.0
    %8426 = vmatprep.subr.mxu0 0.0
    %8427 = vmatpush1.xpose.msra.mxu0 0.0
    %8428 = vmatprep.subr.mxu0 0.0
    %8429 = vmatpush1.xpose.msra.mxu0 0.0
    %8430 = vmatprep.subr.mxu0 0.0
    %8431 = vmatpush1.xpose.msra.mxu0 0.0
    %8432 = vmatprep.subr.mxu0 0.0
    %8433 = vmatpush1.xpose.msra.mxu0 0.0
    %8434 = vmatprep.subr.mxu0 0.0
    %8435 = vmatpush1.xpose.msra.mxu0 0.0
    %8436 = vmatprep.subr.mxu0 0.0
    %8437 = vmatpush1.xpose.msra.mxu0 0.0
    %8438 = vmatprep.subr.mxu0 0.0
    %8439 = vmatpush1.xpose.msra.mxu0 0.0
    %8440 = vmatprep.subr.mxu0 0.0
    %8441 = vmatpush1.xpose.msra.mxu0 0.0
    %8442 = vmatprep.subr.mxu0 0.0
    %8443 = vmatpush1.xpose.msra.mxu0 0.0
    %8444 = vmatprep.subr.mxu0 0.0
    %8445 = vmatpush1.xpose.msra.mxu0 0.0
    %8446 = vmatprep.subr.mxu0 0.0
    %8447 = vmatpush1.xpose.msra.mxu0 0.0
    %8448 = vmatprep.subr.mxu0 0.0
    %8449 = vmatpush1.xpose.msra.mxu0 0.0
    %8450 = vmatprep.subr.mxu0 0.0
    %8451 = vmatpush1.xpose.msra.mxu0 0.0
    %8452 = vmatprep.subr.mxu0 0.0
    %8453 = vmatpush1.xpose.msra.mxu0 0.0
    %8454 = vmatprep.subr.mxu0 0.0
    %8455 = vmatpush1.xpose.msra.mxu0 0.0
    %8456 = vmatprep.subr.mxu0 0.0
    %8457 = vmatpush1.xpose.msra.mxu0 0.0
    %8458 = vmatprep.subr.mxu0 0.0
    %8459 = vmatpush1.xpose.msra.mxu0 0.0
    %8460 = vmatprep.subr.mxu0 0.0
    %8461 = vmatpush1.xpose.msra.mxu0 0.0
    %8462 = vmatprep.subr.mxu0 0.0
    %8463 = vmatpush1.xpose.msra.mxu0 0.0
    %8464 = vmatprep.subr.mxu0 0.0
    %8465 = vmatpush1.xpose.msra.mxu0 0.0
    %8466 = vmatprep.subr.mxu0 0.0
    %8467 = vmatpush1.xpose.msra.mxu0 0.0
    %8468 = vmatprep.subr.mxu0 0.0
    %8469 = vmatpush1.xpose.msra.mxu0 0.0
    %8470 = vmatprep.subr.mxu0 0.0
    %8471 = vmatpush1.xpose.msra.mxu0 0.0
    %8472 = vmatprep.subr.mxu0 0.0
    %8473 = vmatpush1.xpose.msra.mxu0 0.0
    %8474 = vmatprep.subr.mxu0 0.0
    %8475 = vmatpush1.xpose.msra.mxu0 0.0
    %8476 = vmatprep.mubr.f32.mxu0 %v8249
    %8477 = vmatmul.mubr.f32.gmra.mrb[0].mxu0 %v8241
    %v8478 = vpop.f32.mrb[0].mxu0
    %v8479 = vadd.f32 %v8409, %v8478
    %v8480 = vpop.f32.mrb[0].mxu0
    %8481 = vdwg.mxu0
    %8482 = vmatprep.subr.mxu0 %v8261
    %8483 = vmatpush1.xpose.msra.mxu0 %v3744
    %8484 = vmatprep.subr.mxu0 %v8264
    %8485 = vmatpush1.xpose.msra.mxu0 %v3752
    %8486 = vmatprep.subr.mxu0 %v8267
    %8487 = vmatpush1.xpose.msra.mxu0 %v3760
    %8488 = vmatprep.subr.mxu0 %v8270
    %8489 = vmatpush1.xpose.msra.mxu0 %v3768
    %8490 = vmatprep.subr.mxu0 0.0
    %8491 = vmatpush1.xpose.msra.mxu0 0.0
    %8492 = vmatprep.subr.mxu0 0.0
    %8493 = vmatpush1.xpose.msra.mxu0 0.0
    %8494 = vmatprep.subr.mxu0 0.0
    %8495 = vmatpush1.xpose.msra.mxu0 0.0
    %8496 = vmatprep.subr.mxu0 0.0
    %8497 = vmatpush1.xpose.msra.mxu0 0.0
    %8498 = vmatprep.subr.mxu0 0.0
    %8499 = vmatpush1.xpose.msra.mxu0 0.0
    %8500 = vmatprep.subr.mxu0 0.0
    %8501 = vmatpush1.xpose.msra.mxu0 0.0
    %8502 = vmatprep.subr.mxu0 0.0
    %8503 = vmatpush1.xpose.msra.mxu0 0.0
    %8504 = vmatprep.subr.mxu0 0.0
    %8505 = vmatpush1.xpose.msra.mxu0 0.0
    %8506 = vmatprep.subr.mxu0 0.0
    %8507 = vmatpush1.xpose.msra.mxu0 0.0
    %8508 = vmatprep.subr.mxu0 0.0
    %8509 = vmatpush1.xpose.msra.mxu0 0.0
    %8510 = vmatprep.subr.mxu0 0.0
    %8511 = vmatpush1.xpose.msra.mxu0 0.0
    %8512 = vmatprep.subr.mxu0 0.0
    %8513 = vmatpush1.xpose.msra.mxu0 0.0
    %8514 = vmatprep.subr.mxu0 0.0
    %8515 = vmatpush1.xpose.msra.mxu0 0.0
    %8516 = vmatprep.subr.mxu0 0.0
    %8517 = vmatpush1.xpose.msra.mxu0 0.0
    %8518 = vmatprep.subr.mxu0 0.0
    %8519 = vmatpush1.xpose.msra.mxu0 0.0
    %8520 = vmatprep.subr.mxu0 0.0
    %8521 = vmatpush1.xpose.msra.mxu0 0.0
    %8522 = vmatprep.subr.mxu0 0.0
    %8523 = vmatpush1.xpose.msra.mxu0 0.0
    %8524 = vmatprep.subr.mxu0 0.0
    %8525 = vmatpush1.xpose.msra.mxu0 0.0
    %8526 = vmatprep.subr.mxu0 0.0
    %8527 = vmatpush1.xpose.msra.mxu0 0.0
    %8528 = vmatprep.subr.mxu0 0.0
    %8529 = vmatpush1.xpose.msra.mxu0 0.0
    %8530 = vmatprep.subr.mxu0 0.0
    %8531 = vmatpush1.xpose.msra.mxu0 0.0
    %8532 = vmatprep.subr.mxu0 0.0
    %8533 = vmatpush1.xpose.msra.mxu0 0.0
    %8534 = vmatprep.subr.mxu0 0.0
    %8535 = vmatpush1.xpose.msra.mxu0 0.0
    %8536 = vmatprep.subr.mxu0 0.0
    %8537 = vmatpush1.xpose.msra.mxu0 0.0
    %8538 = vmatprep.subr.mxu0 0.0
    %8539 = vmatpush1.xpose.msra.mxu0 0.0
    %8540 = vmatprep.subr.mxu0 0.0
    %8541 = vmatpush1.xpose.msra.mxu0 0.0
    %8542 = vmatprep.subr.mxu0 0.0
    %8543 = vmatpush1.xpose.msra.mxu0 0.0
    %8544 = vmatprep.subr.mxu0 0.0
    %8545 = vmatpush1.xpose.msra.mxu0 0.0
    %8546 = vmatprep.mubr.f32.mxu0 %v8258
    %8547 = vmatmul.mubr.f32.gmra.mrb[0].mxu0 %v8248
    %v8548 = vpop.f32.mrb[0].mxu0
    %v8549 = vadd.f32 %v8479, %v8548
    %v8550 = vpop.f32.mrb[0].mxu0
    %8551 = vdwg.mxu0
    %v8554 = vcombine.high %v3318, %v3318
    %v8556 = vunpack.c.l.s4 1983009808
    %v8557 = vunpack.c.0.s8 %v8556
    %v8558 = vlaneseq
    %v8559 = vshrl.u32 %v8558, 7
    %v8560 = vsub.s32 %v8557, %v8559
    %v8561 = vrot.slane %v3318, %v8560
    %v8563 = vunpack.c.l.s4 1983009808
    %v8564 = vunpack.c.0.s8 %v8563
    %v8565 = vlaneseq
    %v8566 = vshrl.u32 %v8565, 7
    %v8567 = vsub.s32 %v8564, %v8566
    %v8568 = vrot.slane %v8554, %v8567
    %v8569 = vcombine.high %v8561, %v8561
    %v8570 = vcombine.high %v8568, %v8568
    %v8571 = vcombine.high %v3319, %v3319
    %v8573 = vunpack.c.l.s4 1983009808
    %v8574 = vunpack.c.0.s8 %v8573
    %v8575 = vlaneseq
    %v8576 = vshrl.u32 %v8575, 7
    %v8577 = vsub.s32 %v8574, %v8576
    %v8578 = vrot.slane %v3319, %v8577
    %v8580 = vunpack.c.l.s4 1983009808
    %v8581 = vunpack.c.0.s8 %v8580
    %v8582 = vlaneseq
    %v8583 = vshrl.u32 %v8582, 7
    %v8584 = vsub.s32 %v8581, %v8583
    %v8585 = vrot.slane %v8571, %v8584
    %v8586 = vcombine.high %v8578, %v8578
    %v8587 = vcombine.high %v8585, %v8585
    %v8595 = vsel %vm417, %v8587, 0
    %v8598 = vsel %vm417, %v3777, 0
    %v8601 = vsel %vm417, %v3785, 0
    %v8604 = vsel %vm417, %v3793, 0
    %v8607 = vsel %vm417, %v3801, 0
    %8609 = vmatprep.subr.mxu0 %v3771
    %8610 = vmatpush1.xpose.msra.mxu0 %v3770
    %8611 = vmatprep.subr.mxu0 %v3779
    %8612 = vmatpush1.xpose.msra.mxu0 %v3778
    %8613 = vmatprep.subr.mxu0 %v3787
    %8614 = vmatpush1.xpose.msra.mxu0 %v3786
    %8615 = vmatprep.subr.mxu0 %v3795
    %8616 = vmatpush1.xpose.msra.mxu0 %v3794
    %8617 = vmatprep.subr.mxu0 0.0
    %8618 = vmatpush1.xpose.msra.mxu0 0.0
    %8619 = vmatprep.subr.mxu0 0.0
    %8620 = vmatpush1.xpose.msra.mxu0 0.0
    %8621 = vmatprep.subr.mxu0 0.0
    %8622 = vmatpush1.xpose.msra.mxu0 0.0
    %8623 = vmatprep.subr.mxu0 0.0
    %8624 = vmatpush1.xpose.msra.mxu0 0.0
    %8625 = vmatprep.subr.mxu0 0.0
    %8626 = vmatpush1.xpose.msra.mxu0 0.0
    %8627 = vmatprep.subr.mxu0 0.0
    %8628 = vmatpush1.xpose.msra.mxu0 0.0
    %8629 = vmatprep.subr.mxu0 0.0
    %8630 = vmatpush1.xpose.msra.mxu0 0.0
    %8631 = vmatprep.subr.mxu0 0.0
    %8632 = vmatpush1.xpose.msra.mxu0 0.0
    %8633 = vmatprep.subr.mxu0 0.0
    %8634 = vmatpush1.xpose.msra.mxu0 0.0
    %8635 = vmatprep.subr.mxu0 0.0
    %8636 = vmatpush1.xpose.msra.mxu0 0.0
    %8637 = vmatprep.subr.mxu0 0.0
    %8638 = vmatpush1.xpose.msra.mxu0 0.0
    %8639 = vmatprep.subr.mxu0 0.0
    %8640 = vmatpush1.xpose.msra.mxu0 0.0
    %8641 = vmatprep.subr.mxu0 0.0
    %8642 = vmatpush1.xpose.msra.mxu0 0.0
    %8643 = vmatprep.subr.mxu0 0.0
    %8644 = vmatpush1.xpose.msra.mxu0 0.0
    %8645 = vmatprep.subr.mxu0 0.0
    %8646 = vmatpush1.xpose.msra.mxu0 0.0
    %8647 = vmatprep.subr.mxu0 0.0
    %8648 = vmatpush1.xpose.msra.mxu0 0.0
    %8649 = vmatprep.subr.mxu0 0.0
    %8650 = vmatpush1.xpose.msra.mxu0 0.0
    %8651 = vmatprep.subr.mxu0 0.0
    %8652 = vmatpush1.xpose.msra.mxu0 0.0
    %8653 = vmatprep.subr.mxu0 0.0
    %8654 = vmatpush1.xpose.msra.mxu0 0.0
    %8655 = vmatprep.subr.mxu0 0.0
    %8656 = vmatpush1.xpose.msra.mxu0 0.0
    %8657 = vmatprep.subr.mxu0 0.0
    %8658 = vmatpush1.xpose.msra.mxu0 0.0
    %8659 = vmatprep.subr.mxu0 0.0
    %8660 = vmatpush1.xpose.msra.mxu0 0.0
    %8661 = vmatprep.subr.mxu0 0.0
    %8662 = vmatpush1.xpose.msra.mxu0 0.0
    %8663 = vmatprep.subr.mxu0 0.0
    %8664 = vmatpush1.xpose.msra.mxu0 0.0
    %8665 = vmatprep.subr.mxu0 0.0
    %8666 = vmatpush1.xpose.msra.mxu0 0.0
    %8667 = vmatprep.subr.mxu0 0.0
    %8668 = vmatpush1.xpose.msra.mxu0 0.0
    %8669 = vmatprep.subr.mxu0 0.0
    %8670 = vmatpush1.xpose.msra.mxu0 0.0
    %8671 = vmatprep.subr.mxu0 0.0
    %8672 = vmatpush1.xpose.msra.mxu0 0.0
    %8673 = vmatprep.mubr.f32.mxu0 %v8569
    %8674 = vmatmul.mubr.f32.gmra.mrb[0].mxu0 %v8561
    %v8675 = vpop.f32.mrb[0].mxu0
    %v8676 = vadd.f32 0.0, %v8675
    %v8677 = vpop.f32.mrb[0].mxu0
    %8678 = vdwg.mxu0
    %8679 = vmatprep.subr.mxu0 %v3773
    %8680 = vmatpush1.xpose.msra.mxu0 %v3772
    %8681 = vmatprep.subr.mxu0 %v3781
    %8682 = vmatpush1.xpose.msra.mxu0 %v3780
    %8683 = vmatprep.subr.mxu0 %v3789
    %8684 = vmatpush1.xpose.msra.mxu0 %v3788
    %8685 = vmatprep.subr.mxu0 %v3797
    %8686 = vmatpush1.xpose.msra.mxu0 %v3796
    %8687 = vmatprep.subr.mxu0 0.0
    %8688 = vmatpush1.xpose.msra.mxu0 0.0
    %8689 = vmatprep.subr.mxu0 0.0
    %8690 = vmatpush1.xpose.msra.mxu0 0.0
    %8691 = vmatprep.subr.mxu0 0.0
    %8692 = vmatpush1.xpose.msra.mxu0 0.0
    %8693 = vmatprep.subr.mxu0 0.0
    %8694 = vmatpush1.xpose.msra.mxu0 0.0
    %8695 = vmatprep.subr.mxu0 0.0
    %8696 = vmatpush1.xpose.msra.mxu0 0.0
    %8697 = vmatprep.subr.mxu0 0.0
    %8698 = vmatpush1.xpose.msra.mxu0 0.0
    %8699 = vmatprep.subr.mxu0 0.0
    %8700 = vmatpush1.xpose.msra.mxu0 0.0
    %8701 = vmatprep.subr.mxu0 0.0
    %8702 = vmatpush1.xpose.msra.mxu0 0.0
    %8703 = vmatprep.subr.mxu0 0.0
    %8704 = vmatpush1.xpose.msra.mxu0 0.0
    %8705 = vmatprep.subr.mxu0 0.0
    %8706 = vmatpush1.xpose.msra.mxu0 0.0
    %8707 = vmatprep.subr.mxu0 0.0
    %8708 = vmatpush1.xpose.msra.mxu0 0.0
    %8709 = vmatprep.subr.mxu0 0.0
    %8710 = vmatpush1.xpose.msra.mxu0 0.0
    %8711 = vmatprep.subr.mxu0 0.0
    %8712 = vmatpush1.xpose.msra.mxu0 0.0
    %8713 = vmatprep.subr.mxu0 0.0
    %8714 = vmatpush1.xpose.msra.mxu0 0.0
    %8715 = vmatprep.subr.mxu0 0.0
    %8716 = vmatpush1.xpose.msra.mxu0 0.0
    %8717 = vmatprep.subr.mxu0 0.0
    %8718 = vmatpush1.xpose.msra.mxu0 0.0
    %8719 = vmatprep.subr.mxu0 0.0
    %8720 = vmatpush1.xpose.msra.mxu0 0.0
    %8721 = vmatprep.subr.mxu0 0.0
    %8722 = vmatpush1.xpose.msra.mxu0 0.0
    %8723 = vmatprep.subr.mxu0 0.0
    %8724 = vmatpush1.xpose.msra.mxu0 0.0
    %8725 = vmatprep.subr.mxu0 0.0
    %8726 = vmatpush1.xpose.msra.mxu0 0.0
    %8727 = vmatprep.subr.mxu0 0.0
    %8728 = vmatpush1.xpose.msra.mxu0 0.0
    %8729 = vmatprep.subr.mxu0 0.0
    %8730 = vmatpush1.xpose.msra.mxu0 0.0
    %8731 = vmatprep.subr.mxu0 0.0
    %8732 = vmatpush1.xpose.msra.mxu0 0.0
    %8733 = vmatprep.subr.mxu0 0.0
    %8734 = vmatpush1.xpose.msra.mxu0 0.0
    %8735 = vmatprep.subr.mxu0 0.0
    %8736 = vmatpush1.xpose.msra.mxu0 0.0
    %8737 = vmatprep.subr.mxu0 0.0
    %8738 = vmatpush1.xpose.msra.mxu0 0.0
    %8739 = vmatprep.subr.mxu0 0.0
    %8740 = vmatpush1.xpose.msra.mxu0 0.0
    %8741 = vmatprep.subr.mxu0 0.0
    %8742 = vmatpush1.xpose.msra.mxu0 0.0
    %8743 = vmatprep.mubr.f32.mxu0 %v8570
    %8744 = vmatmul.mubr.f32.gmra.mrb[0].mxu0 %v8568
    %v8745 = vpop.f32.mrb[0].mxu0
    %v8746 = vadd.f32 %v8676, %v8745
    %v8747 = vpop.f32.mrb[0].mxu0
    %8748 = vdwg.mxu0
    %8749 = vmatprep.subr.mxu0 %v3775
    %8750 = vmatpush1.xpose.msra.mxu0 %v3774
    %8751 = vmatprep.subr.mxu0 %v3783
    %8752 = vmatpush1.xpose.msra.mxu0 %v3782
    %8753 = vmatprep.subr.mxu0 %v3791
    %8754 = vmatpush1.xpose.msra.mxu0 %v3790
    %8755 = vmatprep.subr.mxu0 %v3799
    %8756 = vmatpush1.xpose.msra.mxu0 %v3798
    %8757 = vmatprep.subr.mxu0 0.0
    %8758 = vmatpush1.xpose.msra.mxu0 0.0
    %8759 = vmatprep.subr.mxu0 0.0
    %8760 = vmatpush1.xpose.msra.mxu0 0.0
    %8761 = vmatprep.subr.mxu0 0.0
    %8762 = vmatpush1.xpose.msra.mxu0 0.0
    %8763 = vmatprep.subr.mxu0 0.0
    %8764 = vmatpush1.xpose.msra.mxu0 0.0
    %8765 = vmatprep.subr.mxu0 0.0
    %8766 = vmatpush1.xpose.msra.mxu0 0.0
    %8767 = vmatprep.subr.mxu0 0.0
    %8768 = vmatpush1.xpose.msra.mxu0 0.0
    %8769 = vmatprep.subr.mxu0 0.0
    %8770 = vmatpush1.xpose.msra.mxu0 0.0
    %8771 = vmatprep.subr.mxu0 0.0
    %8772 = vmatpush1.xpose.msra.mxu0 0.0
    %8773 = vmatprep.subr.mxu0 0.0
    %8774 = vmatpush1.xpose.msra.mxu0 0.0
    %8775 = vmatprep.subr.mxu0 0.0
    %8776 = vmatpush1.xpose.msra.mxu0 0.0
    %8777 = vmatprep.subr.mxu0 0.0
    %8778 = vmatpush1.xpose.msra.mxu0 0.0
    %8779 = vmatprep.subr.mxu0 0.0
    %8780 = vmatpush1.xpose.msra.mxu0 0.0
    %8781 = vmatprep.subr.mxu0 0.0
    %8782 = vmatpush1.xpose.msra.mxu0 0.0
    %8783 = vmatprep.subr.mxu0 0.0
    %8784 = vmatpush1.xpose.msra.mxu0 0.0
    %8785 = vmatprep.subr.mxu0 0.0
    %8786 = vmatpush1.xpose.msra.mxu0 0.0
    %8787 = vmatprep.subr.mxu0 0.0
    %8788 = vmatpush1.xpose.msra.mxu0 0.0
    %8789 = vmatprep.subr.mxu0 0.0
    %8790 = vmatpush1.xpose.msra.mxu0 0.0
    %8791 = vmatprep.subr.mxu0 0.0
    %8792 = vmatpush1.xpose.msra.mxu0 0.0
    %8793 = vmatprep.subr.mxu0 0.0
    %8794 = vmatpush1.xpose.msra.mxu0 0.0
    %8795 = vmatprep.subr.mxu0 0.0
    %8796 = vmatpush1.xpose.msra.mxu0 0.0
    %8797 = vmatprep.subr.mxu0 0.0
    %8798 = vmatpush1.xpose.msra.mxu0 0.0
    %8799 = vmatprep.subr.mxu0 0.0
    %8800 = vmatpush1.xpose.msra.mxu0 0.0
    %8801 = vmatprep.subr.mxu0 0.0
    %8802 = vmatpush1.xpose.msra.mxu0 0.0
    %8803 = vmatprep.subr.mxu0 0.0
    %8804 = vmatpush1.xpose.msra.mxu0 0.0
    %8805 = vmatprep.subr.mxu0 0.0
    %8806 = vmatpush1.xpose.msra.mxu0 0.0
    %8807 = vmatprep.subr.mxu0 0.0
    %8808 = vmatpush1.xpose.msra.mxu0 0.0
    %8809 = vmatprep.subr.mxu0 0.0
    %8810 = vmatpush1.xpose.msra.mxu0 0.0
    %8811 = vmatprep.subr.mxu0 0.0
    %8812 = vmatpush1.xpose.msra.mxu0 0.0
    %8813 = vmatprep.mubr.f32.mxu0 %v8586
    %8814 = vmatmul.mubr.f32.gmra.mrb[0].mxu0 %v8578
    %v8815 = vpop.f32.mrb[0].mxu0
    %v8816 = vadd.f32 %v8746, %v8815
    %v8817 = vpop.f32.mrb[0].mxu0
    %8818 = vdwg.mxu0
    %8819 = vmatprep.subr.mxu0 %v8598
    %8820 = vmatpush1.xpose.msra.mxu0 %v3776
    %8821 = vmatprep.subr.mxu0 %v8601
    %8822 = vmatpush1.xpose.msra.mxu0 %v3784
    %8823 = vmatprep.subr.mxu0 %v8604
    %8824 = vmatpush1.xpose.msra.mxu0 %v3792
    %8825 = vmatprep.subr.mxu0 %v8607
    %8826 = vmatpush1.xpose.msra.mxu0 %v3800
    %8827 = vmatprep.subr.mxu0 0.0
    %8828 = vmatpush1.xpose.msra.mxu0 0.0
    %8829 = vmatprep.subr.mxu0 0.0
    %8830 = vmatpush1.xpose.msra.mxu0 0.0
    %8831 = vmatprep.subr.mxu0 0.0
    %8832 = vmatpush1.xpose.msra.mxu0 0.0
    %8833 = vmatprep.subr.mxu0 0.0
    %8834 = vmatpush1.xpose.msra.mxu0 0.0
    %8835 = vmatprep.subr.mxu0 0.0
    %8836 = vmatpush1.xpose.msra.mxu0 0.0
    %8837 = vmatprep.subr.mxu0 0.0
    %8838 = vmatpush1.xpose.msra.mxu0 0.0
    %8839 = vmatprep.subr.mxu0 0.0
    %8840 = vmatpush1.xpose.msra.mxu0 0.0
    %8841 = vmatprep.subr.mxu0 0.0
    %8842 = vmatpush1.xpose.msra.mxu0 0.0
    %8843 = vmatprep.subr.mxu0 0.0
    %8844 = vmatpush1.xpose.msra.mxu0 0.0
    %8845 = vmatprep.subr.mxu0 0.0
    %8846 = vmatpush1.xpose.msra.mxu0 0.0
    %8847 = vmatprep.subr.mxu0 0.0
    %8848 = vmatpush1.xpose.msra.mxu0 0.0
    %8849 = vmatprep.subr.mxu0 0.0
    %8850 = vmatpush1.xpose.msra.mxu0 0.0
    %8851 = vmatprep.subr.mxu0 0.0
    %8852 = vmatpush1.xpose.msra.mxu0 0.0
    %8853 = vmatprep.subr.mxu0 0.0
    %8854 = vmatpush1.xpose.msra.mxu0 0.0
    %8855 = vmatprep.subr.mxu0 0.0
    %8856 = vmatpush1.xpose.msra.mxu0 0.0
    %8857 = vmatprep.subr.mxu0 0.0
    %8858 = vmatpush1.xpose.msra.mxu0 0.0
    %8859 = vmatprep.subr.mxu0 0.0
    %8860 = vmatpush1.xpose.msra.mxu0 0.0
    %8861 = vmatprep.subr.mxu0 0.0
    %8862 = vmatpush1.xpose.msra.mxu0 0.0
    %8863 = vmatprep.subr.mxu0 0.0
    %8864 = vmatpush1.xpose.msra.mxu0 0.0
    %8865 = vmatprep.subr.mxu0 0.0
    %8866 = vmatpush1.xpose.msra.mxu0 0.0
    %8867 = vmatprep.subr.mxu0 0.0
    %8868 = vmatpush1.xpose.msra.mxu0 0.0
    %8869 = vmatprep.subr.mxu0 0.0
    %8870 = vmatpush1.xpose.msra.mxu0 0.0
    %8871 = vmatprep.subr.mxu0 0.0
    %8872 = vmatpush1.xpose.msra.mxu0 0.0
    %8873 = vmatprep.subr.mxu0 0.0
    %8874 = vmatpush1.xpose.msra.mxu0 0.0
    %8875 = vmatprep.subr.mxu0 0.0
    %8876 = vmatpush1.xpose.msra.mxu0 0.0
    %8877 = vmatprep.subr.mxu0 0.0
    %8878 = vmatpush1.xpose.msra.mxu0 0.0
    %8879 = vmatprep.subr.mxu0 0.0
    %8880 = vmatpush1.xpose.msra.mxu0 0.0
    %8881 = vmatprep.subr.mxu0 0.0
    %8882 = vmatpush1.xpose.msra.mxu0 0.0
    %8883 = vmatprep.mubr.f32.mxu0 %v8595
    %8884 = vmatmul.mubr.f32.gmra.mrb[0].mxu0 %v8585
    %v8885 = vpop.f32.mrb[0].mxu0
    %v8886 = vadd.f32 %v8816, %v8885
    %v8887 = vpop.f32.mrb[0].mxu0
    %8888 = vdwg.mxu0
    %v8891 = vcombine.high %v3320, %v3320
    %v8893 = vunpack.c.l.s4 1983009808
    %v8894 = vunpack.c.0.s8 %v8893
    %v8895 = vlaneseq
    %v8896 = vshrl.u32 %v8895, 7
    %v8897 = vsub.s32 %v8894, %v8896
    %v8898 = vrot.slane %v3320, %v8897
    %v8900 = vunpack.c.l.s4 1983009808
    %v8901 = vunpack.c.0.s8 %v8900
    %v8902 = vlaneseq
    %v8903 = vshrl.u32 %v8902, 7
    %v8904 = vsub.s32 %v8901, %v8903
    %v8905 = vrot.slane %v8891, %v8904
    %v8906 = vcombine.high %v8898, %v8898
    %v8907 = vcombine.high %v8905, %v8905
    %v8908 = vcombine.high %v3321, %v3321
    %v8910 = vunpack.c.l.s4 1983009808
    %v8911 = vunpack.c.0.s8 %v8910
    %v8912 = vlaneseq
    %v8913 = vshrl.u32 %v8912, 7
    %v8914 = vsub.s32 %v8911, %v8913
    %v8915 = vrot.slane %v3321, %v8914
    %v8917 = vunpack.c.l.s4 1983009808
    %v8918 = vunpack.c.0.s8 %v8917
    %v8919 = vlaneseq
    %v8920 = vshrl.u32 %v8919, 7
    %v8921 = vsub.s32 %v8918, %v8920
    %v8922 = vrot.slane %v8908, %v8921
    %v8923 = vcombine.high %v8915, %v8915
    %v8924 = vcombine.high %v8922, %v8922
    %v8932 = vsel %vm417, %v8924, 0
    %v8935 = vsel %vm417, %v3809, 0
    %v8938 = vsel %vm417, %v3817, 0
    %v8941 = vsel %vm417, %v3825, 0
    %v8944 = vsel %vm417, %v3833, 0
    %8946 = vmatprep.subr.mxu0 %v3803
    %8947 = vmatpush1.xpose.msra.mxu0 %v3802
    %8948 = vmatprep.subr.mxu0 %v3811
    %8949 = vmatpush1.xpose.msra.mxu0 %v3810
    %8950 = vmatprep.subr.mxu0 %v3819
    %8951 = vmatpush1.xpose.msra.mxu0 %v3818
    %8952 = vmatprep.subr.mxu0 %v3827
    %8953 = vmatpush1.xpose.msra.mxu0 %v3826
    %8954 = vmatprep.subr.mxu0 0.0
    %8955 = vmatpush1.xpose.msra.mxu0 0.0
    %8956 = vmatprep.subr.mxu0 0.0
    %8957 = vmatpush1.xpose.msra.mxu0 0.0
    %8958 = vmatprep.subr.mxu0 0.0
    %8959 = vmatpush1.xpose.msra.mxu0 0.0
    %8960 = vmatprep.subr.mxu0 0.0
    %8961 = vmatpush1.xpose.msra.mxu0 0.0
    %8962 = vmatprep.subr.mxu0 0.0
    %8963 = vmatpush1.xpose.msra.mxu0 0.0
    %8964 = vmatprep.subr.mxu0 0.0
    %8965 = vmatpush1.xpose.msra.mxu0 0.0
    %8966 = vmatprep.subr.mxu0 0.0
    %8967 = vmatpush1.xpose.msra.mxu0 0.0
    %8968 = vmatprep.subr.mxu0 0.0
    %8969 = vmatpush1.xpose.msra.mxu0 0.0
    %8970 = vmatprep.subr.mxu0 0.0
    %8971 = vmatpush1.xpose.msra.mxu0 0.0
    %8972 = vmatprep.subr.mxu0 0.0
    %8973 = vmatpush1.xpose.msra.mxu0 0.0
    %8974 = vmatprep.subr.mxu0 0.0
    %8975 = vmatpush1.xpose.msra.mxu0 0.0
    %8976 = vmatprep.subr.mxu0 0.0
    %8977 = vmatpush1.xpose.msra.mxu0 0.0
    %8978 = vmatprep.subr.mxu0 0.0
    %8979 = vmatpush1.xpose.msra.mxu0 0.0
    %8980 = vmatprep.subr.mxu0 0.0
    %8981 = vmatpush1.xpose.msra.mxu0 0.0
    %8982 = vmatprep.subr.mxu0 0.0
    %8983 = vmatpush1.xpose.msra.mxu0 0.0
    %8984 = vmatprep.subr.mxu0 0.0
    %8985 = vmatpush1.xpose.msra.mxu0 0.0
    %8986 = vmatprep.subr.mxu0 0.0
    %8987 = vmatpush1.xpose.msra.mxu0 0.0
    %8988 = vmatprep.subr.mxu0 0.0
    %8989 = vmatpush1.xpose.msra.mxu0 0.0
    %8990 = vmatprep.subr.mxu0 0.0
    %8991 = vmatpush1.xpose.msra.mxu0 0.0
    %8992 = vmatprep.subr.mxu0 0.0
    %8993 = vmatpush1.xpose.msra.mxu0 0.0
    %8994 = vmatprep.subr.mxu0 0.0
    %8995 = vmatpush1.xpose.msra.mxu0 0.0
    %8996 = vmatprep.subr.mxu0 0.0
    %8997 = vmatpush1.xpose.msra.mxu0 0.0
    %8998 = vmatprep.subr.mxu0 0.0
    %8999 = vmatpush1.xpose.msra.mxu0 0.0
    %9000 = vmatprep.subr.mxu0 0.0
    %9001 = vmatpush1.xpose.msra.mxu0 0.0
    %9002 = vmatprep.subr.mxu0 0.0
    %9003 = vmatpush1.xpose.msra.mxu0 0.0
    %9004 = vmatprep.subr.mxu0 0.0
    %9005 = vmatpush1.xpose.msra.mxu0 0.0
    %9006 = vmatprep.subr.mxu0 0.0
    %9007 = vmatpush1.xpose.msra.mxu0 0.0
    %9008 = vmatprep.subr.mxu0 0.0
    %9009 = vmatpush1.xpose.msra.mxu0 0.0
    %9010 = vmatprep.mubr.f32.mxu0 %v8906
    %9011 = vmatmul.mubr.f32.gmra.mrb[0].mxu0 %v8898
    %v9012 = vpop.f32.mrb[0].mxu0
    %v9013 = vadd.f32 0.0, %v9012
    %v9014 = vpop.f32.mrb[0].mxu0
    %9015 = vdwg.mxu0
    %9016 = vmatprep.subr.mxu0 %v3805
    %9017 = vmatpush1.xpose.msra.mxu0 %v3804
    %9018 = vmatprep.subr.mxu0 %v3813
    %9019 = vmatpush1.xpose.msra.mxu0 %v3812
    %9020 = vmatprep.subr.mxu0 %v3821
    %9021 = vmatpush1.xpose.msra.mxu0 %v3820
    %9022 = vmatprep.subr.mxu0 %v3829
    %9023 = vmatpush1.xpose.msra.mxu0 %v3828
    %9024 = vmatprep.subr.mxu0 0.0
    %9025 = vmatpush1.xpose.msra.mxu0 0.0
    %9026 = vmatprep.subr.mxu0 0.0
    %9027 = vmatpush1.xpose.msra.mxu0 0.0
    %9028 = vmatprep.subr.mxu0 0.0
    %9029 = vmatpush1.xpose.msra.mxu0 0.0
    %9030 = vmatprep.subr.mxu0 0.0
    %9031 = vmatpush1.xpose.msra.mxu0 0.0
    %9032 = vmatprep.subr.mxu0 0.0
    %9033 = vmatpush1.xpose.msra.mxu0 0.0
    %9034 = vmatprep.subr.mxu0 0.0
    %9035 = vmatpush1.xpose.msra.mxu0 0.0
    %9036 = vmatprep.subr.mxu0 0.0
    %9037 = vmatpush1.xpose.msra.mxu0 0.0
    %9038 = vmatprep.subr.mxu0 0.0
    %9039 = vmatpush1.xpose.msra.mxu0 0.0
    %9040 = vmatprep.subr.mxu0 0.0
    %9041 = vmatpush1.xpose.msra.mxu0 0.0
    %9042 = vmatprep.subr.mxu0 0.0
    %9043 = vmatpush1.xpose.msra.mxu0 0.0
    %9044 = vmatprep.subr.mxu0 0.0
    %9045 = vmatpush1.xpose.msra.mxu0 0.0
    %9046 = vmatprep.subr.mxu0 0.0
    %9047 = vmatpush1.xpose.msra.mxu0 0.0
    %9048 = vmatprep.subr.mxu0 0.0
    %9049 = vmatpush1.xpose.msra.mxu0 0.0
    %9050 = vmatprep.subr.mxu0 0.0
    %9051 = vmatpush1.xpose.msra.mxu0 0.0
    %9052 = vmatprep.subr.mxu0 0.0
    %9053 = vmatpush1.xpose.msra.mxu0 0.0
    %9054 = vmatprep.subr.mxu0 0.0
    %9055 = vmatpush1.xpose.msra.mxu0 0.0
    %9056 = vmatprep.subr.mxu0 0.0
    %9057 = vmatpush1.xpose.msra.mxu0 0.0
    %9058 = vmatprep.subr.mxu0 0.0
    %9059 = vmatpush1.xpose.msra.mxu0 0.0
    %9060 = vmatprep.subr.mxu0 0.0
    %9061 = vmatpush1.xpose.msra.mxu0 0.0
    %9062 = vmatprep.subr.mxu0 0.0
    %9063 = vmatpush1.xpose.msra.mxu0 0.0
    %9064 = vmatprep.subr.mxu0 0.0
    %9065 = vmatpush1.xpose.msra.mxu0 0.0
    %9066 = vmatprep.subr.mxu0 0.0
    %9067 = vmatpush1.xpose.msra.mxu0 0.0
    %9068 = vmatprep.subr.mxu0 0.0
    %9069 = vmatpush1.xpose.msra.mxu0 0.0
    %9070 = vmatprep.subr.mxu0 0.0
    %9071 = vmatpush1.xpose.msra.mxu0 0.0
    %9072 = vmatprep.subr.mxu0 0.0
    %9073 = vmatpush1.xpose.msra.mxu0 0.0
    %9074 = vmatprep.subr.mxu0 0.0
    %9075 = vmatpush1.xpose.msra.mxu0 0.0
    %9076 = vmatprep.subr.mxu0 0.0
    %9077 = vmatpush1.xpose.msra.mxu0 0.0
    %9078 = vmatprep.subr.mxu0 0.0
    %9079 = vmatpush1.xpose.msra.mxu0 0.0
    %9080 = vmatprep.mubr.f32.mxu0 %v8907
    %9081 = vmatmul.mubr.f32.gmra.mrb[0].mxu0 %v8905
    %v9082 = vpop.f32.mrb[0].mxu0
    %v9083 = vadd.f32 %v9013, %v9082
    %v9084 = vpop.f32.mrb[0].mxu0
    %9085 = vdwg.mxu0
    %9086 = vmatprep.subr.mxu0 %v3807
    %9087 = vmatpush1.xpose.msra.mxu0 %v3806
    %9088 = vmatprep.subr.mxu0 %v3815
    %9089 = vmatpush1.xpose.msra.mxu0 %v3814
    %9090 = vmatprep.subr.mxu0 %v3823
    %9091 = vmatpush1.xpose.msra.mxu0 %v3822
    %9092 = vmatprep.subr.mxu0 %v3831
    %9093 = vmatpush1.xpose.msra.mxu0 %v3830
    %9094 = vmatprep.subr.mxu0 0.0
    %9095 = vmatpush1.xpose.msra.mxu0 0.0
    %9096 = vmatprep.subr.mxu0 0.0
    %9097 = vmatpush1.xpose.msra.mxu0 0.0
    %9098 = vmatprep.subr.mxu0 0.0
    %9099 = vmatpush1.xpose.msra.mxu0 0.0
    %9100 = vmatprep.subr.mxu0 0.0
    %9101 = vmatpush1.xpose.msra.mxu0 0.0
    %9102 = vmatprep.subr.mxu0 0.0
    %9103 = vmatpush1.xpose.msra.mxu0 0.0
    %9104 = vmatprep.subr.mxu0 0.0
    %9105 = vmatpush1.xpose.msra.mxu0 0.0
    %9106 = vmatprep.subr.mxu0 0.0
    %9107 = vmatpush1.xpose.msra.mxu0 0.0
    %9108 = vmatprep.subr.mxu0 0.0
    %9109 = vmatpush1.xpose.msra.mxu0 0.0
    %9110 = vmatprep.subr.mxu0 0.0
    %9111 = vmatpush1.xpose.msra.mxu0 0.0
    %9112 = vmatprep.subr.mxu0 0.0
    %9113 = vmatpush1.xpose.msra.mxu0 0.0
    %9114 = vmatprep.subr.mxu0 0.0
    %9115 = vmatpush1.xpose.msra.mxu0 0.0
    %9116 = vmatprep.subr.mxu0 0.0
    %9117 = vmatpush1.xpose.msra.mxu0 0.0
    %9118 = vmatprep.subr.mxu0 0.0
    %9119 = vmatpush1.xpose.msra.mxu0 0.0
    %9120 = vmatprep.subr.mxu0 0.0
    %9121 = vmatpush1.xpose.msra.mxu0 0.0
    %9122 = vmatprep.subr.mxu0 0.0
    %9123 = vmatpush1.xpose.msra.mxu0 0.0
    %9124 = vmatprep.subr.mxu0 0.0
    %9125 = vmatpush1.xpose.msra.mxu0 0.0
    %9126 = vmatprep.subr.mxu0 0.0
    %9127 = vmatpush1.xpose.msra.mxu0 0.0
    %9128 = vmatprep.subr.mxu0 0.0
    %9129 = vmatpush1.xpose.msra.mxu0 0.0
    %9130 = vmatprep.subr.mxu0 0.0
    %9131 = vmatpush1.xpose.msra.mxu0 0.0
    %9132 = vmatprep.subr.mxu0 0.0
    %9133 = vmatpush1.xpose.msra.mxu0 0.0
    %9134 = vmatprep.subr.mxu0 0.0
    %9135 = vmatpush1.xpose.msra.mxu0 0.0
    %9136 = vmatprep.subr.mxu0 0.0
    %9137 = vmatpush1.xpose.msra.mxu0 0.0
    %9138 = vmatprep.subr.mxu0 0.0
    %9139 = vmatpush1.xpose.msra.mxu0 0.0
    %9140 = vmatprep.subr.mxu0 0.0
    %9141 = vmatpush1.xpose.msra.mxu0 0.0
    %9142 = vmatprep.subr.mxu0 0.0
    %9143 = vmatpush1.xpose.msra.mxu0 0.0
    %9144 = vmatprep.subr.mxu0 0.0
    %9145 = vmatpush1.xpose.msra.mxu0 0.0
    %9146 = vmatprep.subr.mxu0 0.0
    %9147 = vmatpush1.xpose.msra.mxu0 0.0
    %9148 = vmatprep.subr.mxu0 0.0
    %9149 = vmatpush1.xpose.msra.mxu0 0.0
    %9150 = vmatprep.mubr.f32.mxu0 %v8923
    %9151 = vmatmul.mubr.f32.gmra.mrb[0].mxu0 %v8915
    %v9152 = vpop.f32.mrb[0].mxu0
    %v9153 = vadd.f32 %v9083, %v9152
    %v9154 = vpop.f32.mrb[0].mxu0
    %9155 = vdwg.mxu0
    %9156 = vmatprep.subr.mxu0 %v8935
    %9157 = vmatpush1.xpose.msra.mxu0 %v3808
    %9158 = vmatprep.subr.mxu0 %v8938
    %9159 = vmatpush1.xpose.msra.mxu0 %v3816
    %9160 = vmatprep.subr.mxu0 %v8941
    %9161 = vmatpush1.xpose.msra.mxu0 %v3824
    %9162 = vmatprep.subr.mxu0 %v8944
    %9163 = vmatpush1.xpose.msra.mxu0 %v3832
    %9164 = vmatprep.subr.mxu0 0.0
    %9165 = vmatpush1.xpose.msra.mxu0 0.0
    %9166 = vmatprep.subr.mxu0 0.0
    %9167 = vmatpush1.xpose.msra.mxu0 0.0
    %9168 = vmatprep.subr.mxu0 0.0
    %9169 = vmatpush1.xpose.msra.mxu0 0.0
    %9170 = vmatprep.subr.mxu0 0.0
    %9171 = vmatpush1.xpose.msra.mxu0 0.0
    %9172 = vmatprep.subr.mxu0 0.0
    %9173 = vmatpush1.xpose.msra.mxu0 0.0
    %9174 = vmatprep.subr.mxu0 0.0
    %9175 = vmatpush1.xpose.msra.mxu0 0.0
    %9176 = vmatprep.subr.mxu0 0.0
    %9177 = vmatpush1.xpose.msra.mxu0 0.0
    %9178 = vmatprep.subr.mxu0 0.0
    %9179 = vmatpush1.xpose.msra.mxu0 0.0
    %9180 = vmatprep.subr.mxu0 0.0
    %9181 = vmatpush1.xpose.msra.mxu0 0.0
    %9182 = vmatprep.subr.mxu0 0.0
    %9183 = vmatpush1.xpose.msra.mxu0 0.0
    %9184 = vmatprep.subr.mxu0 0.0
    %9185 = vmatpush1.xpose.msra.mxu0 0.0
    %9186 = vmatprep.subr.mxu0 0.0
    %9187 = vmatpush1.xpose.msra.mxu0 0.0
    %9188 = vmatprep.subr.mxu0 0.0
    %9189 = vmatpush1.xpose.msra.mxu0 0.0
    %9190 = vmatprep.subr.mxu0 0.0
    %9191 = vmatpush1.xpose.msra.mxu0 0.0
    %9192 = vmatprep.subr.mxu0 0.0
    %9193 = vmatpush1.xpose.msra.mxu0 0.0
    %9194 = vmatprep.subr.mxu0 0.0
    %9195 = vmatpush1.xpose.msra.mxu0 0.0
    %9196 = vmatprep.subr.mxu0 0.0
    %9197 = vmatpush1.xpose.msra.mxu0 0.0
    %9198 = vmatprep.subr.mxu0 0.0
    %9199 = vmatpush1.xpose.msra.mxu0 0.0
    %9200 = vmatprep.subr.mxu0 0.0
    %9201 = vmatpush1.xpose.msra.mxu0 0.0
    %9202 = vmatprep.subr.mxu0 0.0
    %9203 = vmatpush1.xpose.msra.mxu0 0.0
    %9204 = vmatprep.subr.mxu0 0.0
    %9205 = vmatpush1.xpose.msra.mxu0 0.0
    %9206 = vmatprep.subr.mxu0 0.0
    %9207 = vmatpush1.xpose.msra.mxu0 0.0
    %9208 = vmatprep.subr.mxu0 0.0
    %9209 = vmatpush1.xpose.msra.mxu0 0.0
    %9210 = vmatprep.subr.mxu0 0.0
    %9211 = vmatpush1.xpose.msra.mxu0 0.0
    %9212 = vmatprep.subr.mxu0 0.0
    %9213 = vmatpush1.xpose.msra.mxu0 0.0
    %9214 = vmatprep.subr.mxu0 0.0
    %9215 = vmatpush1.xpose.msra.mxu0 0.0
    %9216 = vmatprep.subr.mxu0 0.0
    %9217 = vmatpush1.xpose.msra.mxu0 0.0
    %9218 = vmatprep.subr.mxu0 0.0
    %9219 = vmatpush1.xpose.msra.mxu0 0.0
    %9220 = vmatprep.mubr.f32.mxu0 %v8932
    %9221 = vmatmul.mubr.f32.gmra.mrb[0].mxu0 %v8922
    %v9222 = vpop.f32.mrb[0].mxu0
    %v9223 = vadd.f32 %v9153, %v9222
    %v9224 = vpop.f32.mrb[0].mxu0
    %9225 = vdwg.mxu0
    %vm9226 = vcmask 205824
    %v9227 = vsel %vm9226, %v4168, 0.0
    %v9228 = vsel %vm9226, %v4505, 0.0
    %v9229 = vadd.f32 %v9227, %v9228
    %v9230 = vsel %vm9226, %v4842, 0.0
    %v9231 = vadd.f32 %v9229, %v9230
    %v9232 = vsel %vm9226, %v5179, 0.0
    %v9233 = vadd.f32 %v9231, %v9232
    %v9234 = vsel %vm9226, %v5516, 0.0
    %v9235 = vadd.f32 %v9233, %v9234
    %v9236 = vsel %vm9226, %v5853, 0.0
    %v9237 = vadd.f32 %v9235, %v9236
    %v9238 = vsel %vm9226, %v6190, 0.0
    %v9239 = vadd.f32 %v9237, %v9238
    %v9240 = vsel %vm9226, %v6527, 0.0
    %v9241 = vadd.f32 %v9239, %v9240
    %v9242 = vsel %vm9226, %v6864, 0.0
    %v9243 = vadd.f32 %v9241, %v9242
    %v9244 = vsel %vm9226, %v7201, 0.0
    %v9245 = vadd.f32 %v9243, %v9244
    %v9246 = vsel %vm9226, %v7538, 0.0
    %v9247 = vadd.f32 %v9245, %v9246
    %v9248 = vsel %vm9226, %v7875, 0.0
    %v9249 = vadd.f32 %v9247, %v9248
    %v9250 = vsel %vm9226, %v8212, 0.0
    %v9251 = vadd.f32 %v9249, %v9250
    %v9252 = vsel %vm9226, %v8549, 0.0
    %v9253 = vadd.f32 %v9251, %v9252
    %v9254 = vsel %vm9226, %v8886, 0.0
    %v9255 = vadd.f32 %v9253, %v9254
    %v9256 = vsel %vm9226, %v9223, 0.0
    %v9257 = vadd.f32 %v9255, %v9256
    %v9258 = vld [vmem:[%s4] sm:$0x1]
    %v9260 = vlaneseq
    %v9261 = vshrl.u32 %v9260, 7
    %v9262 = vsub.s32 0, %v9261
    %v9263 = vrot.slane %v9258, %v9262
    %v9265 = vadd.f32 %v9257, %v9263
    %9266 = vst.msk [vmem:[#allocation4] sm:$0x3] %vm9226, %v9265
    // Predicated region
    $region22: #{tpu_custom_call.1} parent=1 // pred_check
      _
    $region23: #{tpu_custom_call.1} parent=1 // pred_check_branch
      %9268 = sbr.rel (0) target = $region25
    $region24: #{tpu_custom_call.1} parent=1 // pred_region
      %s9270 = ssub.s32 32, 32
      %9271 = vsyncadd [#allocation5], %s9270
      %s9273 = sshll.u32 [#allocation4], 4
      %s9274 = int_to_ptr.vmem [resolvable:$true] %s9273
      %9276 = dma.vmem_to_hbm [thread:$0]  %s9274, 32, %s5, [#allocation5]
    $region25: #{tpu_custom_call.1} parent=1 // pred_fallthru
      _
    // Predicated region
    $region26: #{tpu_custom_call.1} parent=1 // pred_check
      _
    $region27: #{tpu_custom_call.1} parent=1 // pred_check_branch
      %9278 = sbr.rel (0) target = $region29
    $region28: #{tpu_custom_call.1} parent=1 // pred_region
      %9279 = dma.done [#allocation5], 32
    $region29: #{tpu_custom_call.1} parent=1 // pred_fallthru
      _
    %9280 = vsyncpa [#allocation5], 1

</llo_original>
